<compile_context>
chip_gen: v7x
topology: tpu7x:2x2x1
jax: 0.10.0
libtpu: 0.0.40
codegen_flags: <defaults>
</compile_context>

<pallas_src>
import math
from functools import partial

import jax
import jax.numpy as jnp
from jax.experimental import pallas as pl
from jax.experimental.pallas import tpu as pltpu

_BF16 = jnp.bfloat16
FEAT_TYPES = ("two_d", "three_d", "audio", "sem")


# ----------------------------------------------------------------------------
# In-kernel helpers
# ----------------------------------------------------------------------------
def _normalize(xf):
    """LayerNorm normalize step only (affine is folded into downstream weights)."""
    mu = jnp.mean(xf, axis=-1, keepdims=True)
    var = jnp.mean((xf - mu) ** 2, axis=-1, keepdims=True)
    return (xf - mu) * jax.lax.rsqrt(var + 1e-5)


def _attend_head(q, k, v, bias, scale):
    """One head of attention with an additive mask bias.

    q [B,Tq,dk] / k,v [B,Tk,dk] (f32) -> [B,Tq,dk] f32.  Matmul operands are
    cast to bf16 (f32 accumulate); softmax math stays in f32.
    """
    s = jnp.einsum("bqd,bkd->bqk", q.astype(_BF16), k.astype(_BF16),
                   preferred_element_type=jnp.float32) * scale + bias
    s = s - jnp.max(s, axis=-1, keepdims=True)
    p = jnp.exp(s)
    p = p * pl.reciprocal(jnp.sum(p, axis=-1, keepdims=True), approx=True)
    return jnp.einsum("bqk,bkd->bqd", p.astype(_BF16), v.astype(_BF16),
                      preferred_element_type=jnp.float32)


# ----------------------------------------------------------------------------
# Fused sub-layer kernels (full arrays resident in VMEM, single grid step)
# ----------------------------------------------------------------------------
def _self_att_kernel(x_ref, m_ref, wqkv_ref, bqkv_ref, wo_ref, bo_ref, o_ref,
                     *, n_heads):
    x = x_ref[...]                                       # [B, T, D] f32
    B, T, D = x.shape
    dk = D // n_heads
    scale = 1.0 / math.sqrt(dk)
    xf = x.reshape(B * T, D)

    # LN0 affine folded into wqkv/bqkv at param-prep time.
    xhat = _normalize(xf)
    qkv = (jnp.dot(xhat.astype(_BF16), wqkv_ref[...],
                   preferred_element_type=jnp.float32)
           + bqkv_ref[...]).reshape(B, T, 3 * D)
    q_all, k_all, v_all = qkv[:, :, :D], qkv[:, :, D:2 * D], qkv[:, :, 2 * D:]

    # 0/1 mask -> additive bias, built once and shared by every head.
    bias = (m_ref[...][:, 0] - 1.0) * 1e9                # [B, T, T]

    # TODO(synk): replace with batched-head einsums + one [B*T,D]x[D,D] output
    # dot once Mosaic supports multi-batch dot_general / non-minor transposes.
    acc = jnp.zeros((B * T, D), jnp.float32)
    for h in range(n_heads):                             # static unroll (H small)
        sl = slice(h * dk, (h + 1) * dk)
        o_h = _attend_head(q_all[:, :, sl], k_all[:, :, sl], v_all[:, :, sl],
                           bias, scale)
        acc = acc + jnp.dot(o_h.reshape(B * T, dk).astype(_BF16), wo_ref[h],
                            preferred_element_type=jnp.float32)

    o_ref[...] = x + (acc + bo_ref[...]).reshape(B, T, D)


def _cross_fuse_kernel(x_ref, fc_ref, fs_ref, m_ref,
                       wq12_ref, bq12_ref,
                       wkv1_ref, bkv1_ref, wo1_ref, bo1_ref,
                       wkv2_ref, bkv2_ref, wo2_ref, bo2_ref,
                       o_ref, *, n_heads):
    x = x_ref[...]                                       # [B, T, D]
    B, T, D = x.shape
    dk = D // n_heads
    scale = 1.0 / math.sqrt(dk)
    xf = x.reshape(B * T, D)

    # Both branches share the normalize step; their LN affines are folded into
    # the fused [D, 2D] query projection (one wide MXU op instead of two).
    xhat = _normalize(xf)
    q12 = (jnp.dot(xhat.astype(_BF16), wq12_ref[...],
                   preferred_element_type=jnp.float32) + bq12_ref[...])  # [B*T,2D]

    # 0/1 mask -> additive bias, broadcast once, shared by both branches/heads.
    M = fc_ref.shape[1]
    bias = jnp.broadcast_to((m_ref[...][:, 0] - 1.0) * 1e9, (B, T, M))

    def branch(q_off, feats, wkv, bkv, wo_ref3, bo):
        ff = feats.reshape(B * M, D)
        kv = (jnp.dot(ff.astype(_BF16), wkv,
                      preferred_element_type=jnp.float32) + bkv).reshape(B, M, 2 * D)
        k_all, v_all = kv[:, :, :D], kv[:, :, D:]
        q = q12[:, q_off:q_off + D].reshape(B, T, D)
        acc = jnp.zeros((B * T, D), jnp.float32)
        for h in range(n_heads):
            sl = slice(h * dk, (h + 1) * dk)
            o_h = _attend_head(q[:, :, sl], k_all[:, :, sl], v_all[:, :, sl],
                               bias, scale)
            acc = acc + jnp.dot(o_h.reshape(B * T, dk).astype(_BF16), wo_ref3[h],
                                preferred_element_type=jnp.float32)
        return acc + bo                                   # [B*T, D] (no residual here)

    con = branch(0, fc_ref[...], wkv1_ref[...], bkv1_ref[...], wo1_ref, bo1_ref[...])
    sen = branch(D, fs_ref[...], wkv2_ref[...], bkv2_ref[...], wo2_ref, bo2_ref[...])

    # 2-way fuse gate (exact reciprocal so gate weights sum to 1 exactly).
    inv_sqrt_d = 1.0 / math.sqrt(D)
    s0 = jnp.sum(con * xf, axis=-1, keepdims=True) * inv_sqrt_d
    s1 = jnp.sum(sen * xf, axis=-1, keepdims=True) * inv_sqrt_d
    mmax = jnp.maximum(s0, s1)
    e0 = jnp.exp(s0 - mmax)
    e1 = jnp.exp(s1 - mmax)
    r = 1.0 / (e0 + e1)
    o_ref[...] = ((e0 * con + e1 * sen) * r).reshape(B, T, D)


def _ffn_fuse_kernel(*refs, n_vis):
    # refs = (captions, sem_fused, vis_fused..., w1, b1, w2, b2, out)
    x_ref, sem_ref = refs[0], refs[1]
    vis_refs = refs[2:2 + n_vis]
    w1_ref, b1_ref, w2_ref, b2_ref = refs[2 + n_vis:6 + n_vis]
    o_ref = refs[6 + n_vis]

    x = x_ref[...]                                       # [B, T, D]
    B, T, D = x.shape
    fused = sem_ref[...]
    for vr in vis_refs:
        fused = fused + vr[...]
    # captions + (sem + sum(vis)) / (1 + n_vis); n_vis == 0 reduces to x + sem.
    fused = x + fused * (1.0 / (1.0 + n_vis))

    ff = fused.reshape(B * T, D)
    xn = _normalize(ff)                                  # LN9 affine folded into W1/b1
    h = jnp.maximum(jnp.dot(xn.astype(_BF16), w1_ref[...],
                            preferred_element_type=jnp.float32) + b1_ref[...], 0.0)
    y = jnp.dot(h.astype(_BF16), w2_ref[...],
                preferred_element_type=jnp.float32) + b2_ref[...]
    o_ref[...] = fused + y.reshape(B, T, D)


def _ln_kernel(x_ref, g_ref, b_ref, o_ref):
    x = x_ref[...]                                       # [B, T, D]
    B, T, D = x.shape
    xf = x.reshape(B * T, D)
    o_ref[...] = (_normalize(xf) * g_ref[...] + b_ref[...]).reshape(B, T, D)


# ----------------------------------------------------------------------------
# pallas_call wrappers (full-array blocks; toy shapes fit comfortably in VMEM)
# ----------------------------------------------------------------------------
_COMPILER_PARAMS = pltpu.CompilerParams(
    dimension_semantics=("arbitrary",),
    # Keep whole-sublayer weights VMEM-resident past the 16/32 MiB scoped default.
    vmem_limit_bytes=64 * 1024 * 1024,
)


def _fs(shape):
    return pl.BlockSpec(shape, lambda i: (0,) * len(shape))


def _call_fused(kernel, args, out_shape, alias_input0=False):
    # TODO(synk): at production sizes add a parallel grid axis over B*T row
    # tiles and a trailing 'arbitrary' K-tiling axis over d_ff / 3*d_model with
    # a VMEM f32 accumulator (keeps the working set under v7x's 64 MiB VMEM and
    # uses both TensorCores).
    return pl.pallas_call(
        kernel,
        out_shape=jax.ShapeDtypeStruct(out_shape, jnp.float32),
        grid=(1,),
        in_specs=[_fs(a.shape) for a in args],
        out_specs=_fs(out_shape),
        input_output_aliases={0: 0} if alias_input0 else {},
        compiler_params=_COMPILER_PARAMS,
    )(*args)


def self_att_sublayer(captions, seq_masks, p, n_heads):
    args = [captions, seq_masks, p["wqkv"], p["bqkv"], p["wo"], p["bo"]]
    return _call_fused(partial(_self_att_kernel, n_heads=n_heads), args,
                       captions.shape, alias_input0=True)


def cross_fuse_sublayer(captions, feats_con, feats_sen, mask, p, n_heads):
    if mask is None:
        mask = jnp.ones((captions.shape[0], 1, 1, feats_con.shape[1]), jnp.float32)
    args = [captions, feats_con, feats_sen, mask,
            p["wq12"], p["bq12"],
            p["con"]["wkv"], p["con"]["bkv"], p["con"]["wo"], p["con"]["bo"],
            p["sen"]["wkv"], p["sen"]["bkv"], p["sen"]["wo"], p["sen"]["bo"]]
    return _call_fused(partial(_cross_fuse_kernel, n_heads=n_heads), args,
                       captions.shape)


def ffn_fuse_sublayer(captions, sem_fused, vis_fused, ff):
    args = [captions, sem_fused, *vis_fused, ff["w1"], ff["b1"], ff["w2"], ff["b2"]]
    return _call_fused(partial(_ffn_fuse_kernel, n_vis=len(vis_fused)), args,
                       captions.shape, alias_input0=True)


def pallas_layernorm(x, ln):
    return _call_fused(_ln_kernel, [x, ln[0], ln[1]], x.shape)


# ----------------------------------------------------------------------------
# Model glue
# ----------------------------------------------------------------------------
def decoder_layer_forward(p, n_heads, captions, seq_masks, sem_feats, vis_feats):
    # masked self-attention + residual (1 call)
    captions = self_att_sublayer(captions, seq_masks, p["self_att"], n_heads)

    # semantic con/sen cross-attention pair + 2-way fuse gate (1 call)
    cpt_words, senti_words = sem_feats
    sem_fused = cross_fuse_sublayer(captions, cpt_words, senti_words, None,
                                    p["mh"]["sem"], n_heads)

    vis_fused = []
    for feat_type, (con_f, sen_f, feat_masks) in vis_feats.items():
        vis_fused.append(cross_fuse_sublayer(captions, con_f, sen_f, feat_masks,
                                             p["mh"][feat_type], n_heads))

    # residual + (sem + sum(vis)) / (1+n) averaging + LN + FFN + residual: 1 call
    return ffn_fuse_sublayer(captions, sem_fused, vis_fused, p["ff"])


def decoder_forward(params, n_heads, captions, seq_masks, sem_feats, vis_feats):
    for layer_p in params["layers"]:
        captions = decoder_layer_forward(layer_p, n_heads, captions, seq_masks,
                                         sem_feats, vis_feats)
    return pallas_layernorm(captions, params["final_ln"])


# ----------------------------------------------------------------------------
# Parameter init (raw, PyTorch-like) + host-side prep (LN folding, fusion, bf16)
# ----------------------------------------------------------------------------
def _w(key, din, dout):
    return jax.random.normal(key, (din, dout), jnp.float32) * 0.02


def _ln(d):
    return (jnp.ones((1, d), jnp.float32), jnp.zeros((1, d), jnp.float32))


def _mha(key, d):
    ks = jax.random.split(key, 4)
    z = lambda n: jnp.zeros((1, n), jnp.float32)
    return {"wq": _w(ks[0], d, d), "bq": z(d), "wk": _w(ks[1], d, d), "bk": z(d),
            "wv": _w(ks[2], d, d), "bv": z(d), "wo": _w(ks[3], d, d), "bo": z(d)}


def _raw_layer(key, d, dff):
    ks = jax.random.split(key, 6)
    mh = {}
    for i, ft in enumerate(FEAT_TYPES):
        sub = jax.random.split(ks[1 + i], 2)
        mh[ft] = {"con": _mha(sub[0], d), "sen": _mha(sub[1], d)}
    ffk = jax.random.split(ks[5], 2)
    return {"self_att": _mha(ks[0], d),
            "mh": mh,
            "ff": {"w1": _w(ffk[0], d, dff), "b1": jnp.zeros((1, dff), jnp.float32),
                   "w2": _w(ffk[1], dff, d), "b2": jnp.zeros((1, d), jnp.float32)},
            "ln": [_ln(d) for _ in range(10)]}


def init_raw_decoder_params(key, settings):
    d, dff, n_dec = settings["d_model"], settings["d_ff"], settings["N_dec"]
    ks = jax.random.split(key, n_dec)
    return {"layers": [_raw_layer(ks[i], d, dff) for i in range(n_dec)],
            "final_ln": _ln(d)}


def _fold_ln_into_linear(ln, w, b):
    """(xhat*g + beta) @ W + b  ==  xhat @ (diag(g)·W) + (beta@W + b)  (exact)."""
    g, beta = ln
    return w * g.reshape(-1, 1), beta @ w + b


def _prepare_layer(p, n_heads):
    ln = p["ln"]
    sa = p["self_att"]
    d = sa["wq"].shape[0]
    dk = d // n_heads

    def head_major(wo):  # [D, D] -> [H, dk, D]: heads indexed on a leading, untiled dim
        return wo.reshape(n_heads, dk, d).astype(_BF16)

    wq, bq = _fold_ln_into_linear(ln[0], sa["wq"], sa["bq"])
    wk, bk = _fold_ln_into_linear(ln[0], sa["wk"], sa["bk"])
    wv, bv = _fold_ln_into_linear(ln[0], sa["wv"], sa["bv"])
    self_att = {"wqkv": jnp.concatenate([wq, wk, wv], axis=1).astype(_BF16),
                "bqkv": jnp.concatenate([bq, bk, bv], axis=1),
                "wo": head_major(sa["wo"]), "bo": sa["bo"]}

    # LayerNorm index convention (matches the reference forward when vis_feats
    # iterates two_d, three_d, audio): sem->(1,2), two_d->(3,4), three_d->(5,6),
    # audio->(7,8).
    ln_idx = {"sem": 1, "two_d": 3, "three_d": 5, "audio": 7}
    mh = {}
    for ft, br in p["mh"].items():
        i = ln_idx[ft]
        con, sen = br["con"], br["sen"]
        wq_c, bq_c = _fold_ln_into_linear(ln[i], con["wq"], con["bq"])
        wq_s, bq_s = _fold_ln_into_linear(ln[i + 1], sen["wq"], sen["bq"])
        mh[ft] = {
            "wq12": jnp.concatenate([wq_c, wq_s], axis=1).astype(_BF16),
            "bq12": jnp.concatenate([bq_c, bq_s], axis=1),
            "con": {"wkv": jnp.concatenate([con["wk"], con["wv"]], axis=1).astype(_BF16),
                    "bkv": jnp.concatenate([con["bk"], con["bv"]], axis=1),
                    "wo": head_major(con["wo"]), "bo": con["bo"]},
            "sen": {"wkv": jnp.concatenate([sen["wk"], sen["wv"]], axis=1).astype(_BF16),
                    "bkv": jnp.concatenate([sen["bk"], sen["bv"]], axis=1),
                    "wo": head_major(sen["wo"]), "bo": sen["bo"]},
        }

    ff = p["ff"]
    w1, b1 = _fold_ln_into_linear(ln[9], ff["w1"], ff["b1"])
    ffp = {"w1": w1.astype(_BF16), "b1": b1,
           "w2": ff["w2"].astype(_BF16), "b2": ff["b2"]}

    return {"self_att": self_att, "mh": mh, "ff": ffp}


def prepare_decoder_params(raw, n_heads):
    return {"layers": [_prepare_layer(lp, n_heads) for lp in raw["layers"]],
            "final_ln": raw["final_ln"]}


# ----------------------------------------------------------------------------
if __name__ == "__main__":
    settings = {"d_model": 32, "n_heads": 4, "d_ff": 64, "dropout_p": 0.1, "N_dec": 2}
    B, T = 2, 8
    M_SEM, M_VIS = 6, 5
    D = settings["d_model"]

    key = jax.random.PRNGKey(0)
    k_params, k_cap, k_cpt, k_sen, k_v1, k_v2 = jax.random.split(key, 6)

    raw_params = init_raw_decoder_params(k_params, settings)
    params = prepare_decoder_params(raw_params, settings["n_heads"])

    captions = jax.random.normal(k_cap, (B, T, D), jnp.float32)
    # causal self-attention mask (1 = attend), kept at [B, 1, T, T]
    seq_masks = jnp.broadcast_to(
        jnp.tril(jnp.ones((T, T), jnp.float32))[None, None, :, :], (B, 1, T, T))
    cpt_words = jax.random.normal(k_cpt, (B, M_SEM, D), jnp.float32)
    senti_words = jax.random.normal(k_sen, (B, M_SEM, D), jnp.float32)
    sem_feats = (cpt_words, senti_words)

    con_feats = jax.random.normal(k_v1, (B, M_VIS, D), jnp.float32)
    sen_feats = jax.random.normal(k_v2, (B, M_VIS, D), jnp.float32)
    feat_masks = jnp.ones((B, 1, 1, M_VIS), jnp.float32).at[1, :, :, -1].set(0.0)
    vis_feats = {"two_d": (con_feats, sen_feats, feat_masks)}

    fwd = jax.jit(decoder_forward, static_argnums=(1,))
    out = fwd(params, settings["n_heads"], captions, seq_masks, sem_feats, vis_feats)
    out = jax.block_until_ready(out)
    assert out.shape == (B, T, D)
    assert bool(jnp.all(jnp.isfinite(out)))
    print("KERNEL_OK")
</pallas_src>

<mosaic_0001>
module attributes {stable_mosaic.version = 11 : i64} {
  func.func @_self_att_kernel(%arg0: i32, %arg1: memref<2x8x32xf32, #tpu.memory_space<vmem>>, %arg2: memref<2x1x8x8xf32, #tpu.memory_space<vmem>>, %arg3: memref<32x96xbf16, #tpu.memory_space<vmem>>, %arg4: memref<1x96xf32, #tpu.memory_space<vmem>>, %arg5: memref<4x8x32xbf16, #tpu.memory_space<vmem>>, %arg6: memref<1x32xf32, #tpu.memory_space<vmem>>, %arg7: memref<2x8x32xf32, #tpu.memory_space<vmem>>) attributes {dimension_semantics = [#tpu.dimension_semantics<arbitrary>], iteration_bounds = array<i64: 1>, scalar_prefetch = 0 : i64, scratch_operands = 0 : i64, tpu.core_type = #tpu.core_type<tc>, window_params = [{pipeline_mode = #tpu.pipeline_mode<synchronous>, transform_indices = @transform_0, window_bounds = array<i64: 2, 8, 32>}, {pipeline_mode = #tpu.pipeline_mode<synchronous>, transform_indices = @transform_1, window_bounds = array<i64: 2, 1, 8, 8>}, {pipeline_mode = #tpu.pipeline_mode<synchronous>, transform_indices = @transform_2, window_bounds = array<i64: 32, 96>}, {pipeline_mode = #tpu.pipeline_mode<synchronous>, transform_indices = @transform_3, window_bounds = array<i64: 1, 96>}, {pipeline_mode = #tpu.pipeline_mode<synchronous>, transform_indices = @transform_4, window_bounds = array<i64: 4, 8, 32>}, {pipeline_mode = #tpu.pipeline_mode<synchronous>, transform_indices = @transform_5, window_bounds = array<i64: 1, 32>}, {pipeline_mode = #tpu.pipeline_mode<synchronous>, transform_indices = @transform_6, window_bounds = array<i64: 2, 8, 32>}]} {
    %c0 = arith.constant 0 : index
    %c0_0 = arith.constant 0 : index
    %c0_1 = arith.constant 0 : index
    %0 = vector.load %arg1[%c0, %c0_0, %c0_1] : memref<2x8x32xf32, #tpu.memory_space<vmem>>, vector<2x8x32xf32>
    %1 = vector.shape_cast %0 : vector<2x8x32xf32> to vector<16x32xf32>
    %cst = arith.constant dense<0.000000e+00> : vector<16xf32>
    %2 = vector.multi_reduction <add>, %1, %cst [1] : vector<16x32xf32> to vector<16xf32>
    %3 = vector.shape_cast %2 : vector<16xf32> to vector<16x1xf32>
    %cst_2 = arith.constant 3.200000e+01 : f32
    %4 = vector.broadcast %cst_2 : f32 to vector<16x1xf32>
    %5 = arith.divf %3, %4 : vector<16x1xf32>
    %6 = vector.broadcast %5 : vector<16x1xf32> to vector<16x32xf32>
    %7 = arith.subf %1, %6 : vector<16x32xf32>
    %8 = arith.mulf %7, %7 : vector<16x32xf32>
    %cst_3 = arith.constant dense<0.000000e+00> : vector<16xf32>
    %9 = vector.multi_reduction <add>, %8, %cst_3 [1] : vector<16x32xf32> to vector<16xf32>
    %10 = vector.shape_cast %9 : vector<16xf32> to vector<16x1xf32>
    %cst_4 = arith.constant 3.200000e+01 : f32
    %11 = vector.broadcast %cst_4 : f32 to vector<16x1xf32>
    %12 = arith.divf %10, %11 : vector<16x1xf32>
    %13 = vector.broadcast %5 : vector<16x1xf32> to vector<16x32xf32>
    %14 = arith.subf %1, %13 : vector<16x32xf32>
    %cst_5 = arith.constant 9.99999974E-6 : f32
    %15 = vector.broadcast %cst_5 : f32 to vector<16x1xf32>
    %16 = arith.addf %12, %15 : vector<16x1xf32>
    %17 = math.rsqrt %16 : vector<16x1xf32>
    %18 = vector.broadcast %17 : vector<16x1xf32> to vector<16x32xf32>
    %19 = arith.mulf %14, %18 : vector<16x32xf32>
    %20 = arith.truncf %19 : vector<16x32xf32> to vector<16x32xbf16>
    %c0_6 = arith.constant 0 : index
    %c0_7 = arith.constant 0 : index
    %21 = vector.load %arg3[%c0_6, %c0_7] : memref<32x96xbf16, #tpu.memory_space<vmem>>, vector<32x96xbf16>
    %cst_8 = arith.constant dense<0.000000e+00> : vector<16x96xf32>
    %22 = tpu.matmul %20, %21, %cst_8 {dimension_numbers = #tpu.dot_dimension_numbers<[1], [0], [0], [1], [0, 0, 1, 1], [], []>} : vector<16x32xbf16>, vector<32x96xbf16>, vector<16x96xf32> -> vector<16x96xf32>
    %c0_9 = arith.constant 0 : index
    %c0_10 = arith.constant 0 : index
    %23 = vector.load %arg4[%c0_9, %c0_10] : memref<1x96xf32, #tpu.memory_space<vmem>>, vector<1x96xf32>
    %24 = vector.broadcast %23 : vector<1x96xf32> to vector<16x96xf32>
    %25 = arith.addf %22, %24 : vector<16x96xf32>
    %26 = vector.shape_cast %25 : vector<16x96xf32> to vector<2x8x96xf32>
    %27 = vector.extract_strided_slice %26 {offsets = [0, 0, 0], sizes = [2, 8, 32], strides = [1, 1, 1]} : vector<2x8x96xf32> to vector<2x8x32xf32>
    %28 = vector.extract_strided_slice %26 {offsets = [0, 0, 32], sizes = [2, 8, 32], strides = [1, 1, 1]} : vector<2x8x96xf32> to vector<2x8x32xf32>
    %29 = vector.extract_strided_slice %26 {offsets = [0, 0, 64], sizes = [2, 8, 32], strides = [1, 1, 1]} : vector<2x8x96xf32> to vector<2x8x32xf32>
    %c0_11 = arith.constant 0 : index
    %c0_12 = arith.constant 0 : index
    %c0_13 = arith.constant 0 : index
    %c0_14 = arith.constant 0 : index
    %30 = vector.load %arg2[%c0_11, %c0_12, %c0_13, %c0_14] : memref<2x1x8x8xf32, #tpu.memory_space<vmem>>, vector<2x1x8x8xf32>
    %31 = vector.shape_cast %30 : vector<2x1x8x8xf32> to vector<2x8x8xf32>
    %cst_15 = arith.constant 1.000000e+00 : f32
    %32 = vector.broadcast %cst_15 : f32 to vector<2x8x8xf32>
    %33 = arith.subf %31, %32 : vector<2x8x8xf32>
    %cst_16 = arith.constant 1.000000e+09 : f32
    %34 = vector.broadcast %cst_16 : f32 to vector<2x8x8xf32>
    %35 = arith.mulf %33, %34 : vector<2x8x8xf32>
    %cst_17 = arith.constant 0.000000e+00 : f32
    %36 = vector.broadcast %cst_17 : f32 to vector<16x32xf32>
    %37 = vector.extract_strided_slice %27 {offsets = [0, 0, 0], sizes = [2, 8, 8], strides = [1, 1, 1]} : vector<2x8x32xf32> to vector<2x8x8xf32>
    %38 = vector.extract_strided_slice %28 {offsets = [0, 0, 0], sizes = [2, 8, 8], strides = [1, 1, 1]} : vector<2x8x32xf32> to vector<2x8x8xf32>
    %39 = vector.extract_strided_slice %29 {offsets = [0, 0, 0], sizes = [2, 8, 8], strides = [1, 1, 1]} : vector<2x8x32xf32> to vector<2x8x8xf32>
    %40 = arith.truncf %37 : vector<2x8x8xf32> to vector<2x8x8xbf16>
    %41 = arith.truncf %38 : vector<2x8x8xf32> to vector<2x8x8xbf16>
    "tpu.trace_start"() <{level = 10 : i32, message = "bqd,bkd->bqk"}> : () -> ()
    %cst_18 = arith.constant dense<0.000000e+00> : vector<2x8x8xf32>
    %42 = tpu.matmul %40, %41, %cst_18 {dimension_numbers = #tpu.dot_dimension_numbers<[2], [2], [1], [1], [0, 0, 0, 1, 1, 1], [0], [0]>} : vector<2x8x8xbf16>, vector<2x8x8xbf16>, vector<2x8x8xf32> -> vector<2x8x8xf32>
    "tpu.trace_stop"() : () -> ()
    %cst_19 = arith.constant 0.353553385 : f32
    %43 = vector.broadcast %cst_19 : f32 to vector<2x8x8xf32>
    %44 = arith.mulf %42, %43 : vector<2x8x8xf32>
    %45 = arith.addf %44, %35 : vector<2x8x8xf32>
    %cst_20 = arith.constant dense<0xFF800000> : vector<2x8xf32>
    %46 = vector.multi_reduction <maximumf>, %45, %cst_20 [2] : vector<2x8x8xf32> to vector<2x8xf32>
    %47 = vector.shape_cast %46 : vector<2x8xf32> to vector<2x8x1xf32>
    %48 = vector.broadcast %47 : vector<2x8x1xf32> to vector<2x8x8xf32>
    %49 = arith.subf %45, %48 : vector<2x8x8xf32>
    %50 = math.exp %49 : vector<2x8x8xf32>
    %cst_21 = arith.constant dense<0.000000e+00> : vector<2x8xf32>
    %51 = vector.multi_reduction <add>, %50, %cst_21 [2] : vector<2x8x8xf32> to vector<2x8xf32>
    %52 = vector.shape_cast %51 : vector<2x8xf32> to vector<2x8x1xf32>
    %53 = tpu.reciprocal %52 {approx = true} : vector<2x8x1xf32> -> vector<2x8x1xf32>
    %54 = vector.broadcast %53 : vector<2x8x1xf32> to vector<2x8x8xf32>
    %55 = arith.mulf %50, %54 : vector<2x8x8xf32>
    %56 = arith.truncf %55 : vector<2x8x8xf32> to vector<2x8x8xbf16>
    %57 = arith.truncf %39 : vector<2x8x8xf32> to vector<2x8x8xbf16>
    "tpu.trace_start"() <{level = 10 : i32, message = "bqk,bkd->bqd"}> : () -> ()
    %cst_22 = arith.constant dense<0.000000e+00> : vector<2x8x8xf32>
    %58 = tpu.matmul %56, %57, %cst_22 {dimension_numbers = #tpu.dot_dimension_numbers<[2], [1], [1], [2], [0, 0, 0, 1, 1, 2], [0], [0]>} : vector<2x8x8xbf16>, vector<2x8x8xbf16>, vector<2x8x8xf32> -> vector<2x8x8xf32>
    "tpu.trace_stop"() : () -> ()
    %59 = vector.shape_cast %58 : vector<2x8x8xf32> to vector<16x8xf32>
    %60 = arith.truncf %59 : vector<16x8xf32> to vector<16x8xbf16>
    %c0_23 = arith.constant 0 : index
    %c0_24 = arith.constant 0 : index
    %c0_25 = arith.constant 0 : index
    %61 = vector.load %arg5[%c0_23, %c0_24, %c0_25] : memref<4x8x32xbf16, #tpu.memory_space<vmem>>, vector<1x8x32xbf16>
    %62 = vector.shape_cast %61 : vector<1x8x32xbf16> to vector<8x32xbf16>
    %cst_26 = arith.constant dense<0.000000e+00> : vector<16x32xf32>
    %63 = tpu.matmul %60, %62, %cst_26 {dimension_numbers = #tpu.dot_dimension_numbers<[1], [0], [0], [1], [0, 0, 1, 1], [], []>} : vector<16x8xbf16>, vector<8x32xbf16>, vector<16x32xf32> -> vector<16x32xf32>
    %64 = arith.addf %36, %63 : vector<16x32xf32>
    %65 = vector.extract_strided_slice %27 {offsets = [0, 0, 8], sizes = [2, 8, 8], strides = [1, 1, 1]} : vector<2x8x32xf32> to vector<2x8x8xf32>
    %66 = vector.extract_strided_slice %28 {offsets = [0, 0, 8], sizes = [2, 8, 8], strides = [1, 1, 1]} : vector<2x8x32xf32> to vector<2x8x8xf32>
    %67 = vector.extract_strided_slice %29 {offsets = [0, 0, 8], sizes = [2, 8, 8], strides = [1, 1, 1]} : vector<2x8x32xf32> to vector<2x8x8xf32>
    %68 = arith.truncf %65 : vector<2x8x8xf32> to vector<2x8x8xbf16>
    %69 = arith.truncf %66 : vector<2x8x8xf32> to vector<2x8x8xbf16>
    "tpu.trace_start"() <{level = 10 : i32, message = "bqd,bkd->bqk"}> : () -> ()
    %cst_27 = arith.constant dense<0.000000e+00> : vector<2x8x8xf32>
    %70 = tpu.matmul %68, %69, %cst_27 {dimension_numbers = #tpu.dot_dimension_numbers<[2], [2], [1], [1], [0, 0, 0, 1, 1, 1], [0], [0]>} : vector<2x8x8xbf16>, vector<2x8x8xbf16>, vector<2x8x8xf32> -> vector<2x8x8xf32>
    "tpu.trace_stop"() : () -> ()
    %cst_28 = arith.constant 0.353553385 : f32
    %71 = vector.broadcast %cst_28 : f32 to vector<2x8x8xf32>
    %72 = arith.mulf %70, %71 : vector<2x8x8xf32>
    %73 = arith.addf %72, %35 : vector<2x8x8xf32>
    %cst_29 = arith.constant dense<0xFF800000> : vector<2x8xf32>
    %74 = vector.multi_reduction <maximumf>, %73, %cst_29 [2] : vector<2x8x8xf32> to vector<2x8xf32>
    %75 = vector.shape_cast %74 : vector<2x8xf32> to vector<2x8x1xf32>
    %76 = vector.broadcast %75 : vector<2x8x1xf32> to vector<2x8x8xf32>
    %77 = arith.subf %73, %76 : vector<2x8x8xf32>
    %78 = math.exp %77 : vector<2x8x8xf32>
    %cst_30 = arith.constant dense<0.000000e+00> : vector<2x8xf32>
    %79 = vector.multi_reduction <add>, %78, %cst_30 [2] : vector<2x8x8xf32> to vector<2x8xf32>
    %80 = vector.shape_cast %79 : vector<2x8xf32> to vector<2x8x1xf32>
    %81 = tpu.reciprocal %80 {approx = true} : vector<2x8x1xf32> -> vector<2x8x1xf32>
    %82 = vector.broadcast %81 : vector<2x8x1xf32> to vector<2x8x8xf32>
    %83 = arith.mulf %78, %82 : vector<2x8x8xf32>
    %84 = arith.truncf %83 : vector<2x8x8xf32> to vector<2x8x8xbf16>
    %85 = arith.truncf %67 : vector<2x8x8xf32> to vector<2x8x8xbf16>
    "tpu.trace_start"() <{level = 10 : i32, message = "bqk,bkd->bqd"}> : () -> ()
    %cst_31 = arith.constant dense<0.000000e+00> : vector<2x8x8xf32>
    %86 = tpu.matmul %84, %85, %cst_31 {dimension_numbers = #tpu.dot_dimension_numbers<[2], [1], [1], [2], [0, 0, 0, 1, 1, 2], [0], [0]>} : vector<2x8x8xbf16>, vector<2x8x8xbf16>, vector<2x8x8xf32> -> vector<2x8x8xf32>
    "tpu.trace_stop"() : () -> ()
    %87 = vector.shape_cast %86 : vector<2x8x8xf32> to vector<16x8xf32>
    %88 = arith.truncf %87 : vector<16x8xf32> to vector<16x8xbf16>
    %c1 = arith.constant 1 : index
    %c0_32 = arith.constant 0 : index
    %c0_33 = arith.constant 0 : index
    %89 = vector.load %arg5[%c1, %c0_32, %c0_33] : memref<4x8x32xbf16, #tpu.memory_space<vmem>>, vector<1x8x32xbf16>
    %90 = vector.shape_cast %89 : vector<1x8x32xbf16> to vector<8x32xbf16>
    %cst_34 = arith.constant dense<0.000000e+00> : vector<16x32xf32>
    %91 = tpu.matmul %88, %90, %cst_34 {dimension_numbers = #tpu.dot_dimension_numbers<[1], [0], [0], [1], [0, 0, 1, 1], [], []>} : vector<16x8xbf16>, vector<8x32xbf16>, vector<16x32xf32> -> vector<16x32xf32>
    %92 = arith.addf %64, %91 : vector<16x32xf32>
    %93 = vector.extract_strided_slice %27 {offsets = [0, 0, 16], sizes = [2, 8, 8], strides = [1, 1, 1]} : vector<2x8x32xf32> to vector<2x8x8xf32>
    %94 = vector.extract_strided_slice %28 {offsets = [0, 0, 16], sizes = [2, 8, 8], strides = [1, 1, 1]} : vector<2x8x32xf32> to vector<2x8x8xf32>
    %95 = vector.extract_strided_slice %29 {offsets = [0, 0, 16], sizes = [2, 8, 8], strides = [1, 1, 1]} : vector<2x8x32xf32> to vector<2x8x8xf32>
    %96 = arith.truncf %93 : vector<2x8x8xf32> to vector<2x8x8xbf16>
    %97 = arith.truncf %94 : vector<2x8x8xf32> to vector<2x8x8xbf16>
    "tpu.trace_start"() <{level = 10 : i32, message = "bqd,bkd->bqk"}> : () -> ()
    %cst_35 = arith.constant dense<0.000000e+00> : vector<2x8x8xf32>
    %98 = tpu.matmul %96, %97, %cst_35 {dimension_numbers = #tpu.dot_dimension_numbers<[2], [2], [1], [1], [0, 0, 0, 1, 1, 1], [0], [0]>} : vector<2x8x8xbf16>, vector<2x8x8xbf16>, vector<2x8x8xf32> -> vector<2x8x8xf32>
    "tpu.trace_stop"() : () -> ()
    %cst_36 = arith.constant 0.353553385 : f32
    %99 = vector.broadcast %cst_36 : f32 to vector<2x8x8xf32>
    %100 = arith.mulf %98, %99 : vector<2x8x8xf32>
    %101 = arith.addf %100, %35 : vector<2x8x8xf32>
    %cst_37 = arith.constant dense<0xFF800000> : vector<2x8xf32>
    %102 = vector.multi_reduction <maximumf>, %101, %cst_37 [2] : vector<2x8x8xf32> to vector<2x8xf32>
    %103 = vector.shape_cast %102 : vector<2x8xf32> to vector<2x8x1xf32>
    %104 = vector.broadcast %103 : vector<2x8x1xf32> to vector<2x8x8xf32>
    %105 = arith.subf %101, %104 : vector<2x8x8xf32>
    %106 = math.exp %105 : vector<2x8x8xf32>
    %cst_38 = arith.constant dense<0.000000e+00> : vector<2x8xf32>
    %107 = vector.multi_reduction <add>, %106, %cst_38 [2] : vector<2x8x8xf32> to vector<2x8xf32>
    %108 = vector.shape_cast %107 : vector<2x8xf32> to vector<2x8x1xf32>
    %109 = tpu.reciprocal %108 {approx = true} : vector<2x8x1xf32> -> vector<2x8x1xf32>
    %110 = vector.broadcast %109 : vector<2x8x1xf32> to vector<2x8x8xf32>
    %111 = arith.mulf %106, %110 : vector<2x8x8xf32>
    %112 = arith.truncf %111 : vector<2x8x8xf32> to vector<2x8x8xbf16>
    %113 = arith.truncf %95 : vector<2x8x8xf32> to vector<2x8x8xbf16>
    "tpu.trace_start"() <{level = 10 : i32, message = "bqk,bkd->bqd"}> : () -> ()
    %cst_39 = arith.constant dense<0.000000e+00> : vector<2x8x8xf32>
    %114 = tpu.matmul %112, %113, %cst_39 {dimension_numbers = #tpu.dot_dimension_numbers<[2], [1], [1], [2], [0, 0, 0, 1, 1, 2], [0], [0]>} : vector<2x8x8xbf16>, vector<2x8x8xbf16>, vector<2x8x8xf32> -> vector<2x8x8xf32>
    "tpu.trace_stop"() : () -> ()
    %115 = vector.shape_cast %114 : vector<2x8x8xf32> to vector<16x8xf32>
    %116 = arith.truncf %115 : vector<16x8xf32> to vector<16x8xbf16>
    %c2 = arith.constant 2 : index
    %c0_40 = arith.constant 0 : index
    %c0_41 = arith.constant 0 : index
    %117 = vector.load %arg5[%c2, %c0_40, %c0_41] : memref<4x8x32xbf16, #tpu.memory_space<vmem>>, vector<1x8x32xbf16>
    %118 = vector.shape_cast %117 : vector<1x8x32xbf16> to vector<8x32xbf16>
    %cst_42 = arith.constant dense<0.000000e+00> : vector<16x32xf32>
    %119 = tpu.matmul %116, %118, %cst_42 {dimension_numbers = #tpu.dot_dimension_numbers<[1], [0], [0], [1], [0, 0, 1, 1], [], []>} : vector<16x8xbf16>, vector<8x32xbf16>, vector<16x32xf32> -> vector<16x32xf32>
    %120 = arith.addf %92, %119 : vector<16x32xf32>
    %121 = vector.extract_strided_slice %27 {offsets = [0, 0, 24], sizes = [2, 8, 8], strides = [1, 1, 1]} : vector<2x8x32xf32> to vector<2x8x8xf32>
    %122 = vector.extract_strided_slice %28 {offsets = [0, 0, 24], sizes = [2, 8, 8], strides = [1, 1, 1]} : vector<2x8x32xf32> to vector<2x8x8xf32>
    %123 = vector.extract_strided_slice %29 {offsets = [0, 0, 24], sizes = [2, 8, 8], strides = [1, 1, 1]} : vector<2x8x32xf32> to vector<2x8x8xf32>
    %124 = arith.truncf %121 : vector<2x8x8xf32> to vector<2x8x8xbf16>
    %125 = arith.truncf %122 : vector<2x8x8xf32> to vector<2x8x8xbf16>
    "tpu.trace_start"() <{level = 10 : i32, message = "bqd,bkd->bqk"}> : () -> ()
    %cst_43 = arith.constant dense<0.000000e+00> : vector<2x8x8xf32>
    %126 = tpu.matmul %124, %125, %cst_43 {dimension_numbers = #tpu.dot_dimension_numbers<[2], [2], [1], [1], [0, 0, 0, 1, 1, 1], [0], [0]>} : vector<2x8x8xbf16>, vector<2x8x8xbf16>, vector<2x8x8xf32> -> vector<2x8x8xf32>
    "tpu.trace_stop"() : () -> ()
    %cst_44 = arith.constant 0.353553385 : f32
    %127 = vector.broadcast %cst_44 : f32 to vector<2x8x8xf32>
    %128 = arith.mulf %126, %127 : vector<2x8x8xf32>
    %129 = arith.addf %128, %35 : vector<2x8x8xf32>
    %cst_45 = arith.constant dense<0xFF800000> : vector<2x8xf32>
    %130 = vector.multi_reduction <maximumf>, %129, %cst_45 [2] : vector<2x8x8xf32> to vector<2x8xf32>
    %131 = vector.shape_cast %130 : vector<2x8xf32> to vector<2x8x1xf32>
    %132 = vector.broadcast %131 : vector<2x8x1xf32> to vector<2x8x8xf32>
    %133 = arith.subf %129, %132 : vector<2x8x8xf32>
    %134 = math.exp %133 : vector<2x8x8xf32>
    %cst_46 = arith.constant dense<0.000000e+00> : vector<2x8xf32>
    %135 = vector.multi_reduction <add>, %134, %cst_46 [2] : vector<2x8x8xf32> to vector<2x8xf32>
    %136 = vector.shape_cast %135 : vector<2x8xf32> to vector<2x8x1xf32>
    %137 = tpu.reciprocal %136 {approx = true} : vector<2x8x1xf32> -> vector<2x8x1xf32>
    %138 = vector.broadcast %137 : vector<2x8x1xf32> to vector<2x8x8xf32>
    %139 = arith.mulf %134, %138 : vector<2x8x8xf32>
    %140 = arith.truncf %139 : vector<2x8x8xf32> to vector<2x8x8xbf16>
    %141 = arith.truncf %123 : vector<2x8x8xf32> to vector<2x8x8xbf16>
    "tpu.trace_start"() <{level = 10 : i32, message = "bqk,bkd->bqd"}> : () -> ()
    %cst_47 = arith.constant dense<0.000000e+00> : vector<2x8x8xf32>
    %142 = tpu.matmul %140, %141, %cst_47 {dimension_numbers = #tpu.dot_dimension_numbers<[2], [1], [1], [2], [0, 0, 0, 1, 1, 2], [0], [0]>} : vector<2x8x8xbf16>, vector<2x8x8xbf16>, vector<2x8x8xf32> -> vector<2x8x8xf32>
    "tpu.trace_stop"() : () -> ()
    %143 = vector.shape_cast %142 : vector<2x8x8xf32> to vector<16x8xf32>
    %144 = arith.truncf %143 : vector<16x8xf32> to vector<16x8xbf16>
    %c3 = arith.constant 3 : index
    %c0_48 = arith.constant 0 : index
    %c0_49 = arith.constant 0 : index
    %145 = vector.load %arg5[%c3, %c0_48, %c0_49] : memref<4x8x32xbf16, #tpu.memory_space<vmem>>, vector<1x8x32xbf16>
    %146 = vector.shape_cast %145 : vector<1x8x32xbf16> to vector<8x32xbf16>
    %cst_50 = arith.constant dense<0.000000e+00> : vector<16x32xf32>
    %147 = tpu.matmul %144, %146, %cst_50 {dimension_numbers = #tpu.dot_dimension_numbers<[1], [0], [0], [1], [0, 0, 1, 1], [], []>} : vector<16x8xbf16>, vector<8x32xbf16>, vector<16x32xf32> -> vector<16x32xf32>
    %148 = arith.addf %120, %147 : vector<16x32xf32>
    %c0_51 = arith.constant 0 : index
    %c0_52 = arith.constant 0 : index
    %149 = vector.load %arg6[%c0_51, %c0_52] : memref<1x32xf32, #tpu.memory_space<vmem>>, vector<1x32xf32>
    %150 = vector.broadcast %149 : vector<1x32xf32> to vector<16x32xf32>
    %151 = arith.addf %148, %150 : vector<16x32xf32>
    %152 = vector.shape_cast %151 : vector<16x32xf32> to vector<2x8x32xf32>
    %153 = arith.addf %0, %152 : vector<2x8x32xf32>
    %c0_53 = arith.constant 0 : index
    %c0_54 = arith.constant 0 : index
    %c0_55 = arith.constant 0 : index
    %154 = vector.load %arg7[%c0_53, %c0_54, %c0_55] : memref<2x8x32xf32, #tpu.memory_space<vmem>>, vector<2x8x32xf32>
    tpu.vector_store %arg7[%c0_53, %c0_54, %c0_55], %153 {strides = array<i32>} : memref<2x8x32xf32, #tpu.memory_space<vmem>>, vector<2x8x32xf32>,
    return
  }
  func.func @transform_0(%arg0: i32) -> (i32, i32, i32) {
    %c0_i32 = arith.constant 0 : i32
    %c0_i32_0 = arith.constant 0 : i32
    %c0_i32_1 = arith.constant 0 : i32
    %c0_i32_2 = arith.constant 0 : i32
    return %c0_i32, %c0_i32_0, %c0_i32_1 : i32, i32, i32
  }
  func.func @transform_1(%arg0: i32) -> (i32, i32, i32, i32) {
    %c0_i32 = arith.constant 0 : i32
    %c0_i32_0 = arith.constant 0 : i32
    %c0_i32_1 = arith.constant 0 : i32
    %c0_i32_2 = arith.constant 0 : i32
    %c0_i32_3 = arith.constant 0 : i32
    return %c0_i32, %c0_i32_0, %c0_i32_1, %c0_i32_2 : i32, i32, i32, i32
  }
  func.func @transform_2(%arg0: i32) -> (i32, i32) {
    %c0_i32 = arith.constant 0 : i32
    %c0_i32_0 = arith.constant 0 : i32
    %c0_i32_1 = arith.constant 0 : i32
    return %c0_i32, %c0_i32_0 : i32, i32
  }
  func.func @transform_3(%arg0: i32) -> (i32, i32) {
    %c0_i32 = arith.constant 0 : i32
    %c0_i32_0 = arith.constant 0 : i32
    %c0_i32_1 = arith.constant 0 : i32
    return %c0_i32, %c0_i32_0 : i32, i32
  }
  func.func @transform_4(%arg0: i32) -> (i32, i32, i32) {
    %c0_i32 = arith.constant 0 : i32
    %c0_i32_0 = arith.constant 0 : i32
    %c0_i32_1 = arith.constant 0 : i32
    %c0_i32_2 = arith.constant 0 : i32
    return %c0_i32, %c0_i32_0, %c0_i32_1 : i32, i32, i32
  }
  func.func @transform_5(%arg0: i32) -> (i32, i32) {
    %c0_i32 = arith.constant 0 : i32
    %c0_i32_0 = arith.constant 0 : i32
    %c0_i32_1 = arith.constant 0 : i32
    return %c0_i32, %c0_i32_0 : i32, i32
  }
  func.func @transform_6(%arg0: i32) -> (i32, i32, i32) {
    %c0_i32 = arith.constant 0 : i32
    %c0_i32_0 = arith.constant 0 : i32
    %c0_i32_1 = arith.constant 0 : i32
    %c0_i32_2 = arith.constant 0 : i32
    return %c0_i32, %c0_i32_0, %c0_i32_1 : i32, i32, i32
  }
}

module attributes {stable_mosaic.version = 11 : i64} {
  func.func @_cross_fuse_kernel(%arg0: i32, %arg1: memref<2x8x32xf32, #tpu.memory_space<vmem>>, %arg2: memref<2x5x32xf32, #tpu.memory_space<vmem>>, %arg3: memref<2x5x32xf32, #tpu.memory_space<vmem>>, %arg4: memref<2x1x1x5xf32, #tpu.memory_space<vmem>>, %arg5: memref<32x64xbf16, #tpu.memory_space<vmem>>, %arg6: memref<1x64xf32, #tpu.memory_space<vmem>>, %arg7: memref<32x64xbf16, #tpu.memory_space<vmem>>, %arg8: memref<1x64xf32, #tpu.memory_space<vmem>>, %arg9: memref<4x8x32xbf16, #tpu.memory_space<vmem>>, %arg10: memref<1x32xf32, #tpu.memory_space<vmem>>, %arg11: memref<32x64xbf16, #tpu.memory_space<vmem>>, %arg12: memref<1x64xf32, #tpu.memory_space<vmem>>, %arg13: memref<4x8x32xbf16, #tpu.memory_space<vmem>>, %arg14: memref<1x32xf32, #tpu.memory_space<vmem>>, %arg15: memref<2x8x32xf32, #tpu.memory_space<vmem>>) attributes {dimension_semantics = [#tpu.dimension_semantics<arbitrary>], iteration_bounds = array<i64: 1>, scalar_prefetch = 0 : i64, scratch_operands = 0 : i64, tpu.core_type = #tpu.core_type<tc>, window_params = [{pipeline_mode = #tpu.pipeline_mode<synchronous>, transform_indices = @transform_0, window_bounds = array<i64: 2, 8, 32>}, {pipeline_mode = #tpu.pipeline_mode<synchronous>, transform_indices = @transform_1, window_bounds = array<i64: 2, 5, 32>}, {pipeline_mode = #tpu.pipeline_mode<synchronous>, transform_indices = @transform_2, window_bounds = array<i64: 2, 5, 32>}, {pipeline_mode = #tpu.pipeline_mode<synchronous>, transform_indices = @transform_3, window_bounds = array<i64: 2, 1, 1, 5>}, {pipeline_mode = #tpu.pipeline_mode<synchronous>, transform_indices = @transform_4, window_bounds = array<i64: 32, 64>}, {pipeline_mode = #tpu.pipeline_mode<synchronous>, transform_indices = @transform_5, window_bounds = array<i64: 1, 64>}, {pipeline_mode = #tpu.pipeline_mode<synchronous>, transform_indices = @transform_6, window_bounds = array<i64: 32, 64>}, {pipeline_mode = #tpu.pipeline_mode<synchronous>, transform_indices = @transform_7, window_bounds = array<i64: 1, 64>}, {pipeline_mode = #tpu.pipeline_mode<synchronous>, transform_indices = @transform_8, window_bounds = array<i64: 4, 8, 32>}, {pipeline_mode = #tpu.pipeline_mode<synchronous>, transform_indices = @transform_9, window_bounds = array<i64: 1, 32>}, {pipeline_mode = #tpu.pipeline_mode<synchronous>, transform_indices = @transform_10, window_bounds = array<i64: 32, 64>}, {pipeline_mode = #tpu.pipeline_mode<synchronous>, transform_indices = @transform_11, window_bounds = array<i64: 1, 64>}, {pipeline_mode = #tpu.pipeline_mode<synchronous>, transform_indices = @transform_12, window_bounds = array<i64: 4, 8, 32>}, {pipeline_mode = #tpu.pipeline_mode<synchronous>, transform_indices = @transform_13, window_bounds = array<i64: 1, 32>}, {pipeline_mode = #tpu.pipeline_mode<synchronous>, transform_indices = @transform_14, window_bounds = array<i64: 2, 8, 32>}]} {
    %c0 = arith.constant 0 : index
    %c0_0 = arith.constant 0 : index
    %c0_1 = arith.constant 0 : index
    %0 = vector.load %arg1[%c0, %c0_0, %c0_1] : memref<2x8x32xf32, #tpu.memory_space<vmem>>, vector<2x8x32xf32>
    %1 = vector.shape_cast %0 : vector<2x8x32xf32> to vector<16x32xf32>
    %cst = arith.constant dense<0.000000e+00> : vector<16xf32>
    %2 = vector.multi_reduction <add>, %1, %cst [1] : vector<16x32xf32> to vector<16xf32>
    %3 = vector.shape_cast %2 : vector<16xf32> to vector<16x1xf32>
    %cst_2 = arith.constant 3.200000e+01 : f32
    %4 = vector.broadcast %cst_2 : f32 to vector<16x1xf32>
    %5 = arith.divf %3, %4 : vector<16x1xf32>
    %6 = vector.broadcast %5 : vector<16x1xf32> to vector<16x32xf32>
    %7 = arith.subf %1, %6 : vector<16x32xf32>
    %8 = arith.mulf %7, %7 : vector<16x32xf32>
    %cst_3 = arith.constant dense<0.000000e+00> : vector<16xf32>
    %9 = vector.multi_reduction <add>, %8, %cst_3 [1] : vector<16x32xf32> to vector<16xf32>
    %10 = vector.shape_cast %9 : vector<16xf32> to vector<16x1xf32>
    %cst_4 = arith.constant 3.200000e+01 : f32
    %11 = vector.broadcast %cst_4 : f32 to vector<16x1xf32>
    %12 = arith.divf %10, %11 : vector<16x1xf32>
    %13 = vector.broadcast %5 : vector<16x1xf32> to vector<16x32xf32>
    %14 = arith.subf %1, %13 : vector<16x32xf32>
    %cst_5 = arith.constant 9.99999974E-6 : f32
    %15 = vector.broadcast %cst_5 : f32 to vector<16x1xf32>
    %16 = arith.addf %12, %15 : vector<16x1xf32>
    %17 = math.rsqrt %16 : vector<16x1xf32>
    %18 = vector.broadcast %17 : vector<16x1xf32> to vector<16x32xf32>
    %19 = arith.mulf %14, %18 : vector<16x32xf32>
    %20 = arith.truncf %19 : vector<16x32xf32> to vector<16x32xbf16>
    %c0_6 = arith.constant 0 : index
    %c0_7 = arith.constant 0 : index
    %21 = vector.load %arg5[%c0_6, %c0_7] : memref<32x64xbf16, #tpu.memory_space<vmem>>, vector<32x64xbf16>
    %cst_8 = arith.constant dense<0.000000e+00> : vector<16x64xf32>
    %22 = tpu.matmul %20, %21, %cst_8 {dimension_numbers = #tpu.dot_dimension_numbers<[1], [0], [0], [1], [0, 0, 1, 1], [], []>} : vector<16x32xbf16>, vector<32x64xbf16>, vector<16x64xf32> -> vector<16x64xf32>
    %c0_9 = arith.constant 0 : index
    %c0_10 = arith.constant 0 : index
    %23 = vector.load %arg6[%c0_9, %c0_10] : memref<1x64xf32, #tpu.memory_space<vmem>>, vector<1x64xf32>
    %24 = vector.broadcast %23 : vector<1x64xf32> to vector<16x64xf32>
    %25 = arith.addf %22, %24 : vector<16x64xf32>
    %c0_11 = arith.constant 0 : index
    %c0_12 = arith.constant 0 : index
    %c0_13 = arith.constant 0 : index
    %c0_14 = arith.constant 0 : index
    %26 = vector.load %arg4[%c0_11, %c0_12, %c0_13, %c0_14] : memref<2x1x1x5xf32, #tpu.memory_space<vmem>>, vector<2x1x1x5xf32>
    %27 = vector.shape_cast %26 : vector<2x1x1x5xf32> to vector<2x1x5xf32>
    %cst_15 = arith.constant 1.000000e+00 : f32
    %28 = vector.broadcast %cst_15 : f32 to vector<2x1x5xf32>
    %29 = arith.subf %27, %28 : vector<2x1x5xf32>
    %cst_16 = arith.constant 1.000000e+09 : f32
    %30 = vector.broadcast %cst_16 : f32 to vector<2x1x5xf32>
    %31 = arith.mulf %29, %30 : vector<2x1x5xf32>
    %32 = vector.shape_cast %31 : vector<2x1x5xf32> to vector<2x1x5xf32>
    %33 = vector.broadcast %32 : vector<2x1x5xf32> to vector<2x8x5xf32>
    %c0_17 = arith.constant 0 : index
    %c0_18 = arith.constant 0 : index
    %c0_19 = arith.constant 0 : index
    %34 = vector.load %arg2[%c0_17, %c0_18, %c0_19] : memref<2x5x32xf32, #tpu.memory_space<vmem>>, vector<2x5x32xf32>
    %c0_20 = arith.constant 0 : index
    %c0_21 = arith.constant 0 : index
    %35 = vector.load %arg7[%c0_20, %c0_21] : memref<32x64xbf16, #tpu.memory_space<vmem>>, vector<32x64xbf16>
    %c0_22 = arith.constant 0 : index
    %c0_23 = arith.constant 0 : index
    %36 = vector.load %arg8[%c0_22, %c0_23] : memref<1x64xf32, #tpu.memory_space<vmem>>, vector<1x64xf32>
    %c0_24 = arith.constant 0 : index
    %c0_25 = arith.constant 0 : index
    %37 = vector.load %arg10[%c0_24, %c0_25] : memref<1x32xf32, #tpu.memory_space<vmem>>, vector<1x32xf32>
    %38 = vector.shape_cast %34 : vector<2x5x32xf32> to vector<10x32xf32>
    %39 = arith.truncf %38 : vector<10x32xf32> to vector<10x32xbf16>
    %cst_26 = arith.constant dense<0.000000e+00> : vector<10x64xf32>
    %40 = tpu.matmul %39, %35, %cst_26 {dimension_numbers = #tpu.dot_dimension_numbers<[1], [0], [0], [1], [0, 0, 1, 1], [], []>} : vector<10x32xbf16>, vector<32x64xbf16>, vector<10x64xf32> -> vector<10x64xf32>
    %41 = vector.broadcast %36 : vector<1x64xf32> to vector<10x64xf32>
    %42 = arith.addf %40, %41 : vector<10x64xf32>
    %43 = vector.shape_cast %42 : vector<10x64xf32> to vector<2x5x64xf32>
    %44 = vector.extract_strided_slice %43 {offsets = [0, 0, 0], sizes = [2, 5, 32], strides = [1, 1, 1]} : vector<2x5x64xf32> to vector<2x5x32xf32>
    %45 = vector.extract_strided_slice %43 {offsets = [0, 0, 32], sizes = [2, 5, 32], strides = [1, 1, 1]} : vector<2x5x64xf32> to vector<2x5x32xf32>
    %46 = vector.extract_strided_slice %25 {offsets = [0, 0], sizes = [16, 32], strides = [1, 1]} : vector<16x64xf32> to vector<16x32xf32>
    %47 = vector.shape_cast %46 : vector<16x32xf32> to vector<2x8x32xf32>
    %cst_27 = arith.constant 0.000000e+00 : f32
    %48 = vector.broadcast %cst_27 : f32 to vector<16x32xf32>
    %49 = vector.extract_strided_slice %47 {offsets = [0, 0, 0], sizes = [2, 8, 8], strides = [1, 1, 1]} : vector<2x8x32xf32> to vector<2x8x8xf32>
    %50 = vector.extract_strided_slice %44 {offsets = [0, 0, 0], sizes = [2, 5, 8], strides = [1, 1, 1]} : vector<2x5x32xf32> to vector<2x5x8xf32>
    %51 = vector.extract_strided_slice %45 {offsets = [0, 0, 0], sizes = [2, 5, 8], strides = [1, 1, 1]} : vector<2x5x32xf32> to vector<2x5x8xf32>
    %52 = arith.truncf %49 : vector<2x8x8xf32> to vector<2x8x8xbf16>
    %53 = arith.truncf %50 : vector<2x5x8xf32> to vector<2x5x8xbf16>
    "tpu.trace_start"() <{level = 10 : i32, message = "bqd,bkd->bqk"}> : () -> ()
    %cst_28 = arith.constant dense<0.000000e+00> : vector<2x8x5xf32>
    %54 = tpu.matmul %52, %53, %cst_28 {dimension_numbers = #tpu.dot_dimension_numbers<[2], [2], [1], [1], [0, 0, 0, 1, 1, 1], [0], [0]>} : vector<2x8x8xbf16>, vector<2x5x8xbf16>, vector<2x8x5xf32> -> vector<2x8x5xf32>
    "tpu.trace_stop"() : () -> ()
    %cst_29 = arith.constant 0.353553385 : f32
    %55 = vector.broadcast %cst_29 : f32 to vector<2x8x5xf32>
    %56 = arith.mulf %54, %55 : vector<2x8x5xf32>
    %57 = arith.addf %56, %33 : vector<2x8x5xf32>
    %cst_30 = arith.constant dense<0xFF800000> : vector<2x8xf32>
    %58 = vector.multi_reduction <maximumf>, %57, %cst_30 [2] : vector<2x8x5xf32> to vector<2x8xf32>
    %59 = vector.shape_cast %58 : vector<2x8xf32> to vector<2x8x1xf32>
    %60 = vector.broadcast %59 : vector<2x8x1xf32> to vector<2x8x5xf32>
    %61 = arith.subf %57, %60 : vector<2x8x5xf32>
    %62 = math.exp %61 : vector<2x8x5xf32>
    %cst_31 = arith.constant dense<0.000000e+00> : vector<2x8xf32>
    %63 = vector.multi_reduction <add>, %62, %cst_31 [2] : vector<2x8x5xf32> to vector<2x8xf32>
    %64 = vector.shape_cast %63 : vector<2x8xf32> to vector<2x8x1xf32>
    %65 = tpu.reciprocal %64 {approx = true} : vector<2x8x1xf32> -> vector<2x8x1xf32>
    %66 = vector.broadcast %65 : vector<2x8x1xf32> to vector<2x8x5xf32>
    %67 = arith.mulf %62, %66 : vector<2x8x5xf32>
    %68 = arith.truncf %67 : vector<2x8x5xf32> to vector<2x8x5xbf16>
    %69 = arith.truncf %51 : vector<2x5x8xf32> to vector<2x5x8xbf16>
    "tpu.trace_start"() <{level = 10 : i32, message = "bqk,bkd->bqd"}> : () -> ()
    %cst_32 = arith.constant dense<0.000000e+00> : vector<2x8x8xf32>
    %70 = tpu.matmul %68, %69, %cst_32 {dimension_numbers = #tpu.dot_dimension_numbers<[2], [1], [1], [2], [0, 0, 0, 1, 1, 2], [0], [0]>} : vector<2x8x5xbf16>, vector<2x5x8xbf16>, vector<2x8x8xf32> -> vector<2x8x8xf32>
    "tpu.trace_stop"() : () -> ()
    %71 = vector.shape_cast %70 : vector<2x8x8xf32> to vector<16x8xf32>
    %72 = arith.truncf %71 : vector<16x8xf32> to vector<16x8xbf16>
    %c0_33 = arith.constant 0 : index
    %c0_34 = arith.constant 0 : index
    %c0_35 = arith.constant 0 : index
    %73 = vector.load %arg9[%c0_33, %c0_34, %c0_35] : memref<4x8x32xbf16, #tpu.memory_space<vmem>>, vector<1x8x32xbf16>
    %74 = vector.shape_cast %73 : vector<1x8x32xbf16> to vector<8x32xbf16>
    %cst_36 = arith.constant dense<0.000000e+00> : vector<16x32xf32>
    %75 = tpu.matmul %72, %74, %cst_36 {dimension_numbers = #tpu.dot_dimension_numbers<[1], [0], [0], [1], [0, 0, 1, 1], [], []>} : vector<16x8xbf16>, vector<8x32xbf16>, vector<16x32xf32> -> vector<16x32xf32>
    %76 = arith.addf %48, %75 : vector<16x32xf32>
    %77 = vector.extract_strided_slice %47 {offsets = [0, 0, 8], sizes = [2, 8, 8], strides = [1, 1, 1]} : vector<2x8x32xf32> to vector<2x8x8xf32>
    %78 = vector.extract_strided_slice %44 {offsets = [0, 0, 8], sizes = [2, 5, 8], strides = [1, 1, 1]} : vector<2x5x32xf32> to vector<2x5x8xf32>
    %79 = vector.extract_strided_slice %45 {offsets = [0, 0, 8], sizes = [2, 5, 8], strides = [1, 1, 1]} : vector<2x5x32xf32> to vector<2x5x8xf32>
    %80 = arith.truncf %77 : vector<2x8x8xf32> to vector<2x8x8xbf16>
    %81 = arith.truncf %78 : vector<2x5x8xf32> to vector<2x5x8xbf16>
    "tpu.trace_start"() <{level = 10 : i32, message = "bqd,bkd->bqk"}> : () -> ()
    %cst_37 = arith.constant dense<0.000000e+00> : vector<2x8x5xf32>
    %82 = tpu.matmul %80, %81, %cst_37 {dimension_numbers = #tpu.dot_dimension_numbers<[2], [2], [1], [1], [0, 0, 0, 1, 1, 1], [0], [0]>} : vector<2x8x8xbf16>, vector<2x5x8xbf16>, vector<2x8x5xf32> -> vector<2x8x5xf32>
    "tpu.trace_stop"() : () -> ()
    %cst_38 = arith.constant 0.353553385 : f32
    %83 = vector.broadcast %cst_38 : f32 to vector<2x8x5xf32>
    %84 = arith.mulf %82, %83 : vector<2x8x5xf32>
    %85 = arith.addf %84, %33 : vector<2x8x5xf32>
    %cst_39 = arith.constant dense<0xFF800000> : vector<2x8xf32>
    %86 = vector.multi_reduction <maximumf>, %85, %cst_39 [2] : vector<2x8x5xf32> to vector<2x8xf32>
    %87 = vector.shape_cast %86 : vector<2x8xf32> to vector<2x8x1xf32>
    %88 = vector.broadcast %87 : vector<2x8x1xf32> to vector<2x8x5xf32>
    %89 = arith.subf %85, %88 : vector<2x8x5xf32>
    %90 = math.exp %89 : vector<2x8x5xf32>
    %cst_40 = arith.constant dense<0.000000e+00> : vector<2x8xf32>
    %91 = vector.multi_reduction <add>, %90, %cst_40 [2] : vector<2x8x5xf32> to vector<2x8xf32>
    %92 = vector.shape_cast %91 : vector<2x8xf32> to vector<2x8x1xf32>
    %93 = tpu.reciprocal %92 {approx = true} : vector<2x8x1xf32> -> vector<2x8x1xf32>
    %94 = vector.broadcast %93 : vector<2x8x1xf32> to vector<2x8x5xf32>
    %95 = arith.mulf %90, %94 : vector<2x8x5xf32>
    %96 = arith.truncf %95 : vector<2x8x5xf32> to vector<2x8x5xbf16>
    %97 = arith.truncf %79 : vector<2x5x8xf32> to vector<2x5x8xbf16>
    "tpu.trace_start"() <{level = 10 : i32, message = "bqk,bkd->bqd"}> : () -> ()
    %cst_41 = arith.constant dense<0.000000e+00> : vector<2x8x8xf32>
    %98 = tpu.matmul %96, %97, %cst_41 {dimension_numbers = #tpu.dot_dimension_numbers<[2], [1], [1], [2], [0, 0, 0, 1, 1, 2], [0], [0]>} : vector<2x8x5xbf16>, vector<2x5x8xbf16>, vector<2x8x8xf32> -> vector<2x8x8xf32>
    "tpu.trace_stop"() : () -> ()
    %99 = vector.shape_cast %98 : vector<2x8x8xf32> to vector<16x8xf32>
    %100 = arith.truncf %99 : vector<16x8xf32> to vector<16x8xbf16>
    %c1 = arith.constant 1 : index
    %c0_42 = arith.constant 0 : index
    %c0_43 = arith.constant 0 : index
    %101 = vector.load %arg9[%c1, %c0_42, %c0_43] : memref<4x8x32xbf16, #tpu.memory_space<vmem>>, vector<1x8x32xbf16>
    %102 = vector.shape_cast %101 : vector<1x8x32xbf16> to vector<8x32xbf16>
    %cst_44 = arith.constant dense<0.000000e+00> : vector<16x32xf32>
    %103 = tpu.matmul %100, %102, %cst_44 {dimension_numbers = #tpu.dot_dimension_numbers<[1], [0], [0], [1], [0, 0, 1, 1], [], []>} : vector<16x8xbf16>, vector<8x32xbf16>, vector<16x32xf32> -> vector<16x32xf32>
    %104 = arith.addf %76, %103 : vector<16x32xf32>
    %105 = vector.extract_strided_slice %47 {offsets = [0, 0, 16], sizes = [2, 8, 8], strides = [1, 1, 1]} : vector<2x8x32xf32> to vector<2x8x8xf32>
    %106 = vector.extract_strided_slice %44 {offsets = [0, 0, 16], sizes = [2, 5, 8], strides = [1, 1, 1]} : vector<2x5x32xf32> to vector<2x5x8xf32>
    %107 = vector.extract_strided_slice %45 {offsets = [0, 0, 16], sizes = [2, 5, 8], strides = [1, 1, 1]} : vector<2x5x32xf32> to vector<2x5x8xf32>
    %108 = arith.truncf %105 : vector<2x8x8xf32> to vector<2x8x8xbf16>
    %109 = arith.truncf %106 : vector<2x5x8xf32> to vector<2x5x8xbf16>
    "tpu.trace_start"() <{level = 10 : i32, message = "bqd,bkd->bqk"}> : () -> ()
    %cst_45 = arith.constant dense<0.000000e+00> : vector<2x8x5xf32>
    %110 = tpu.matmul %108, %109, %cst_45 {dimension_numbers = #tpu.dot_dimension_numbers<[2], [2], [1], [1], [0, 0, 0, 1, 1, 1], [0], [0]>} : vector<2x8x8xbf16>, vector<2x5x8xbf16>, vector<2x8x5xf32> -> vector<2x8x5xf32>
    "tpu.trace_stop"() : () -> ()
    %cst_46 = arith.constant 0.353553385 : f32
    %111 = vector.broadcast %cst_46 : f32 to vector<2x8x5xf32>
    %112 = arith.mulf %110, %111 : vector<2x8x5xf32>
    %113 = arith.addf %112, %33 : vector<2x8x5xf32>
    %cst_47 = arith.constant dense<0xFF800000> : vector<2x8xf32>
    %114 = vector.multi_reduction <maximumf>, %113, %cst_47 [2] : vector<2x8x5xf32> to vector<2x8xf32>
    %115 = vector.shape_cast %114 : vector<2x8xf32> to vector<2x8x1xf32>
    %116 = vector.broadcast %115 : vector<2x8x1xf32> to vector<2x8x5xf32>
    %117 = arith.subf %113, %116 : vector<2x8x5xf32>
    %118 = math.exp %117 : vector<2x8x5xf32>
    %cst_48 = arith.constant dense<0.000000e+00> : vector<2x8xf32>
    %119 = vector.multi_reduction <add>, %118, %cst_48 [2] : vector<2x8x5xf32> to vector<2x8xf32>
    %120 = vector.shape_cast %119 : vector<2x8xf32> to vector<2x8x1xf32>
    %121 = tpu.reciprocal %120 {approx = true} : vector<2x8x1xf32> -> vector<2x8x1xf32>
    %122 = vector.broadcast %121 : vector<2x8x1xf32> to vector<2x8x5xf32>
    %123 = arith.mulf %118, %122 : vector<2x8x5xf32>
    %124 = arith.truncf %123 : vector<2x8x5xf32> to vector<2x8x5xbf16>
    %125 = arith.truncf %107 : vector<2x5x8xf32> to vector<2x5x8xbf16>
    "tpu.trace_start"() <{level = 10 : i32, message = "bqk,bkd->bqd"}> : () -> ()
    %cst_49 = arith.constant dense<0.000000e+00> : vector<2x8x8xf32>
    %126 = tpu.matmul %124, %125, %cst_49 {dimension_numbers = #tpu.dot_dimension_numbers<[2], [1], [1], [2], [0, 0, 0, 1, 1, 2], [0], [0]>} : vector<2x8x5xbf16>, vector<2x5x8xbf16>, vector<2x8x8xf32> -> vector<2x8x8xf32>
    "tpu.trace_stop"() : () -> ()
    %127 = vector.shape_cast %126 : vector<2x8x8xf32> to vector<16x8xf32>
    %128 = arith.truncf %127 : vector<16x8xf32> to vector<16x8xbf16>
    %c2 = arith.constant 2 : index
    %c0_50 = arith.constant 0 : index
    %c0_51 = arith.constant 0 : index
    %129 = vector.load %arg9[%c2, %c0_50, %c0_51] : memref<4x8x32xbf16, #tpu.memory_space<vmem>>, vector<1x8x32xbf16>
    %130 = vector.shape_cast %129 : vector<1x8x32xbf16> to vector<8x32xbf16>
    %cst_52 = arith.constant dense<0.000000e+00> : vector<16x32xf32>
    %131 = tpu.matmul %128, %130, %cst_52 {dimension_numbers = #tpu.dot_dimension_numbers<[1], [0], [0], [1], [0, 0, 1, 1], [], []>} : vector<16x8xbf16>, vector<8x32xbf16>, vector<16x32xf32> -> vector<16x32xf32>
    %132 = arith.addf %104, %131 : vector<16x32xf32>
    %133 = vector.extract_strided_slice %47 {offsets = [0, 0, 24], sizes = [2, 8, 8], strides = [1, 1, 1]} : vector<2x8x32xf32> to vector<2x8x8xf32>
    %134 = vector.extract_strided_slice %44 {offsets = [0, 0, 24], sizes = [2, 5, 8], strides = [1, 1, 1]} : vector<2x5x32xf32> to vector<2x5x8xf32>
    %135 = vector.extract_strided_slice %45 {offsets = [0, 0, 24], sizes = [2, 5, 8], strides = [1, 1, 1]} : vector<2x5x32xf32> to vector<2x5x8xf32>
    %136 = arith.truncf %133 : vector<2x8x8xf32> to vector<2x8x8xbf16>
    %137 = arith.truncf %134 : vector<2x5x8xf32> to vector<2x5x8xbf16>
    "tpu.trace_start"() <{level = 10 : i32, message = "bqd,bkd->bqk"}> : () -> ()
    %cst_53 = arith.constant dense<0.000000e+00> : vector<2x8x5xf32>
    %138 = tpu.matmul %136, %137, %cst_53 {dimension_numbers = #tpu.dot_dimension_numbers<[2], [2], [1], [1], [0, 0, 0, 1, 1, 1], [0], [0]>} : vector<2x8x8xbf16>, vector<2x5x8xbf16>, vector<2x8x5xf32> -> vector<2x8x5xf32>
    "tpu.trace_stop"() : () -> ()
    %cst_54 = arith.constant 0.353553385 : f32
    %139 = vector.broadcast %cst_54 : f32 to vector<2x8x5xf32>
    %140 = arith.mulf %138, %139 : vector<2x8x5xf32>
    %141 = arith.addf %140, %33 : vector<2x8x5xf32>
    %cst_55 = arith.constant dense<0xFF800000> : vector<2x8xf32>
    %142 = vector.multi_reduction <maximumf>, %141, %cst_55 [2] : vector<2x8x5xf32> to vector<2x8xf32>
    %143 = vector.shape_cast %142 : vector<2x8xf32> to vector<2x8x1xf32>
    %144 = vector.broadcast %143 : vector<2x8x1xf32> to vector<2x8x5xf32>
    %145 = arith.subf %141, %144 : vector<2x8x5xf32>
    %146 = math.exp %145 : vector<2x8x5xf32>
    %cst_56 = arith.constant dense<0.000000e+00> : vector<2x8xf32>
    %147 = vector.multi_reduction <add>, %146, %cst_56 [2] : vector<2x8x5xf32> to vector<2x8xf32>
    %148 = vector.shape_cast %147 : vector<2x8xf32> to vector<2x8x1xf32>
    %149 = tpu.reciprocal %148 {approx = true} : vector<2x8x1xf32> -> vector<2x8x1xf32>
    %150 = vector.broadcast %149 : vector<2x8x1xf32> to vector<2x8x5xf32>
    %151 = arith.mulf %146, %150 : vector<2x8x5xf32>
    %152 = arith.truncf %151 : vector<2x8x5xf32> to vector<2x8x5xbf16>
    %153 = arith.truncf %135 : vector<2x5x8xf32> to vector<2x5x8xbf16>
    "tpu.trace_start"() <{level = 10 : i32, message = "bqk,bkd->bqd"}> : () -> ()
    %cst_57 = arith.constant dense<0.000000e+00> : vector<2x8x8xf32>
    %154 = tpu.matmul %152, %153, %cst_57 {dimension_numbers = #tpu.dot_dimension_numbers<[2], [1], [1], [2], [0, 0, 0, 1, 1, 2], [0], [0]>} : vector<2x8x5xbf16>, vector<2x5x8xbf16>, vector<2x8x8xf32> -> vector<2x8x8xf32>
    "tpu.trace_stop"() : () -> ()
    %155 = vector.shape_cast %154 : vector<2x8x8xf32> to vector<16x8xf32>
    %156 = arith.truncf %155 : vector<16x8xf32> to vector<16x8xbf16>
    %c3 = arith.constant 3 : index
    %c0_58 = arith.constant 0 : index
    %c0_59 = arith.constant 0 : index
    %157 = vector.load %arg9[%c3, %c0_58, %c0_59] : memref<4x8x32xbf16, #tpu.memory_space<vmem>>, vector<1x8x32xbf16>
    %158 = vector.shape_cast %157 : vector<1x8x32xbf16> to vector<8x32xbf16>
    %cst_60 = arith.constant dense<0.000000e+00> : vector<16x32xf32>
    %159 = tpu.matmul %156, %158, %cst_60 {dimension_numbers = #tpu.dot_dimension_numbers<[1], [0], [0], [1], [0, 0, 1, 1], [], []>} : vector<16x8xbf16>, vector<8x32xbf16>, vector<16x32xf32> -> vector<16x32xf32>
    %160 = arith.addf %132, %159 : vector<16x32xf32>
    %161 = vector.broadcast %37 : vector<1x32xf32> to vector<16x32xf32>
    %162 = arith.addf %160, %161 : vector<16x32xf32>
    %c0_61 = arith.constant 0 : index
    %c0_62 = arith.constant 0 : index
    %c0_63 = arith.constant 0 : index
    %163 = vector.load %arg3[%c0_61, %c0_62, %c0_63] : memref<2x5x32xf32, #tpu.memory_space<vmem>>, vector<2x5x32xf32>
    %c0_64 = arith.constant 0 : index
    %c0_65 = arith.constant 0 : index
    %164 = vector.load %arg11[%c0_64, %c0_65] : memref<32x64xbf16, #tpu.memory_space<vmem>>, vector<32x64xbf16>
    %c0_66 = arith.constant 0 : index
    %c0_67 = arith.constant 0 : index
    %165 = vector.load %arg12[%c0_66, %c0_67] : memref<1x64xf32, #tpu.memory_space<vmem>>, vector<1x64xf32>
    %c0_68 = arith.constant 0 : index
    %c0_69 = arith.constant 0 : index
    %166 = vector.load %arg14[%c0_68, %c0_69] : memref<1x32xf32, #tpu.memory_space<vmem>>, vector<1x32xf32>
    %167 = vector.shape_cast %163 : vector<2x5x32xf32> to vector<10x32xf32>
    %168 = arith.truncf %167 : vector<10x32xf32> to vector<10x32xbf16>
    %cst_70 = arith.constant dense<0.000000e+00> : vector<10x64xf32>
    %169 = tpu.matmul %168, %164, %cst_70 {dimension_numbers = #tpu.dot_dimension_numbers<[1], [0], [0], [1], [0, 0, 1, 1], [], []>} : vector<10x32xbf16>, vector<32x64xbf16>, vector<10x64xf32> -> vector<10x64xf32>
    %170 = vector.broadcast %165 : vector<1x64xf32> to vector<10x64xf32>
    %171 = arith.addf %169, %170 : vector<10x64xf32>
    %172 = vector.shape_cast %171 : vector<10x64xf32> to vector<2x5x64xf32>
    %173 = vector.extract_strided_slice %172 {offsets = [0, 0, 0], sizes = [2, 5, 32], strides = [1, 1, 1]} : vector<2x5x64xf32> to vector<2x5x32xf32>
    %174 = vector.extract_strided_slice %172 {offsets = [0, 0, 32], sizes = [2, 5, 32], strides = [1, 1, 1]} : vector<2x5x64xf32> to vector<2x5x32xf32>
    %175 = vector.extract_strided_slice %25 {offsets = [0, 32], sizes = [16, 32], strides = [1, 1]} : vector<16x64xf32> to vector<16x32xf32>
    %176 = vector.shape_cast %175 : vector<16x32xf32> to vector<2x8x32xf32>
    %cst_71 = arith.constant 0.000000e+00 : f32
    %177 = vector.broadcast %cst_71 : f32 to vector<16x32xf32>
    %178 = vector.extract_strided_slice %176 {offsets = [0, 0, 0], sizes = [2, 8, 8], strides = [1, 1, 1]} : vector<2x8x32xf32> to vector<2x8x8xf32>
    %179 = vector.extract_strided_slice %173 {offsets = [0, 0, 0], sizes = [2, 5, 8], strides = [1, 1, 1]} : vector<2x5x32xf32> to vector<2x5x8xf32>
    %180 = vector.extract_strided_slice %174 {offsets = [0, 0, 0], sizes = [2, 5, 8], strides = [1, 1, 1]} : vector<2x5x32xf32> to vector<2x5x8xf32>
    %181 = arith.truncf %178 : vector<2x8x8xf32> to vector<2x8x8xbf16>
    %182 = arith.truncf %179 : vector<2x5x8xf32> to vector<2x5x8xbf16>
    "tpu.trace_start"() <{level = 10 : i32, message = "bqd,bkd->bqk"}> : () -> ()
    %cst_72 = arith.constant dense<0.000000e+00> : vector<2x8x5xf32>
    %183 = tpu.matmul %181, %182, %cst_72 {dimension_numbers = #tpu.dot_dimension_numbers<[2], [2], [1], [1], [0, 0, 0, 1, 1, 1], [0], [0]>} : vector<2x8x8xbf16>, vector<2x5x8xbf16>, vector<2x8x5xf32> -> vector<2x8x5xf32>
    "tpu.trace_stop"() : () -> ()
    %cst_73 = arith.constant 0.353553385 : f32
    %184 = vector.broadcast %cst_73 : f32 to vector<2x8x5xf32>
    %185 = arith.mulf %183, %184 : vector<2x8x5xf32>
    %186 = arith.addf %185, %33 : vector<2x8x5xf32>
    %cst_74 = arith.constant dense<0xFF800000> : vector<2x8xf32>
    %187 = vector.multi_reduction <maximumf>, %186, %cst_74 [2] : vector<2x8x5xf32> to vector<2x8xf32>
    %188 = vector.shape_cast %187 : vector<2x8xf32> to vector<2x8x1xf32>
    %189 = vector.broadcast %188 : vector<2x8x1xf32> to vector<2x8x5xf32>
    %190 = arith.subf %186, %189 : vector<2x8x5xf32>
    %191 = math.exp %190 : vector<2x8x5xf32>
    %cst_75 = arith.constant dense<0.000000e+00> : vector<2x8xf32>
    %192 = vector.multi_reduction <add>, %191, %cst_75 [2] : vector<2x8x5xf32> to vector<2x8xf32>
    %193 = vector.shape_cast %192 : vector<2x8xf32> to vector<2x8x1xf32>
    %194 = tpu.reciprocal %193 {approx = true} : vector<2x8x1xf32> -> vector<2x8x1xf32>
    %195 = vector.broadcast %194 : vector<2x8x1xf32> to vector<2x8x5xf32>
    %196 = arith.mulf %191, %195 : vector<2x8x5xf32>
    %197 = arith.truncf %196 : vector<2x8x5xf32> to vector<2x8x5xbf16>
    %198 = arith.truncf %180 : vector<2x5x8xf32> to vector<2x5x8xbf16>
    "tpu.trace_start"() <{level = 10 : i32, message = "bqk,bkd->bqd"}> : () -> ()
    %cst_76 = arith.constant dense<0.000000e+00> : vector<2x8x8xf32>
    %199 = tpu.matmul %197, %198, %cst_76 {dimension_numbers = #tpu.dot_dimension_numbers<[2], [1], [1], [2], [0, 0, 0, 1, 1, 2], [0], [0]>} : vector<2x8x5xbf16>, vector<2x5x8xbf16>, vector<2x8x8xf32> -> vector<2x8x8xf32>
    "tpu.trace_stop"() : () -> ()
    %200 = vector.shape_cast %199 : vector<2x8x8xf32> to vector<16x8xf32>
    %201 = arith.truncf %200 : vector<16x8xf32> to vector<16x8xbf16>
    %c0_77 = arith.constant 0 : index
    %c0_78 = arith.constant 0 : index
    %c0_79 = arith.constant 0 : index
    %202 = vector.load %arg13[%c0_77, %c0_78, %c0_79] : memref<4x8x32xbf16, #tpu.memory_space<vmem>>, vector<1x8x32xbf16>
    %203 = vector.shape_cast %202 : vector<1x8x32xbf16> to vector<8x32xbf16>
    %cst_80 = arith.constant dense<0.000000e+00> : vector<16x32xf32>
    %204 = tpu.matmul %201, %203, %cst_80 {dimension_numbers = #tpu.dot_dimension_numbers<[1], [0], [0], [1], [0, 0, 1, 1], [], []>} : vector<16x8xbf16>, vector<8x32xbf16>, vector<16x32xf32> -> vector<16x32xf32>
    %205 = arith.addf %177, %204 : vector<16x32xf32>
    %206 = vector.extract_strided_slice %176 {offsets = [0, 0, 8], sizes = [2, 8, 8], strides = [1, 1, 1]} : vector<2x8x32xf32> to vector<2x8x8xf32>
    %207 = vector.extract_strided_slice %173 {offsets = [0, 0, 8], sizes = [2, 5, 8], strides = [1, 1, 1]} : vector<2x5x32xf32> to vector<2x5x8xf32>
    %208 = vector.extract_strided_slice %174 {offsets = [0, 0, 8], sizes = [2, 5, 8], strides = [1, 1, 1]} : vector<2x5x32xf32> to vector<2x5x8xf32>
    %209 = arith.truncf %206 : vector<2x8x8xf32> to vector<2x8x8xbf16>
    %210 = arith.truncf %207 : vector<2x5x8xf32> to vector<2x5x8xbf16>
    "tpu.trace_start"() <{level = 10 : i32, message = "bqd,bkd->bqk"}> : () -> ()
    %cst_81 = arith.constant dense<0.000000e+00> : vector<2x8x5xf32>
    %211 = tpu.matmul %209, %210, %cst_81 {dimension_numbers = #tpu.dot_dimension_numbers<[2], [2], [1], [1], [0, 0, 0, 1, 1, 1], [0], [0]>} : vector<2x8x8xbf16>, vector<2x5x8xbf16>, vector<2x8x5xf32> -> vector<2x8x5xf32>
    "tpu.trace_stop"() : () -> ()
    %cst_82 = arith.constant 0.353553385 : f32
    %212 = vector.broadcast %cst_82 : f32 to vector<2x8x5xf32>
    %213 = arith.mulf %211, %212 : vector<2x8x5xf32>
    %214 = arith.addf %213, %33 : vector<2x8x5xf32>
    %cst_83 = arith.constant dense<0xFF800000> : vector<2x8xf32>
    %215 = vector.multi_reduction <maximumf>, %214, %cst_83 [2] : vector<2x8x5xf32> to vector<2x8xf32>
    %216 = vector.shape_cast %215 : vector<2x8xf32> to vector<2x8x1xf32>
    %217 = vector.broadcast %216 : vector<2x8x1xf32> to vector<2x8x5xf32>
    %218 = arith.subf %214, %217 : vector<2x8x5xf32>
    %219 = math.exp %218 : vector<2x8x5xf32>
    %cst_84 = arith.constant dense<0.000000e+00> : vector<2x8xf32>
    %220 = vector.multi_reduction <add>, %219, %cst_84 [2] : vector<2x8x5xf32> to vector<2x8xf32>
    %221 = vector.shape_cast %220 : vector<2x8xf32> to vector<2x8x1xf32>
    %222 = tpu.reciprocal %221 {approx = true} : vector<2x8x1xf32> -> vector<2x8x1xf32>
    %223 = vector.broadcast %222 : vector<2x8x1xf32> to vector<2x8x5xf32>
    %224 = arith.mulf %219, %223 : vector<2x8x5xf32>
    %225 = arith.truncf %224 : vector<2x8x5xf32> to vector<2x8x5xbf16>
    %226 = arith.truncf %208 : vector<2x5x8xf32> to vector<2x5x8xbf16>
    "tpu.trace_start"() <{level = 10 : i32, message = "bqk,bkd->bqd"}> : () -> ()
    %cst_85 = arith.constant dense<0.000000e+00> : vector<2x8x8xf32>
    %227 = tpu.matmul %225, %226, %cst_85 {dimension_numbers = #tpu.dot_dimension_numbers<[2], [1], [1], [2], [0, 0, 0, 1, 1, 2], [0], [0]>} : vector<2x8x5xbf16>, vector<2x5x8xbf16>, vector<2x8x8xf32> -> vector<2x8x8xf32>
    "tpu.trace_stop"() : () -> ()
    %228 = vector.shape_cast %227 : vector<2x8x8xf32> to vector<16x8xf32>
    %229 = arith.truncf %228 : vector<16x8xf32> to vector<16x8xbf16>
    %c1_86 = arith.constant 1 : index
    %c0_87 = arith.constant 0 : index
    %c0_88 = arith.constant 0 : index
    %230 = vector.load %arg13[%c1_86, %c0_87, %c0_88] : memref<4x8x32xbf16, #tpu.memory_space<vmem>>, vector<1x8x32xbf16>
    %231 = vector.shape_cast %230 : vector<1x8x32xbf16> to vector<8x32xbf16>
    %cst_89 = arith.constant dense<0.000000e+00> : vector<16x32xf32>
    %232 = tpu.matmul %229, %231, %cst_89 {dimension_numbers = #tpu.dot_dimension_numbers<[1], [0], [0], [1], [0, 0, 1, 1], [], []>} : vector<16x8xbf16>, vector<8x32xbf16>, vector<16x32xf32> -> vector<16x32xf32>
    %233 = arith.addf %205, %232 : vector<16x32xf32>
    %234 = vector.extract_strided_slice %176 {offsets = [0, 0, 16], sizes = [2, 8, 8], strides = [1, 1, 1]} : vector<2x8x32xf32> to vector<2x8x8xf32>
    %235 = vector.extract_strided_slice %173 {offsets = [0, 0, 16], sizes = [2, 5, 8], strides = [1, 1, 1]} : vector<2x5x32xf32> to vector<2x5x8xf32>
    %236 = vector.extract_strided_slice %174 {offsets = [0, 0, 16], sizes = [2, 5, 8], strides = [1, 1, 1]} : vector<2x5x32xf32> to vector<2x5x8xf32>
    %237 = arith.truncf %234 : vector<2x8x8xf32> to vector<2x8x8xbf16>
    %238 = arith.truncf %235 : vector<2x5x8xf32> to vector<2x5x8xbf16>
    "tpu.trace_start"() <{level = 10 : i32, message = "bqd,bkd->bqk"}> : () -> ()
    %cst_90 = arith.constant dense<0.000000e+00> : vector<2x8x5xf32>
    %239 = tpu.matmul %237, %238, %cst_90 {dimension_numbers = #tpu.dot_dimension_numbers<[2], [2], [1], [1], [0, 0, 0, 1, 1, 1], [0], [0]>} : vector<2x8x8xbf16>, vector<2x5x8xbf16>, vector<2x8x5xf32> -> vector<2x8x5xf32>
    "tpu.trace_stop"() : () -> ()
    %cst_91 = arith.constant 0.353553385 : f32
    %240 = vector.broadcast %cst_91 : f32 to vector<2x8x5xf32>
    %241 = arith.mulf %239, %240 : vector<2x8x5xf32>
    %242 = arith.addf %241, %33 : vector<2x8x5xf32>
    %cst_92 = arith.constant dense<0xFF800000> : vector<2x8xf32>
    %243 = vector.multi_reduction <maximumf>, %242, %cst_92 [2] : vector<2x8x5xf32> to vector<2x8xf32>
    %244 = vector.shape_cast %243 : vector<2x8xf32> to vector<2x8x1xf32>
    %245 = vector.broadcast %244 : vector<2x8x1xf32> to vector<2x8x5xf32>
    %246 = arith.subf %242, %245 : vector<2x8x5xf32>
    %247 = math.exp %246 : vector<2x8x5xf32>
    %cst_93 = arith.constant dense<0.000000e+00> : vector<2x8xf32>
    %248 = vector.multi_reduction <add>, %247, %cst_93 [2] : vector<2x8x5xf32> to vector<2x8xf32>
    %249 = vector.shape_cast %248 : vector<2x8xf32> to vector<2x8x1xf32>
    %250 = tpu.reciprocal %249 {approx = true} : vector<2x8x1xf32> -> vector<2x8x1xf32>
    %251 = vector.broadcast %250 : vector<2x8x1xf32> to vector<2x8x5xf32>
    %252 = arith.mulf %247, %251 : vector<2x8x5xf32>
    %253 = arith.truncf %252 : vector<2x8x5xf32> to vector<2x8x5xbf16>
    %254 = arith.truncf %236 : vector<2x5x8xf32> to vector<2x5x8xbf16>
    "tpu.trace_start"() <{level = 10 : i32, message = "bqk,bkd->bqd"}> : () -> ()
    %cst_94 = arith.constant dense<0.000000e+00> : vector<2x8x8xf32>
    %255 = tpu.matmul %253, %254, %cst_94 {dimension_numbers = #tpu.dot_dimension_numbers<[2], [1], [1], [2], [0, 0, 0, 1, 1, 2], [0], [0]>} : vector<2x8x5xbf16>, vector<2x5x8xbf16>, vector<2x8x8xf32> -> vector<2x8x8xf32>
    "tpu.trace_stop"() : () -> ()
    %256 = vector.shape_cast %255 : vector<2x8x8xf32> to vector<16x8xf32>
    %257 = arith.truncf %256 : vector<16x8xf32> to vector<16x8xbf16>
    %c2_95 = arith.constant 2 : index
    %c0_96 = arith.constant 0 : index
    %c0_97 = arith.constant 0 : index
    %258 = vector.load %arg13[%c2_95, %c0_96, %c0_97] : memref<4x8x32xbf16, #tpu.memory_space<vmem>>, vector<1x8x32xbf16>
    %259 = vector.shape_cast %258 : vector<1x8x32xbf16> to vector<8x32xbf16>
    %cst_98 = arith.constant dense<0.000000e+00> : vector<16x32xf32>
    %260 = tpu.matmul %257, %259, %cst_98 {dimension_numbers = #tpu.dot_dimension_numbers<[1], [0], [0], [1], [0, 0, 1, 1], [], []>} : vector<16x8xbf16>, vector<8x32xbf16>, vector<16x32xf32> -> vector<16x32xf32>
    %261 = arith.addf %233, %260 : vector<16x32xf32>
    %262 = vector.extract_strided_slice %176 {offsets = [0, 0, 24], sizes = [2, 8, 8], strides = [1, 1, 1]} : vector<2x8x32xf32> to vector<2x8x8xf32>
    %263 = vector.extract_strided_slice %173 {offsets = [0, 0, 24], sizes = [2, 5, 8], strides = [1, 1, 1]} : vector<2x5x32xf32> to vector<2x5x8xf32>
    %264 = vector.extract_strided_slice %174 {offsets = [0, 0, 24], sizes = [2, 5, 8], strides = [1, 1, 1]} : vector<2x5x32xf32> to vector<2x5x8xf32>
    %265 = arith.truncf %262 : vector<2x8x8xf32> to vector<2x8x8xbf16>
    %266 = arith.truncf %263 : vector<2x5x8xf32> to vector<2x5x8xbf16>
    "tpu.trace_start"() <{level = 10 : i32, message = "bqd,bkd->bqk"}> : () -> ()
    %cst_99 = arith.constant dense<0.000000e+00> : vector<2x8x5xf32>
    %267 = tpu.matmul %265, %266, %cst_99 {dimension_numbers = #tpu.dot_dimension_numbers<[2], [2], [1], [1], [0, 0, 0, 1, 1, 1], [0], [0]>} : vector<2x8x8xbf16>, vector<2x5x8xbf16>, vector<2x8x5xf32> -> vector<2x8x5xf32>
    "tpu.trace_stop"() : () -> ()
    %cst_100 = arith.constant 0.353553385 : f32
    %268 = vector.broadcast %cst_100 : f32 to vector<2x8x5xf32>
    %269 = arith.mulf %267, %268 : vector<2x8x5xf32>
    %270 = arith.addf %269, %33 : vector<2x8x5xf32>
    %cst_101 = arith.constant dense<0xFF800000> : vector<2x8xf32>
    %271 = vector.multi_reduction <maximumf>, %270, %cst_101 [2] : vector<2x8x5xf32> to vector<2x8xf32>
    %272 = vector.shape_cast %271 : vector<2x8xf32> to vector<2x8x1xf32>
    %273 = vector.broadcast %272 : vector<2x8x1xf32> to vector<2x8x5xf32>
    %274 = arith.subf %270, %273 : vector<2x8x5xf32>
    %275 = math.exp %274 : vector<2x8x5xf32>
    %cst_102 = arith.constant dense<0.000000e+00> : vector<2x8xf32>
    %276 = vector.multi_reduction <add>, %275, %cst_102 [2] : vector<2x8x5xf32> to vector<2x8xf32>
    %277 = vector.shape_cast %276 : vector<2x8xf32> to vector<2x8x1xf32>
    %278 = tpu.reciprocal %277 {approx = true} : vector<2x8x1xf32> -> vector<2x8x1xf32>
    %279 = vector.broadcast %278 : vector<2x8x1xf32> to vector<2x8x5xf32>
    %280 = arith.mulf %275, %279 : vector<2x8x5xf32>
    %281 = arith.truncf %280 : vector<2x8x5xf32> to vector<2x8x5xbf16>
    %282 = arith.truncf %264 : vector<2x5x8xf32> to vector<2x5x8xbf16>
    "tpu.trace_start"() <{level = 10 : i32, message = "bqk,bkd->bqd"}> : () -> ()
    %cst_103 = arith.constant dense<0.000000e+00> : vector<2x8x8xf32>
    %283 = tpu.matmul %281, %282, %cst_103 {dimension_numbers = #tpu.dot_dimension_numbers<[2], [1], [1], [2], [0, 0, 0, 1, 1, 2], [0], [0]>} : vector<2x8x5xbf16>, vector<2x5x8xbf16>, vector<2x8x8xf32> -> vector<2x8x8xf32>
    "tpu.trace_stop"() : () -> ()
    %284 = vector.shape_cast %283 : vector<2x8x8xf32> to vector<16x8xf32>
    %285 = arith.truncf %284 : vector<16x8xf32> to vector<16x8xbf16>
    %c3_104 = arith.constant 3 : index
    %c0_105 = arith.constant 0 : index
    %c0_106 = arith.constant 0 : index
    %286 = vector.load %arg13[%c3_104, %c0_105, %c0_106] : memref<4x8x32xbf16, #tpu.memory_space<vmem>>, vector<1x8x32xbf16>
    %287 = vector.shape_cast %286 : vector<1x8x32xbf16> to vector<8x32xbf16>
    %cst_107 = arith.constant dense<0.000000e+00> : vector<16x32xf32>
    %288 = tpu.matmul %285, %287, %cst_107 {dimension_numbers = #tpu.dot_dimension_numbers<[1], [0], [0], [1], [0, 0, 1, 1], [], []>} : vector<16x8xbf16>, vector<8x32xbf16>, vector<16x32xf32> -> vector<16x32xf32>
    %289 = arith.addf %261, %288 : vector<16x32xf32>
    %290 = vector.broadcast %166 : vector<1x32xf32> to vector<16x32xf32>
    %291 = arith.addf %289, %290 : vector<16x32xf32>
    %292 = arith.mulf %162, %1 : vector<16x32xf32>
    %cst_108 = arith.constant dense<0.000000e+00> : vector<16xf32>
    %293 = vector.multi_reduction <add>, %292, %cst_108 [1] : vector<16x32xf32> to vector<16xf32>
    %294 = vector.shape_cast %293 : vector<16xf32> to vector<16x1xf32>
    %cst_109 = arith.constant 0.176776692 : f32
    %295 = vector.broadcast %cst_109 : f32 to vector<16x1xf32>
    %296 = arith.mulf %294, %295 : vector<16x1xf32>
    %297 = arith.mulf %291, %1 : vector<16x32xf32>
    %cst_110 = arith.constant dense<0.000000e+00> : vector<16xf32>
    %298 = vector.multi_reduction <add>, %297, %cst_110 [1] : vector<16x32xf32> to vector<16xf32>
    %299 = vector.shape_cast %298 : vector<16xf32> to vector<16x1xf32>
    %cst_111 = arith.constant 0.176776692 : f32
    %300 = vector.broadcast %cst_111 : f32 to vector<16x1xf32>
    %301 = arith.mulf %299, %300 : vector<16x1xf32>
    %302 = arith.maximumf %296, %301 : vector<16x1xf32>
    %303 = arith.subf %296, %302 : vector<16x1xf32>
    %304 = math.exp %303 : vector<16x1xf32>
    %305 = arith.subf %301, %302 : vector<16x1xf32>
    %306 = math.exp %305 : vector<16x1xf32>
    %307 = arith.addf %304, %306 : vector<16x1xf32>
    %cst_112 = arith.constant 1.000000e+00 : f32
    %308 = vector.broadcast %cst_112 : f32 to vector<16x1xf32>
    %309 = arith.divf %308, %307 : vector<16x1xf32>
    %310 = vector.broadcast %304 : vector<16x1xf32> to vector<16x32xf32>
    %311 = arith.mulf %310, %162 : vector<16x32xf32>
    %312 = vector.broadcast %306 : vector<16x1xf32> to vector<16x32xf32>
    %313 = arith.mulf %312, %291 : vector<16x32xf32>
    %314 = arith.addf %311, %313 : vector<16x32xf32>
    %315 = vector.broadcast %309 : vector<16x1xf32> to vector<16x32xf32>
    %316 = arith.mulf %314, %315 : vector<16x32xf32>
    %317 = vector.shape_cast %316 : vector<16x32xf32> to vector<2x8x32xf32>
    %c0_113 = arith.constant 0 : index
    %c0_114 = arith.constant 0 : index
    %c0_115 = arith.constant 0 : index
    %318 = vector.load %arg15[%c0_113, %c0_114, %c0_115] : memref<2x8x32xf32, #tpu.memory_space<vmem>>, vector<2x8x32xf32>
    tpu.vector_store %arg15[%c0_113, %c0_114, %c0_115], %317 {strides = array<i32>} : memref<2x8x32xf32, #tpu.memory_space<vmem>>, vector<2x8x32xf32>,
    return
  }
  func.func @transform_0(%arg0: i32) -> (i32, i32, i32) {
    %c0_i32 = arith.constant 0 : i32
    %c0_i32_0 = arith.constant 0 : i32
    %c0_i32_1 = arith.constant 0 : i32
    %c0_i32_2 = arith.constant 0 : i32
    return %c0_i32, %c0_i32_0, %c0_i32_1 : i32, i32, i32
  }
  func.func @transform_1(%arg0: i32) -> (i32, i32, i32) {
    %c0_i32 = arith.constant 0 : i32
    %c0_i32_0 = arith.constant 0 : i32
    %c0_i32_1 = arith.constant 0 : i32
    %c0_i32_2 = arith.constant 0 : i32
    return %c0_i32, %c0_i32_0, %c0_i32_1 : i32, i32, i32
  }
  func.func @transform_2(%arg0: i32) -> (i32, i32, i32) {
    %c0_i32 = arith.constant 0 : i32
    %c0_i32_0 = arith.constant 0 : i32
    %c0_i32_1 = arith.constant 0 : i32
    %c0_i32_2 = arith.constant 0 : i32
    return %c0_i32, %c0_i32_0, %c0_i32_1 : i32, i32, i32
  }
  func.func @transform_3(%arg0: i32) -> (i32, i32, i32, i32) {
    %c0_i32 = arith.constant 0 : i32
    %c0_i32_0 = arith.constant 0 : i32
    %c0_i32_1 = arith.constant 0 : i32
    %c0_i32_2 = arith.constant 0 : i32
    %c0_i32_3 = arith.constant 0 : i32
    return %c0_i32, %c0_i32_0, %c0_i32_1, %c0_i32_2 : i32, i32, i32, i32
  }
  func.func @transform_4(%arg0: i32) -> (i32, i32) {
    %c0_i32 = arith.constant 0 : i32
    %c0_i32_0 = arith.constant 0 : i32
    %c0_i32_1 = arith.constant 0 : i32
    return %c0_i32, %c0_i32_0 : i32, i32
  }
  func.func @transform_5(%arg0: i32) -> (i32, i32) {
    %c0_i32 = arith.constant 0 : i32
    %c0_i32_0 = arith.constant 0 : i32
    %c0_i32_1 = arith.constant 0 : i32
    return %c0_i32, %c0_i32_0 : i32, i32
  }
  func.func @transform_6(%arg0: i32) -> (i32, i32) {
    %c0_i32 = arith.constant 0 : i32
    %c0_i32_0 = arith.constant 0 : i32
    %c0_i32_1 = arith.constant 0 : i32
    return %c0_i32, %c0_i32_0 : i32, i32
  }
  func.func @transform_7(%arg0: i32) -> (i32, i32) {
    %c0_i32 = arith.constant 0 : i32
    %c0_i32_0 = arith.constant 0 : i32
    %c0_i32_1 = arith.constant 0 : i32
    return %c0_i32, %c0_i32_0 : i32, i32
  }
  func.func @transform_8(%arg0: i32) -> (i32, i32, i32) {
    %c0_i32 = arith.constant 0 : i32
    %c0_i32_0 = arith.constant 0 : i32
    %c0_i32_1 = arith.constant 0 : i32
    %c0_i32_2 = arith.constant 0 : i32
    return %c0_i32, %c0_i32_0, %c0_i32_1 : i32, i32, i32
  }
  func.func @transform_9(%arg0: i32) -> (i32, i32) {
    %c0_i32 = arith.constant 0 : i32
    %c0_i32_0 = arith.constant 0 : i32
    %c0_i32_1 = arith.constant 0 : i32
    return %c0_i32, %c0_i32_0 : i32, i32
  }
  func.func @transform_10(%arg0: i32) -> (i32, i32) {
    %c0_i32 = arith.constant 0 : i32
    %c0_i32_0 = arith.constant 0 : i32
    %c0_i32_1 = arith.constant 0 : i32
    return %c0_i32, %c0_i32_0 : i32, i32
  }
  func.func @transform_11(%arg0: i32) -> (i32, i32) {
    %c0_i32 = arith.constant 0 : i32
    %c0_i32_0 = arith.constant 0 : i32
    %c0_i32_1 = arith.constant 0 : i32
    return %c0_i32, %c0_i32_0 : i32, i32
  }
  func.func @transform_12(%arg0: i32) -> (i32, i32, i32) {
    %c0_i32 = arith.constant 0 : i32
    %c0_i32_0 = arith.constant 0 : i32
    %c0_i32_1 = arith.constant 0 : i32
    %c0_i32_2 = arith.constant 0 : i32
    return %c0_i32, %c0_i32_0, %c0_i32_1 : i32, i32, i32
  }
  func.func @transform_13(%arg0: i32) -> (i32, i32) {
    %c0_i32 = arith.constant 0 : i32
    %c0_i32_0 = arith.constant 0 : i32
    %c0_i32_1 = arith.constant 0 : i32
    return %c0_i32, %c0_i32_0 : i32, i32
  }
  func.func @transform_14(%arg0: i32) -> (i32, i32, i32) {
    %c0_i32 = arith.constant 0 : i32
    %c0_i32_0 = arith.constant 0 : i32
    %c0_i32_1 = arith.constant 0 : i32
    %c0_i32_2 = arith.constant 0 : i32
    return %c0_i32, %c0_i32_0, %c0_i32_1 : i32, i32, i32
  }
}

module attributes {stable_mosaic.version = 11 : i64} {
  func.func @_cross_fuse_kernel(%arg0: i32, %arg1: memref<2x8x32xf32, #tpu.memory_space<vmem>>, %arg2: memref<2x6x32xf32, #tpu.memory_space<vmem>>, %arg3: memref<2x6x32xf32, #tpu.memory_space<vmem>>, %arg4: memref<2x1x1x6xf32, #tpu.memory_space<vmem>>, %arg5: memref<32x64xbf16, #tpu.memory_space<vmem>>, %arg6: memref<1x64xf32, #tpu.memory_space<vmem>>, %arg7: memref<32x64xbf16, #tpu.memory_space<vmem>>, %arg8: memref<1x64xf32, #tpu.memory_space<vmem>>, %arg9: memref<4x8x32xbf16, #tpu.memory_space<vmem>>, %arg10: memref<1x32xf32, #tpu.memory_space<vmem>>, %arg11: memref<32x64xbf16, #tpu.memory_space<vmem>>, %arg12: memref<1x64xf32, #tpu.memory_space<vmem>>, %arg13: memref<4x8x32xbf16, #tpu.memory_space<vmem>>, %arg14: memref<1x32xf32, #tpu.memory_space<vmem>>, %arg15: memref<2x8x32xf32, #tpu.memory_space<vmem>>) attributes {dimension_semantics = [#tpu.dimension_semantics<arbitrary>], iteration_bounds = array<i64: 1>, scalar_prefetch = 0 : i64, scratch_operands = 0 : i64, tpu.core_type = #tpu.core_type<tc>, window_params = [{pipeline_mode = #tpu.pipeline_mode<synchronous>, transform_indices = @transform_0, window_bounds = array<i64: 2, 8, 32>}, {pipeline_mode = #tpu.pipeline_mode<synchronous>, transform_indices = @transform_1, window_bounds = array<i64: 2, 6, 32>}, {pipeline_mode = #tpu.pipeline_mode<synchronous>, transform_indices = @transform_2, window_bounds = array<i64: 2, 6, 32>}, {pipeline_mode = #tpu.pipeline_mode<synchronous>, transform_indices = @transform_3, window_bounds = array<i64: 2, 1, 1, 6>}, {pipeline_mode = #tpu.pipeline_mode<synchronous>, transform_indices = @transform_4, window_bounds = array<i64: 32, 64>}, {pipeline_mode = #tpu.pipeline_mode<synchronous>, transform_indices = @transform_5, window_bounds = array<i64: 1, 64>}, {pipeline_mode = #tpu.pipeline_mode<synchronous>, transform_indices = @transform_6, window_bounds = array<i64: 32, 64>}, {pipeline_mode = #tpu.pipeline_mode<synchronous>, transform_indices = @transform_7, window_bounds = array<i64: 1, 64>}, {pipeline_mode = #tpu.pipeline_mode<synchronous>, transform_indices = @transform_8, window_bounds = array<i64: 4, 8, 32>}, {pipeline_mode = #tpu.pipeline_mode<synchronous>, transform_indices = @transform_9, window_bounds = array<i64: 1, 32>}, {pipeline_mode = #tpu.pipeline_mode<synchronous>, transform_indices = @transform_10, window_bounds = array<i64: 32, 64>}, {pipeline_mode = #tpu.pipeline_mode<synchronous>, transform_indices = @transform_11, window_bounds = array<i64: 1, 64>}, {pipeline_mode = #tpu.pipeline_mode<synchronous>, transform_indices = @transform_12, window_bounds = array<i64: 4, 8, 32>}, {pipeline_mode = #tpu.pipeline_mode<synchronous>, transform_indices = @transform_13, window_bounds = array<i64: 1, 32>}, {pipeline_mode = #tpu.pipeline_mode<synchronous>, transform_indices = @transform_14, window_bounds = array<i64: 2, 8, 32>}]} {
    %c0 = arith.constant 0 : index
    %c0_0 = arith.constant 0 : index
    %c0_1 = arith.constant 0 : index
    %0 = vector.load %arg1[%c0, %c0_0, %c0_1] : memref<2x8x32xf32, #tpu.memory_space<vmem>>, vector<2x8x32xf32>
    %1 = vector.shape_cast %0 : vector<2x8x32xf32> to vector<16x32xf32>
    %cst = arith.constant dense<0.000000e+00> : vector<16xf32>
    %2 = vector.multi_reduction <add>, %1, %cst [1] : vector<16x32xf32> to vector<16xf32>
    %3 = vector.shape_cast %2 : vector<16xf32> to vector<16x1xf32>
    %cst_2 = arith.constant 3.200000e+01 : f32
    %4 = vector.broadcast %cst_2 : f32 to vector<16x1xf32>
    %5 = arith.divf %3, %4 : vector<16x1xf32>
    %6 = vector.broadcast %5 : vector<16x1xf32> to vector<16x32xf32>
    %7 = arith.subf %1, %6 : vector<16x32xf32>
    %8 = arith.mulf %7, %7 : vector<16x32xf32>
    %cst_3 = arith.constant dense<0.000000e+00> : vector<16xf32>
    %9 = vector.multi_reduction <add>, %8, %cst_3 [1] : vector<16x32xf32> to vector<16xf32>
    %10 = vector.shape_cast %9 : vector<16xf32> to vector<16x1xf32>
    %cst_4 = arith.constant 3.200000e+01 : f32
    %11 = vector.broadcast %cst_4 : f32 to vector<16x1xf32>
    %12 = arith.divf %10, %11 : vector<16x1xf32>
    %13 = vector.broadcast %5 : vector<16x1xf32> to vector<16x32xf32>
    %14 = arith.subf %1, %13 : vector<16x32xf32>
    %cst_5 = arith.constant 9.99999974E-6 : f32
    %15 = vector.broadcast %cst_5 : f32 to vector<16x1xf32>
    %16 = arith.addf %12, %15 : vector<16x1xf32>
    %17 = math.rsqrt %16 : vector<16x1xf32>
    %18 = vector.broadcast %17 : vector<16x1xf32> to vector<16x32xf32>
    %19 = arith.mulf %14, %18 : vector<16x32xf32>
    %20 = arith.truncf %19 : vector<16x32xf32> to vector<16x32xbf16>
    %c0_6 = arith.constant 0 : index
    %c0_7 = arith.constant 0 : index
    %21 = vector.load %arg5[%c0_6, %c0_7] : memref<32x64xbf16, #tpu.memory_space<vmem>>, vector<32x64xbf16>
    %cst_8 = arith.constant dense<0.000000e+00> : vector<16x64xf32>
    %22 = tpu.matmul %20, %21, %cst_8 {dimension_numbers = #tpu.dot_dimension_numbers<[1], [0], [0], [1], [0, 0, 1, 1], [], []>} : vector<16x32xbf16>, vector<32x64xbf16>, vector<16x64xf32> -> vector<16x64xf32>
    %c0_9 = arith.constant 0 : index
    %c0_10 = arith.constant 0 : index
    %23 = vector.load %arg6[%c0_9, %c0_10] : memref<1x64xf32, #tpu.memory_space<vmem>>, vector<1x64xf32>
    %24 = vector.broadcast %23 : vector<1x64xf32> to vector<16x64xf32>
    %25 = arith.addf %22, %24 : vector<16x64xf32>
    %c0_11 = arith.constant 0 : index
    %c0_12 = arith.constant 0 : index
    %c0_13 = arith.constant 0 : index
    %c0_14 = arith.constant 0 : index
    %26 = vector.load %arg4[%c0_11, %c0_12, %c0_13, %c0_14] : memref<2x1x1x6xf32, #tpu.memory_space<vmem>>, vector<2x1x1x6xf32>
    %27 = vector.shape_cast %26 : vector<2x1x1x6xf32> to vector<2x1x6xf32>
    %cst_15 = arith.constant 1.000000e+00 : f32
    %28 = vector.broadcast %cst_15 : f32 to vector<2x1x6xf32>
    %29 = arith.subf %27, %28 : vector<2x1x6xf32>
    %cst_16 = arith.constant 1.000000e+09 : f32
    %30 = vector.broadcast %cst_16 : f32 to vector<2x1x6xf32>
    %31 = arith.mulf %29, %30 : vector<2x1x6xf32>
    %32 = vector.shape_cast %31 : vector<2x1x6xf32> to vector<2x1x6xf32>
    %33 = vector.broadcast %32 : vector<2x1x6xf32> to vector<2x8x6xf32>
    %c0_17 = arith.constant 0 : index
    %c0_18 = arith.constant 0 : index
    %c0_19 = arith.constant 0 : index
    %34 = vector.load %arg2[%c0_17, %c0_18, %c0_19] : memref<2x6x32xf32, #tpu.memory_space<vmem>>, vector<2x6x32xf32>
    %c0_20 = arith.constant 0 : index
    %c0_21 = arith.constant 0 : index
    %35 = vector.load %arg7[%c0_20, %c0_21] : memref<32x64xbf16, #tpu.memory_space<vmem>>, vector<32x64xbf16>
    %c0_22 = arith.constant 0 : index
    %c0_23 = arith.constant 0 : index
    %36 = vector.load %arg8[%c0_22, %c0_23] : memref<1x64xf32, #tpu.memory_space<vmem>>, vector<1x64xf32>
    %c0_24 = arith.constant 0 : index
    %c0_25 = arith.constant 0 : index
    %37 = vector.load %arg10[%c0_24, %c0_25] : memref<1x32xf32, #tpu.memory_space<vmem>>, vector<1x32xf32>
    %38 = vector.shape_cast %34 : vector<2x6x32xf32> to vector<12x32xf32>
    %39 = arith.truncf %38 : vector<12x32xf32> to vector<12x32xbf16>
    %cst_26 = arith.constant dense<0.000000e+00> : vector<12x64xf32>
    %40 = tpu.matmul %39, %35, %cst_26 {dimension_numbers = #tpu.dot_dimension_numbers<[1], [0], [0], [1], [0, 0, 1, 1], [], []>} : vector<12x32xbf16>, vector<32x64xbf16>, vector<12x64xf32> -> vector<12x64xf32>
    %41 = vector.broadcast %36 : vector<1x64xf32> to vector<12x64xf32>
    %42 = arith.addf %40, %41 : vector<12x64xf32>
    %43 = vector.shape_cast %42 : vector<12x64xf32> to vector<2x6x64xf32>
    %44 = vector.extract_strided_slice %43 {offsets = [0, 0, 0], sizes = [2, 6, 32], strides = [1, 1, 1]} : vector<2x6x64xf32> to vector<2x6x32xf32>
    %45 = vector.extract_strided_slice %43 {offsets = [0, 0, 32], sizes = [2, 6, 32], strides = [1, 1, 1]} : vector<2x6x64xf32> to vector<2x6x32xf32>
    %46 = vector.extract_strided_slice %25 {offsets = [0, 0], sizes = [16, 32], strides = [1, 1]} : vector<16x64xf32> to vector<16x32xf32>
    %47 = vector.shape_cast %46 : vector<16x32xf32> to vector<2x8x32xf32>
    %cst_27 = arith.constant 0.000000e+00 : f32
    %48 = vector.broadcast %cst_27 : f32 to vector<16x32xf32>
    %49 = vector.extract_strided_slice %47 {offsets = [0, 0, 0], sizes = [2, 8, 8], strides = [1, 1, 1]} : vector<2x8x32xf32> to vector<2x8x8xf32>
    %50 = vector.extract_strided_slice %44 {offsets = [0, 0, 0], sizes = [2, 6, 8], strides = [1, 1, 1]} : vector<2x6x32xf32> to vector<2x6x8xf32>
    %51 = vector.extract_strided_slice %45 {offsets = [0, 0, 0], sizes = [2, 6, 8], strides = [1, 1, 1]} : vector<2x6x32xf32> to vector<2x6x8xf32>
    %52 = arith.truncf %49 : vector<2x8x8xf32> to vector<2x8x8xbf16>
    %53 = arith.truncf %50 : vector<2x6x8xf32> to vector<2x6x8xbf16>
    "tpu.trace_start"() <{level = 10 : i32, message = "bqd,bkd->bqk"}> : () -> ()
    %cst_28 = arith.constant dense<0.000000e+00> : vector<2x8x6xf32>
    %54 = tpu.matmul %52, %53, %cst_28 {dimension_numbers = #tpu.dot_dimension_numbers<[2], [2], [1], [1], [0, 0, 0, 1, 1, 1], [0], [0]>} : vector<2x8x8xbf16>, vector<2x6x8xbf16>, vector<2x8x6xf32> -> vector<2x8x6xf32>
    "tpu.trace_stop"() : () -> ()
    %cst_29 = arith.constant 0.353553385 : f32
    %55 = vector.broadcast %cst_29 : f32 to vector<2x8x6xf32>
    %56 = arith.mulf %54, %55 : vector<2x8x6xf32>
    %57 = arith.addf %56, %33 : vector<2x8x6xf32>
    %cst_30 = arith.constant dense<0xFF800000> : vector<2x8xf32>
    %58 = vector.multi_reduction <maximumf>, %57, %cst_30 [2] : vector<2x8x6xf32> to vector<2x8xf32>
    %59 = vector.shape_cast %58 : vector<2x8xf32> to vector<2x8x1xf32>
    %60 = vector.broadcast %59 : vector<2x8x1xf32> to vector<2x8x6xf32>
    %61 = arith.subf %57, %60 : vector<2x8x6xf32>
    %62 = math.exp %61 : vector<2x8x6xf32>
    %cst_31 = arith.constant dense<0.000000e+00> : vector<2x8xf32>
    %63 = vector.multi_reduction <add>, %62, %cst_31 [2] : vector<2x8x6xf32> to vector<2x8xf32>
    %64 = vector.shape_cast %63 : vector<2x8xf32> to vector<2x8x1xf32>
    %65 = tpu.reciprocal %64 {approx = true} : vector<2x8x1xf32> -> vector<2x8x1xf32>
    %66 = vector.broadcast %65 : vector<2x8x1xf32> to vector<2x8x6xf32>
    %67 = arith.mulf %62, %66 : vector<2x8x6xf32>
    %68 = arith.truncf %67 : vector<2x8x6xf32> to vector<2x8x6xbf16>
    %69 = arith.truncf %51 : vector<2x6x8xf32> to vector<2x6x8xbf16>
    "tpu.trace_start"() <{level = 10 : i32, message = "bqk,bkd->bqd"}> : () -> ()
    %cst_32 = arith.constant dense<0.000000e+00> : vector<2x8x8xf32>
    %70 = tpu.matmul %68, %69, %cst_32 {dimension_numbers = #tpu.dot_dimension_numbers<[2], [1], [1], [2], [0, 0, 0, 1, 1, 2], [0], [0]>} : vector<2x8x6xbf16>, vector<2x6x8xbf16>, vector<2x8x8xf32> -> vector<2x8x8xf32>
    "tpu.trace_stop"() : () -> ()
    %71 = vector.shape_cast %70 : vector<2x8x8xf32> to vector<16x8xf32>
    %72 = arith.truncf %71 : vector<16x8xf32> to vector<16x8xbf16>
    %c0_33 = arith.constant 0 : index
    %c0_34 = arith.constant 0 : index
    %c0_35 = arith.constant 0 : index
    %73 = vector.load %arg9[%c0_33, %c0_34, %c0_35] : memref<4x8x32xbf16, #tpu.memory_space<vmem>>, vector<1x8x32xbf16>
    %74 = vector.shape_cast %73 : vector<1x8x32xbf16> to vector<8x32xbf16>
    %cst_36 = arith.constant dense<0.000000e+00> : vector<16x32xf32>
    %75 = tpu.matmul %72, %74, %cst_36 {dimension_numbers = #tpu.dot_dimension_numbers<[1], [0], [0], [1], [0, 0, 1, 1], [], []>} : vector<16x8xbf16>, vector<8x32xbf16>, vector<16x32xf32> -> vector<16x32xf32>
    %76 = arith.addf %48, %75 : vector<16x32xf32>
    %77 = vector.extract_strided_slice %47 {offsets = [0, 0, 8], sizes = [2, 8, 8], strides = [1, 1, 1]} : vector<2x8x32xf32> to vector<2x8x8xf32>
    %78 = vector.extract_strided_slice %44 {offsets = [0, 0, 8], sizes = [2, 6, 8], strides = [1, 1, 1]} : vector<2x6x32xf32> to vector<2x6x8xf32>
    %79 = vector.extract_strided_slice %45 {offsets = [0, 0, 8], sizes = [2, 6, 8], strides = [1, 1, 1]} : vector<2x6x32xf32> to vector<2x6x8xf32>
    %80 = arith.truncf %77 : vector<2x8x8xf32> to vector<2x8x8xbf16>
    %81 = arith.truncf %78 : vector<2x6x8xf32> to vector<2x6x8xbf16>
    "tpu.trace_start"() <{level = 10 : i32, message = "bqd,bkd->bqk"}> : () -> ()
    %cst_37 = arith.constant dense<0.000000e+00> : vector<2x8x6xf32>
    %82 = tpu.matmul %80, %81, %cst_37 {dimension_numbers = #tpu.dot_dimension_numbers<[2], [2], [1], [1], [0, 0, 0, 1, 1, 1], [0], [0]>} : vector<2x8x8xbf16>, vector<2x6x8xbf16>, vector<2x8x6xf32> -> vector<2x8x6xf32>
    "tpu.trace_stop"() : () -> ()
    %cst_38 = arith.constant 0.353553385 : f32
    %83 = vector.broadcast %cst_38 : f32 to vector<2x8x6xf32>
    %84 = arith.mulf %82, %83 : vector<2x8x6xf32>
    %85 = arith.addf %84, %33 : vector<2x8x6xf32>
    %cst_39 = arith.constant dense<0xFF800000> : vector<2x8xf32>
    %86 = vector.multi_reduction <maximumf>, %85, %cst_39 [2] : vector<2x8x6xf32> to vector<2x8xf32>
    %87 = vector.shape_cast %86 : vector<2x8xf32> to vector<2x8x1xf32>
    %88 = vector.broadcast %87 : vector<2x8x1xf32> to vector<2x8x6xf32>
    %89 = arith.subf %85, %88 : vector<2x8x6xf32>
    %90 = math.exp %89 : vector<2x8x6xf32>
    %cst_40 = arith.constant dense<0.000000e+00> : vector<2x8xf32>
    %91 = vector.multi_reduction <add>, %90, %cst_40 [2] : vector<2x8x6xf32> to vector<2x8xf32>
    %92 = vector.shape_cast %91 : vector<2x8xf32> to vector<2x8x1xf32>
    %93 = tpu.reciprocal %92 {approx = true} : vector<2x8x1xf32> -> vector<2x8x1xf32>
    %94 = vector.broadcast %93 : vector<2x8x1xf32> to vector<2x8x6xf32>
    %95 = arith.mulf %90, %94 : vector<2x8x6xf32>
    %96 = arith.truncf %95 : vector<2x8x6xf32> to vector<2x8x6xbf16>
    %97 = arith.truncf %79 : vector<2x6x8xf32> to vector<2x6x8xbf16>
    "tpu.trace_start"() <{level = 10 : i32, message = "bqk,bkd->bqd"}> : () -> ()
    %cst_41 = arith.constant dense<0.000000e+00> : vector<2x8x8xf32>
    %98 = tpu.matmul %96, %97, %cst_41 {dimension_numbers = #tpu.dot_dimension_numbers<[2], [1], [1], [2], [0, 0, 0, 1, 1, 2], [0], [0]>} : vector<2x8x6xbf16>, vector<2x6x8xbf16>, vector<2x8x8xf32> -> vector<2x8x8xf32>
    "tpu.trace_stop"() : () -> ()
    %99 = vector.shape_cast %98 : vector<2x8x8xf32> to vector<16x8xf32>
    %100 = arith.truncf %99 : vector<16x8xf32> to vector<16x8xbf16>
    %c1 = arith.constant 1 : index
    %c0_42 = arith.constant 0 : index
    %c0_43 = arith.constant 0 : index
    %101 = vector.load %arg9[%c1, %c0_42, %c0_43] : memref<4x8x32xbf16, #tpu.memory_space<vmem>>, vector<1x8x32xbf16>
    %102 = vector.shape_cast %101 : vector<1x8x32xbf16> to vector<8x32xbf16>
    %cst_44 = arith.constant dense<0.000000e+00> : vector<16x32xf32>
    %103 = tpu.matmul %100, %102, %cst_44 {dimension_numbers = #tpu.dot_dimension_numbers<[1], [0], [0], [1], [0, 0, 1, 1], [], []>} : vector<16x8xbf16>, vector<8x32xbf16>, vector<16x32xf32> -> vector<16x32xf32>
    %104 = arith.addf %76, %103 : vector<16x32xf32>
    %105 = vector.extract_strided_slice %47 {offsets = [0, 0, 16], sizes = [2, 8, 8], strides = [1, 1, 1]} : vector<2x8x32xf32> to vector<2x8x8xf32>
    %106 = vector.extract_strided_slice %44 {offsets = [0, 0, 16], sizes = [2, 6, 8], strides = [1, 1, 1]} : vector<2x6x32xf32> to vector<2x6x8xf32>
    %107 = vector.extract_strided_slice %45 {offsets = [0, 0, 16], sizes = [2, 6, 8], strides = [1, 1, 1]} : vector<2x6x32xf32> to vector<2x6x8xf32>
    %108 = arith.truncf %105 : vector<2x8x8xf32> to vector<2x8x8xbf16>
    %109 = arith.truncf %106 : vector<2x6x8xf32> to vector<2x6x8xbf16>
    "tpu.trace_start"() <{level = 10 : i32, message = "bqd,bkd->bqk"}> : () -> ()
    %cst_45 = arith.constant dense<0.000000e+00> : vector<2x8x6xf32>
    %110 = tpu.matmul %108, %109, %cst_45 {dimension_numbers = #tpu.dot_dimension_numbers<[2], [2], [1], [1], [0, 0, 0, 1, 1, 1], [0], [0]>} : vector<2x8x8xbf16>, vector<2x6x8xbf16>, vector<2x8x6xf32> -> vector<2x8x6xf32>
    "tpu.trace_stop"() : () -> ()
    %cst_46 = arith.constant 0.353553385 : f32
    %111 = vector.broadcast %cst_46 : f32 to vector<2x8x6xf32>
    %112 = arith.mulf %110, %111 : vector<2x8x6xf32>
    %113 = arith.addf %112, %33 : vector<2x8x6xf32>
    %cst_47 = arith.constant dense<0xFF800000> : vector<2x8xf32>
    %114 = vector.multi_reduction <maximumf>, %113, %cst_47 [2] : vector<2x8x6xf32> to vector<2x8xf32>
    %115 = vector.shape_cast %114 : vector<2x8xf32> to vector<2x8x1xf32>
    %116 = vector.broadcast %115 : vector<2x8x1xf32> to vector<2x8x6xf32>
    %117 = arith.subf %113, %116 : vector<2x8x6xf32>
    %118 = math.exp %117 : vector<2x8x6xf32>
    %cst_48 = arith.constant dense<0.000000e+00> : vector<2x8xf32>
    %119 = vector.multi_reduction <add>, %118, %cst_48 [2] : vector<2x8x6xf32> to vector<2x8xf32>
    %120 = vector.shape_cast %119 : vector<2x8xf32> to vector<2x8x1xf32>
    %121 = tpu.reciprocal %120 {approx = true} : vector<2x8x1xf32> -> vector<2x8x1xf32>
    %122 = vector.broadcast %121 : vector<2x8x1xf32> to vector<2x8x6xf32>
    %123 = arith.mulf %118, %122 : vector<2x8x6xf32>
    %124 = arith.truncf %123 : vector<2x8x6xf32> to vector<2x8x6xbf16>
    %125 = arith.truncf %107 : vector<2x6x8xf32> to vector<2x6x8xbf16>
    "tpu.trace_start"() <{level = 10 : i32, message = "bqk,bkd->bqd"}> : () -> ()
    %cst_49 = arith.constant dense<0.000000e+00> : vector<2x8x8xf32>
    %126 = tpu.matmul %124, %125, %cst_49 {dimension_numbers = #tpu.dot_dimension_numbers<[2], [1], [1], [2], [0, 0, 0, 1, 1, 2], [0], [0]>} : vector<2x8x6xbf16>, vector<2x6x8xbf16>, vector<2x8x8xf32> -> vector<2x8x8xf32>
    "tpu.trace_stop"() : () -> ()
    %127 = vector.shape_cast %126 : vector<2x8x8xf32> to vector<16x8xf32>
    %128 = arith.truncf %127 : vector<16x8xf32> to vector<16x8xbf16>
    %c2 = arith.constant 2 : index
    %c0_50 = arith.constant 0 : index
    %c0_51 = arith.constant 0 : index
    %129 = vector.load %arg9[%c2, %c0_50, %c0_51] : memref<4x8x32xbf16, #tpu.memory_space<vmem>>, vector<1x8x32xbf16>
    %130 = vector.shape_cast %129 : vector<1x8x32xbf16> to vector<8x32xbf16>
    %cst_52 = arith.constant dense<0.000000e+00> : vector<16x32xf32>
    %131 = tpu.matmul %128, %130, %cst_52 {dimension_numbers = #tpu.dot_dimension_numbers<[1], [0], [0], [1], [0, 0, 1, 1], [], []>} : vector<16x8xbf16>, vector<8x32xbf16>, vector<16x32xf32> -> vector<16x32xf32>
    %132 = arith.addf %104, %131 : vector<16x32xf32>
    %133 = vector.extract_strided_slice %47 {offsets = [0, 0, 24], sizes = [2, 8, 8], strides = [1, 1, 1]} : vector<2x8x32xf32> to vector<2x8x8xf32>
    %134 = vector.extract_strided_slice %44 {offsets = [0, 0, 24], sizes = [2, 6, 8], strides = [1, 1, 1]} : vector<2x6x32xf32> to vector<2x6x8xf32>
    %135 = vector.extract_strided_slice %45 {offsets = [0, 0, 24], sizes = [2, 6, 8], strides = [1, 1, 1]} : vector<2x6x32xf32> to vector<2x6x8xf32>
    %136 = arith.truncf %133 : vector<2x8x8xf32> to vector<2x8x8xbf16>
    %137 = arith.truncf %134 : vector<2x6x8xf32> to vector<2x6x8xbf16>
    "tpu.trace_start"() <{level = 10 : i32, message = "bqd,bkd->bqk"}> : () -> ()
    %cst_53 = arith.constant dense<0.000000e+00> : vector<2x8x6xf32>
    %138 = tpu.matmul %136, %137, %cst_53 {dimension_numbers = #tpu.dot_dimension_numbers<[2], [2], [1], [1], [0, 0, 0, 1, 1, 1], [0], [0]>} : vector<2x8x8xbf16>, vector<2x6x8xbf16>, vector<2x8x6xf32> -> vector<2x8x6xf32>
    "tpu.trace_stop"() : () -> ()
    %cst_54 = arith.constant 0.353553385 : f32
    %139 = vector.broadcast %cst_54 : f32 to vector<2x8x6xf32>
    %140 = arith.mulf %138, %139 : vector<2x8x6xf32>
    %141 = arith.addf %140, %33 : vector<2x8x6xf32>
    %cst_55 = arith.constant dense<0xFF800000> : vector<2x8xf32>
    %142 = vector.multi_reduction <maximumf>, %141, %cst_55 [2] : vector<2x8x6xf32> to vector<2x8xf32>
    %143 = vector.shape_cast %142 : vector<2x8xf32> to vector<2x8x1xf32>
    %144 = vector.broadcast %143 : vector<2x8x1xf32> to vector<2x8x6xf32>
    %145 = arith.subf %141, %144 : vector<2x8x6xf32>
    %146 = math.exp %145 : vector<2x8x6xf32>
    %cst_56 = arith.constant dense<0.000000e+00> : vector<2x8xf32>
    %147 = vector.multi_reduction <add>, %146, %cst_56 [2] : vector<2x8x6xf32> to vector<2x8xf32>
    %148 = vector.shape_cast %147 : vector<2x8xf32> to vector<2x8x1xf32>
    %149 = tpu.reciprocal %148 {approx = true} : vector<2x8x1xf32> -> vector<2x8x1xf32>
    %150 = vector.broadcast %149 : vector<2x8x1xf32> to vector<2x8x6xf32>
    %151 = arith.mulf %146, %150 : vector<2x8x6xf32>
    %152 = arith.truncf %151 : vector<2x8x6xf32> to vector<2x8x6xbf16>
    %153 = arith.truncf %135 : vector<2x6x8xf32> to vector<2x6x8xbf16>
    "tpu.trace_start"() <{level = 10 : i32, message = "bqk,bkd->bqd"}> : () -> ()
    %cst_57 = arith.constant dense<0.000000e+00> : vector<2x8x8xf32>
    %154 = tpu.matmul %152, %153, %cst_57 {dimension_numbers = #tpu.dot_dimension_numbers<[2], [1], [1], [2], [0, 0, 0, 1, 1, 2], [0], [0]>} : vector<2x8x6xbf16>, vector<2x6x8xbf16>, vector<2x8x8xf32> -> vector<2x8x8xf32>
    "tpu.trace_stop"() : () -> ()
    %155 = vector.shape_cast %154 : vector<2x8x8xf32> to vector<16x8xf32>
    %156 = arith.truncf %155 : vector<16x8xf32> to vector<16x8xbf16>
    %c3 = arith.constant 3 : index
    %c0_58 = arith.constant 0 : index
    %c0_59 = arith.constant 0 : index
    %157 = vector.load %arg9[%c3, %c0_58, %c0_59] : memref<4x8x32xbf16, #tpu.memory_space<vmem>>, vector<1x8x32xbf16>
    %158 = vector.shape_cast %157 : vector<1x8x32xbf16> to vector<8x32xbf16>
    %cst_60 = arith.constant dense<0.000000e+00> : vector<16x32xf32>
    %159 = tpu.matmul %156, %158, %cst_60 {dimension_numbers = #tpu.dot_dimension_numbers<[1], [0], [0], [1], [0, 0, 1, 1], [], []>} : vector<16x8xbf16>, vector<8x32xbf16>, vector<16x32xf32> -> vector<16x32xf32>
    %160 = arith.addf %132, %159 : vector<16x32xf32>
    %161 = vector.broadcast %37 : vector<1x32xf32> to vector<16x32xf32>
    %162 = arith.addf %160, %161 : vector<16x32xf32>
    %c0_61 = arith.constant 0 : index
    %c0_62 = arith.constant 0 : index
    %c0_63 = arith.constant 0 : index
    %163 = vector.load %arg3[%c0_61, %c0_62, %c0_63] : memref<2x6x32xf32, #tpu.memory_space<vmem>>, vector<2x6x32xf32>
    %c0_64 = arith.constant 0 : index
    %c0_65 = arith.constant 0 : index
    %164 = vector.load %arg11[%c0_64, %c0_65] : memref<32x64xbf16, #tpu.memory_space<vmem>>, vector<32x64xbf16>
    %c0_66 = arith.constant 0 : index
    %c0_67 = arith.constant 0 : index
    %165 = vector.load %arg12[%c0_66, %c0_67] : memref<1x64xf32, #tpu.memory_space<vmem>>, vector<1x64xf32>
    %c0_68 = arith.constant 0 : index
    %c0_69 = arith.constant 0 : index
    %166 = vector.load %arg14[%c0_68, %c0_69] : memref<1x32xf32, #tpu.memory_space<vmem>>, vector<1x32xf32>
    %167 = vector.shape_cast %163 : vector<2x6x32xf32> to vector<12x32xf32>
    %168 = arith.truncf %167 : vector<12x32xf32> to vector<12x32xbf16>
    %cst_70 = arith.constant dense<0.000000e+00> : vector<12x64xf32>
    %169 = tpu.matmul %168, %164, %cst_70 {dimension_numbers = #tpu.dot_dimension_numbers<[1], [0], [0], [1], [0, 0, 1, 1], [], []>} : vector<12x32xbf16>, vector<32x64xbf16>, vector<12x64xf32> -> vector<12x64xf32>
    %170 = vector.broadcast %165 : vector<1x64xf32> to vector<12x64xf32>
    %171 = arith.addf %169, %170 : vector<12x64xf32>
    %172 = vector.shape_cast %171 : vector<12x64xf32> to vector<2x6x64xf32>
    %173 = vector.extract_strided_slice %172 {offsets = [0, 0, 0], sizes = [2, 6, 32], strides = [1, 1, 1]} : vector<2x6x64xf32> to vector<2x6x32xf32>
    %174 = vector.extract_strided_slice %172 {offsets = [0, 0, 32], sizes = [2, 6, 32], strides = [1, 1, 1]} : vector<2x6x64xf32> to vector<2x6x32xf32>
    %175 = vector.extract_strided_slice %25 {offsets = [0, 32], sizes = [16, 32], strides = [1, 1]} : vector<16x64xf32> to vector<16x32xf32>
    %176 = vector.shape_cast %175 : vector<16x32xf32> to vector<2x8x32xf32>
    %cst_71 = arith.constant 0.000000e+00 : f32
    %177 = vector.broadcast %cst_71 : f32 to vector<16x32xf32>
    %178 = vector.extract_strided_slice %176 {offsets = [0, 0, 0], sizes = [2, 8, 8], strides = [1, 1, 1]} : vector<2x8x32xf32> to vector<2x8x8xf32>
    %179 = vector.extract_strided_slice %173 {offsets = [0, 0, 0], sizes = [2, 6, 8], strides = [1, 1, 1]} : vector<2x6x32xf32> to vector<2x6x8xf32>
    %180 = vector.extract_strided_slice %174 {offsets = [0, 0, 0], sizes = [2, 6, 8], strides = [1, 1, 1]} : vector<2x6x32xf32> to vector<2x6x8xf32>
    %181 = arith.truncf %178 : vector<2x8x8xf32> to vector<2x8x8xbf16>
    %182 = arith.truncf %179 : vector<2x6x8xf32> to vector<2x6x8xbf16>
    "tpu.trace_start"() <{level = 10 : i32, message = "bqd,bkd->bqk"}> : () -> ()
    %cst_72 = arith.constant dense<0.000000e+00> : vector<2x8x6xf32>
    %183 = tpu.matmul %181, %182, %cst_72 {dimension_numbers = #tpu.dot_dimension_numbers<[2], [2], [1], [1], [0, 0, 0, 1, 1, 1], [0], [0]>} : vector<2x8x8xbf16>, vector<2x6x8xbf16>, vector<2x8x6xf32> -> vector<2x8x6xf32>
    "tpu.trace_stop"() : () -> ()
    %cst_73 = arith.constant 0.353553385 : f32
    %184 = vector.broadcast %cst_73 : f32 to vector<2x8x6xf32>
    %185 = arith.mulf %183, %184 : vector<2x8x6xf32>
    %186 = arith.addf %185, %33 : vector<2x8x6xf32>
    %cst_74 = arith.constant dense<0xFF800000> : vector<2x8xf32>
    %187 = vector.multi_reduction <maximumf>, %186, %cst_74 [2] : vector<2x8x6xf32> to vector<2x8xf32>
    %188 = vector.shape_cast %187 : vector<2x8xf32> to vector<2x8x1xf32>
    %189 = vector.broadcast %188 : vector<2x8x1xf32> to vector<2x8x6xf32>
    %190 = arith.subf %186, %189 : vector<2x8x6xf32>
    %191 = math.exp %190 : vector<2x8x6xf32>
    %cst_75 = arith.constant dense<0.000000e+00> : vector<2x8xf32>
    %192 = vector.multi_reduction <add>, %191, %cst_75 [2] : vector<2x8x6xf32> to vector<2x8xf32>
    %193 = vector.shape_cast %192 : vector<2x8xf32> to vector<2x8x1xf32>
    %194 = tpu.reciprocal %193 {approx = true} : vector<2x8x1xf32> -> vector<2x8x1xf32>
    %195 = vector.broadcast %194 : vector<2x8x1xf32> to vector<2x8x6xf32>
    %196 = arith.mulf %191, %195 : vector<2x8x6xf32>
    %197 = arith.truncf %196 : vector<2x8x6xf32> to vector<2x8x6xbf16>
    %198 = arith.truncf %180 : vector<2x6x8xf32> to vector<2x6x8xbf16>
    "tpu.trace_start"() <{level = 10 : i32, message = "bqk,bkd->bqd"}> : () -> ()
    %cst_76 = arith.constant dense<0.000000e+00> : vector<2x8x8xf32>
    %199 = tpu.matmul %197, %198, %cst_76 {dimension_numbers = #tpu.dot_dimension_numbers<[2], [1], [1], [2], [0, 0, 0, 1, 1, 2], [0], [0]>} : vector<2x8x6xbf16>, vector<2x6x8xbf16>, vector<2x8x8xf32> -> vector<2x8x8xf32>
    "tpu.trace_stop"() : () -> ()
    %200 = vector.shape_cast %199 : vector<2x8x8xf32> to vector<16x8xf32>
    %201 = arith.truncf %200 : vector<16x8xf32> to vector<16x8xbf16>
    %c0_77 = arith.constant 0 : index
    %c0_78 = arith.constant 0 : index
    %c0_79 = arith.constant 0 : index
    %202 = vector.load %arg13[%c0_77, %c0_78, %c0_79] : memref<4x8x32xbf16, #tpu.memory_space<vmem>>, vector<1x8x32xbf16>
    %203 = vector.shape_cast %202 : vector<1x8x32xbf16> to vector<8x32xbf16>
    %cst_80 = arith.constant dense<0.000000e+00> : vector<16x32xf32>
    %204 = tpu.matmul %201, %203, %cst_80 {dimension_numbers = #tpu.dot_dimension_numbers<[1], [0], [0], [1], [0, 0, 1, 1], [], []>} : vector<16x8xbf16>, vector<8x32xbf16>, vector<16x32xf32> -> vector<16x32xf32>
    %205 = arith.addf %177, %204 : vector<16x32xf32>
    %206 = vector.extract_strided_slice %176 {offsets = [0, 0, 8], sizes = [2, 8, 8], strides = [1, 1, 1]} : vector<2x8x32xf32> to vector<2x8x8xf32>
    %207 = vector.extract_strided_slice %173 {offsets = [0, 0, 8], sizes = [2, 6, 8], strides = [1, 1, 1]} : vector<2x6x32xf32> to vector<2x6x8xf32>
    %208 = vector.extract_strided_slice %174 {offsets = [0, 0, 8], sizes = [2, 6, 8], strides = [1, 1, 1]} : vector<2x6x32xf32> to vector<2x6x8xf32>
    %209 = arith.truncf %206 : vector<2x8x8xf32> to vector<2x8x8xbf16>
    %210 = arith.truncf %207 : vector<2x6x8xf32> to vector<2x6x8xbf16>
    "tpu.trace_start"() <{level = 10 : i32, message = "bqd,bkd->bqk"}> : () -> ()
    %cst_81 = arith.constant dense<0.000000e+00> : vector<2x8x6xf32>
    %211 = tpu.matmul %209, %210, %cst_81 {dimension_numbers = #tpu.dot_dimension_numbers<[2], [2], [1], [1], [0, 0, 0, 1, 1, 1], [0], [0]>} : vector<2x8x8xbf16>, vector<2x6x8xbf16>, vector<2x8x6xf32> -> vector<2x8x6xf32>
    "tpu.trace_stop"() : () -> ()
    %cst_82 = arith.constant 0.353553385 : f32
    %212 = vector.broadcast %cst_82 : f32 to vector<2x8x6xf32>
    %213 = arith.mulf %211, %212 : vector<2x8x6xf32>
    %214 = arith.addf %213, %33 : vector<2x8x6xf32>
    %cst_83 = arith.constant dense<0xFF800000> : vector<2x8xf32>
    %215 = vector.multi_reduction <maximumf>, %214, %cst_83 [2] : vector<2x8x6xf32> to vector<2x8xf32>
    %216 = vector.shape_cast %215 : vector<2x8xf32> to vector<2x8x1xf32>
    %217 = vector.broadcast %216 : vector<2x8x1xf32> to vector<2x8x6xf32>
    %218 = arith.subf %214, %217 : vector<2x8x6xf32>
    %219 = math.exp %218 : vector<2x8x6xf32>
    %cst_84 = arith.constant dense<0.000000e+00> : vector<2x8xf32>
    %220 = vector.multi_reduction <add>, %219, %cst_84 [2] : vector<2x8x6xf32> to vector<2x8xf32>
    %221 = vector.shape_cast %220 : vector<2x8xf32> to vector<2x8x1xf32>
    %222 = tpu.reciprocal %221 {approx = true} : vector<2x8x1xf32> -> vector<2x8x1xf32>
    %223 = vector.broadcast %222 : vector<2x8x1xf32> to vector<2x8x6xf32>
    %224 = arith.mulf %219, %223 : vector<2x8x6xf32>
    %225 = arith.truncf %224 : vector<2x8x6xf32> to vector<2x8x6xbf16>
    %226 = arith.truncf %208 : vector<2x6x8xf32> to vector<2x6x8xbf16>
    "tpu.trace_start"() <{level = 10 : i32, message = "bqk,bkd->bqd"}> : () -> ()
    %cst_85 = arith.constant dense<0.000000e+00> : vector<2x8x8xf32>
    %227 = tpu.matmul %225, %226, %cst_85 {dimension_numbers = #tpu.dot_dimension_numbers<[2], [1], [1], [2], [0, 0, 0, 1, 1, 2], [0], [0]>} : vector<2x8x6xbf16>, vector<2x6x8xbf16>, vector<2x8x8xf32> -> vector<2x8x8xf32>
    "tpu.trace_stop"() : () -> ()
    %228 = vector.shape_cast %227 : vector<2x8x8xf32> to vector<16x8xf32>
    %229 = arith.truncf %228 : vector<16x8xf32> to vector<16x8xbf16>
    %c1_86 = arith.constant 1 : index
    %c0_87 = arith.constant 0 : index
    %c0_88 = arith.constant 0 : index
    %230 = vector.load %arg13[%c1_86, %c0_87, %c0_88] : memref<4x8x32xbf16, #tpu.memory_space<vmem>>, vector<1x8x32xbf16>
    %231 = vector.shape_cast %230 : vector<1x8x32xbf16> to vector<8x32xbf16>
    %cst_89 = arith.constant dense<0.000000e+00> : vector<16x32xf32>
    %232 = tpu.matmul %229, %231, %cst_89 {dimension_numbers = #tpu.dot_dimension_numbers<[1], [0], [0], [1], [0, 0, 1, 1], [], []>} : vector<16x8xbf16>, vector<8x32xbf16>, vector<16x32xf32> -> vector<16x32xf32>
    %233 = arith.addf %205, %232 : vector<16x32xf32>
    %234 = vector.extract_strided_slice %176 {offsets = [0, 0, 16], sizes = [2, 8, 8], strides = [1, 1, 1]} : vector<2x8x32xf32> to vector<2x8x8xf32>
    %235 = vector.extract_strided_slice %173 {offsets = [0, 0, 16], sizes = [2, 6, 8], strides = [1, 1, 1]} : vector<2x6x32xf32> to vector<2x6x8xf32>
    %236 = vector.extract_strided_slice %174 {offsets = [0, 0, 16], sizes = [2, 6, 8], strides = [1, 1, 1]} : vector<2x6x32xf32> to vector<2x6x8xf32>
    %237 = arith.truncf %234 : vector<2x8x8xf32> to vector<2x8x8xbf16>
    %238 = arith.truncf %235 : vector<2x6x8xf32> to vector<2x6x8xbf16>
    "tpu.trace_start"() <{level = 10 : i32, message = "bqd,bkd->bqk"}> : () -> ()
    %cst_90 = arith.constant dense<0.000000e+00> : vector<2x8x6xf32>
    %239 = tpu.matmul %237, %238, %cst_90 {dimension_numbers = #tpu.dot_dimension_numbers<[2], [2], [1], [1], [0, 0, 0, 1, 1, 1], [0], [0]>} : vector<2x8x8xbf16>, vector<2x6x8xbf16>, vector<2x8x6xf32> -> vector<2x8x6xf32>
    "tpu.trace_stop"() : () -> ()
    %cst_91 = arith.constant 0.353553385 : f32
    %240 = vector.broadcast %cst_91 : f32 to vector<2x8x6xf32>
    %241 = arith.mulf %239, %240 : vector<2x8x6xf32>
    %242 = arith.addf %241, %33 : vector<2x8x6xf32>
    %cst_92 = arith.constant dense<0xFF800000> : vector<2x8xf32>
    %243 = vector.multi_reduction <maximumf>, %242, %cst_92 [2] : vector<2x8x6xf32> to vector<2x8xf32>
    %244 = vector.shape_cast %243 : vector<2x8xf32> to vector<2x8x1xf32>
    %245 = vector.broadcast %244 : vector<2x8x1xf32> to vector<2x8x6xf32>
    %246 = arith.subf %242, %245 : vector<2x8x6xf32>
    %247 = math.exp %246 : vector<2x8x6xf32>
    %cst_93 = arith.constant dense<0.000000e+00> : vector<2x8xf32>
    %248 = vector.multi_reduction <add>, %247, %cst_93 [2] : vector<2x8x6xf32> to vector<2x8xf32>
    %249 = vector.shape_cast %248 : vector<2x8xf32> to vector<2x8x1xf32>
    %250 = tpu.reciprocal %249 {approx = true} : vector<2x8x1xf32> -> vector<2x8x1xf32>
    %251 = vector.broadcast %250 : vector<2x8x1xf32> to vector<2x8x6xf32>
    %252 = arith.mulf %247, %251 : vector<2x8x6xf32>
    %253 = arith.truncf %252 : vector<2x8x6xf32> to vector<2x8x6xbf16>
    %254 = arith.truncf %236 : vector<2x6x8xf32> to vector<2x6x8xbf16>
    "tpu.trace_start"() <{level = 10 : i32, message = "bqk,bkd->bqd"}> : () -> ()
    %cst_94 = arith.constant dense<0.000000e+00> : vector<2x8x8xf32>
    %255 = tpu.matmul %253, %254, %cst_94 {dimension_numbers = #tpu.dot_dimension_numbers<[2], [1], [1], [2], [0, 0, 0, 1, 1, 2], [0], [0]>} : vector<2x8x6xbf16>, vector<2x6x8xbf16>, vector<2x8x8xf32> -> vector<2x8x8xf32>
    "tpu.trace_stop"() : () -> ()
    %256 = vector.shape_cast %255 : vector<2x8x8xf32> to vector<16x8xf32>
    %257 = arith.truncf %256 : vector<16x8xf32> to vector<16x8xbf16>
    %c2_95 = arith.constant 2 : index
    %c0_96 = arith.constant 0 : index
    %c0_97 = arith.constant 0 : index
    %258 = vector.load %arg13[%c2_95, %c0_96, %c0_97] : memref<4x8x32xbf16, #tpu.memory_space<vmem>>, vector<1x8x32xbf16>
    %259 = vector.shape_cast %258 : vector<1x8x32xbf16> to vector<8x32xbf16>
    %cst_98 = arith.constant dense<0.000000e+00> : vector<16x32xf32>
    %260 = tpu.matmul %257, %259, %cst_98 {dimension_numbers = #tpu.dot_dimension_numbers<[1], [0], [0], [1], [0, 0, 1, 1], [], []>} : vector<16x8xbf16>, vector<8x32xbf16>, vector<16x32xf32> -> vector<16x32xf32>
    %261 = arith.addf %233, %260 : vector<16x32xf32>
    %262 = vector.extract_strided_slice %176 {offsets = [0, 0, 24], sizes = [2, 8, 8], strides = [1, 1, 1]} : vector<2x8x32xf32> to vector<2x8x8xf32>
    %263 = vector.extract_strided_slice %173 {offsets = [0, 0, 24], sizes = [2, 6, 8], strides = [1, 1, 1]} : vector<2x6x32xf32> to vector<2x6x8xf32>
    %264 = vector.extract_strided_slice %174 {offsets = [0, 0, 24], sizes = [2, 6, 8], strides = [1, 1, 1]} : vector<2x6x32xf32> to vector<2x6x8xf32>
    %265 = arith.truncf %262 : vector<2x8x8xf32> to vector<2x8x8xbf16>
    %266 = arith.truncf %263 : vector<2x6x8xf32> to vector<2x6x8xbf16>
    "tpu.trace_start"() <{level = 10 : i32, message = "bqd,bkd->bqk"}> : () -> ()
    %cst_99 = arith.constant dense<0.000000e+00> : vector<2x8x6xf32>
    %267 = tpu.matmul %265, %266, %cst_99 {dimension_numbers = #tpu.dot_dimension_numbers<[2], [2], [1], [1], [0, 0, 0, 1, 1, 1], [0], [0]>} : vector<2x8x8xbf16>, vector<2x6x8xbf16>, vector<2x8x6xf32> -> vector<2x8x6xf32>
    "tpu.trace_stop"() : () -> ()
    %cst_100 = arith.constant 0.353553385 : f32
    %268 = vector.broadcast %cst_100 : f32 to vector<2x8x6xf32>
    %269 = arith.mulf %267, %268 : vector<2x8x6xf32>
    %270 = arith.addf %269, %33 : vector<2x8x6xf32>
    %cst_101 = arith.constant dense<0xFF800000> : vector<2x8xf32>
    %271 = vector.multi_reduction <maximumf>, %270, %cst_101 [2] : vector<2x8x6xf32> to vector<2x8xf32>
    %272 = vector.shape_cast %271 : vector<2x8xf32> to vector<2x8x1xf32>
    %273 = vector.broadcast %272 : vector<2x8x1xf32> to vector<2x8x6xf32>
    %274 = arith.subf %270, %273 : vector<2x8x6xf32>
    %275 = math.exp %274 : vector<2x8x6xf32>
    %cst_102 = arith.constant dense<0.000000e+00> : vector<2x8xf32>
    %276 = vector.multi_reduction <add>, %275, %cst_102 [2] : vector<2x8x6xf32> to vector<2x8xf32>
    %277 = vector.shape_cast %276 : vector<2x8xf32> to vector<2x8x1xf32>
    %278 = tpu.reciprocal %277 {approx = true} : vector<2x8x1xf32> -> vector<2x8x1xf32>
    %279 = vector.broadcast %278 : vector<2x8x1xf32> to vector<2x8x6xf32>
    %280 = arith.mulf %275, %279 : vector<2x8x6xf32>
    %281 = arith.truncf %280 : vector<2x8x6xf32> to vector<2x8x6xbf16>
    %282 = arith.truncf %264 : vector<2x6x8xf32> to vector<2x6x8xbf16>
    "tpu.trace_start"() <{level = 10 : i32, message = "bqk,bkd->bqd"}> : () -> ()
    %cst_103 = arith.constant dense<0.000000e+00> : vector<2x8x8xf32>
    %283 = tpu.matmul %281, %282, %cst_103 {dimension_numbers = #tpu.dot_dimension_numbers<[2], [1], [1], [2], [0, 0, 0, 1, 1, 2], [0], [0]>} : vector<2x8x6xbf16>, vector<2x6x8xbf16>, vector<2x8x8xf32> -> vector<2x8x8xf32>
    "tpu.trace_stop"() : () -> ()
    %284 = vector.shape_cast %283 : vector<2x8x8xf32> to vector<16x8xf32>
    %285 = arith.truncf %284 : vector<16x8xf32> to vector<16x8xbf16>
    %c3_104 = arith.constant 3 : index
    %c0_105 = arith.constant 0 : index
    %c0_106 = arith.constant 0 : index
    %286 = vector.load %arg13[%c3_104, %c0_105, %c0_106] : memref<4x8x32xbf16, #tpu.memory_space<vmem>>, vector<1x8x32xbf16>
    %287 = vector.shape_cast %286 : vector<1x8x32xbf16> to vector<8x32xbf16>
    %cst_107 = arith.constant dense<0.000000e+00> : vector<16x32xf32>
    %288 = tpu.matmul %285, %287, %cst_107 {dimension_numbers = #tpu.dot_dimension_numbers<[1], [0], [0], [1], [0, 0, 1, 1], [], []>} : vector<16x8xbf16>, vector<8x32xbf16>, vector<16x32xf32> -> vector<16x32xf32>
    %289 = arith.addf %261, %288 : vector<16x32xf32>
    %290 = vector.broadcast %166 : vector<1x32xf32> to vector<16x32xf32>
    %291 = arith.addf %289, %290 : vector<16x32xf32>
    %292 = arith.mulf %162, %1 : vector<16x32xf32>
    %cst_108 = arith.constant dense<0.000000e+00> : vector<16xf32>
    %293 = vector.multi_reduction <add>, %292, %cst_108 [1] : vector<16x32xf32> to vector<16xf32>
    %294 = vector.shape_cast %293 : vector<16xf32> to vector<16x1xf32>
    %cst_109 = arith.constant 0.176776692 : f32
    %295 = vector.broadcast %cst_109 : f32 to vector<16x1xf32>
    %296 = arith.mulf %294, %295 : vector<16x1xf32>
    %297 = arith.mulf %291, %1 : vector<16x32xf32>
    %cst_110 = arith.constant dense<0.000000e+00> : vector<16xf32>
    %298 = vector.multi_reduction <add>, %297, %cst_110 [1] : vector<16x32xf32> to vector<16xf32>
    %299 = vector.shape_cast %298 : vector<16xf32> to vector<16x1xf32>
    %cst_111 = arith.constant 0.176776692 : f32
    %300 = vector.broadcast %cst_111 : f32 to vector<16x1xf32>
    %301 = arith.mulf %299, %300 : vector<16x1xf32>
    %302 = arith.maximumf %296, %301 : vector<16x1xf32>
    %303 = arith.subf %296, %302 : vector<16x1xf32>
    %304 = math.exp %303 : vector<16x1xf32>
    %305 = arith.subf %301, %302 : vector<16x1xf32>
    %306 = math.exp %305 : vector<16x1xf32>
    %307 = arith.addf %304, %306 : vector<16x1xf32>
    %cst_112 = arith.constant 1.000000e+00 : f32
    %308 = vector.broadcast %cst_112 : f32 to vector<16x1xf32>
    %309 = arith.divf %308, %307 : vector<16x1xf32>
    %310 = vector.broadcast %304 : vector<16x1xf32> to vector<16x32xf32>
    %311 = arith.mulf %310, %162 : vector<16x32xf32>
    %312 = vector.broadcast %306 : vector<16x1xf32> to vector<16x32xf32>
    %313 = arith.mulf %312, %291 : vector<16x32xf32>
    %314 = arith.addf %311, %313 : vector<16x32xf32>
    %315 = vector.broadcast %309 : vector<16x1xf32> to vector<16x32xf32>
    %316 = arith.mulf %314, %315 : vector<16x32xf32>
    %317 = vector.shape_cast %316 : vector<16x32xf32> to vector<2x8x32xf32>
    %c0_113 = arith.constant 0 : index
    %c0_114 = arith.constant 0 : index
    %c0_115 = arith.constant 0 : index
    %318 = vector.load %arg15[%c0_113, %c0_114, %c0_115] : memref<2x8x32xf32, #tpu.memory_space<vmem>>, vector<2x8x32xf32>
    tpu.vector_store %arg15[%c0_113, %c0_114, %c0_115], %317 {strides = array<i32>} : memref<2x8x32xf32, #tpu.memory_space<vmem>>, vector<2x8x32xf32>,
    return
  }
  func.func @transform_0(%arg0: i32) -> (i32, i32, i32) {
    %c0_i32 = arith.constant 0 : i32
    %c0_i32_0 = arith.constant 0 : i32
    %c0_i32_1 = arith.constant 0 : i32
    %c0_i32_2 = arith.constant 0 : i32
    return %c0_i32, %c0_i32_0, %c0_i32_1 : i32, i32, i32
  }
  func.func @transform_1(%arg0: i32) -> (i32, i32, i32) {
    %c0_i32 = arith.constant 0 : i32
    %c0_i32_0 = arith.constant 0 : i32
    %c0_i32_1 = arith.constant 0 : i32
    %c0_i32_2 = arith.constant 0 : i32
    return %c0_i32, %c0_i32_0, %c0_i32_1 : i32, i32, i32
  }
  func.func @transform_2(%arg0: i32) -> (i32, i32, i32) {
    %c0_i32 = arith.constant 0 : i32
    %c0_i32_0 = arith.constant 0 : i32
    %c0_i32_1 = arith.constant 0 : i32
    %c0_i32_2 = arith.constant 0 : i32
    return %c0_i32, %c0_i32_0, %c0_i32_1 : i32, i32, i32
  }
  func.func @transform_3(%arg0: i32) -> (i32, i32, i32, i32) {
    %c0_i32 = arith.constant 0 : i32
    %c0_i32_0 = arith.constant 0 : i32
    %c0_i32_1 = arith.constant 0 : i32
    %c0_i32_2 = arith.constant 0 : i32
    %c0_i32_3 = arith.constant 0 : i32
    return %c0_i32, %c0_i32_0, %c0_i32_1, %c0_i32_2 : i32, i32, i32, i32
  }
  func.func @transform_4(%arg0: i32) -> (i32, i32) {
    %c0_i32 = arith.constant 0 : i32
    %c0_i32_0 = arith.constant 0 : i32
    %c0_i32_1 = arith.constant 0 : i32
    return %c0_i32, %c0_i32_0 : i32, i32
  }
  func.func @transform_5(%arg0: i32) -> (i32, i32) {
    %c0_i32 = arith.constant 0 : i32
    %c0_i32_0 = arith.constant 0 : i32
    %c0_i32_1 = arith.constant 0 : i32
    return %c0_i32, %c0_i32_0 : i32, i32
  }
  func.func @transform_6(%arg0: i32) -> (i32, i32) {
    %c0_i32 = arith.constant 0 : i32
    %c0_i32_0 = arith.constant 0 : i32
    %c0_i32_1 = arith.constant 0 : i32
    return %c0_i32, %c0_i32_0 : i32, i32
  }
  func.func @transform_7(%arg0: i32) -> (i32, i32) {
    %c0_i32 = arith.constant 0 : i32
    %c0_i32_0 = arith.constant 0 : i32
    %c0_i32_1 = arith.constant 0 : i32
    return %c0_i32, %c0_i32_0 : i32, i32
  }
  func.func @transform_8(%arg0: i32) -> (i32, i32, i32) {
    %c0_i32 = arith.constant 0 : i32
    %c0_i32_0 = arith.constant 0 : i32
    %c0_i32_1 = arith.constant 0 : i32
    %c0_i32_2 = arith.constant 0 : i32
    return %c0_i32, %c0_i32_0, %c0_i32_1 : i32, i32, i32
  }
  func.func @transform_9(%arg0: i32) -> (i32, i32) {
    %c0_i32 = arith.constant 0 : i32
    %c0_i32_0 = arith.constant 0 : i32
    %c0_i32_1 = arith.constant 0 : i32
    return %c0_i32, %c0_i32_0 : i32, i32
  }
  func.func @transform_10(%arg0: i32) -> (i32, i32) {
    %c0_i32 = arith.constant 0 : i32
    %c0_i32_0 = arith.constant 0 : i32
    %c0_i32_1 = arith.constant 0 : i32
    return %c0_i32, %c0_i32_0 : i32, i32
  }
  func.func @transform_11(%arg0: i32) -> (i32, i32) {
    %c0_i32 = arith.constant 0 : i32
    %c0_i32_0 = arith.constant 0 : i32
    %c0_i32_1 = arith.constant 0 : i32
    return %c0_i32, %c0_i32_0 : i32, i32
  }
  func.func @transform_12(%arg0: i32) -> (i32, i32, i32) {
    %c0_i32 = arith.constant 0 : i32
    %c0_i32_0 = arith.constant 0 : i32
    %c0_i32_1 = arith.constant 0 : i32
    %c0_i32_2 = arith.constant 0 : i32
    return %c0_i32, %c0_i32_0, %c0_i32_1 : i32, i32, i32
  }
  func.func @transform_13(%arg0: i32) -> (i32, i32) {
    %c0_i32 = arith.constant 0 : i32
    %c0_i32_0 = arith.constant 0 : i32
    %c0_i32_1 = arith.constant 0 : i32
    return %c0_i32, %c0_i32_0 : i32, i32
  }
  func.func @transform_14(%arg0: i32) -> (i32, i32, i32) {
    %c0_i32 = arith.constant 0 : i32
    %c0_i32_0 = arith.constant 0 : i32
    %c0_i32_1 = arith.constant 0 : i32
    %c0_i32_2 = arith.constant 0 : i32
    return %c0_i32, %c0_i32_0, %c0_i32_1 : i32, i32, i32
  }
}

module attributes {stable_mosaic.version = 11 : i64} {
  func.func @_ffn_fuse_kernel(%arg0: i32, %arg1: memref<2x8x32xf32, #tpu.memory_space<vmem>>, %arg2: memref<2x8x32xf32, #tpu.memory_space<vmem>>, %arg3: memref<2x8x32xf32, #tpu.memory_space<vmem>>, %arg4: memref<32x64xbf16, #tpu.memory_space<vmem>>, %arg5: memref<1x64xf32, #tpu.memory_space<vmem>>, %arg6: memref<64x32xbf16, #tpu.memory_space<vmem>>, %arg7: memref<1x32xf32, #tpu.memory_space<vmem>>, %arg8: memref<2x8x32xf32, #tpu.memory_space<vmem>>) attributes {dimension_semantics = [#tpu.dimension_semantics<arbitrary>], iteration_bounds = array<i64: 1>, scalar_prefetch = 0 : i64, scratch_operands = 0 : i64, tpu.core_type = #tpu.core_type<tc>, window_params = [{pipeline_mode = #tpu.pipeline_mode<synchronous>, transform_indices = @transform_0, window_bounds = array<i64: 2, 8, 32>}, {pipeline_mode = #tpu.pipeline_mode<synchronous>, transform_indices = @transform_1, window_bounds = array<i64: 2, 8, 32>}, {pipeline_mode = #tpu.pipeline_mode<synchronous>, transform_indices = @transform_2, window_bounds = array<i64: 2, 8, 32>}, {pipeline_mode = #tpu.pipeline_mode<synchronous>, transform_indices = @transform_3, window_bounds = array<i64: 32, 64>}, {pipeline_mode = #tpu.pipeline_mode<synchronous>, transform_indices = @transform_4, window_bounds = array<i64: 1, 64>}, {pipeline_mode = #tpu.pipeline_mode<synchronous>, transform_indices = @transform_5, window_bounds = array<i64: 64, 32>}, {pipeline_mode = #tpu.pipeline_mode<synchronous>, transform_indices = @transform_6, window_bounds = array<i64: 1, 32>}, {pipeline_mode = #tpu.pipeline_mode<synchronous>, transform_indices = @transform_7, window_bounds = array<i64: 2, 8, 32>}]} {
    %c0 = arith.constant 0 : index
    %c0_0 = arith.constant 0 : index
    %c0_1 = arith.constant 0 : index
    %0 = vector.load %arg1[%c0, %c0_0, %c0_1] : memref<2x8x32xf32, #tpu.memory_space<vmem>>, vector<2x8x32xf32>
    %c0_2 = arith.constant 0 : index
    %c0_3 = arith.constant 0 : index
    %c0_4 = arith.constant 0 : index
    %1 = vector.load %arg2[%c0_2, %c0_3, %c0_4] : memref<2x8x32xf32, #tpu.memory_space<vmem>>, vector<2x8x32xf32>
    %c0_5 = arith.constant 0 : index
    %c0_6 = arith.constant 0 : index
    %c0_7 = arith.constant 0 : index
    %2 = vector.load %arg3[%c0_5, %c0_6, %c0_7] : memref<2x8x32xf32, #tpu.memory_space<vmem>>, vector<2x8x32xf32>
    %3 = arith.addf %1, %2 : vector<2x8x32xf32>
    %cst = arith.constant 5.000000e-01 : f32
    %4 = vector.broadcast %cst : f32 to vector<2x8x32xf32>
    %5 = arith.mulf %3, %4 : vector<2x8x32xf32>
    %6 = arith.addf %0, %5 : vector<2x8x32xf32>
    %7 = vector.shape_cast %6 : vector<2x8x32xf32> to vector<16x32xf32>
    %cst_8 = arith.constant dense<0.000000e+00> : vector<16xf32>
    %8 = vector.multi_reduction <add>, %7, %cst_8 [1] : vector<16x32xf32> to vector<16xf32>
    %9 = vector.shape_cast %8 : vector<16xf32> to vector<16x1xf32>
    %cst_9 = arith.constant 3.200000e+01 : f32
    %10 = vector.broadcast %cst_9 : f32 to vector<16x1xf32>
    %11 = arith.divf %9, %10 : vector<16x1xf32>
    %12 = vector.broadcast %11 : vector<16x1xf32> to vector<16x32xf32>
    %13 = arith.subf %7, %12 : vector<16x32xf32>
    %14 = arith.mulf %13, %13 : vector<16x32xf32>
    %cst_10 = arith.constant dense<0.000000e+00> : vector<16xf32>
    %15 = vector.multi_reduction <add>, %14, %cst_10 [1] : vector<16x32xf32> to vector<16xf32>
    %16 = vector.shape_cast %15 : vector<16xf32> to vector<16x1xf32>
    %cst_11 = arith.constant 3.200000e+01 : f32
    %17 = vector.broadcast %cst_11 : f32 to vector<16x1xf32>
    %18 = arith.divf %16, %17 : vector<16x1xf32>
    %19 = vector.broadcast %11 : vector<16x1xf32> to vector<16x32xf32>
    %20 = arith.subf %7, %19 : vector<16x32xf32>
    %cst_12 = arith.constant 9.99999974E-6 : f32
    %21 = vector.broadcast %cst_12 : f32 to vector<16x1xf32>
    %22 = arith.addf %18, %21 : vector<16x1xf32>
    %23 = math.rsqrt %22 : vector<16x1xf32>
    %24 = vector.broadcast %23 : vector<16x1xf32> to vector<16x32xf32>
    %25 = arith.mulf %20, %24 : vector<16x32xf32>
    %26 = arith.truncf %25 : vector<16x32xf32> to vector<16x32xbf16>
    %c0_13 = arith.constant 0 : index
    %c0_14 = arith.constant 0 : index
    %27 = vector.load %arg4[%c0_13, %c0_14] : memref<32x64xbf16, #tpu.memory_space<vmem>>, vector<32x64xbf16>
    %cst_15 = arith.constant dense<0.000000e+00> : vector<16x64xf32>
    %28 = tpu.matmul %26, %27, %cst_15 {dimension_numbers = #tpu.dot_dimension_numbers<[1], [0], [0], [1], [0, 0, 1, 1], [], []>} : vector<16x32xbf16>, vector<32x64xbf16>, vector<16x64xf32> -> vector<16x64xf32>
    %c0_16 = arith.constant 0 : index
    %c0_17 = arith.constant 0 : index
    %29 = vector.load %arg5[%c0_16, %c0_17] : memref<1x64xf32, #tpu.memory_space<vmem>>, vector<1x64xf32>
    %30 = vector.broadcast %29 : vector<1x64xf32> to vector<16x64xf32>
    %31 = arith.addf %28, %30 : vector<16x64xf32>
    %cst_18 = arith.constant 0.000000e+00 : f32
    %32 = vector.broadcast %cst_18 : f32 to vector<16x64xf32>
    %33 = arith.maximumf %31, %32 : vector<16x64xf32>
    %34 = arith.truncf %33 : vector<16x64xf32> to vector<16x64xbf16>
    %c0_19 = arith.constant 0 : index
    %c0_20 = arith.constant 0 : index
    %35 = vector.load %arg6[%c0_19, %c0_20] : memref<64x32xbf16, #tpu.memory_space<vmem>>, vector<64x32xbf16>
    %cst_21 = arith.constant dense<0.000000e+00> : vector<16x32xf32>
    %36 = tpu.matmul %34, %35, %cst_21 {dimension_numbers = #tpu.dot_dimension_numbers<[1], [0], [0], [1], [0, 0, 1, 1], [], []>} : vector<16x64xbf16>, vector<64x32xbf16>, vector<16x32xf32> -> vector<16x32xf32>
    %c0_22 = arith.constant 0 : index
    %c0_23 = arith.constant 0 : index
    %37 = vector.load %arg7[%c0_22, %c0_23] : memref<1x32xf32, #tpu.memory_space<vmem>>, vector<1x32xf32>
    %38 = vector.broadcast %37 : vector<1x32xf32> to vector<16x32xf32>
    %39 = arith.addf %36, %38 : vector<16x32xf32>
    %40 = vector.shape_cast %39 : vector<16x32xf32> to vector<2x8x32xf32>
    %41 = arith.addf %6, %40 : vector<2x8x32xf32>
    %c0_24 = arith.constant 0 : index
    %c0_25 = arith.constant 0 : index
    %c0_26 = arith.constant 0 : index
    %42 = vector.load %arg8[%c0_24, %c0_25, %c0_26] : memref<2x8x32xf32, #tpu.memory_space<vmem>>, vector<2x8x32xf32>
    tpu.vector_store %arg8[%c0_24, %c0_25, %c0_26], %41 {strides = array<i32>} : memref<2x8x32xf32, #tpu.memory_space<vmem>>, vector<2x8x32xf32>,
    return
  }
  func.func @transform_0(%arg0: i32) -> (i32, i32, i32) {
    %c0_i32 = arith.constant 0 : i32
    %c0_i32_0 = arith.constant 0 : i32
    %c0_i32_1 = arith.constant 0 : i32
    %c0_i32_2 = arith.constant 0 : i32
    return %c0_i32, %c0_i32_0, %c0_i32_1 : i32, i32, i32
  }
  func.func @transform_1(%arg0: i32) -> (i32, i32, i32) {
    %c0_i32 = arith.constant 0 : i32
    %c0_i32_0 = arith.constant 0 : i32
    %c0_i32_1 = arith.constant 0 : i32
    %c0_i32_2 = arith.constant 0 : i32
    return %c0_i32, %c0_i32_0, %c0_i32_1 : i32, i32, i32
  }
  func.func @transform_2(%arg0: i32) -> (i32, i32, i32) {
    %c0_i32 = arith.constant 0 : i32
    %c0_i32_0 = arith.constant 0 : i32
    %c0_i32_1 = arith.constant 0 : i32
    %c0_i32_2 = arith.constant 0 : i32
    return %c0_i32, %c0_i32_0, %c0_i32_1 : i32, i32, i32
  }
  func.func @transform_3(%arg0: i32) -> (i32, i32) {
    %c0_i32 = arith.constant 0 : i32
    %c0_i32_0 = arith.constant 0 : i32
    %c0_i32_1 = arith.constant 0 : i32
    return %c0_i32, %c0_i32_0 : i32, i32
  }
  func.func @transform_4(%arg0: i32) -> (i32, i32) {
    %c0_i32 = arith.constant 0 : i32
    %c0_i32_0 = arith.constant 0 : i32
    %c0_i32_1 = arith.constant 0 : i32
    return %c0_i32, %c0_i32_0 : i32, i32
  }
  func.func @transform_5(%arg0: i32) -> (i32, i32) {
    %c0_i32 = arith.constant 0 : i32
    %c0_i32_0 = arith.constant 0 : i32
    %c0_i32_1 = arith.constant 0 : i32
    return %c0_i32, %c0_i32_0 : i32, i32
  }
  func.func @transform_6(%arg0: i32) -> (i32, i32) {
    %c0_i32 = arith.constant 0 : i32
    %c0_i32_0 = arith.constant 0 : i32
    %c0_i32_1 = arith.constant 0 : i32
    return %c0_i32, %c0_i32_0 : i32, i32
  }
  func.func @transform_7(%arg0: i32) -> (i32, i32, i32) {
    %c0_i32 = arith.constant 0 : i32
    %c0_i32_0 = arith.constant 0 : i32
    %c0_i32_1 = arith.constant 0 : i32
    %c0_i32_2 = arith.constant 0 : i32
    return %c0_i32, %c0_i32_0, %c0_i32_1 : i32, i32, i32
  }
}

module attributes {stable_mosaic.version = 11 : i64} {
  func.func @_ln_kernel(%arg0: i32, %arg1: memref<2x8x32xf32, #tpu.memory_space<vmem>>, %arg2: memref<1x32xf32, #tpu.memory_space<vmem>>, %arg3: memref<1x32xf32, #tpu.memory_space<vmem>>, %arg4: memref<2x8x32xf32, #tpu.memory_space<vmem>>) attributes {dimension_semantics = [#tpu.dimension_semantics<arbitrary>], iteration_bounds = array<i64: 1>, scalar_prefetch = 0 : i64, scratch_operands = 0 : i64, tpu.core_type = #tpu.core_type<tc>, window_params = [{pipeline_mode = #tpu.pipeline_mode<synchronous>, transform_indices = @transform_0, window_bounds = array<i64: 2, 8, 32>}, {pipeline_mode = #tpu.pipeline_mode<synchronous>, transform_indices = @transform_1, window_bounds = array<i64: 1, 32>}, {pipeline_mode = #tpu.pipeline_mode<synchronous>, transform_indices = @transform_2, window_bounds = array<i64: 1, 32>}, {pipeline_mode = #tpu.pipeline_mode<synchronous>, transform_indices = @transform_3, window_bounds = array<i64: 2, 8, 32>}]} {
    %c0 = arith.constant 0 : index
    %c0_0 = arith.constant 0 : index
    %c0_1 = arith.constant 0 : index
    %0 = vector.load %arg1[%c0, %c0_0, %c0_1] : memref<2x8x32xf32, #tpu.memory_space<vmem>>, vector<2x8x32xf32>
    %1 = vector.shape_cast %0 : vector<2x8x32xf32> to vector<16x32xf32>
    %cst = arith.constant dense<0.000000e+00> : vector<16xf32>
    %2 = vector.multi_reduction <add>, %1, %cst [1] : vector<16x32xf32> to vector<16xf32>
    %3 = vector.shape_cast %2 : vector<16xf32> to vector<16x1xf32>
    %cst_2 = arith.constant 3.200000e+01 : f32
    %4 = vector.broadcast %cst_2 : f32 to vector<16x1xf32>
    %5 = arith.divf %3, %4 : vector<16x1xf32>
    %6 = vector.broadcast %5 : vector<16x1xf32> to vector<16x32xf32>
    %7 = arith.subf %1, %6 : vector<16x32xf32>
    %8 = arith.mulf %7, %7 : vector<16x32xf32>
    %cst_3 = arith.constant dense<0.000000e+00> : vector<16xf32>
    %9 = vector.multi_reduction <add>, %8, %cst_3 [1] : vector<16x32xf32> to vector<16xf32>
    %10 = vector.shape_cast %9 : vector<16xf32> to vector<16x1xf32>
    %cst_4 = arith.constant 3.200000e+01 : f32
    %11 = vector.broadcast %cst_4 : f32 to vector<16x1xf32>
    %12 = arith.divf %10, %11 : vector<16x1xf32>
    %13 = vector.broadcast %5 : vector<16x1xf32> to vector<16x32xf32>
    %14 = arith.subf %1, %13 : vector<16x32xf32>
    %cst_5 = arith.constant 9.99999974E-6 : f32
    %15 = vector.broadcast %cst_5 : f32 to vector<16x1xf32>
    %16 = arith.addf %12, %15 : vector<16x1xf32>
    %17 = math.rsqrt %16 : vector<16x1xf32>
    %18 = vector.broadcast %17 : vector<16x1xf32> to vector<16x32xf32>
    %19 = arith.mulf %14, %18 : vector<16x32xf32>
    %c0_6 = arith.constant 0 : index
    %c0_7 = arith.constant 0 : index
    %20 = vector.load %arg2[%c0_6, %c0_7] : memref<1x32xf32, #tpu.memory_space<vmem>>, vector<1x32xf32>
    %21 = vector.broadcast %20 : vector<1x32xf32> to vector<16x32xf32>
    %22 = arith.mulf %19, %21 : vector<16x32xf32>
    %c0_8 = arith.constant 0 : index
    %c0_9 = arith.constant 0 : index
    %23 = vector.load %arg3[%c0_8, %c0_9] : memref<1x32xf32, #tpu.memory_space<vmem>>, vector<1x32xf32>
    %24 = vector.broadcast %23 : vector<1x32xf32> to vector<16x32xf32>
    %25 = arith.addf %22, %24 : vector<16x32xf32>
    %26 = vector.shape_cast %25 : vector<16x32xf32> to vector<2x8x32xf32>
    %c0_10 = arith.constant 0 : index
    %c0_11 = arith.constant 0 : index
    %c0_12 = arith.constant 0 : index
    %27 = vector.load %arg4[%c0_10, %c0_11, %c0_12] : memref<2x8x32xf32, #tpu.memory_space<vmem>>, vector<2x8x32xf32>
    tpu.vector_store %arg4[%c0_10, %c0_11, %c0_12], %26 {strides = array<i32>} : memref<2x8x32xf32, #tpu.memory_space<vmem>>, vector<2x8x32xf32>,
    return
  }
  func.func @transform_0(%arg0: i32) -> (i32, i32, i32) {
    %c0_i32 = arith.constant 0 : i32
    %c0_i32_0 = arith.constant 0 : i32
    %c0_i32_1 = arith.constant 0 : i32
    %c0_i32_2 = arith.constant 0 : i32
    return %c0_i32, %c0_i32_0, %c0_i32_1 : i32, i32, i32
  }
  func.func @transform_1(%arg0: i32) -> (i32, i32) {
    %c0_i32 = arith.constant 0 : i32
    %c0_i32_0 = arith.constant 0 : i32
    %c0_i32_1 = arith.constant 0 : i32
    return %c0_i32, %c0_i32_0 : i32, i32
  }
  func.func @transform_2(%arg0: i32) -> (i32, i32) {
    %c0_i32 = arith.constant 0 : i32
    %c0_i32_0 = arith.constant 0 : i32
    %c0_i32_1 = arith.constant 0 : i32
    return %c0_i32, %c0_i32_0 : i32, i32
  }
  func.func @transform_3(%arg0: i32) -> (i32, i32, i32) {
    %c0_i32 = arith.constant 0 : i32
    %c0_i32_0 = arith.constant 0 : i32
    %c0_i32_1 = arith.constant 0 : i32
    %c0_i32_2 = arith.constant 0 : i32
    return %c0_i32, %c0_i32_0, %c0_i32_1 : i32, i32, i32
  }
}

</mosaic_0001>

<llo_original>
// kernel: decoder_forward.12
$region0: #{decoder_forward.12}
  #allocation0 [shape = 'u32[]', space=smem, size = 0x4, offset = 0x4, fixed_abs, tag = 'smem constant byte address 0x4 - core index']
  #allocation1 [shape = 'u32[144,128]{1,0:T(1,128)}', space=vmem, size = 0x12000, scoped, tag = 'internal scratch']
  %s0 = inlined_call_operand.hbm [shape: f32[2,8,32], index: 0, kind: input, shape index: {}, may-alias: {0,7}]
  %s1 = inlined_call_operand.hbm [shape: f32[2,8,32], index: 1, kind: input, shape index: {}]
  %s2 = inlined_call_operand.hbm [shape: f32[2,8,32], index: 2, kind: input, shape index: {}]
  %s3 = inlined_call_operand.hbm [shape: bf16[32,64], index: 3, kind: input, shape index: {}]
  %s4 = inlined_call_operand.hbm [shape: f32[1,64], index: 4, kind: input, shape index: {}]
  %s5 = inlined_call_operand.hbm [shape: bf16[64,32], index: 5, kind: input, shape index: {}]
  %s6 = inlined_call_operand.hbm [shape: f32[1,32], index: 6, kind: input, shape index: {}]
  %s7 = inlined_call_operand.hbm [shape: f32[2,8,32], index: 7, kind: output, shape index: {}, may-alias: {0,7}]
  %s8 = sld [smem:[#allocation0]]
  $region66: #{decoder_forward.12} parent=0
    _
  %s10 = ssub.s32 1, %s8
  %s11 = scalar_select 0, %s10, %s8
  $region1: #{decoder_forward.12} parent=0
    #allocation2 [shape = 'u8[8192]{0}', space=vmem, size = 0x2000, scoped, tag = 'input window, operand 0, single buffered']
    #allocation3 [shape = 's32[1]{0}', space=sflag, size = 0x4, scoped, tag = 'scoped memory for decoder_forward.12']
    #allocation4 [shape = 's32[1]{0}', space=sflag, size = 0x4, scoped, tag = 'scoped memory for decoder_forward.12']
    #allocation5 [shape = 'u8[8192]{0}', space=vmem, size = 0x2000, scoped, tag = 'input window, operand 1, single buffered']
    #allocation6 [shape = 's32[1]{0}', space=sflag, size = 0x4, scoped, tag = 'scoped memory for decoder_forward.12']
    #allocation7 [shape = 'u8[8192]{0}', space=vmem, size = 0x2000, scoped, tag = 'input window, operand 2, single buffered']
    #allocation8 [shape = 'u8[8192]{0}', space=vmem, size = 0x2000, scoped, tag = 'input window, operand 3, single buffered']
    #allocation9 [shape = 's32[1]{0}', space=sflag, size = 0x4, scoped, tag = 'scoped memory for decoder_forward.12']
    #allocation10 [shape = 'u8[512]{0}', space=vmem, size = 0x400, scoped, tag = 'input window, operand 4, single buffered']
    #allocation11 [shape = 'u8[16384]{0}', space=vmem, size = 0x4000, scoped, tag = 'input window, operand 5, single buffered']
    #allocation12 [shape = 's32[1]{0}', space=sflag, size = 0x4, scoped, tag = 'scoped memory for decoder_forward.12']
    #allocation13 [shape = 'u8[512]{0}', space=vmem, size = 0x400, scoped, tag = 'input window, operand 6, single buffered']
    #allocation14 [shape = 'u8[8192]{0}', space=vmem, size = 0x2000, scoped, tag = 'output window, operand 0, single buffered']
    %12 = vsyncpa [#allocation3], 0
    %13 = vsyncpa [#allocation6], 0
    %14 = vsyncpa [#allocation9], 0
    %15 = vsyncpa [#allocation12], 0
    %16 = vsyncpa [#allocation4], 0
    // Predicated region
    $region2: #{decoder_forward.12} parent=1 // pred_check
      _
    $region3: #{decoder_forward.12} parent=1 // pred_check_branch
      %18 = sbr.rel (0) target = $region5
    $region4: #{decoder_forward.12} parent=1 // pred_region
      %s20 = ssub.s32 256, 256
      %21 = vsyncadd [#allocation3], %s20
      %s22 = sshll.u32 [#allocation2], 4
      %s23 = int_to_ptr.vmem [resolvable:$true] %s22
      %28 = dma.hbm_to_vmem [thread:$0]  %s0, 256, %s23, [#allocation3], 128, 128, 8
    $region5: #{decoder_forward.12} parent=1 // pred_fallthru
      _
    // Predicated region
    $region6: #{decoder_forward.12} parent=1 // pred_check
      _
    $region7: #{decoder_forward.12} parent=1 // pred_check_branch
      %30 = sbr.rel (0) target = $region9
    $region8: #{decoder_forward.12} parent=1 // pred_region
      %s32 = ssub.s32 256, 256
      %33 = vsyncadd [#allocation6], %s32
      %s34 = sshll.u32 [#allocation5], 4
      %s35 = int_to_ptr.vmem [resolvable:$true] %s34
      %40 = dma.hbm_to_vmem [thread:$0]  %s1, 256, %s35, [#allocation6], 128, 128, 8
    $region9: #{decoder_forward.12} parent=1 // pred_fallthru
      _
    // Predicated region
    $region10: #{decoder_forward.12} parent=1 // pred_check
      _
    $region11: #{decoder_forward.12} parent=1 // pred_check_branch
      %42 = sbr.rel (0) target = $region13
    $region12: #{decoder_forward.12} parent=1 // pred_region
      %s44 = ssub.s32 256, 256
      %45 = vsyncadd [#allocation6], %s44
      %s46 = sshll.u32 [#allocation7], 4
      %s47 = int_to_ptr.vmem [resolvable:$true] %s46
      %52 = dma.hbm_to_vmem [thread:$0]  %s2, 256, %s47, [#allocation6], 128, 128, 8
    $region13: #{decoder_forward.12} parent=1 // pred_fallthru
      _
    // Predicated region
    $region14: #{decoder_forward.12} parent=1 // pred_check
      _
    $region15: #{decoder_forward.12} parent=1 // pred_check_branch
      %54 = sbr.rel (0) target = $region17
    $region16: #{decoder_forward.12} parent=1 // pred_region
      %s56 = ssub.s32 256, 256
      %57 = vsyncadd [#allocation9], %s56
      %s58 = sshll.u32 [#allocation8], 4
      %s59 = int_to_ptr.vmem [resolvable:$true] %s58
      %64 = dma.hbm_to_vmem [thread:$0]  %s3, 256, %s59, [#allocation9], 64, 64, 4
    $region17: #{decoder_forward.12} parent=1 // pred_fallthru
      _
    // Predicated region
    $region18: #{decoder_forward.12} parent=1 // pred_check
      _
    $region19: #{decoder_forward.12} parent=1 // pred_check_branch
      %66 = sbr.rel (0) target = $region21
    $region20: #{decoder_forward.12} parent=1 // pred_region
      %s68 = ssub.s32 16, 16
      %69 = vsyncadd [#allocation9], %s68
      %s71 = sshll.u32 [#allocation10], 4
      %s72 = int_to_ptr.vmem [resolvable:$true] %s71
      %74 = dma.hbm_to_vmem [thread:$0]  %s4, 16, %s72, [#allocation9]
    $region21: #{decoder_forward.12} parent=1 // pred_fallthru
      _
    // Predicated region
    $region22: #{decoder_forward.12} parent=1 // pred_check
      _
    $region23: #{decoder_forward.12} parent=1 // pred_check_branch
      %76 = sbr.rel (0) target = $region25
    $region24: #{decoder_forward.12} parent=1 // pred_region
      %s78 = ssub.s32 512, 512
      %79 = vsyncadd [#allocation12], %s78
      %s80 = sshll.u32 [#allocation11], 4
      %s81 = int_to_ptr.vmem [resolvable:$true] %s80
      %86 = dma.hbm_to_vmem [thread:$0]  %s5, 512, %s81, [#allocation12], 64, 64, 4
    $region25: #{decoder_forward.12} parent=1 // pred_fallthru
      _
    // Predicated region
    $region26: #{decoder_forward.12} parent=1 // pred_check
      _
    $region27: #{decoder_forward.12} parent=1 // pred_check_branch
      %88 = sbr.rel (0) target = $region29
    $region28: #{decoder_forward.12} parent=1 // pred_region
      %s90 = ssub.s32 16, 16
      %91 = vsyncadd [#allocation12], %s90
      %s93 = sshll.u32 [#allocation13], 4
      %s94 = int_to_ptr.vmem [resolvable:$true] %s93
      %96 = dma.hbm_to_vmem [thread:$0]  %s6, 16, %s94, [#allocation12]
    $region29: #{decoder_forward.12} parent=1 // pred_fallthru
      _
    // Predicated region
    $region30: #{decoder_forward.12} parent=1 // pred_check
      _
    $region31: #{decoder_forward.12} parent=1 // pred_check_branch
      %98 = sbr.rel (0) target = $region33
    $region32: #{decoder_forward.12} parent=1 // pred_region
      %99 = dma.done [#allocation3], 256
    $region33: #{decoder_forward.12} parent=1 // pred_fallthru
      _
    // Predicated region
    $region34: #{decoder_forward.12} parent=1 // pred_check
      _
    $region35: #{decoder_forward.12} parent=1 // pred_check_branch
      %101 = sbr.rel (0) target = $region37
    $region36: #{decoder_forward.12} parent=1 // pred_region
      %102 = dma.done [#allocation6], 256
    $region37: #{decoder_forward.12} parent=1 // pred_fallthru
      _
    // Predicated region
    $region38: #{decoder_forward.12} parent=1 // pred_check
      _
    $region39: #{decoder_forward.12} parent=1 // pred_check_branch
      %104 = sbr.rel (0) target = $region41
    $region40: #{decoder_forward.12} parent=1 // pred_region
      %105 = dma.done [#allocation6], 256
    $region41: #{decoder_forward.12} parent=1 // pred_fallthru
      _
    // Predicated region
    $region42: #{decoder_forward.12} parent=1 // pred_check
      _
    $region43: #{decoder_forward.12} parent=1 // pred_check_branch
      %107 = sbr.rel (0) target = $region45
    $region44: #{decoder_forward.12} parent=1 // pred_region
      %108 = dma.done [#allocation9], 256
    $region45: #{decoder_forward.12} parent=1 // pred_fallthru
      _
    // Predicated region
    $region46: #{decoder_forward.12} parent=1 // pred_check
      _
    $region47: #{decoder_forward.12} parent=1 // pred_check_branch
      %110 = sbr.rel (0) target = $region49
    $region48: #{decoder_forward.12} parent=1 // pred_region
      %111 = dma.done [#allocation9], 16
    $region49: #{decoder_forward.12} parent=1 // pred_fallthru
      _
    // Predicated region
    $region50: #{decoder_forward.12} parent=1 // pred_check
      _
    $region51: #{decoder_forward.12} parent=1 // pred_check_branch
      %113 = sbr.rel (0) target = $region53
    $region52: #{decoder_forward.12} parent=1 // pred_region
      %114 = dma.done [#allocation12], 512
    $region53: #{decoder_forward.12} parent=1 // pred_fallthru
      _
    // Predicated region
    $region54: #{decoder_forward.12} parent=1 // pred_check
      _
    $region55: #{decoder_forward.12} parent=1 // pred_check_branch
      %116 = sbr.rel (0) target = $region57
    $region56: #{decoder_forward.12} parent=1 // pred_region
      %117 = dma.done [#allocation12], 16
    $region57: #{decoder_forward.12} parent=1 // pred_fallthru
      _
    %v119 = vld [vmem:[#allocation2] sm:$0xff]
    %v120 = vld [vmem:[#allocation2 + $0x8] sm:$0xff]
    %v121 = vld [vmem:[#allocation5] sm:$0xff]
    %v122 = vld [vmem:[#allocation5 + $0x8] sm:$0xff]
    %v123 = vld [vmem:[#allocation7] sm:$0xff]
    %v124 = vld [vmem:[#allocation7 + $0x8] sm:$0xff]
    %v125 = vadd.f32 %v121, %v123
    %v126 = vadd.f32 %v122, %v124
    %v127 = vmul.f32 %v125, 0.5
    %v128 = vmul.f32 %v126, 0.5
    %v129 = vadd.f32 %v119, %v127
    %v130 = vadd.f32 %v120, %v128
    %vm131 = vcmask 261120
    %v132 = vsel %vm131, %v129, 0.0
    %133 = vadd.xlane.f32.xlu0 %v132
    %v134 = vpop.xlane.xlu0 %133
    %v135 = vsel %vm131, %v130, 0.0
    %136 = vadd.xlane.f32.xlu0 %v135
    %v137 = vpop.xlane.xlu0 %136
    %v138 = vrcp.pop 32.0
    %v139 = vmul.f32 %v134, %v138
    %v140 = vmul.f32 %v137, %v138
    %v141 = vsub.f32 %v129, %v139
    %v142 = vsub.f32 %v130, %v140
    %v143 = vmul.f32 %v141, %v141
    %v144 = vmul.f32 %v142, %v142
    %v145 = vsel %vm131, %v143, 0.0
    %146 = vadd.xlane.f32.xlu0 %v145
    %v147 = vpop.xlane.xlu0 %146
    %v148 = vsel %vm131, %v144, 0.0
    %149 = vadd.xlane.f32.xlu0 %v148
    %v150 = vpop.xlane.xlu0 %149
    %v151 = vmul.f32 %v147, %v138
    %v152 = vmul.f32 %v150, %v138
    %v153 = vadd.f32 %v151, 1e-05
    %v154 = vadd.f32 %v152, 1e-05
    %v155 = vrsqrt.pop %v153
    %v156 = vrsqrt.pop %v154
    %v157 = vmul.f32 %v141, %v155
    %v158 = vmul.f32 %v142, %v156
    %v159 = vpack.c.bf16 %v158, %v157
    %v160 = vld [vmem:[#allocation8] sm:$0xf]
    %v161 = vld [vmem:[#allocation8 + $0x4] sm:$0xf]
    %v162 = vld [vmem:[#allocation8 + $0x8] sm:$0xf]
    %v163 = vld [vmem:[#allocation8 + $0xc] sm:$0xf]
    %v164 = vld [vmem:[#allocation10] sm:$0x1]
    %v166 = vlaneseq
    %v167 = vshrl.u32 %v166, 7
    %v168 = vsub.s32 0, %v167
    %v169 = vrot.slane %v164, %v168
    %v175 = vunpack.c.l.b16 %v160
    %v176 = vunpack.c.l.b16 %v161
    %v177 = vunpack.c.l.b16 %v162
    %v178 = vunpack.c.l.b16 %v163
    %v179 = vpack.c.b16 %v176, %v175
    %v180 = vpack.c.b16 %v178, %v177
    %v184 = vsel %vm131, %v159, 0
    %186 = vmatprep.subr.bf16.mxu0 0
    %187 = vmatpush1.bf16.msra.mxu0 %v179
    %188 = vmatprep.subr.bf16.mxu0 0
    %189 = vmatpush1.bf16.msra.mxu0 %v180
    %190 = vmatprep.subr.bf16.mxu0 0
    %191 = vmatpush1.bf16.msra.mxu0 0
    %192 = vmatprep.subr.bf16.mxu0 0
    %193 = vmatpush1.bf16.msra.mxu0 0
    %194 = vmatprep.subr.bf16.mxu0 0
    %195 = vmatpush1.bf16.msra.mxu0 0
    %196 = vmatprep.subr.bf16.mxu0 0
    %197 = vmatpush1.bf16.msra.mxu0 0
    %198 = vmatprep.subr.bf16.mxu0 0
    %199 = vmatpush1.bf16.msra.mxu0 0
    %200 = vmatprep.subr.bf16.mxu0 0
    %201 = vmatpush1.bf16.msra.mxu0 0
    %202 = vmatprep.subr.bf16.mxu0 0
    %203 = vmatpush1.bf16.msra.mxu0 0
    %204 = vmatprep.subr.bf16.mxu0 0
    %205 = vmatpush1.bf16.msra.mxu0 0
    %206 = vmatprep.subr.bf16.mxu0 0
    %207 = vmatpush1.bf16.msra.mxu0 0
    %208 = vmatprep.subr.bf16.mxu0 0
    %209 = vmatpush1.bf16.msra.mxu0 0
    %210 = vmatprep.subr.bf16.mxu0 0
    %211 = vmatpush1.bf16.msra.mxu0 0
    %212 = vmatprep.subr.bf16.mxu0 0
    %213 = vmatpush1.bf16.msra.mxu0 0
    %214 = vmatprep.subr.bf16.mxu0 0
    %215 = vmatpush1.bf16.msra.mxu0 0
    %216 = vmatprep.subr.bf16.mxu0 0
    %217 = vmatpush1.bf16.msra.mxu0 0
    %218 = vmatprep.mubr.bf16.mxu0 0
    %219 = vmatmul.mubr.bf16.gmra.mrb[0].mxu0 %v184
    %v220 = vpop.f32.mrb[0].mxu0
    %v221 = vadd.f32 %v169, %v220
    %v222 = vpop.f32.mrb[0].mxu0
    %v223 = vpop.f32.mrb[0].mxu0
    %v224 = vadd.f32 %v169, %v223
    %v225 = vpop.f32.mrb[0].mxu0
    %226 = vdwg.mxu0
    %v227 = vmax.f32 %v221, 0.0
    %v228 = vmax.f32 %v224, 0.0
    %v229 = vpack.c.bf16 %v228, %v227
    %v230 = vld [vmem:[#allocation11] sm:$0xf]
    %v231 = vld [vmem:[#allocation11 + $0x4] sm:$0xf]
    %v232 = vld [vmem:[#allocation11 + $0x8] sm:$0xf]
    %v233 = vld [vmem:[#allocation11 + $0xc] sm:$0xf]
    %v234 = vld [vmem:[#allocation11 + $0x10] sm:$0xf]
    %v235 = vld [vmem:[#allocation11 + $0x14] sm:$0xf]
    %v236 = vld [vmem:[#allocation11 + $0x18] sm:$0xf]
    %v237 = vld [vmem:[#allocation11 + $0x1c] sm:$0xf]
    %v238 = vld [vmem:[#allocation13] sm:$0x1]
    %v240 = vlaneseq
    %v241 = vshrl.u32 %v240, 7
    %v242 = vsub.s32 0, %v241
    %v243 = vrot.slane %v238, %v242
    %v253 = vunpack.c.l.b16 %v230
    %v254 = vunpack.c.l.b16 %v231
    %v255 = vunpack.c.l.b16 %v232
    %v256 = vunpack.c.l.b16 %v233
    %v257 = vunpack.c.l.b16 %v234
    %v258 = vunpack.c.l.b16 %v235
    %v259 = vunpack.c.l.b16 %v236
    %v260 = vunpack.c.l.b16 %v237
    %v261 = vpack.c.b16 %v254, %v253
    %v262 = vpack.c.b16 %v256, %v255
    %v263 = vpack.c.b16 %v258, %v257
    %v264 = vpack.c.b16 %v260, %v259
    %vm269 = vcmask 523264
    %v271 = vsel %vm269, %v229, 0
    %273 = vmatprep.subr.bf16.mxu0 0
    %274 = vmatpush1.bf16.msra.mxu0 %v261
    %275 = vmatprep.subr.bf16.mxu0 0
    %276 = vmatpush1.bf16.msra.mxu0 %v262
    %277 = vmatprep.subr.bf16.mxu0 0
    %278 = vmatpush1.bf16.msra.mxu0 %v263
    %279 = vmatprep.subr.bf16.mxu0 0
    %280 = vmatpush1.bf16.msra.mxu0 %v264
    %281 = vmatprep.subr.bf16.mxu0 0
    %282 = vmatpush1.bf16.msra.mxu0 0
    %283 = vmatprep.subr.bf16.mxu0 0
    %284 = vmatpush1.bf16.msra.mxu0 0
    %285 = vmatprep.subr.bf16.mxu0 0
    %286 = vmatpush1.bf16.msra.mxu0 0
    %287 = vmatprep.subr.bf16.mxu0 0
    %288 = vmatpush1.bf16.msra.mxu0 0
    %289 = vmatprep.subr.bf16.mxu0 0
    %290 = vmatpush1.bf16.msra.mxu0 0
    %291 = vmatprep.subr.bf16.mxu0 0
    %292 = vmatpush1.bf16.msra.mxu0 0
    %293 = vmatprep.subr.bf16.mxu0 0
    %294 = vmatpush1.bf16.msra.mxu0 0
    %295 = vmatprep.subr.bf16.mxu0 0
    %296 = vmatpush1.bf16.msra.mxu0 0
    %297 = vmatprep.subr.bf16.mxu0 0
    %298 = vmatpush1.bf16.msra.mxu0 0
    %299 = vmatprep.subr.bf16.mxu0 0
    %300 = vmatpush1.bf16.msra.mxu0 0
    %301 = vmatprep.subr.bf16.mxu0 0
    %302 = vmatpush1.bf16.msra.mxu0 0
    %303 = vmatprep.subr.bf16.mxu0 0
    %304 = vmatpush1.bf16.msra.mxu0 0
    %305 = vmatprep.mubr.bf16.mxu0 0
    %306 = vmatmul.mubr.bf16.gmra.mrb[0].mxu0 %v271
    %v307 = vpop.f32.mrb[0].mxu0
    %v308 = vadd.f32 %v243, %v307
    %v309 = vpop.f32.mrb[0].mxu0
    %v310 = vpop.f32.mrb[0].mxu0
    %v311 = vadd.f32 %v243, %v310
    %v312 = vpop.f32.mrb[0].mxu0
    %313 = vdwg.mxu0
    %v314 = vadd.f32 %v129, %v308
    %v315 = vadd.f32 %v130, %v311
    %316 = vst.msk [vmem:[#allocation14] sm:$0xff] %vm131, %v314
    %317 = vst.msk [vmem:[#allocation14 + $0x8] sm:$0xff] %vm131, %v315
    // Predicated region
    $region58: #{decoder_forward.12} parent=1 // pred_check
      _
    $region59: #{decoder_forward.12} parent=1 // pred_check_branch
      %319 = sbr.rel (0) target = $region61
    $region60: #{decoder_forward.12} parent=1 // pred_region
      %s321 = ssub.s32 256, 256
      %322 = vsyncadd [#allocation4], %s321
      %s323 = sshll.u32 [#allocation14], 4
      %s324 = int_to_ptr.vmem [resolvable:$true] %s323
      %329 = dma.vmem_to_hbm [thread:$0]  %s324, 256, %s7, [#allocation4], 128, 128, 8
    $region61: #{decoder_forward.12} parent=1 // pred_fallthru
      _
    // Predicated region
    $region62: #{decoder_forward.12} parent=1 // pred_check
      _
    $region63: #{decoder_forward.12} parent=1 // pred_check_branch
      %331 = sbr.rel (0) target = $region65
    $region64: #{decoder_forward.12} parent=1 // pred_region
      %332 = dma.done [#allocation4], 256
    $region65: #{decoder_forward.12} parent=1 // pred_fallthru
      _
    %333 = vsyncpa [#allocation3], 1
    %334 = vsyncpa [#allocation6], 1
    %335 = vsyncpa [#allocation9], 1
    %336 = vsyncpa [#allocation12], 1
    %337 = vsyncpa [#allocation4], 1

// kernel: decoder_forward.9
$region0: #{decoder_forward.9}
  #allocation0 [shape = 'u32[]', space=smem, size = 0x4, offset = 0x4, fixed_abs, tag = 'smem constant byte address 0x4 - core index']
  #allocation1 [shape = 'u32[144,128]{1,0:T(1,128)}', space=vmem, size = 0x12000, scoped, tag = 'internal scratch']
  %s0 = inlined_call_operand.hbm [shape: f32[2,8,32], index: 0, kind: input, shape index: {}, may-alias: {0,6}]
  %s1 = inlined_call_operand.hbm [shape: f32[2,1,8,8], index: 1, kind: input, shape index: {}]
  %s2 = inlined_call_operand.hbm [shape: bf16[32,96], index: 2, kind: input, shape index: {}]
  %s3 = inlined_call_operand.hbm [shape: f32[1,96], index: 3, kind: input, shape index: {}]
  %s4 = inlined_call_operand.hbm [shape: bf16[4,8,32], index: 4, kind: input, shape index: {}]
  %s5 = inlined_call_operand.hbm [shape: f32[1,32], index: 5, kind: input, shape index: {}]
  %s6 = inlined_call_operand.hbm [shape: f32[2,8,32], index: 6, kind: output, shape index: {}, may-alias: {0,6}]
  %s7 = sld [smem:[#allocation0]]
  $region58: #{decoder_forward.9} parent=0
    _
  %s9 = ssub.s32 1, %s7
  %s10 = scalar_select 0, %s9, %s7
  $region1: #{decoder_forward.9} parent=0
    #allocation2 [shape = 'u8[8192]{0}', space=vmem, size = 0x2000, scoped, tag = 'input window, operand 0, single buffered']
    #allocation3 [shape = 's32[1]{0}', space=sflag, size = 0x4, scoped, tag = 'scoped memory for decoder_forward.9']
    #allocation4 [shape = 's32[1]{0}', space=sflag, size = 0x4, scoped, tag = 'scoped memory for decoder_forward.9']
    #allocation5 [shape = 'u8[8192]{0}', space=vmem, size = 0x2000, scoped, tag = 'input window, operand 1, single buffered']
    #allocation6 [shape = 's32[1]{0}', space=sflag, size = 0x4, scoped, tag = 'scoped memory for decoder_forward.9']
    #allocation7 [shape = 'u8[8192]{0}', space=vmem, size = 0x2000, scoped, tag = 'input window, operand 2, single buffered']
    #allocation8 [shape = 'u8[512]{0}', space=vmem, size = 0x400, scoped, tag = 'input window, operand 3, single buffered']
    #allocation9 [shape = 's32[1]{0}', space=sflag, size = 0x4, scoped, tag = 'scoped memory for decoder_forward.9']
    #allocation10 [shape = 'u8[8192]{0}', space=vmem, size = 0x2000, scoped, tag = 'input window, operand 4, single buffered']
    #allocation11 [shape = 'u8[512]{0}', space=vmem, size = 0x400, scoped, tag = 'input window, operand 5, single buffered']
    #allocation12 [shape = 's32[1]{0}', space=sflag, size = 0x4, scoped, tag = 'scoped memory for decoder_forward.9']
    #allocation13 [shape = 'u8[8192]{0}', space=vmem, size = 0x2000, scoped, tag = 'output window, operand 0, single buffered']
    %11 = vsyncpa [#allocation3], 0
    %12 = vsyncpa [#allocation6], 0
    %13 = vsyncpa [#allocation9], 0
    %14 = vsyncpa [#allocation12], 0
    %15 = vsyncpa [#allocation4], 0
    // Predicated region
    $region2: #{decoder_forward.9} parent=1 // pred_check
      _
    $region3: #{decoder_forward.9} parent=1 // pred_check_branch
      %17 = sbr.rel (0) target = $region5
    $region4: #{decoder_forward.9} parent=1 // pred_region
      %s19 = ssub.s32 256, 256
      %20 = vsyncadd [#allocation3], %s19
      %s21 = sshll.u32 [#allocation2], 4
      %s22 = int_to_ptr.vmem [resolvable:$true] %s21
      %27 = dma.hbm_to_vmem [thread:$0]  %s0, 256, %s22, [#allocation3], 128, 128, 8
    $region5: #{decoder_forward.9} parent=1 // pred_fallthru
      _
    // Predicated region
    $region6: #{decoder_forward.9} parent=1 // pred_check
      _
    $region7: #{decoder_forward.9} parent=1 // pred_check_branch
      %29 = sbr.rel (0) target = $region9
    $region8: #{decoder_forward.9} parent=1 // pred_region
      %s31 = ssub.s32 256, 256
      %32 = vsyncadd [#allocation6], %s31
      %s33 = sshll.u32 [#allocation5], 4
      %s34 = int_to_ptr.vmem [resolvable:$true] %s33
      %39 = dma.hbm_to_vmem [thread:$0]  %s1, 256, %s34, [#allocation6], 128, 128, 8
    $region9: #{decoder_forward.9} parent=1 // pred_fallthru
      _
    // Predicated region
    $region10: #{decoder_forward.9} parent=1 // pred_check
      _
    $region11: #{decoder_forward.9} parent=1 // pred_check_branch
      %41 = sbr.rel (0) target = $region13
    $region12: #{decoder_forward.9} parent=1 // pred_region
      %s43 = ssub.s32 256, 256
      %44 = vsyncadd [#allocation6], %s43
      %s45 = sshll.u32 [#allocation7], 4
      %s46 = int_to_ptr.vmem [resolvable:$true] %s45
      %51 = dma.hbm_to_vmem [thread:$0]  %s2, 256, %s46, [#allocation6], 64, 64, 4
    $region13: #{decoder_forward.9} parent=1 // pred_fallthru
      _
    // Predicated region
    $region14: #{decoder_forward.9} parent=1 // pred_check
      _
    $region15: #{decoder_forward.9} parent=1 // pred_check_branch
      %53 = sbr.rel (0) target = $region17
    $region16: #{decoder_forward.9} parent=1 // pred_region
      %s55 = ssub.s32 16, 16
      %56 = vsyncadd [#allocation9], %s55
      %s58 = sshll.u32 [#allocation8], 4
      %s59 = int_to_ptr.vmem [resolvable:$true] %s58
      %61 = dma.hbm_to_vmem [thread:$0]  %s3, 16, %s59, [#allocation9]
    $region17: #{decoder_forward.9} parent=1 // pred_fallthru
      _
    // Predicated region
    $region18: #{decoder_forward.9} parent=1 // pred_check
      _
    $region19: #{decoder_forward.9} parent=1 // pred_check_branch
      %63 = sbr.rel (0) target = $region21
    $region20: #{decoder_forward.9} parent=1 // pred_region
      %s65 = ssub.s32 256, 256
      %66 = vsyncadd [#allocation9], %s65
      %s67 = sshll.u32 [#allocation10], 4
      %s68 = int_to_ptr.vmem [resolvable:$true] %s67
      %73 = dma.hbm_to_vmem [thread:$0]  %s4, 256, %s68, [#allocation9], 64, 64, 4
    $region21: #{decoder_forward.9} parent=1 // pred_fallthru
      _
    // Predicated region
    $region22: #{decoder_forward.9} parent=1 // pred_check
      _
    $region23: #{decoder_forward.9} parent=1 // pred_check_branch
      %75 = sbr.rel (0) target = $region25
    $region24: #{decoder_forward.9} parent=1 // pred_region
      %s77 = ssub.s32 16, 16
      %78 = vsyncadd [#allocation12], %s77
      %s80 = sshll.u32 [#allocation11], 4
      %s81 = int_to_ptr.vmem [resolvable:$true] %s80
      %83 = dma.hbm_to_vmem [thread:$0]  %s5, 16, %s81, [#allocation12]
    $region25: #{decoder_forward.9} parent=1 // pred_fallthru
      _
    // Predicated region
    $region26: #{decoder_forward.9} parent=1 // pred_check
      _
    $region27: #{decoder_forward.9} parent=1 // pred_check_branch
      %85 = sbr.rel (0) target = $region29
    $region28: #{decoder_forward.9} parent=1 // pred_region
      %86 = dma.done [#allocation3], 256
    $region29: #{decoder_forward.9} parent=1 // pred_fallthru
      _
    // Predicated region
    $region30: #{decoder_forward.9} parent=1 // pred_check
      _
    $region31: #{decoder_forward.9} parent=1 // pred_check_branch
      %88 = sbr.rel (0) target = $region33
    $region32: #{decoder_forward.9} parent=1 // pred_region
      %89 = dma.done [#allocation6], 256
    $region33: #{decoder_forward.9} parent=1 // pred_fallthru
      _
    // Predicated region
    $region34: #{decoder_forward.9} parent=1 // pred_check
      _
    $region35: #{decoder_forward.9} parent=1 // pred_check_branch
      %91 = sbr.rel (0) target = $region37
    $region36: #{decoder_forward.9} parent=1 // pred_region
      %92 = dma.done [#allocation6], 256
    $region37: #{decoder_forward.9} parent=1 // pred_fallthru
      _
    // Predicated region
    $region38: #{decoder_forward.9} parent=1 // pred_check
      _
    $region39: #{decoder_forward.9} parent=1 // pred_check_branch
      %94 = sbr.rel (0) target = $region41
    $region40: #{decoder_forward.9} parent=1 // pred_region
      %95 = dma.done [#allocation9], 16
    $region41: #{decoder_forward.9} parent=1 // pred_fallthru
      _
    // Predicated region
    $region42: #{decoder_forward.9} parent=1 // pred_check
      _
    $region43: #{decoder_forward.9} parent=1 // pred_check_branch
      %97 = sbr.rel (0) target = $region45
    $region44: #{decoder_forward.9} parent=1 // pred_region
      %98 = dma.done [#allocation9], 256
    $region45: #{decoder_forward.9} parent=1 // pred_fallthru
      _
    // Predicated region
    $region46: #{decoder_forward.9} parent=1 // pred_check
      _
    $region47: #{decoder_forward.9} parent=1 // pred_check_branch
      %100 = sbr.rel (0) target = $region49
    $region48: #{decoder_forward.9} parent=1 // pred_region
      %101 = dma.done [#allocation12], 16
    $region49: #{decoder_forward.9} parent=1 // pred_fallthru
      _
    %v103 = vld [vmem:[#allocation2] sm:$0xff]
    %v104 = vld [vmem:[#allocation2 + $0x8] sm:$0xff]
    %vm105 = vcmask 261120
    %v106 = vsel %vm105, %v103, 0.0
    %107 = vadd.xlane.f32.xlu0 %v106
    %v108 = vpop.xlane.xlu0 %107
    %v109 = vsel %vm105, %v104, 0.0
    %110 = vadd.xlane.f32.xlu0 %v109
    %v111 = vpop.xlane.xlu0 %110
    %v112 = vrcp.pop 32.0
    %v113 = vmul.f32 %v108, %v112
    %v114 = vmul.f32 %v111, %v112
    %v115 = vsub.f32 %v103, %v113
    %v116 = vsub.f32 %v104, %v114
    %v117 = vmul.f32 %v115, %v115
    %v118 = vmul.f32 %v116, %v116
    %v119 = vsel %vm105, %v117, 0.0
    %120 = vadd.xlane.f32.xlu0 %v119
    %v121 = vpop.xlane.xlu0 %120
    %v122 = vsel %vm105, %v118, 0.0
    %123 = vadd.xlane.f32.xlu0 %v122
    %v124 = vpop.xlane.xlu0 %123
    %v125 = vmul.f32 %v121, %v112
    %v126 = vmul.f32 %v124, %v112
    %v127 = vadd.f32 %v125, 1e-05
    %v128 = vadd.f32 %v126, 1e-05
    %v129 = vrsqrt.pop %v127
    %v130 = vrsqrt.pop %v128
    %v131 = vmul.f32 %v115, %v129
    %v132 = vmul.f32 %v116, %v130
    %v133 = vpack.c.bf16 %v132, %v131
    %v134 = vld [vmem:[#allocation7] sm:$0xf]
    %v135 = vld [vmem:[#allocation7 + $0x4] sm:$0xf]
    %v136 = vld [vmem:[#allocation7 + $0x8] sm:$0xf]
    %v137 = vld [vmem:[#allocation7 + $0xc] sm:$0xf]
    %v138 = vld [vmem:[#allocation8] sm:$0x1]
    %v140 = vlaneseq
    %v141 = vshrl.u32 %v140, 7
    %v142 = vsub.s32 0, %v141
    %v143 = vrot.slane %v138, %v142
    %v149 = vunpack.c.l.b16 %v134
    %v150 = vunpack.c.l.b16 %v135
    %v151 = vunpack.c.l.b16 %v136
    %v152 = vunpack.c.l.b16 %v137
    %v153 = vpack.c.b16 %v150, %v149
    %v154 = vpack.c.b16 %v152, %v151
    %v158 = vsel %vm105, %v133, 0
    %160 = vmatprep.subr.bf16.mxu0 0
    %161 = vmatpush1.bf16.msra.mxu0 %v153
    %162 = vmatprep.subr.bf16.mxu0 0
    %163 = vmatpush1.bf16.msra.mxu0 %v154
    %164 = vmatprep.subr.bf16.mxu0 0
    %165 = vmatpush1.bf16.msra.mxu0 0
    %166 = vmatprep.subr.bf16.mxu0 0
    %167 = vmatpush1.bf16.msra.mxu0 0
    %168 = vmatprep.subr.bf16.mxu0 0
    %169 = vmatpush1.bf16.msra.mxu0 0
    %170 = vmatprep.subr.bf16.mxu0 0
    %171 = vmatpush1.bf16.msra.mxu0 0
    %172 = vmatprep.subr.bf16.mxu0 0
    %173 = vmatpush1.bf16.msra.mxu0 0
    %174 = vmatprep.subr.bf16.mxu0 0
    %175 = vmatpush1.bf16.msra.mxu0 0
    %176 = vmatprep.subr.bf16.mxu0 0
    %177 = vmatpush1.bf16.msra.mxu0 0
    %178 = vmatprep.subr.bf16.mxu0 0
    %179 = vmatpush1.bf16.msra.mxu0 0
    %180 = vmatprep.subr.bf16.mxu0 0
    %181 = vmatpush1.bf16.msra.mxu0 0
    %182 = vmatprep.subr.bf16.mxu0 0
    %183 = vmatpush1.bf16.msra.mxu0 0
    %184 = vmatprep.subr.bf16.mxu0 0
    %185 = vmatpush1.bf16.msra.mxu0 0
    %186 = vmatprep.subr.bf16.mxu0 0
    %187 = vmatpush1.bf16.msra.mxu0 0
    %188 = vmatprep.subr.bf16.mxu0 0
    %189 = vmatpush1.bf16.msra.mxu0 0
    %190 = vmatprep.subr.bf16.mxu0 0
    %191 = vmatpush1.bf16.msra.mxu0 0
    %192 = vmatprep.mubr.bf16.mxu0 0
    %193 = vmatmul.mubr.bf16.gmra.mrb[0].mxu0 %v158
    %v194 = vpop.f32.mrb[0].mxu0
    %v195 = vadd.f32 %v143, %v194
    %v196 = vpop.f32.mrb[0].mxu0
    %v197 = vpop.f32.mrb[0].mxu0
    %v198 = vadd.f32 %v143, %v197
    %v199 = vpop.f32.mrb[0].mxu0
    %200 = vdwg.mxu0
    %v201 = vld [vmem:[#allocation5] sm:$0xff]
    %v202 = vld [vmem:[#allocation5 + $0x8] sm:$0xff]
    %v203 = vsub.f32 %v201, 1.0
    %v204 = vsub.f32 %v202, 1.0
    %v205 = vmul.f32 %v203, 1e+09
    %v206 = vmul.f32 %v204, 1e+09
    %v207 = vpack.c.bf16 %v195, %v195
    %v208 = vpack.c.bf16 %v198, %v198
    %210 = vrot.lane.b32.xlu0 %v207, 96
    %v211 = vpop.permute.xlu0 %210
    %vm212 = vcmask 64512
    %v214 = vsel %vm212, %v207, 0
    %v217 = vsel %vm212, %v211, 0
    %219 = vmatprep.subr.bf16.mxu0 0
    %220 = vmatpush1.bf16.xpose.msra.mxu0 %v217
    %221 = vmatprep.subr.bf16.mxu0 0
    %222 = vmatpush1.bf16.xpose.msra.mxu0 0
    %223 = vmatprep.subr.bf16.mxu0 0
    %224 = vmatpush1.bf16.xpose.msra.mxu0 0
    %225 = vmatprep.subr.bf16.mxu0 0
    %226 = vmatpush1.bf16.xpose.msra.mxu0 0
    %227 = vmatprep.subr.bf16.mxu0 0
    %228 = vmatpush1.bf16.xpose.msra.mxu0 0
    %229 = vmatprep.subr.bf16.mxu0 0
    %230 = vmatpush1.bf16.xpose.msra.mxu0 0
    %231 = vmatprep.subr.bf16.mxu0 0
    %232 = vmatpush1.bf16.xpose.msra.mxu0 0
    %233 = vmatprep.subr.bf16.mxu0 0
    %234 = vmatpush1.bf16.xpose.msra.mxu0 0
    %235 = vmatprep.subr.bf16.mxu0 0
    %236 = vmatpush1.bf16.xpose.msra.mxu0 0
    %237 = vmatprep.subr.bf16.mxu0 0
    %238 = vmatpush1.bf16.xpose.msra.mxu0 0
    %239 = vmatprep.subr.bf16.mxu0 0
    %240 = vmatpush1.bf16.xpose.msra.mxu0 0
    %241 = vmatprep.subr.bf16.mxu0 0
    %242 = vmatpush1.bf16.xpose.msra.mxu0 0
    %243 = vmatprep.subr.bf16.mxu0 0
    %244 = vmatpush1.bf16.xpose.msra.mxu0 0
    %245 = vmatprep.subr.bf16.mxu0 0
    %246 = vmatpush1.bf16.xpose.msra.mxu0 0
    %247 = vmatprep.subr.bf16.mxu0 0
    %248 = vmatpush1.bf16.xpose.msra.mxu0 0
    %249 = vmatprep.subr.bf16.mxu0 0
    %250 = vmatpush1.bf16.xpose.msra.mxu0 0
    %251 = vmatprep.mubr.bf16.mxu0 0
    %252 = vmatmul.mubr.bf16.gmra.mrb[0].mxu0 %v214
    %v253 = vpop.f32.mrb[0].mxu0
    %v254 = vadd.f32 0.0, %v253
    %v255 = vpop.f32.mrb[0].mxu0
    %v256 = vpop.f32.mrb[0].mxu0
    %v257 = vpop.f32.mrb[0].mxu0
    %258 = vdwg.mxu0
    %260 = vrot.lane.b32.xlu0 %v208, 96
    %v261 = vpop.permute.xlu0 %260
    %v263 = vsel %vm212, %v208, 0
    %v266 = vsel %vm212, %v261, 0
    %268 = vmatprep.subr.bf16.mxu0 0
    %269 = vmatpush1.bf16.xpose.msra.mxu0 %v266
    %270 = vmatprep.subr.bf16.mxu0 0
    %271 = vmatpush1.bf16.xpose.msra.mxu0 0
    %272 = vmatprep.subr.bf16.mxu0 0
    %273 = vmatpush1.bf16.xpose.msra.mxu0 0
    %274 = vmatprep.subr.bf16.mxu0 0
    %275 = vmatpush1.bf16.xpose.msra.mxu0 0
    %276 = vmatprep.subr.bf16.mxu0 0
    %277 = vmatpush1.bf16.xpose.msra.mxu0 0
    %278 = vmatprep.subr.bf16.mxu0 0
    %279 = vmatpush1.bf16.xpose.msra.mxu0 0
    %280 = vmatprep.subr.bf16.mxu0 0
    %281 = vmatpush1.bf16.xpose.msra.mxu0 0
    %282 = vmatprep.subr.bf16.mxu0 0
    %283 = vmatpush1.bf16.xpose.msra.mxu0 0
    %284 = vmatprep.subr.bf16.mxu0 0
    %285 = vmatpush1.bf16.xpose.msra.mxu0 0
    %286 = vmatprep.subr.bf16.mxu0 0
    %287 = vmatpush1.bf16.xpose.msra.mxu0 0
    %288 = vmatprep.subr.bf16.mxu0 0
    %289 = vmatpush1.bf16.xpose.msra.mxu0 0
    %290 = vmatprep.subr.bf16.mxu0 0
    %291 = vmatpush1.bf16.xpose.msra.mxu0 0
    %292 = vmatprep.subr.bf16.mxu0 0
    %293 = vmatpush1.bf16.xpose.msra.mxu0 0
    %294 = vmatprep.subr.bf16.mxu0 0
    %295 = vmatpush1.bf16.xpose.msra.mxu0 0
    %296 = vmatprep.subr.bf16.mxu0 0
    %297 = vmatpush1.bf16.xpose.msra.mxu0 0
    %298 = vmatprep.subr.bf16.mxu0 0
    %299 = vmatpush1.bf16.xpose.msra.mxu0 0
    %300 = vmatprep.mubr.bf16.mxu0 0
    %301 = vmatmul.mubr.bf16.gmra.mrb[0].mxu0 %v263
    %v302 = vpop.f32.mrb[0].mxu0
    %v303 = vadd.f32 0.0, %v302
    %v304 = vpop.f32.mrb[0].mxu0
    %v305 = vpop.f32.mrb[0].mxu0
    %v306 = vpop.f32.mrb[0].mxu0
    %307 = vdwg.mxu0
    %v308 = vmul.f32 %v254, 0.35355338
    %v309 = vmul.f32 %v303, 0.35355338
    %v310 = vadd.f32 %v308, %v205
    %v311 = vadd.f32 %v309, %v206
    %v312 = vsel %vm212, %v310, -inf
    %313 = vmax.xlane.f32.xlu0 %v312
    %v314 = vpop.xlane.xlu0 %313
    %v315 = vsel %vm212, %v311, -inf
    %316 = vmax.xlane.f32.xlu0 %v315
    %v317 = vpop.xlane.xlu0 %316
    %v318 = vsub.f32 %v310, %v314
    %v319 = vsub.f32 %v311, %v317
    %v320 = vmul.f32 %v318, 1.442695
    %v321 = vpow.pop %v320
    %v322 = vmul.f32 %v319, 1.442695
    %v323 = vpow.pop %v322
    %v324 = vsel %vm212, %v321, 0.0
    %325 = vadd.xlane.f32.xlu0 %v324
    %v326 = vpop.xlane.xlu0 %325
    %v327 = vsel %vm212, %v323, 0.0
    %328 = vadd.xlane.f32.xlu0 %v327
    %v329 = vpop.xlane.xlu0 %328
    %v330 = vrcp.pop %v326
    %v331 = vrcp.pop %v329
    %v332 = vmul.f32 %v321, %v330
    %v333 = vmul.f32 %v323, %v331
    %v334 = vpack.c.bf16 %v332, %v332
    %v335 = vpack.c.bf16 %v333, %v333
    %336 = vrot.lane.b32.xlu0 %v207, 64
    %v337 = vpop.permute.xlu0 %336
    %v339 = vsel %vm212, %v334, 0
    %vm341 = vcmask 1043456
    %v343 = vsel %vm341, %v337, 0
    %345 = vmatprep.subr.bf16.mxu0 0
    %346 = vmatpush1.bf16.msra.mxu0 %v343
    %347 = vmatprep.subr.bf16.mxu0 0
    %348 = vmatpush1.bf16.msra.mxu0 0
    %349 = vmatprep.subr.bf16.mxu0 0
    %350 = vmatpush1.bf16.msra.mxu0 0
    %351 = vmatprep.subr.bf16.mxu0 0
    %352 = vmatpush1.bf16.msra.mxu0 0
    %353 = vmatprep.subr.bf16.mxu0 0
    %354 = vmatpush1.bf16.msra.mxu0 0
    %355 = vmatprep.subr.bf16.mxu0 0
    %356 = vmatpush1.bf16.msra.mxu0 0
    %357 = vmatprep.subr.bf16.mxu0 0
    %358 = vmatpush1.bf16.msra.mxu0 0
    %359 = vmatprep.subr.bf16.mxu0 0
    %360 = vmatpush1.bf16.msra.mxu0 0
    %361 = vmatprep.subr.bf16.mxu0 0
    %362 = vmatpush1.bf16.msra.mxu0 0
    %363 = vmatprep.subr.bf16.mxu0 0
    %364 = vmatpush1.bf16.msra.mxu0 0
    %365 = vmatprep.subr.bf16.mxu0 0
    %366 = vmatpush1.bf16.msra.mxu0 0
    %367 = vmatprep.subr.bf16.mxu0 0
    %368 = vmatpush1.bf16.msra.mxu0 0
    %369 = vmatprep.subr.bf16.mxu0 0
    %370 = vmatpush1.bf16.msra.mxu0 0
    %371 = vmatprep.subr.bf16.mxu0 0
    %372 = vmatpush1.bf16.msra.mxu0 0
    %373 = vmatprep.subr.bf16.mxu0 0
    %374 = vmatpush1.bf16.msra.mxu0 0
    %375 = vmatprep.subr.bf16.mxu0 0
    %376 = vmatpush1.bf16.msra.mxu0 0
    %377 = vmatprep.mubr.bf16.mxu0 0
    %378 = vmatmul.mubr.bf16.gmra.mrb[0].mxu0 %v339
    %v379 = vpop.f32.mrb[0].mxu0
    %v380 = vadd.f32 0.0, %v379
    %v381 = vpop.f32.mrb[0].mxu0
    %v382 = vpop.f32.mrb[0].mxu0
    %v383 = vpop.f32.mrb[0].mxu0
    %384 = vdwg.mxu0
    %385 = vrot.lane.b32.xlu0 %v208, 64
    %v386 = vpop.permute.xlu0 %385
    %v388 = vsel %vm212, %v335, 0
    %v391 = vsel %vm341, %v386, 0
    %393 = vmatprep.subr.bf16.mxu0 0
    %394 = vmatpush1.bf16.msra.mxu0 %v391
    %395 = vmatprep.subr.bf16.mxu0 0
    %396 = vmatpush1.bf16.msra.mxu0 0
    %397 = vmatprep.subr.bf16.mxu0 0
    %398 = vmatpush1.bf16.msra.mxu0 0
    %399 = vmatprep.subr.bf16.mxu0 0
    %400 = vmatpush1.bf16.msra.mxu0 0
    %401 = vmatprep.subr.bf16.mxu0 0
    %402 = vmatpush1.bf16.msra.mxu0 0
    %403 = vmatprep.subr.bf16.mxu0 0
    %404 = vmatpush1.bf16.msra.mxu0 0
    %405 = vmatprep.subr.bf16.mxu0 0
    %406 = vmatpush1.bf16.msra.mxu0 0
    %407 = vmatprep.subr.bf16.mxu0 0
    %408 = vmatpush1.bf16.msra.mxu0 0
    %409 = vmatprep.subr.bf16.mxu0 0
    %410 = vmatpush1.bf16.msra.mxu0 0
    %411 = vmatprep.subr.bf16.mxu0 0
    %412 = vmatpush1.bf16.msra.mxu0 0
    %413 = vmatprep.subr.bf16.mxu0 0
    %414 = vmatpush1.bf16.msra.mxu0 0
    %415 = vmatprep.subr.bf16.mxu0 0
    %416 = vmatpush1.bf16.msra.mxu0 0
    %417 = vmatprep.subr.bf16.mxu0 0
    %418 = vmatpush1.bf16.msra.mxu0 0
    %419 = vmatprep.subr.bf16.mxu0 0
    %420 = vmatpush1.bf16.msra.mxu0 0
    %421 = vmatprep.subr.bf16.mxu0 0
    %422 = vmatpush1.bf16.msra.mxu0 0
    %423 = vmatprep.subr.bf16.mxu0 0
    %424 = vmatpush1.bf16.msra.mxu0 0
    %425 = vmatprep.mubr.bf16.mxu0 0
    %426 = vmatmul.mubr.bf16.gmra.mrb[0].mxu0 %v388
    %v427 = vpop.f32.mrb[0].mxu0
    %v428 = vadd.f32 0.0, %v427
    %v429 = vpop.f32.mrb[0].mxu0
    %v430 = vpop.f32.mrb[0].mxu0
    %v431 = vpop.f32.mrb[0].mxu0
    %432 = vdwg.mxu0
    %v433 = vpack.c.bf16 %v428, %v380
    %v434 = vld [vmem:[#allocation10] sm:$0xf]
    %435 = vrot.lane.b32.xlu0 %v207, 120
    %v436 = vpop.permute.xlu0 %435
    %437 = vrot.lane.b32.xlu0 %v207, 88
    %v438 = vpop.permute.xlu0 %437
    %v440 = vsel %vm212, %v436, 0
    %v443 = vsel %vm212, %v438, 0
    %445 = vmatprep.subr.bf16.mxu0 0
    %446 = vmatpush1.bf16.xpose.msra.mxu0 %v443
    %447 = vmatprep.subr.bf16.mxu0 0
    %448 = vmatpush1.bf16.xpose.msra.mxu0 0
    %449 = vmatprep.subr.bf16.mxu0 0
    %450 = vmatpush1.bf16.xpose.msra.mxu0 0
    %451 = vmatprep.subr.bf16.mxu0 0
    %452 = vmatpush1.bf16.xpose.msra.mxu0 0
    %453 = vmatprep.subr.bf16.mxu0 0
    %454 = vmatpush1.bf16.xpose.msra.mxu0 0
    %455 = vmatprep.subr.bf16.mxu0 0
    %456 = vmatpush1.bf16.xpose.msra.mxu0 0
    %457 = vmatprep.subr.bf16.mxu0 0
    %458 = vmatpush1.bf16.xpose.msra.mxu0 0
    %459 = vmatprep.subr.bf16.mxu0 0
    %460 = vmatpush1.bf16.xpose.msra.mxu0 0
    %461 = vmatprep.subr.bf16.mxu0 0
    %462 = vmatpush1.bf16.xpose.msra.mxu0 0
    %463 = vmatprep.subr.bf16.mxu0 0
    %464 = vmatpush1.bf16.xpose.msra.mxu0 0
    %465 = vmatprep.subr.bf16.mxu0 0
    %466 = vmatpush1.bf16.xpose.msra.mxu0 0
    %467 = vmatprep.subr.bf16.mxu0 0
    %468 = vmatpush1.bf16.xpose.msra.mxu0 0
    %469 = vmatprep.subr.bf16.mxu0 0
    %470 = vmatpush1.bf16.xpose.msra.mxu0 0
    %471 = vmatprep.subr.bf16.mxu0 0
    %472 = vmatpush1.bf16.xpose.msra.mxu0 0
    %473 = vmatprep.subr.bf16.mxu0 0
    %474 = vmatpush1.bf16.xpose.msra.mxu0 0
    %475 = vmatprep.subr.bf16.mxu0 0
    %476 = vmatpush1.bf16.xpose.msra.mxu0 0
    %477 = vmatprep.mubr.bf16.mxu0 0
    %478 = vmatmul.mubr.bf16.gmra.mrb[0].mxu0 %v440
    %v479 = vpop.f32.mrb[0].mxu0
    %v480 = vadd.f32 0.0, %v479
    %v481 = vpop.f32.mrb[0].mxu0
    %v482 = vpop.f32.mrb[0].mxu0
    %v483 = vpop.f32.mrb[0].mxu0
    %484 = vdwg.mxu0
    %485 = vrot.lane.b32.xlu0 %v208, 120
    %v486 = vpop.permute.xlu0 %485
    %487 = vrot.lane.b32.xlu0 %v208, 88
    %v488 = vpop.permute.xlu0 %487
    %v490 = vsel %vm212, %v486, 0
    %v493 = vsel %vm212, %v488, 0
    %495 = vmatprep.subr.bf16.mxu0 0
    %496 = vmatpush1.bf16.xpose.msra.mxu0 %v493
    %497 = vmatprep.subr.bf16.mxu0 0
    %498 = vmatpush1.bf16.xpose.msra.mxu0 0
    %499 = vmatprep.subr.bf16.mxu0 0
    %500 = vmatpush1.bf16.xpose.msra.mxu0 0
    %501 = vmatprep.subr.bf16.mxu0 0
    %502 = vmatpush1.bf16.xpose.msra.mxu0 0
    %503 = vmatprep.subr.bf16.mxu0 0
    %504 = vmatpush1.bf16.xpose.msra.mxu0 0
    %505 = vmatprep.subr.bf16.mxu0 0
    %506 = vmatpush1.bf16.xpose.msra.mxu0 0
    %507 = vmatprep.subr.bf16.mxu0 0
    %508 = vmatpush1.bf16.xpose.msra.mxu0 0
    %509 = vmatprep.subr.bf16.mxu0 0
    %510 = vmatpush1.bf16.xpose.msra.mxu0 0
    %511 = vmatprep.subr.bf16.mxu0 0
    %512 = vmatpush1.bf16.xpose.msra.mxu0 0
    %513 = vmatprep.subr.bf16.mxu0 0
    %514 = vmatpush1.bf16.xpose.msra.mxu0 0
    %515 = vmatprep.subr.bf16.mxu0 0
    %516 = vmatpush1.bf16.xpose.msra.mxu0 0
    %517 = vmatprep.subr.bf16.mxu0 0
    %518 = vmatpush1.bf16.xpose.msra.mxu0 0
    %519 = vmatprep.subr.bf16.mxu0 0
    %520 = vmatpush1.bf16.xpose.msra.mxu0 0
    %521 = vmatprep.subr.bf16.mxu0 0
    %522 = vmatpush1.bf16.xpose.msra.mxu0 0
    %523 = vmatprep.subr.bf16.mxu0 0
    %524 = vmatpush1.bf16.xpose.msra.mxu0 0
    %525 = vmatprep.subr.bf16.mxu0 0
    %526 = vmatpush1.bf16.xpose.msra.mxu0 0
    %527 = vmatprep.mubr.bf16.mxu0 0
    %528 = vmatmul.mubr.bf16.gmra.mrb[0].mxu0 %v490
    %v529 = vpop.f32.mrb[0].mxu0
    %v530 = vadd.f32 0.0, %v529
    %v531 = vpop.f32.mrb[0].mxu0
    %v532 = vpop.f32.mrb[0].mxu0
    %v533 = vpop.f32.mrb[0].mxu0
    %534 = vdwg.mxu0
    %v535 = vmul.f32 %v480, 0.35355338
    %v536 = vmul.f32 %v530, 0.35355338
    %v537 = vadd.f32 %v535, %v205
    %v538 = vadd.f32 %v536, %v206
    %v539 = vsel %vm212, %v537, -inf
    %540 = vmax.xlane.f32.xlu0 %v539
    %v541 = vpop.xlane.xlu0 %540
    %v542 = vsel %vm212, %v538, -inf
    %543 = vmax.xlane.f32.xlu0 %v542
    %v544 = vpop.xlane.xlu0 %543
    %v545 = vsub.f32 %v537, %v541
    %v546 = vsub.f32 %v538, %v544
    %v547 = vmul.f32 %v545, 1.442695
    %v548 = vpow.pop %v547
    %v549 = vmul.f32 %v546, 1.442695
    %v550 = vpow.pop %v549
    %v551 = vsel %vm212, %v548, 0.0
    %552 = vadd.xlane.f32.xlu0 %v551
    %v553 = vpop.xlane.xlu0 %552
    %v554 = vsel %vm212, %v550, 0.0
    %555 = vadd.xlane.f32.xlu0 %v554
    %v556 = vpop.xlane.xlu0 %555
    %v557 = vrcp.pop %v553
    %v558 = vrcp.pop %v556
    %v559 = vmul.f32 %v548, %v557
    %v560 = vmul.f32 %v550, %v558
    %v561 = vpack.c.bf16 %v559, %v559
    %v562 = vpack.c.bf16 %v560, %v560
    %563 = vrot.lane.b32.xlu0 %v207, 56
    %v564 = vpop.permute.xlu0 %563
    %v566 = vsel %vm212, %v561, 0
    %v569 = vsel %vm341, %v564, 0
    %571 = vmatprep.subr.bf16.mxu0 0
    %572 = vmatpush1.bf16.msra.mxu0 %v569
    %573 = vmatprep.subr.bf16.mxu0 0
    %574 = vmatpush1.bf16.msra.mxu0 0
    %575 = vmatprep.subr.bf16.mxu0 0
    %576 = vmatpush1.bf16.msra.mxu0 0
    %577 = vmatprep.subr.bf16.mxu0 0
    %578 = vmatpush1.bf16.msra.mxu0 0
    %579 = vmatprep.subr.bf16.mxu0 0
    %580 = vmatpush1.bf16.msra.mxu0 0
    %581 = vmatprep.subr.bf16.mxu0 0
    %582 = vmatpush1.bf16.msra.mxu0 0
    %583 = vmatprep.subr.bf16.mxu0 0
    %584 = vmatpush1.bf16.msra.mxu0 0
    %585 = vmatprep.subr.bf16.mxu0 0
    %586 = vmatpush1.bf16.msra.mxu0 0
    %587 = vmatprep.subr.bf16.mxu0 0
    %588 = vmatpush1.bf16.msra.mxu0 0
    %589 = vmatprep.subr.bf16.mxu0 0
    %590 = vmatpush1.bf16.msra.mxu0 0
    %591 = vmatprep.subr.bf16.mxu0 0
    %592 = vmatpush1.bf16.msra.mxu0 0
    %593 = vmatprep.subr.bf16.mxu0 0
    %594 = vmatpush1.bf16.msra.mxu0 0
    %595 = vmatprep.subr.bf16.mxu0 0
    %596 = vmatpush1.bf16.msra.mxu0 0
    %597 = vmatprep.subr.bf16.mxu0 0
    %598 = vmatpush1.bf16.msra.mxu0 0
    %599 = vmatprep.subr.bf16.mxu0 0
    %600 = vmatpush1.bf16.msra.mxu0 0
    %601 = vmatprep.subr.bf16.mxu0 0
    %602 = vmatpush1.bf16.msra.mxu0 0
    %603 = vmatprep.mubr.bf16.mxu0 0
    %604 = vmatmul.mubr.bf16.gmra.mrb[0].mxu0 %v566
    %v605 = vpop.f32.mrb[0].mxu0
    %v606 = vadd.f32 0.0, %v605
    %v607 = vpop.f32.mrb[0].mxu0
    %v608 = vpop.f32.mrb[0].mxu0
    %v609 = vpop.f32.mrb[0].mxu0
    %610 = vdwg.mxu0
    %611 = vrot.lane.b32.xlu0 %v208, 56
    %v612 = vpop.permute.xlu0 %611
    %v614 = vsel %vm212, %v562, 0
    %v617 = vsel %vm341, %v612, 0
    %619 = vmatprep.subr.bf16.mxu0 0
    %620 = vmatpush1.bf16.msra.mxu0 %v617
    %621 = vmatprep.subr.bf16.mxu0 0
    %622 = vmatpush1.bf16.msra.mxu0 0
    %623 = vmatprep.subr.bf16.mxu0 0
    %624 = vmatpush1.bf16.msra.mxu0 0
    %625 = vmatprep.subr.bf16.mxu0 0
    %626 = vmatpush1.bf16.msra.mxu0 0
    %627 = vmatprep.subr.bf16.mxu0 0
    %628 = vmatpush1.bf16.msra.mxu0 0
    %629 = vmatprep.subr.bf16.mxu0 0
    %630 = vmatpush1.bf16.msra.mxu0 0
    %631 = vmatprep.subr.bf16.mxu0 0
    %632 = vmatpush1.bf16.msra.mxu0 0
    %633 = vmatprep.subr.bf16.mxu0 0
    %634 = vmatpush1.bf16.msra.mxu0 0
    %635 = vmatprep.subr.bf16.mxu0 0
    %636 = vmatpush1.bf16.msra.mxu0 0
    %637 = vmatprep.subr.bf16.mxu0 0
    %638 = vmatpush1.bf16.msra.mxu0 0
    %639 = vmatprep.subr.bf16.mxu0 0
    %640 = vmatpush1.bf16.msra.mxu0 0
    %641 = vmatprep.subr.bf16.mxu0 0
    %642 = vmatpush1.bf16.msra.mxu0 0
    %643 = vmatprep.subr.bf16.mxu0 0
    %644 = vmatpush1.bf16.msra.mxu0 0
    %645 = vmatprep.subr.bf16.mxu0 0
    %646 = vmatpush1.bf16.msra.mxu0 0
    %647 = vmatprep.subr.bf16.mxu0 0
    %648 = vmatpush1.bf16.msra.mxu0 0
    %649 = vmatprep.subr.bf16.mxu0 0
    %650 = vmatpush1.bf16.msra.mxu0 0
    %651 = vmatprep.mubr.bf16.mxu0 0
    %652 = vmatmul.mubr.bf16.gmra.mrb[0].mxu0 %v614
    %v653 = vpop.f32.mrb[0].mxu0
    %v654 = vadd.f32 0.0, %v653
    %v655 = vpop.f32.mrb[0].mxu0
    %v656 = vpop.f32.mrb[0].mxu0
    %v657 = vpop.f32.mrb[0].mxu0
    %658 = vdwg.mxu0
    %v659 = vpack.c.bf16 %v654, %v606
    %s660 = scalar_lea.vmem [#allocation10], 4
    %v661 = vld [vmem:[%s660] sm:$0xf]
    %v663 = vsel %vm212, %v659, 0
    %v666 = vsel %vm341, %v661, 0
    %668 = vmatprep.subr.bf16.mxu0 0
    %669 = vmatpush1.bf16.msra.mxu0 %v666
    %670 = vmatprep.subr.bf16.mxu0 0
    %671 = vmatpush1.bf16.msra.mxu0 0
    %672 = vmatprep.subr.bf16.mxu0 0
    %673 = vmatpush1.bf16.msra.mxu0 0
    %674 = vmatprep.subr.bf16.mxu0 0
    %675 = vmatpush1.bf16.msra.mxu0 0
    %676 = vmatprep.subr.bf16.mxu0 0
    %677 = vmatpush1.bf16.msra.mxu0 0
    %678 = vmatprep.subr.bf16.mxu0 0
    %679 = vmatpush1.bf16.msra.mxu0 0
    %680 = vmatprep.subr.bf16.mxu0 0
    %681 = vmatpush1.bf16.msra.mxu0 0
    %682 = vmatprep.subr.bf16.mxu0 0
    %683 = vmatpush1.bf16.msra.mxu0 0
    %684 = vmatprep.subr.bf16.mxu0 0
    %685 = vmatpush1.bf16.msra.mxu0 0
    %686 = vmatprep.subr.bf16.mxu0 0
    %687 = vmatpush1.bf16.msra.mxu0 0
    %688 = vmatprep.subr.bf16.mxu0 0
    %689 = vmatpush1.bf16.msra.mxu0 0
    %690 = vmatprep.subr.bf16.mxu0 0
    %691 = vmatpush1.bf16.msra.mxu0 0
    %692 = vmatprep.subr.bf16.mxu0 0
    %693 = vmatpush1.bf16.msra.mxu0 0
    %694 = vmatprep.subr.bf16.mxu0 0
    %695 = vmatpush1.bf16.msra.mxu0 0
    %696 = vmatprep.subr.bf16.mxu0 0
    %697 = vmatpush1.bf16.msra.mxu0 0
    %698 = vmatprep.subr.bf16.mxu0 0
    %699 = vmatpush1.bf16.msra.mxu0 0
    %700 = vmatprep.mubr.bf16.mxu0 0
    %701 = vmatmul.mubr.bf16.gmra.mrb[0].mxu0 %v663
    %v702 = vpop.f32.mrb[0].mxu0
    %v703 = vadd.f32 0.0, %v702
    %v704 = vpop.f32.mrb[0].mxu0
    %v705 = vpop.f32.mrb[0].mxu0
    %v706 = vadd.f32 0.0, %v705
    %v707 = vpop.f32.mrb[0].mxu0
    %708 = vdwg.mxu0
    %v710 = vsel %vm212, %v433, 0
    %v713 = vsel %vm341, %v434, 0
    %715 = vmatprep.subr.bf16.mxu0 0
    %716 = vmatpush1.bf16.msra.mxu0 %v713
    %717 = vmatprep.subr.bf16.mxu0 0
    %718 = vmatpush1.bf16.msra.mxu0 0
    %719 = vmatprep.subr.bf16.mxu0 0
    %720 = vmatpush1.bf16.msra.mxu0 0
    %721 = vmatprep.subr.bf16.mxu0 0
    %722 = vmatpush1.bf16.msra.mxu0 0
    %723 = vmatprep.subr.bf16.mxu0 0
    %724 = vmatpush1.bf16.msra.mxu0 0
    %725 = vmatprep.subr.bf16.mxu0 0
    %726 = vmatpush1.bf16.msra.mxu0 0
    %727 = vmatprep.subr.bf16.mxu0 0
    %728 = vmatpush1.bf16.msra.mxu0 0
    %729 = vmatprep.subr.bf16.mxu0 0
    %730 = vmatpush1.bf16.msra.mxu0 0
    %731 = vmatprep.subr.bf16.mxu0 0
    %732 = vmatpush1.bf16.msra.mxu0 0
    %733 = vmatprep.subr.bf16.mxu0 0
    %734 = vmatpush1.bf16.msra.mxu0 0
    %735 = vmatprep.subr.bf16.mxu0 0
    %736 = vmatpush1.bf16.msra.mxu0 0
    %737 = vmatprep.subr.bf16.mxu0 0
    %738 = vmatpush1.bf16.msra.mxu0 0
    %739 = vmatprep.subr.bf16.mxu0 0
    %740 = vmatpush1.bf16.msra.mxu0 0
    %741 = vmatprep.subr.bf16.mxu0 0
    %742 = vmatpush1.bf16.msra.mxu0 0
    %743 = vmatprep.subr.bf16.mxu0 0
    %744 = vmatpush1.bf16.msra.mxu0 0
    %745 = vmatprep.subr.bf16.mxu0 0
    %746 = vmatpush1.bf16.msra.mxu0 0
    %747 = vmatprep.mubr.bf16.mxu0 0
    %748 = vmatmul.mubr.bf16.gmra.mrb[0].mxu0 %v710
    %v749 = vpop.f32.mrb[0].mxu0
    %v750 = vadd.f32 %v703, %v749
    %v751 = vpop.f32.mrb[0].mxu0
    %v752 = vpop.f32.mrb[0].mxu0
    %v753 = vadd.f32 %v706, %v752
    %v754 = vpop.f32.mrb[0].mxu0
    %755 = vdwg.mxu0
    %756 = vrot.lane.b32.xlu0 %v207, 112
    %v757 = vpop.permute.xlu0 %756
    %758 = vrot.lane.b32.xlu0 %v207, 80
    %v759 = vpop.permute.xlu0 %758
    %v761 = vsel %vm212, %v757, 0
    %v764 = vsel %vm212, %v759, 0
    %766 = vmatprep.subr.bf16.mxu0 0
    %767 = vmatpush1.bf16.xpose.msra.mxu0 %v764
    %768 = vmatprep.subr.bf16.mxu0 0
    %769 = vmatpush1.bf16.xpose.msra.mxu0 0
    %770 = vmatprep.subr.bf16.mxu0 0
    %771 = vmatpush1.bf16.xpose.msra.mxu0 0
    %772 = vmatprep.subr.bf16.mxu0 0
    %773 = vmatpush1.bf16.xpose.msra.mxu0 0
    %774 = vmatprep.subr.bf16.mxu0 0
    %775 = vmatpush1.bf16.xpose.msra.mxu0 0
    %776 = vmatprep.subr.bf16.mxu0 0
    %777 = vmatpush1.bf16.xpose.msra.mxu0 0
    %778 = vmatprep.subr.bf16.mxu0 0
    %779 = vmatpush1.bf16.xpose.msra.mxu0 0
    %780 = vmatprep.subr.bf16.mxu0 0
    %781 = vmatpush1.bf16.xpose.msra.mxu0 0
    %782 = vmatprep.subr.bf16.mxu0 0
    %783 = vmatpush1.bf16.xpose.msra.mxu0 0
    %784 = vmatprep.subr.bf16.mxu0 0
    %785 = vmatpush1.bf16.xpose.msra.mxu0 0
    %786 = vmatprep.subr.bf16.mxu0 0
    %787 = vmatpush1.bf16.xpose.msra.mxu0 0
    %788 = vmatprep.subr.bf16.mxu0 0
    %789 = vmatpush1.bf16.xpose.msra.mxu0 0
    %790 = vmatprep.subr.bf16.mxu0 0
    %791 = vmatpush1.bf16.xpose.msra.mxu0 0
    %792 = vmatprep.subr.bf16.mxu0 0
    %793 = vmatpush1.bf16.xpose.msra.mxu0 0
    %794 = vmatprep.subr.bf16.mxu0 0
    %795 = vmatpush1.bf16.xpose.msra.mxu0 0
    %796 = vmatprep.subr.bf16.mxu0 0
    %797 = vmatpush1.bf16.xpose.msra.mxu0 0
    %798 = vmatprep.mubr.bf16.mxu0 0
    %799 = vmatmul.mubr.bf16.gmra.mrb[0].mxu0 %v761
    %v800 = vpop.f32.mrb[0].mxu0
    %v801 = vadd.f32 0.0, %v800
    %v802 = vpop.f32.mrb[0].mxu0
    %v803 = vpop.f32.mrb[0].mxu0
    %v804 = vpop.f32.mrb[0].mxu0
    %805 = vdwg.mxu0
    %806 = vrot.lane.b32.xlu0 %v208, 112
    %v807 = vpop.permute.xlu0 %806
    %808 = vrot.lane.b32.xlu0 %v208, 80
    %v809 = vpop.permute.xlu0 %808
    %v811 = vsel %vm212, %v807, 0
    %v814 = vsel %vm212, %v809, 0
    %816 = vmatprep.subr.bf16.mxu0 0
    %817 = vmatpush1.bf16.xpose.msra.mxu0 %v814
    %818 = vmatprep.subr.bf16.mxu0 0
    %819 = vmatpush1.bf16.xpose.msra.mxu0 0
    %820 = vmatprep.subr.bf16.mxu0 0
    %821 = vmatpush1.bf16.xpose.msra.mxu0 0
    %822 = vmatprep.subr.bf16.mxu0 0
    %823 = vmatpush1.bf16.xpose.msra.mxu0 0
    %824 = vmatprep.subr.bf16.mxu0 0
    %825 = vmatpush1.bf16.xpose.msra.mxu0 0
    %826 = vmatprep.subr.bf16.mxu0 0
    %827 = vmatpush1.bf16.xpose.msra.mxu0 0
    %828 = vmatprep.subr.bf16.mxu0 0
    %829 = vmatpush1.bf16.xpose.msra.mxu0 0
    %830 = vmatprep.subr.bf16.mxu0 0
    %831 = vmatpush1.bf16.xpose.msra.mxu0 0
    %832 = vmatprep.subr.bf16.mxu0 0
    %833 = vmatpush1.bf16.xpose.msra.mxu0 0
    %834 = vmatprep.subr.bf16.mxu0 0
    %835 = vmatpush1.bf16.xpose.msra.mxu0 0
    %836 = vmatprep.subr.bf16.mxu0 0
    %837 = vmatpush1.bf16.xpose.msra.mxu0 0
    %838 = vmatprep.subr.bf16.mxu0 0
    %839 = vmatpush1.bf16.xpose.msra.mxu0 0
    %840 = vmatprep.subr.bf16.mxu0 0
    %841 = vmatpush1.bf16.xpose.msra.mxu0 0
    %842 = vmatprep.subr.bf16.mxu0 0
    %843 = vmatpush1.bf16.xpose.msra.mxu0 0
    %844 = vmatprep.subr.bf16.mxu0 0
    %845 = vmatpush1.bf16.xpose.msra.mxu0 0
    %846 = vmatprep.subr.bf16.mxu0 0
    %847 = vmatpush1.bf16.xpose.msra.mxu0 0
    %848 = vmatprep.mubr.bf16.mxu0 0
    %849 = vmatmul.mubr.bf16.gmra.mrb[0].mxu0 %v811
    %v850 = vpop.f32.mrb[0].mxu0
    %v851 = vadd.f32 0.0, %v850
    %v852 = vpop.f32.mrb[0].mxu0
    %v853 = vpop.f32.mrb[0].mxu0
    %v854 = vpop.f32.mrb[0].mxu0
    %855 = vdwg.mxu0
    %v856 = vmul.f32 %v801, 0.35355338
    %v857 = vmul.f32 %v851, 0.35355338
    %v858 = vadd.f32 %v856, %v205
    %v859 = vadd.f32 %v857, %v206
    %v860 = vsel %vm212, %v858, -inf
    %861 = vmax.xlane.f32.xlu0 %v860
    %v862 = vpop.xlane.xlu0 %861
    %v863 = vsel %vm212, %v859, -inf
    %864 = vmax.xlane.f32.xlu0 %v863
    %v865 = vpop.xlane.xlu0 %864
    %v866 = vsub.f32 %v858, %v862
    %v867 = vsub.f32 %v859, %v865
    %v868 = vmul.f32 %v866, 1.442695
    %v869 = vpow.pop %v868
    %v870 = vmul.f32 %v867, 1.442695
    %v871 = vpow.pop %v870
    %v872 = vsel %vm212, %v869, 0.0
    %873 = vadd.xlane.f32.xlu0 %v872
    %v874 = vpop.xlane.xlu0 %873
    %v875 = vsel %vm212, %v871, 0.0
    %876 = vadd.xlane.f32.xlu0 %v875
    %v877 = vpop.xlane.xlu0 %876
    %v878 = vrcp.pop %v874
    %v879 = vrcp.pop %v877
    %v880 = vmul.f32 %v869, %v878
    %v881 = vmul.f32 %v871, %v879
    %v882 = vpack.c.bf16 %v880, %v880
    %v883 = vpack.c.bf16 %v881, %v881
    %884 = vrot.lane.b32.xlu0 %v207, 48
    %v885 = vpop.permute.xlu0 %884
    %v887 = vsel %vm212, %v882, 0
    %v890 = vsel %vm341, %v885, 0
    %892 = vmatprep.subr.bf16.mxu0 0
    %893 = vmatpush1.bf16.msra.mxu0 %v890
    %894 = vmatprep.subr.bf16.mxu0 0
    %895 = vmatpush1.bf16.msra.mxu0 0
    %896 = vmatprep.subr.bf16.mxu0 0
    %897 = vmatpush1.bf16.msra.mxu0 0
    %898 = vmatprep.subr.bf16.mxu0 0
    %899 = vmatpush1.bf16.msra.mxu0 0
    %900 = vmatprep.subr.bf16.mxu0 0
    %901 = vmatpush1.bf16.msra.mxu0 0
    %902 = vmatprep.subr.bf16.mxu0 0
    %903 = vmatpush1.bf16.msra.mxu0 0
    %904 = vmatprep.subr.bf16.mxu0 0
    %905 = vmatpush1.bf16.msra.mxu0 0
    %906 = vmatprep.subr.bf16.mxu0 0
    %907 = vmatpush1.bf16.msra.mxu0 0
    %908 = vmatprep.subr.bf16.mxu0 0
    %909 = vmatpush1.bf16.msra.mxu0 0
    %910 = vmatprep.subr.bf16.mxu0 0
    %911 = vmatpush1.bf16.msra.mxu0 0
    %912 = vmatprep.subr.bf16.mxu0 0
    %913 = vmatpush1.bf16.msra.mxu0 0
    %914 = vmatprep.subr.bf16.mxu0 0
    %915 = vmatpush1.bf16.msra.mxu0 0
    %916 = vmatprep.subr.bf16.mxu0 0
    %917 = vmatpush1.bf16.msra.mxu0 0
    %918 = vmatprep.subr.bf16.mxu0 0
    %919 = vmatpush1.bf16.msra.mxu0 0
    %920 = vmatprep.subr.bf16.mxu0 0
    %921 = vmatpush1.bf16.msra.mxu0 0
    %922 = vmatprep.subr.bf16.mxu0 0
    %923 = vmatpush1.bf16.msra.mxu0 0
    %924 = vmatprep.mubr.bf16.mxu0 0
    %925 = vmatmul.mubr.bf16.gmra.mrb[0].mxu0 %v887
    %v926 = vpop.f32.mrb[0].mxu0
    %v927 = vadd.f32 0.0, %v926
    %v928 = vpop.f32.mrb[0].mxu0
    %v929 = vpop.f32.mrb[0].mxu0
    %v930 = vpop.f32.mrb[0].mxu0
    %931 = vdwg.mxu0
    %932 = vrot.lane.b32.xlu0 %v208, 48
    %v933 = vpop.permute.xlu0 %932
    %v935 = vsel %vm212, %v883, 0
    %v938 = vsel %vm341, %v933, 0
    %940 = vmatprep.subr.bf16.mxu0 0
    %941 = vmatpush1.bf16.msra.mxu0 %v938
    %942 = vmatprep.subr.bf16.mxu0 0
    %943 = vmatpush1.bf16.msra.mxu0 0
    %944 = vmatprep.subr.bf16.mxu0 0
    %945 = vmatpush1.bf16.msra.mxu0 0
    %946 = vmatprep.subr.bf16.mxu0 0
    %947 = vmatpush1.bf16.msra.mxu0 0
    %948 = vmatprep.subr.bf16.mxu0 0
    %949 = vmatpush1.bf16.msra.mxu0 0
    %950 = vmatprep.subr.bf16.mxu0 0
    %951 = vmatpush1.bf16.msra.mxu0 0
    %952 = vmatprep.subr.bf16.mxu0 0
    %953 = vmatpush1.bf16.msra.mxu0 0
    %954 = vmatprep.subr.bf16.mxu0 0
    %955 = vmatpush1.bf16.msra.mxu0 0
    %956 = vmatprep.subr.bf16.mxu0 0
    %957 = vmatpush1.bf16.msra.mxu0 0
    %958 = vmatprep.subr.bf16.mxu0 0
    %959 = vmatpush1.bf16.msra.mxu0 0
    %960 = vmatprep.subr.bf16.mxu0 0
    %961 = vmatpush1.bf16.msra.mxu0 0
    %962 = vmatprep.subr.bf16.mxu0 0
    %963 = vmatpush1.bf16.msra.mxu0 0
    %964 = vmatprep.subr.bf16.mxu0 0
    %965 = vmatpush1.bf16.msra.mxu0 0
    %966 = vmatprep.subr.bf16.mxu0 0
    %967 = vmatpush1.bf16.msra.mxu0 0
    %968 = vmatprep.subr.bf16.mxu0 0
    %969 = vmatpush1.bf16.msra.mxu0 0
    %970 = vmatprep.subr.bf16.mxu0 0
    %971 = vmatpush1.bf16.msra.mxu0 0
    %972 = vmatprep.mubr.bf16.mxu0 0
    %973 = vmatmul.mubr.bf16.gmra.mrb[0].mxu0 %v935
    %v974 = vpop.f32.mrb[0].mxu0
    %v975 = vadd.f32 0.0, %v974
    %v976 = vpop.f32.mrb[0].mxu0
    %v977 = vpop.f32.mrb[0].mxu0
    %v978 = vpop.f32.mrb[0].mxu0
    %979 = vdwg.mxu0
    %v980 = vpack.c.bf16 %v975, %v927
    %s981 = scalar_lea.vmem [#allocation10], 8
    %v982 = vld [vmem:[%s981] sm:$0xf]
    %v984 = vsel %vm212, %v980, 0
    %v987 = vsel %vm341, %v982, 0
    %989 = vmatprep.subr.bf16.mxu0 0
    %990 = vmatpush1.bf16.msra.mxu0 %v987
    %991 = vmatprep.subr.bf16.mxu0 0
    %992 = vmatpush1.bf16.msra.mxu0 0
    %993 = vmatprep.subr.bf16.mxu0 0
    %994 = vmatpush1.bf16.msra.mxu0 0
    %995 = vmatprep.subr.bf16.mxu0 0
    %996 = vmatpush1.bf16.msra.mxu0 0
    %997 = vmatprep.subr.bf16.mxu0 0
    %998 = vmatpush1.bf16.msra.mxu0 0
    %999 = vmatprep.subr.bf16.mxu0 0
    %1000 = vmatpush1.bf16.msra.mxu0 0
    %1001 = vmatprep.subr.bf16.mxu0 0
    %1002 = vmatpush1.bf16.msra.mxu0 0
    %1003 = vmatprep.subr.bf16.mxu0 0
    %1004 = vmatpush1.bf16.msra.mxu0 0
    %1005 = vmatprep.subr.bf16.mxu0 0
    %1006 = vmatpush1.bf16.msra.mxu0 0
    %1007 = vmatprep.subr.bf16.mxu0 0
    %1008 = vmatpush1.bf16.msra.mxu0 0
    %1009 = vmatprep.subr.bf16.mxu0 0
    %1010 = vmatpush1.bf16.msra.mxu0 0
    %1011 = vmatprep.subr.bf16.mxu0 0
    %1012 = vmatpush1.bf16.msra.mxu0 0
    %1013 = vmatprep.subr.bf16.mxu0 0
    %1014 = vmatpush1.bf16.msra.mxu0 0
    %1015 = vmatprep.subr.bf16.mxu0 0
    %1016 = vmatpush1.bf16.msra.mxu0 0
    %1017 = vmatprep.subr.bf16.mxu0 0
    %1018 = vmatpush1.bf16.msra.mxu0 0
    %1019 = vmatprep.subr.bf16.mxu0 0
    %1020 = vmatpush1.bf16.msra.mxu0 0
    %1021 = vmatprep.mubr.bf16.mxu0 0
    %1022 = vmatmul.mubr.bf16.gmra.mrb[0].mxu0 %v984
    %v1023 = vpop.f32.mrb[0].mxu0
    %v1024 = vadd.f32 0.0, %v1023
    %v1025 = vpop.f32.mrb[0].mxu0
    %v1026 = vpop.f32.mrb[0].mxu0
    %v1027 = vadd.f32 0.0, %v1026
    %v1028 = vpop.f32.mrb[0].mxu0
    %1029 = vdwg.mxu0
    %v1030 = vadd.f32 %v750, %v1024
    %v1031 = vadd.f32 %v753, %v1027
    %1032 = vrot.lane.b32.xlu0 %v207, 104
    %v1033 = vpop.permute.xlu0 %1032
    %1034 = vrot.lane.b32.xlu0 %v207, 72
    %v1035 = vpop.permute.xlu0 %1034
    %v1037 = vsel %vm212, %v1033, 0
    %v1040 = vsel %vm212, %v1035, 0
    %1042 = vmatprep.subr.bf16.mxu0 0
    %1043 = vmatpush1.bf16.xpose.msra.mxu0 %v1040
    %1044 = vmatprep.subr.bf16.mxu0 0
    %1045 = vmatpush1.bf16.xpose.msra.mxu0 0
    %1046 = vmatprep.subr.bf16.mxu0 0
    %1047 = vmatpush1.bf16.xpose.msra.mxu0 0
    %1048 = vmatprep.subr.bf16.mxu0 0
    %1049 = vmatpush1.bf16.xpose.msra.mxu0 0
    %1050 = vmatprep.subr.bf16.mxu0 0
    %1051 = vmatpush1.bf16.xpose.msra.mxu0 0
    %1052 = vmatprep.subr.bf16.mxu0 0
    %1053 = vmatpush1.bf16.xpose.msra.mxu0 0
    %1054 = vmatprep.subr.bf16.mxu0 0
    %1055 = vmatpush1.bf16.xpose.msra.mxu0 0
    %1056 = vmatprep.subr.bf16.mxu0 0
    %1057 = vmatpush1.bf16.xpose.msra.mxu0 0
    %1058 = vmatprep.subr.bf16.mxu0 0
    %1059 = vmatpush1.bf16.xpose.msra.mxu0 0
    %1060 = vmatprep.subr.bf16.mxu0 0
    %1061 = vmatpush1.bf16.xpose.msra.mxu0 0
    %1062 = vmatprep.subr.bf16.mxu0 0
    %1063 = vmatpush1.bf16.xpose.msra.mxu0 0
    %1064 = vmatprep.subr.bf16.mxu0 0
    %1065 = vmatpush1.bf16.xpose.msra.mxu0 0
    %1066 = vmatprep.subr.bf16.mxu0 0
    %1067 = vmatpush1.bf16.xpose.msra.mxu0 0
    %1068 = vmatprep.subr.bf16.mxu0 0
    %1069 = vmatpush1.bf16.xpose.msra.mxu0 0
    %1070 = vmatprep.subr.bf16.mxu0 0
    %1071 = vmatpush1.bf16.xpose.msra.mxu0 0
    %1072 = vmatprep.subr.bf16.mxu0 0
    %1073 = vmatpush1.bf16.xpose.msra.mxu0 0
    %1074 = vmatprep.mubr.bf16.mxu0 0
    %1075 = vmatmul.mubr.bf16.gmra.mrb[0].mxu0 %v1037
    %v1076 = vpop.f32.mrb[0].mxu0
    %v1077 = vadd.f32 0.0, %v1076
    %v1078 = vpop.f32.mrb[0].mxu0
    %v1079 = vpop.f32.mrb[0].mxu0
    %v1080 = vpop.f32.mrb[0].mxu0
    %1081 = vdwg.mxu0
    %1082 = vrot.lane.b32.xlu0 %v208, 104
    %v1083 = vpop.permute.xlu0 %1082
    %1084 = vrot.lane.b32.xlu0 %v208, 72
    %v1085 = vpop.permute.xlu0 %1084
    %v1087 = vsel %vm212, %v1083, 0
    %v1090 = vsel %vm212, %v1085, 0
    %1092 = vmatprep.subr.bf16.mxu0 0
    %1093 = vmatpush1.bf16.xpose.msra.mxu0 %v1090
    %1094 = vmatprep.subr.bf16.mxu0 0
    %1095 = vmatpush1.bf16.xpose.msra.mxu0 0
    %1096 = vmatprep.subr.bf16.mxu0 0
    %1097 = vmatpush1.bf16.xpose.msra.mxu0 0
    %1098 = vmatprep.subr.bf16.mxu0 0
    %1099 = vmatpush1.bf16.xpose.msra.mxu0 0
    %1100 = vmatprep.subr.bf16.mxu0 0
    %1101 = vmatpush1.bf16.xpose.msra.mxu0 0
    %1102 = vmatprep.subr.bf16.mxu0 0
    %1103 = vmatpush1.bf16.xpose.msra.mxu0 0
    %1104 = vmatprep.subr.bf16.mxu0 0
    %1105 = vmatpush1.bf16.xpose.msra.mxu0 0
    %1106 = vmatprep.subr.bf16.mxu0 0
    %1107 = vmatpush1.bf16.xpose.msra.mxu0 0
    %1108 = vmatprep.subr.bf16.mxu0 0
    %1109 = vmatpush1.bf16.xpose.msra.mxu0 0
    %1110 = vmatprep.subr.bf16.mxu0 0
    %1111 = vmatpush1.bf16.xpose.msra.mxu0 0
    %1112 = vmatprep.subr.bf16.mxu0 0
    %1113 = vmatpush1.bf16.xpose.msra.mxu0 0
    %1114 = vmatprep.subr.bf16.mxu0 0
    %1115 = vmatpush1.bf16.xpose.msra.mxu0 0
    %1116 = vmatprep.subr.bf16.mxu0 0
    %1117 = vmatpush1.bf16.xpose.msra.mxu0 0
    %1118 = vmatprep.subr.bf16.mxu0 0
    %1119 = vmatpush1.bf16.xpose.msra.mxu0 0
    %1120 = vmatprep.subr.bf16.mxu0 0
    %1121 = vmatpush1.bf16.xpose.msra.mxu0 0
    %1122 = vmatprep.subr.bf16.mxu0 0
    %1123 = vmatpush1.bf16.xpose.msra.mxu0 0
    %1124 = vmatprep.mubr.bf16.mxu0 0
    %1125 = vmatmul.mubr.bf16.gmra.mrb[0].mxu0 %v1087
    %v1126 = vpop.f32.mrb[0].mxu0
    %v1127 = vadd.f32 0.0, %v1126
    %v1128 = vpop.f32.mrb[0].mxu0
    %v1129 = vpop.f32.mrb[0].mxu0
    %v1130 = vpop.f32.mrb[0].mxu0
    %1131 = vdwg.mxu0
    %v1132 = vmul.f32 %v1077, 0.35355338
    %v1133 = vmul.f32 %v1127, 0.35355338
    %v1134 = vadd.f32 %v1132, %v205
    %v1135 = vadd.f32 %v1133, %v206
    %v1136 = vsel %vm212, %v1134, -inf
    %1137 = vmax.xlane.f32.xlu0 %v1136
    %v1138 = vpop.xlane.xlu0 %1137
    %v1139 = vsel %vm212, %v1135, -inf
    %1140 = vmax.xlane.f32.xlu0 %v1139
    %v1141 = vpop.xlane.xlu0 %1140
    %v1142 = vsub.f32 %v1134, %v1138
    %v1143 = vsub.f32 %v1135, %v1141
    %v1144 = vmul.f32 %v1142, 1.442695
    %v1145 = vpow.pop %v1144
    %v1146 = vmul.f32 %v1143, 1.442695
    %v1147 = vpow.pop %v1146
    %v1148 = vsel %vm212, %v1145, 0.0
    %1149 = vadd.xlane.f32.xlu0 %v1148
    %v1150 = vpop.xlane.xlu0 %1149
    %v1151 = vsel %vm212, %v1147, 0.0
    %1152 = vadd.xlane.f32.xlu0 %v1151
    %v1153 = vpop.xlane.xlu0 %1152
    %v1154 = vrcp.pop %v1150
    %v1155 = vrcp.pop %v1153
    %v1156 = vmul.f32 %v1145, %v1154
    %v1157 = vmul.f32 %v1147, %v1155
    %v1158 = vpack.c.bf16 %v1156, %v1156
    %v1159 = vpack.c.bf16 %v1157, %v1157
    %1160 = vrot.lane.b32.xlu0 %v207, 40
    %v1161 = vpop.permute.xlu0 %1160
    %v1163 = vsel %vm212, %v1158, 0
    %v1166 = vsel %vm341, %v1161, 0
    %1168 = vmatprep.subr.bf16.mxu0 0
    %1169 = vmatpush1.bf16.msra.mxu0 %v1166
    %1170 = vmatprep.subr.bf16.mxu0 0
    %1171 = vmatpush1.bf16.msra.mxu0 0
    %1172 = vmatprep.subr.bf16.mxu0 0
    %1173 = vmatpush1.bf16.msra.mxu0 0
    %1174 = vmatprep.subr.bf16.mxu0 0
    %1175 = vmatpush1.bf16.msra.mxu0 0
    %1176 = vmatprep.subr.bf16.mxu0 0
    %1177 = vmatpush1.bf16.msra.mxu0 0
    %1178 = vmatprep.subr.bf16.mxu0 0
    %1179 = vmatpush1.bf16.msra.mxu0 0
    %1180 = vmatprep.subr.bf16.mxu0 0
    %1181 = vmatpush1.bf16.msra.mxu0 0
    %1182 = vmatprep.subr.bf16.mxu0 0
    %1183 = vmatpush1.bf16.msra.mxu0 0
    %1184 = vmatprep.subr.bf16.mxu0 0
    %1185 = vmatpush1.bf16.msra.mxu0 0
    %1186 = vmatprep.subr.bf16.mxu0 0
    %1187 = vmatpush1.bf16.msra.mxu0 0
    %1188 = vmatprep.subr.bf16.mxu0 0
    %1189 = vmatpush1.bf16.msra.mxu0 0
    %1190 = vmatprep.subr.bf16.mxu0 0
    %1191 = vmatpush1.bf16.msra.mxu0 0
    %1192 = vmatprep.subr.bf16.mxu0 0
    %1193 = vmatpush1.bf16.msra.mxu0 0
    %1194 = vmatprep.subr.bf16.mxu0 0
    %1195 = vmatpush1.bf16.msra.mxu0 0
    %1196 = vmatprep.subr.bf16.mxu0 0
    %1197 = vmatpush1.bf16.msra.mxu0 0
    %1198 = vmatprep.subr.bf16.mxu0 0
    %1199 = vmatpush1.bf16.msra.mxu0 0
    %1200 = vmatprep.mubr.bf16.mxu0 0
    %1201 = vmatmul.mubr.bf16.gmra.mrb[0].mxu0 %v1163
    %v1202 = vpop.f32.mrb[0].mxu0
    %v1203 = vadd.f32 0.0, %v1202
    %v1204 = vpop.f32.mrb[0].mxu0
    %v1205 = vpop.f32.mrb[0].mxu0
    %v1206 = vpop.f32.mrb[0].mxu0
    %1207 = vdwg.mxu0
    %1208 = vrot.lane.b32.xlu0 %v208, 40
    %v1209 = vpop.permute.xlu0 %1208
    %v1211 = vsel %vm212, %v1159, 0
    %v1214 = vsel %vm341, %v1209, 0
    %1216 = vmatprep.subr.bf16.mxu0 0
    %1217 = vmatpush1.bf16.msra.mxu0 %v1214
    %1218 = vmatprep.subr.bf16.mxu0 0
    %1219 = vmatpush1.bf16.msra.mxu0 0
    %1220 = vmatprep.subr.bf16.mxu0 0
    %1221 = vmatpush1.bf16.msra.mxu0 0
    %1222 = vmatprep.subr.bf16.mxu0 0
    %1223 = vmatpush1.bf16.msra.mxu0 0
    %1224 = vmatprep.subr.bf16.mxu0 0
    %1225 = vmatpush1.bf16.msra.mxu0 0
    %1226 = vmatprep.subr.bf16.mxu0 0
    %1227 = vmatpush1.bf16.msra.mxu0 0
    %1228 = vmatprep.subr.bf16.mxu0 0
    %1229 = vmatpush1.bf16.msra.mxu0 0
    %1230 = vmatprep.subr.bf16.mxu0 0
    %1231 = vmatpush1.bf16.msra.mxu0 0
    %1232 = vmatprep.subr.bf16.mxu0 0
    %1233 = vmatpush1.bf16.msra.mxu0 0
    %1234 = vmatprep.subr.bf16.mxu0 0
    %1235 = vmatpush1.bf16.msra.mxu0 0
    %1236 = vmatprep.subr.bf16.mxu0 0
    %1237 = vmatpush1.bf16.msra.mxu0 0
    %1238 = vmatprep.subr.bf16.mxu0 0
    %1239 = vmatpush1.bf16.msra.mxu0 0
    %1240 = vmatprep.subr.bf16.mxu0 0
    %1241 = vmatpush1.bf16.msra.mxu0 0
    %1242 = vmatprep.subr.bf16.mxu0 0
    %1243 = vmatpush1.bf16.msra.mxu0 0
    %1244 = vmatprep.subr.bf16.mxu0 0
    %1245 = vmatpush1.bf16.msra.mxu0 0
    %1246 = vmatprep.subr.bf16.mxu0 0
    %1247 = vmatpush1.bf16.msra.mxu0 0
    %1248 = vmatprep.mubr.bf16.mxu0 0
    %1249 = vmatmul.mubr.bf16.gmra.mrb[0].mxu0 %v1211
    %v1250 = vpop.f32.mrb[0].mxu0
    %v1251 = vadd.f32 0.0, %v1250
    %v1252 = vpop.f32.mrb[0].mxu0
    %v1253 = vpop.f32.mrb[0].mxu0
    %v1254 = vpop.f32.mrb[0].mxu0
    %1255 = vdwg.mxu0
    %v1256 = vpack.c.bf16 %v1251, %v1203
    %s1257 = scalar_lea.vmem [#allocation10], 12
    %v1258 = vld [vmem:[%s1257] sm:$0xf]
    %v1260 = vsel %vm212, %v1256, 0
    %v1263 = vsel %vm341, %v1258, 0
    %1265 = vmatprep.subr.bf16.mxu0 0
    %1266 = vmatpush1.bf16.msra.mxu0 %v1263
    %1267 = vmatprep.subr.bf16.mxu0 0
    %1268 = vmatpush1.bf16.msra.mxu0 0
    %1269 = vmatprep.subr.bf16.mxu0 0
    %1270 = vmatpush1.bf16.msra.mxu0 0
    %1271 = vmatprep.subr.bf16.mxu0 0
    %1272 = vmatpush1.bf16.msra.mxu0 0
    %1273 = vmatprep.subr.bf16.mxu0 0
    %1274 = vmatpush1.bf16.msra.mxu0 0
    %1275 = vmatprep.subr.bf16.mxu0 0
    %1276 = vmatpush1.bf16.msra.mxu0 0
    %1277 = vmatprep.subr.bf16.mxu0 0
    %1278 = vmatpush1.bf16.msra.mxu0 0
    %1279 = vmatprep.subr.bf16.mxu0 0
    %1280 = vmatpush1.bf16.msra.mxu0 0
    %1281 = vmatprep.subr.bf16.mxu0 0
    %1282 = vmatpush1.bf16.msra.mxu0 0
    %1283 = vmatprep.subr.bf16.mxu0 0
    %1284 = vmatpush1.bf16.msra.mxu0 0
    %1285 = vmatprep.subr.bf16.mxu0 0
    %1286 = vmatpush1.bf16.msra.mxu0 0
    %1287 = vmatprep.subr.bf16.mxu0 0
    %1288 = vmatpush1.bf16.msra.mxu0 0
    %1289 = vmatprep.subr.bf16.mxu0 0
    %1290 = vmatpush1.bf16.msra.mxu0 0
    %1291 = vmatprep.subr.bf16.mxu0 0
    %1292 = vmatpush1.bf16.msra.mxu0 0
    %1293 = vmatprep.subr.bf16.mxu0 0
    %1294 = vmatpush1.bf16.msra.mxu0 0
    %1295 = vmatprep.subr.bf16.mxu0 0
    %1296 = vmatpush1.bf16.msra.mxu0 0
    %1297 = vmatprep.mubr.bf16.mxu0 0
    %1298 = vmatmul.mubr.bf16.gmra.mrb[0].mxu0 %v1260
    %v1299 = vpop.f32.mrb[0].mxu0
    %v1300 = vadd.f32 0.0, %v1299
    %v1301 = vpop.f32.mrb[0].mxu0
    %v1302 = vpop.f32.mrb[0].mxu0
    %v1303 = vadd.f32 0.0, %v1302
    %v1304 = vpop.f32.mrb[0].mxu0
    %1305 = vdwg.mxu0
    %v1306 = vadd.f32 %v1030, %v1300
    %v1307 = vadd.f32 %v1031, %v1303
    %v1308 = vld [vmem:[#allocation11] sm:$0x1]
    %v1310 = vlaneseq
    %v1311 = vshrl.u32 %v1310, 7
    %v1312 = vsub.s32 0, %v1311
    %v1313 = vrot.slane %v1308, %v1312
    %v1315 = vadd.f32 %v1306, %v1313
    %v1316 = vadd.f32 %v1307, %v1313
    %v1317 = vadd.f32 %v103, %v1315
    %v1318 = vadd.f32 %v104, %v1316
    %1319 = vst.msk [vmem:[#allocation13] sm:$0xff] %vm105, %v1317
    %1320 = vst.msk [vmem:[#allocation13 + $0x8] sm:$0xff] %vm105, %v1318
    // Predicated region
    $region50: #{decoder_forward.9} parent=1 // pred_check
      _
    $region51: #{decoder_forward.9} parent=1 // pred_check_branch
      %1322 = sbr.rel (0) target = $region53
    $region52: #{decoder_forward.9} parent=1 // pred_region
      %s1324 = ssub.s32 256, 256
      %1325 = vsyncadd [#allocation4], %s1324
      %s1326 = sshll.u32 [#allocation13], 4
      %s1327 = int_to_ptr.vmem [resolvable:$true] %s1326
      %1332 = dma.vmem_to_hbm [thread:$0]  %s1327, 256, %s6, [#allocation4], 128, 128, 8
    $region53: #{decoder_forward.9} parent=1 // pred_fallthru
      _
    // Predicated region
    $region54: #{decoder_forward.9} parent=1 // pred_check
      _
    $region55: #{decoder_forward.9} parent=1 // pred_check_branch
      %1334 = sbr.rel (0) target = $region57
    $region56: #{decoder_forward.9} parent=1 // pred_region
      %1335 = dma.done [#allocation4], 256
    $region57: #{decoder_forward.9} parent=1 // pred_fallthru
      _
    %1336 = vsyncpa [#allocation3], 1
    %1337 = vsyncpa [#allocation6], 1
    %1338 = vsyncpa [#allocation9], 1
    %1339 = vsyncpa [#allocation12], 1
    %1340 = vsyncpa [#allocation4], 1

// kernel: decoder_forward.17
$region0: #{decoder_forward.17}
  #allocation0 [shape = 'u32[]', space=smem, size = 0x4, offset = 0x4, fixed_abs, tag = 'smem constant byte address 0x4 - core index']
  #allocation1 [shape = 'u32[144,128]{1,0:T(1,128)}', space=vmem, size = 0x12000, scoped, tag = 'internal scratch']
  %s0 = inlined_call_operand.hbm [shape: f32[2,8,32], index: 0, kind: input, shape index: {}]
  %s1 = inlined_call_operand.hbm [shape: f32[1,32], index: 1, kind: input, shape index: {}]
  %s2 = inlined_call_operand.hbm [shape: f32[1,32], index: 2, kind: input, shape index: {}]
  %s3 = inlined_call_operand.hbm [shape: f32[2,8,32], index: 3, kind: output, shape index: {}]
  %s4 = sld [smem:[#allocation0]]
  $region34: #{decoder_forward.17} parent=0
    _
  %s6 = ssub.s32 1, %s4
  %s7 = scalar_select 0, %s6, %s4
  $region1: #{decoder_forward.17} parent=0
    #allocation2 [shape = 'u8[8192]{0}', space=vmem, size = 0x2000, scoped, tag = 'input window, operand 0, single buffered']
    #allocation3 [shape = 's32[1]{0}', space=sflag, size = 0x4, scoped, tag = 'scoped memory for decoder_forward.17']
    #allocation4 [shape = 's32[1]{0}', space=sflag, size = 0x4, scoped, tag = 'scoped memory for decoder_forward.17']
    #allocation5 [shape = 'u8[512]{0}', space=vmem, size = 0x400, scoped, tag = 'input window, operand 1, single buffered']
    #allocation6 [shape = 's32[1]{0}', space=sflag, size = 0x4, scoped, tag = 'scoped memory for decoder_forward.17']
    #allocation7 [shape = 'u8[512]{0}', space=vmem, size = 0x400, scoped, tag = 'input window, operand 2, single buffered']
    #allocation8 [shape = 'u8[8192]{0}', space=vmem, size = 0x2000, scoped, tag = 'output window, operand 0, single buffered']
    %8 = vsyncpa [#allocation3], 0
    %9 = vsyncpa [#allocation6], 0
    %10 = vsyncpa [#allocation4], 0
    // Predicated region
    $region2: #{decoder_forward.17} parent=1 // pred_check
      _
    $region3: #{decoder_forward.17} parent=1 // pred_check_branch
      %12 = sbr.rel (0) target = $region5
    $region4: #{decoder_forward.17} parent=1 // pred_region
      %s14 = ssub.s32 256, 256
      %15 = vsyncadd [#allocation3], %s14
      %s16 = sshll.u32 [#allocation2], 4
      %s17 = int_to_ptr.vmem [resolvable:$true] %s16
      %22 = dma.hbm_to_vmem [thread:$0]  %s0, 256, %s17, [#allocation3], 128, 128, 8
    $region5: #{decoder_forward.17} parent=1 // pred_fallthru
      _
    // Predicated region
    $region6: #{decoder_forward.17} parent=1 // pred_check
      _
    $region7: #{decoder_forward.17} parent=1 // pred_check_branch
      %24 = sbr.rel (0) target = $region9
    $region8: #{decoder_forward.17} parent=1 // pred_region
      %s26 = ssub.s32 16, 16
      %27 = vsyncadd [#allocation6], %s26
      %s29 = sshll.u32 [#allocation5], 4
      %s30 = int_to_ptr.vmem [resolvable:$true] %s29
      %32 = dma.hbm_to_vmem [thread:$0]  %s1, 16, %s30, [#allocation6]
    $region9: #{decoder_forward.17} parent=1 // pred_fallthru
      _
    // Predicated region
    $region10: #{decoder_forward.17} parent=1 // pred_check
      _
    $region11: #{decoder_forward.17} parent=1 // pred_check_branch
      %34 = sbr.rel (0) target = $region13
    $region12: #{decoder_forward.17} parent=1 // pred_region
      %s36 = ssub.s32 16, 16
      %37 = vsyncadd [#allocation6], %s36
      %s39 = sshll.u32 [#allocation7], 4
      %s40 = int_to_ptr.vmem [resolvable:$true] %s39
      %42 = dma.hbm_to_vmem [thread:$0]  %s2, 16, %s40, [#allocation6]
    $region13: #{decoder_forward.17} parent=1 // pred_fallthru
      _
    // Predicated region
    $region14: #{decoder_forward.17} parent=1 // pred_check
      _
    $region15: #{decoder_forward.17} parent=1 // pred_check_branch
      %44 = sbr.rel (0) target = $region17
    $region16: #{decoder_forward.17} parent=1 // pred_region
      %45 = dma.done [#allocation3], 256
    $region17: #{decoder_forward.17} parent=1 // pred_fallthru
      _
    // Predicated region
    $region18: #{decoder_forward.17} parent=1 // pred_check
      _
    $region19: #{decoder_forward.17} parent=1 // pred_check_branch
      %47 = sbr.rel (0) target = $region21
    $region20: #{decoder_forward.17} parent=1 // pred_region
      %48 = dma.done [#allocation6], 16
    $region21: #{decoder_forward.17} parent=1 // pred_fallthru
      _
    // Predicated region
    $region22: #{decoder_forward.17} parent=1 // pred_check
      _
    $region23: #{decoder_forward.17} parent=1 // pred_check_branch
      %50 = sbr.rel (0) target = $region25
    $region24: #{decoder_forward.17} parent=1 // pred_region
      %51 = dma.done [#allocation6], 16
    $region25: #{decoder_forward.17} parent=1 // pred_fallthru
      _
    %v52 = vld [vmem:[#allocation2] sm:$0xff]
    %v53 = vld [vmem:[#allocation2 + $0x8] sm:$0xff]
    %vm54 = vcmask 261120
    %v55 = vsel %vm54, %v52, 0.0
    %56 = vadd.xlane.f32.xlu0 %v55
    %v57 = vpop.xlane.xlu0 %56
    %v58 = vsel %vm54, %v53, 0.0
    %59 = vadd.xlane.f32.xlu0 %v58
    %v60 = vpop.xlane.xlu0 %59
    %v61 = vrcp.pop 32.0
    %v62 = vmul.f32 %v57, %v61
    %v63 = vmul.f32 %v60, %v61
    %v64 = vsub.f32 %v52, %v62
    %v65 = vsub.f32 %v53, %v63
    %v66 = vmul.f32 %v64, %v64
    %v67 = vmul.f32 %v65, %v65
    %v68 = vsel %vm54, %v66, 0.0
    %69 = vadd.xlane.f32.xlu0 %v68
    %v70 = vpop.xlane.xlu0 %69
    %v71 = vsel %vm54, %v67, 0.0
    %72 = vadd.xlane.f32.xlu0 %v71
    %v73 = vpop.xlane.xlu0 %72
    %v74 = vmul.f32 %v70, %v61
    %v75 = vmul.f32 %v73, %v61
    %v76 = vadd.f32 %v74, 1e-05
    %v77 = vadd.f32 %v75, 1e-05
    %v78 = vrsqrt.pop %v76
    %v79 = vrsqrt.pop %v77
    %v80 = vmul.f32 %v64, %v78
    %v81 = vmul.f32 %v65, %v79
    %v82 = vld [vmem:[#allocation5] sm:$0x1]
    %v84 = vlaneseq
    %v85 = vshrl.u32 %v84, 7
    %v86 = vsub.s32 0, %v85
    %v87 = vrot.slane %v82, %v86
    %v89 = vmul.f32 %v80, %v87
    %v90 = vmul.f32 %v81, %v87
    %v91 = vld [vmem:[#allocation7] sm:$0x1]
    %v93 = vlaneseq
    %v94 = vshrl.u32 %v93, 7
    %v95 = vsub.s32 0, %v94
    %v96 = vrot.slane %v91, %v95
    %v98 = vadd.f32 %v89, %v96
    %v99 = vadd.f32 %v90, %v96
    %100 = vst.msk [vmem:[#allocation8] sm:$0xff] %vm54, %v98
    %101 = vst.msk [vmem:[#allocation8 + $0x8] sm:$0xff] %vm54, %v99
    // Predicated region
    $region26: #{decoder_forward.17} parent=1 // pred_check
      _
    $region27: #{decoder_forward.17} parent=1 // pred_check_branch
      %103 = sbr.rel (0) target = $region29
    $region28: #{decoder_forward.17} parent=1 // pred_region
      %s105 = ssub.s32 256, 256
      %106 = vsyncadd [#allocation4], %s105
      %s107 = sshll.u32 [#allocation8], 4
      %s108 = int_to_ptr.vmem [resolvable:$true] %s107
      %113 = dma.vmem_to_hbm [thread:$0]  %s108, 256, %s3, [#allocation4], 128, 128, 8
    $region29: #{decoder_forward.17} parent=1 // pred_fallthru
      _
    // Predicated region
    $region30: #{decoder_forward.17} parent=1 // pred_check
      _
    $region31: #{decoder_forward.17} parent=1 // pred_check_branch
      %115 = sbr.rel (0) target = $region33
    $region32: #{decoder_forward.17} parent=1 // pred_region
      %116 = dma.done [#allocation4], 256
    $region33: #{decoder_forward.17} parent=1 // pred_fallthru
      _
    %117 = vsyncpa [#allocation3], 1
    %118 = vsyncpa [#allocation6], 1
    %119 = vsyncpa [#allocation4], 1

// kernel: decoder_forward.10
$region0: #{decoder_forward.10}
  #allocation0 [shape = 'u32[]', space=smem, size = 0x4, offset = 0x4, fixed_abs, tag = 'smem constant byte address 0x4 - core index']
  #allocation1 [shape = 'u32[144,128]{1,0:T(1,128)}', space=vmem, size = 0x12000, scoped, tag = 'internal scratch']
  %s0 = inlined_call_operand.hbm [shape: f32[2,8,32], index: 0, kind: input, shape index: {}]
  %s1 = inlined_call_operand.hbm [shape: f32[2,6,32], index: 1, kind: input, shape index: {}]
  %s2 = inlined_call_operand.hbm [shape: f32[2,6,32], index: 2, kind: input, shape index: {}]
  %s3 = inlined_call_operand.hbm [shape: f32[2,1,1,6], index: 3, kind: input, shape index: {}]
  %s4 = inlined_call_operand.hbm [shape: bf16[32,64], index: 4, kind: input, shape index: {}]
  %s5 = inlined_call_operand.hbm [shape: f32[1,64], index: 5, kind: input, shape index: {}]
  %s6 = inlined_call_operand.hbm [shape: bf16[32,64], index: 6, kind: input, shape index: {}]
  %s7 = inlined_call_operand.hbm [shape: f32[1,64], index: 7, kind: input, shape index: {}]
  %s8 = inlined_call_operand.hbm [shape: bf16[4,8,32], index: 8, kind: input, shape index: {}]
  %s9 = inlined_call_operand.hbm [shape: f32[1,32], index: 9, kind: input, shape index: {}]
  %s10 = inlined_call_operand.hbm [shape: bf16[32,64], index: 10, kind: input, shape index: {}]
  %s11 = inlined_call_operand.hbm [shape: f32[1,64], index: 11, kind: input, shape index: {}]
  %s12 = inlined_call_operand.hbm [shape: bf16[4,8,32], index: 12, kind: input, shape index: {}]
  %s13 = inlined_call_operand.hbm [shape: f32[1,32], index: 13, kind: input, shape index: {}]
  %s14 = inlined_call_operand.hbm [shape: f32[2,8,32], index: 14, kind: output, shape index: {}]
  %s15 = sld [smem:[#allocation0]]
  $region122: #{decoder_forward.10} parent=0
    _
  %s17 = ssub.s32 1, %s15
  %s18 = scalar_select 0, %s17, %s15
  $region1: #{decoder_forward.10} parent=0
    #allocation2 [shape = 'u8[8192]{0}', space=vmem, size = 0x2000, scoped, tag = 'input window, operand 0, single buffered']
    #allocation3 [shape = 's32[1]{0}', space=sflag, size = 0x4, scoped, tag = 'scoped memory for decoder_forward.10']
    #allocation4 [shape = 's32[1]{0}', space=sflag, size = 0x4, scoped, tag = 'scoped memory for decoder_forward.10']
    #allocation5 [shape = 'u8[8192]{0}', space=vmem, size = 0x2000, scoped, tag = 'input window, operand 1, single buffered']
    #allocation6 [shape = 's32[1]{0}', space=sflag, size = 0x4, scoped, tag = 'scoped memory for decoder_forward.10']
    #allocation7 [shape = 'u8[8192]{0}', space=vmem, size = 0x2000, scoped, tag = 'input window, operand 2, single buffered']
    #allocation8 [shape = 'u8[1024]{0}', space=vmem, size = 0x400, scoped, tag = 'input window, operand 3, single buffered']
    #allocation9 [shape = 's32[1]{0}', space=sflag, size = 0x4, scoped, tag = 'scoped memory for decoder_forward.10']
    #allocation10 [shape = 'u8[8192]{0}', space=vmem, size = 0x2000, scoped, tag = 'input window, operand 4, single buffered']
    #allocation11 [shape = 'u8[512]{0}', space=vmem, size = 0x400, scoped, tag = 'input window, operand 5, single buffered']
    #allocation12 [shape = 's32[1]{0}', space=sflag, size = 0x4, scoped, tag = 'scoped memory for decoder_forward.10']
    #allocation13 [shape = 'u8[8192]{0}', space=vmem, size = 0x2000, scoped, tag = 'input window, operand 6, single buffered']
    #allocation14 [shape = 'u8[512]{0}', space=vmem, size = 0x400, scoped, tag = 'input window, operand 7, single buffered']
    #allocation15 [shape = 's32[1]{0}', space=sflag, size = 0x4, scoped, tag = 'scoped memory for decoder_forward.10']
    #allocation16 [shape = 'u8[8192]{0}', space=vmem, size = 0x2000, scoped, tag = 'input window, operand 8, single buffered']
    #allocation17 [shape = 'u8[512]{0}', space=vmem, size = 0x400, scoped, tag = 'input window, operand 9, single buffered']
    #allocation18 [shape = 's32[1]{0}', space=sflag, size = 0x4, scoped, tag = 'scoped memory for decoder_forward.10']
    #allocation19 [shape = 'u8[8192]{0}', space=vmem, size = 0x2000, scoped, tag = 'input window, operand 10, single buffered']
    #allocation20 [shape = 'u8[512]{0}', space=vmem, size = 0x400, scoped, tag = 'input window, operand 11, single buffered']
    #allocation21 [shape = 's32[1]{0}', space=sflag, size = 0x4, scoped, tag = 'scoped memory for decoder_forward.10']
    #allocation22 [shape = 'u8[8192]{0}', space=vmem, size = 0x2000, scoped, tag = 'input window, operand 12, single buffered']
    #allocation23 [shape = 'u8[512]{0}', space=vmem, size = 0x400, scoped, tag = 'input window, operand 13, single buffered']
    #allocation24 [shape = 's32[1]{0}', space=sflag, size = 0x4, scoped, tag = 'scoped memory for decoder_forward.10']
    #allocation25 [shape = 'u8[8192]{0}', space=vmem, size = 0x2000, scoped, tag = 'output window, operand 0, single buffered']
    %19 = vsyncpa [#allocation3], 0
    %20 = vsyncpa [#allocation6], 0
    %21 = vsyncpa [#allocation9], 0
    %22 = vsyncpa [#allocation12], 0
    %23 = vsyncpa [#allocation15], 0
    %24 = vsyncpa [#allocation18], 0
    %25 = vsyncpa [#allocation21], 0
    %26 = vsyncpa [#allocation24], 0
    %27 = vsyncpa [#allocation4], 0
    // Predicated region
    $region2: #{decoder_forward.10} parent=1 // pred_check
      _
    $region3: #{decoder_forward.10} parent=1 // pred_check_branch
      %29 = sbr.rel (0) target = $region5
    $region4: #{decoder_forward.10} parent=1 // pred_region
      %s31 = ssub.s32 256, 256
      %32 = vsyncadd [#allocation3], %s31
      %s33 = sshll.u32 [#allocation2], 4
      %s34 = int_to_ptr.vmem [resolvable:$true] %s33
      %39 = dma.hbm_to_vmem [thread:$0]  %s0, 256, %s34, [#allocation3], 128, 128, 8
    $region5: #{decoder_forward.10} parent=1 // pred_fallthru
      _
    // Predicated region
    $region6: #{decoder_forward.10} parent=1 // pred_check
      _
    $region7: #{decoder_forward.10} parent=1 // pred_check_branch
      %41 = sbr.rel (0) target = $region9
    $region8: #{decoder_forward.10} parent=1 // pred_region
      %s43 = ssub.s32 256, 256
      %44 = vsyncadd [#allocation6], %s43
      %s45 = sshll.u32 [#allocation5], 4
      %s46 = int_to_ptr.vmem [resolvable:$true] %s45
      %51 = dma.hbm_to_vmem [thread:$0]  %s1, 256, %s46, [#allocation6], 128, 128, 8
    $region9: #{decoder_forward.10} parent=1 // pred_fallthru
      _
    // Predicated region
    $region10: #{decoder_forward.10} parent=1 // pred_check
      _
    $region11: #{decoder_forward.10} parent=1 // pred_check_branch
      %53 = sbr.rel (0) target = $region13
    $region12: #{decoder_forward.10} parent=1 // pred_region
      %s55 = ssub.s32 256, 256
      %56 = vsyncadd [#allocation6], %s55
      %s57 = sshll.u32 [#allocation7], 4
      %s58 = int_to_ptr.vmem [resolvable:$true] %s57
      %63 = dma.hbm_to_vmem [thread:$0]  %s2, 256, %s58, [#allocation6], 128, 128, 8
    $region13: #{decoder_forward.10} parent=1 // pred_fallthru
      _
    // Predicated region
    $region14: #{decoder_forward.10} parent=1 // pred_check
      _
    $region15: #{decoder_forward.10} parent=1 // pred_check_branch
      %65 = sbr.rel (0) target = $region17
    $region16: #{decoder_forward.10} parent=1 // pred_region
      %s67 = ssub.s32 32, 32
      %68 = vsyncadd [#allocation9], %s67
      %s69 = sshll.u32 [#allocation8], 4
      %s70 = int_to_ptr.vmem [resolvable:$true] %s69
      %75 = dma.hbm_to_vmem [thread:$0]  %s3, 32, %s70, [#allocation9], 16, 16, 1
    $region17: #{decoder_forward.10} parent=1 // pred_fallthru
      _
    // Predicated region
    $region18: #{decoder_forward.10} parent=1 // pred_check
      _
    $region19: #{decoder_forward.10} parent=1 // pred_check_branch
      %77 = sbr.rel (0) target = $region21
    $region20: #{decoder_forward.10} parent=1 // pred_region
      %s79 = ssub.s32 256, 256
      %80 = vsyncadd [#allocation9], %s79
      %s81 = sshll.u32 [#allocation10], 4
      %s82 = int_to_ptr.vmem [resolvable:$true] %s81
      %87 = dma.hbm_to_vmem [thread:$0]  %s4, 256, %s82, [#allocation9], 64, 64, 4
    $region21: #{decoder_forward.10} parent=1 // pred_fallthru
      _
    // Predicated region
    $region22: #{decoder_forward.10} parent=1 // pred_check
      _
    $region23: #{decoder_forward.10} parent=1 // pred_check_branch
      %89 = sbr.rel (0) target = $region25
    $region24: #{decoder_forward.10} parent=1 // pred_region
      %s91 = ssub.s32 16, 16
      %92 = vsyncadd [#allocation12], %s91
      %s94 = sshll.u32 [#allocation11], 4
      %s95 = int_to_ptr.vmem [resolvable:$true] %s94
      %97 = dma.hbm_to_vmem [thread:$0]  %s5, 16, %s95, [#allocation12]
    $region25: #{decoder_forward.10} parent=1 // pred_fallthru
      _
    // Predicated region
    $region26: #{decoder_forward.10} parent=1 // pred_check
      _
    $region27: #{decoder_forward.10} parent=1 // pred_check_branch
      %99 = sbr.rel (0) target = $region29
    $region28: #{decoder_forward.10} parent=1 // pred_region
      %s101 = ssub.s32 256, 256
      %102 = vsyncadd [#allocation12], %s101
      %s103 = sshll.u32 [#allocation13], 4
      %s104 = int_to_ptr.vmem [resolvable:$true] %s103
      %109 = dma.hbm_to_vmem [thread:$0]  %s6, 256, %s104, [#allocation12], 64, 64, 4
    $region29: #{decoder_forward.10} parent=1 // pred_fallthru
      _
    // Predicated region
    $region30: #{decoder_forward.10} parent=1 // pred_check
      _
    $region31: #{decoder_forward.10} parent=1 // pred_check_branch
      %111 = sbr.rel (0) target = $region33
    $region32: #{decoder_forward.10} parent=1 // pred_region
      %s113 = ssub.s32 16, 16
      %114 = vsyncadd [#allocation15], %s113
      %s116 = sshll.u32 [#allocation14], 4
      %s117 = int_to_ptr.vmem [resolvable:$true] %s116
      %119 = dma.hbm_to_vmem [thread:$0]  %s7, 16, %s117, [#allocation15]
    $region33: #{decoder_forward.10} parent=1 // pred_fallthru
      _
    // Predicated region
    $region34: #{decoder_forward.10} parent=1 // pred_check
      _
    $region35: #{decoder_forward.10} parent=1 // pred_check_branch
      %121 = sbr.rel (0) target = $region37
    $region36: #{decoder_forward.10} parent=1 // pred_region
      %s123 = ssub.s32 256, 256
      %124 = vsyncadd [#allocation15], %s123
      %s125 = sshll.u32 [#allocation16], 4
      %s126 = int_to_ptr.vmem [resolvable:$true] %s125
      %131 = dma.hbm_to_vmem [thread:$0]  %s8, 256, %s126, [#allocation15], 64, 64, 4
    $region37: #{decoder_forward.10} parent=1 // pred_fallthru
      _
    // Predicated region
    $region38: #{decoder_forward.10} parent=1 // pred_check
      _
    $region39: #{decoder_forward.10} parent=1 // pred_check_branch
      %133 = sbr.rel (0) target = $region41
    $region40: #{decoder_forward.10} parent=1 // pred_region
      %s135 = ssub.s32 16, 16
      %136 = vsyncadd [#allocation18], %s135
      %s138 = sshll.u32 [#allocation17], 4
      %s139 = int_to_ptr.vmem [resolvable:$true] %s138
      %141 = dma.hbm_to_vmem [thread:$0]  %s9, 16, %s139, [#allocation18]
    $region41: #{decoder_forward.10} parent=1 // pred_fallthru
      _
    // Predicated region
    $region42: #{decoder_forward.10} parent=1 // pred_check
      _
    $region43: #{decoder_forward.10} parent=1 // pred_check_branch
      %143 = sbr.rel (0) target = $region45
    $region44: #{decoder_forward.10} parent=1 // pred_region
      %s145 = ssub.s32 256, 256
      %146 = vsyncadd [#allocation18], %s145
      %s147 = sshll.u32 [#allocation19], 4
      %s148 = int_to_ptr.vmem [resolvable:$true] %s147
      %153 = dma.hbm_to_vmem [thread:$0]  %s10, 256, %s148, [#allocation18], 64, 64, 4
    $region45: #{decoder_forward.10} parent=1 // pred_fallthru
      _
    // Predicated region
    $region46: #{decoder_forward.10} parent=1 // pred_check
      _
    $region47: #{decoder_forward.10} parent=1 // pred_check_branch
      %155 = sbr.rel (0) target = $region49
    $region48: #{decoder_forward.10} parent=1 // pred_region
      %s157 = ssub.s32 16, 16
      %158 = vsyncadd [#allocation21], %s157
      %s160 = sshll.u32 [#allocation20], 4
      %s161 = int_to_ptr.vmem [resolvable:$true] %s160
      %163 = dma.hbm_to_vmem [thread:$0]  %s11, 16, %s161, [#allocation21]
    $region49: #{decoder_forward.10} parent=1 // pred_fallthru
      _
    // Predicated region
    $region50: #{decoder_forward.10} parent=1 // pred_check
      _
    $region51: #{decoder_forward.10} parent=1 // pred_check_branch
      %165 = sbr.rel (0) target = $region53
    $region52: #{decoder_forward.10} parent=1 // pred_region
      %s167 = ssub.s32 256, 256
      %168 = vsyncadd [#allocation21], %s167
      %s169 = sshll.u32 [#allocation22], 4
      %s170 = int_to_ptr.vmem [resolvable:$true] %s169
      %175 = dma.hbm_to_vmem [thread:$0]  %s12, 256, %s170, [#allocation21], 64, 64, 4
    $region53: #{decoder_forward.10} parent=1 // pred_fallthru
      _
    // Predicated region
    $region54: #{decoder_forward.10} parent=1 // pred_check
      _
    $region55: #{decoder_forward.10} parent=1 // pred_check_branch
      %177 = sbr.rel (0) target = $region57
    $region56: #{decoder_forward.10} parent=1 // pred_region
      %s179 = ssub.s32 16, 16
      %180 = vsyncadd [#allocation24], %s179
      %s182 = sshll.u32 [#allocation23], 4
      %s183 = int_to_ptr.vmem [resolvable:$true] %s182
      %185 = dma.hbm_to_vmem [thread:$0]  %s13, 16, %s183, [#allocation24]
    $region57: #{decoder_forward.10} parent=1 // pred_fallthru
      _
    // Predicated region
    $region58: #{decoder_forward.10} parent=1 // pred_check
      _
    $region59: #{decoder_forward.10} parent=1 // pred_check_branch
      %187 = sbr.rel (0) target = $region61
    $region60: #{decoder_forward.10} parent=1 // pred_region
      %188 = dma.done [#allocation3], 256
    $region61: #{decoder_forward.10} parent=1 // pred_fallthru
      _
    // Predicated region
    $region62: #{decoder_forward.10} parent=1 // pred_check
      _
    $region63: #{decoder_forward.10} parent=1 // pred_check_branch
      %190 = sbr.rel (0) target = $region65
    $region64: #{decoder_forward.10} parent=1 // pred_region
      %191 = dma.done [#allocation6], 256
    $region65: #{decoder_forward.10} parent=1 // pred_fallthru
      _
    // Predicated region
    $region66: #{decoder_forward.10} parent=1 // pred_check
      _
    $region67: #{decoder_forward.10} parent=1 // pred_check_branch
      %193 = sbr.rel (0) target = $region69
    $region68: #{decoder_forward.10} parent=1 // pred_region
      %194 = dma.done [#allocation6], 256
    $region69: #{decoder_forward.10} parent=1 // pred_fallthru
      _
    // Predicated region
    $region70: #{decoder_forward.10} parent=1 // pred_check
      _
    $region71: #{decoder_forward.10} parent=1 // pred_check_branch
      %196 = sbr.rel (0) target = $region73
    $region72: #{decoder_forward.10} parent=1 // pred_region
      %197 = dma.done [#allocation9], 32
    $region73: #{decoder_forward.10} parent=1 // pred_fallthru
      _
    // Predicated region
    $region74: #{decoder_forward.10} parent=1 // pred_check
      _
    $region75: #{decoder_forward.10} parent=1 // pred_check_branch
      %199 = sbr.rel (0) target = $region77
    $region76: #{decoder_forward.10} parent=1 // pred_region
      %200 = dma.done [#allocation9], 256
    $region77: #{decoder_forward.10} parent=1 // pred_fallthru
      _
    // Predicated region
    $region78: #{decoder_forward.10} parent=1 // pred_check
      _
    $region79: #{decoder_forward.10} parent=1 // pred_check_branch
      %202 = sbr.rel (0) target = $region81
    $region80: #{decoder_forward.10} parent=1 // pred_region
      %203 = dma.done [#allocation12], 16
    $region81: #{decoder_forward.10} parent=1 // pred_fallthru
      _
    // Predicated region
    $region82: #{decoder_forward.10} parent=1 // pred_check
      _
    $region83: #{decoder_forward.10} parent=1 // pred_check_branch
      %205 = sbr.rel (0) target = $region85
    $region84: #{decoder_forward.10} parent=1 // pred_region
      %206 = dma.done [#allocation12], 256
    $region85: #{decoder_forward.10} parent=1 // pred_fallthru
      _
    // Predicated region
    $region86: #{decoder_forward.10} parent=1 // pred_check
      _
    $region87: #{decoder_forward.10} parent=1 // pred_check_branch
      %208 = sbr.rel (0) target = $region89
    $region88: #{decoder_forward.10} parent=1 // pred_region
      %209 = dma.done [#allocation15], 16
    $region89: #{decoder_forward.10} parent=1 // pred_fallthru
      _
    // Predicated region
    $region90: #{decoder_forward.10} parent=1 // pred_check
      _
    $region91: #{decoder_forward.10} parent=1 // pred_check_branch
      %211 = sbr.rel (0) target = $region93
    $region92: #{decoder_forward.10} parent=1 // pred_region
      %212 = dma.done [#allocation15], 256
    $region93: #{decoder_forward.10} parent=1 // pred_fallthru
      _
    // Predicated region
    $region94: #{decoder_forward.10} parent=1 // pred_check
      _
    $region95: #{decoder_forward.10} parent=1 // pred_check_branch
      %214 = sbr.rel (0) target = $region97
    $region96: #{decoder_forward.10} parent=1 // pred_region
      %215 = dma.done [#allocation18], 16
    $region97: #{decoder_forward.10} parent=1 // pred_fallthru
      _
    // Predicated region
    $region98: #{decoder_forward.10} parent=1 // pred_check
      _
    $region99: #{decoder_forward.10} parent=1 // pred_check_branch
      %217 = sbr.rel (0) target = $region101
    $region100: #{decoder_forward.10} parent=1 // pred_region
      %218 = dma.done [#allocation18], 256
    $region101: #{decoder_forward.10} parent=1 // pred_fallthru
      _
    // Predicated region
    $region102: #{decoder_forward.10} parent=1 // pred_check
      _
    $region103: #{decoder_forward.10} parent=1 // pred_check_branch
      %220 = sbr.rel (0) target = $region105
    $region104: #{decoder_forward.10} parent=1 // pred_region
      %221 = dma.done [#allocation21], 16
    $region105: #{decoder_forward.10} parent=1 // pred_fallthru
      _
    // Predicated region
    $region106: #{decoder_forward.10} parent=1 // pred_check
      _
    $region107: #{decoder_forward.10} parent=1 // pred_check_branch
      %223 = sbr.rel (0) target = $region109
    $region108: #{decoder_forward.10} parent=1 // pred_region
      %224 = dma.done [#allocation21], 256
    $region109: #{decoder_forward.10} parent=1 // pred_fallthru
      _
    // Predicated region
    $region110: #{decoder_forward.10} parent=1 // pred_check
      _
    $region111: #{decoder_forward.10} parent=1 // pred_check_branch
      %226 = sbr.rel (0) target = $region113
    $region112: #{decoder_forward.10} parent=1 // pred_region
      %227 = dma.done [#allocation24], 16
    $region113: #{decoder_forward.10} parent=1 // pred_fallthru
      _
    %v229 = vld [vmem:[#allocation2] sm:$0xff]
    %v230 = vld [vmem:[#allocation2 + $0x8] sm:$0xff]
    %vm231 = vcmask 261120
    %v232 = vsel %vm231, %v229, 0.0
    %233 = vadd.xlane.f32.xlu0 %v232
    %v234 = vpop.xlane.xlu0 %233
    %v235 = vsel %vm231, %v230, 0.0
    %236 = vadd.xlane.f32.xlu0 %v235
    %v237 = vpop.xlane.xlu0 %236
    %v238 = vrcp.pop 32.0
    %v239 = vmul.f32 %v234, %v238
    %v240 = vmul.f32 %v237, %v238
    %v241 = vsub.f32 %v229, %v239
    %v242 = vsub.f32 %v230, %v240
    %v243 = vmul.f32 %v241, %v241
    %v244 = vmul.f32 %v242, %v242
    %v245 = vsel %vm231, %v243, 0.0
    %246 = vadd.xlane.f32.xlu0 %v245
    %v247 = vpop.xlane.xlu0 %246
    %v248 = vsel %vm231, %v244, 0.0
    %249 = vadd.xlane.f32.xlu0 %v248
    %v250 = vpop.xlane.xlu0 %249
    %v251 = vmul.f32 %v247, %v238
    %v252 = vmul.f32 %v250, %v238
    %v253 = vadd.f32 %v251, 1e-05
    %v254 = vadd.f32 %v252, 1e-05
    %v255 = vrsqrt.pop %v253
    %v256 = vrsqrt.pop %v254
    %v257 = vmul.f32 %v241, %v255
    %v258 = vmul.f32 %v242, %v256
    %v259 = vpack.c.bf16 %v258, %v257
    %v260 = vld [vmem:[#allocation10] sm:$0xf]
    %v261 = vld [vmem:[#allocation10 + $0x4] sm:$0xf]
    %v262 = vld [vmem:[#allocation10 + $0x8] sm:$0xf]
    %v263 = vld [vmem:[#allocation10 + $0xc] sm:$0xf]
    %v264 = vld [vmem:[#allocation11] sm:$0x1]
    %v266 = vlaneseq
    %v267 = vshrl.u32 %v266, 7
    %v268 = vsub.s32 0, %v267
    %v269 = vrot.slane %v264, %v268
    %v275 = vunpack.c.l.b16 %v260
    %v276 = vunpack.c.l.b16 %v261
    %v277 = vunpack.c.l.b16 %v262
    %v278 = vunpack.c.l.b16 %v263
    %v279 = vpack.c.b16 %v276, %v275
    %v280 = vpack.c.b16 %v278, %v277
    %v284 = vsel %vm231, %v259, 0
    %286 = vmatprep.subr.bf16.mxu0 0
    %287 = vmatpush1.bf16.msra.mxu0 %v279
    %288 = vmatprep.subr.bf16.mxu0 0
    %289 = vmatpush1.bf16.msra.mxu0 %v280
    %290 = vmatprep.subr.bf16.mxu0 0
    %291 = vmatpush1.bf16.msra.mxu0 0
    %292 = vmatprep.subr.bf16.mxu0 0
    %293 = vmatpush1.bf16.msra.mxu0 0
    %294 = vmatprep.subr.bf16.mxu0 0
    %295 = vmatpush1.bf16.msra.mxu0 0
    %296 = vmatprep.subr.bf16.mxu0 0
    %297 = vmatpush1.bf16.msra.mxu0 0
    %298 = vmatprep.subr.bf16.mxu0 0
    %299 = vmatpush1.bf16.msra.mxu0 0
    %300 = vmatprep.subr.bf16.mxu0 0
    %301 = vmatpush1.bf16.msra.mxu0 0
    %302 = vmatprep.subr.bf16.mxu0 0
    %303 = vmatpush1.bf16.msra.mxu0 0
    %304 = vmatprep.subr.bf16.mxu0 0
    %305 = vmatpush1.bf16.msra.mxu0 0
    %306 = vmatprep.subr.bf16.mxu0 0
    %307 = vmatpush1.bf16.msra.mxu0 0
    %308 = vmatprep.subr.bf16.mxu0 0
    %309 = vmatpush1.bf16.msra.mxu0 0
    %310 = vmatprep.subr.bf16.mxu0 0
    %311 = vmatpush1.bf16.msra.mxu0 0
    %312 = vmatprep.subr.bf16.mxu0 0
    %313 = vmatpush1.bf16.msra.mxu0 0
    %314 = vmatprep.subr.bf16.mxu0 0
    %315 = vmatpush1.bf16.msra.mxu0 0
    %316 = vmatprep.subr.bf16.mxu0 0
    %317 = vmatpush1.bf16.msra.mxu0 0
    %318 = vmatprep.mubr.bf16.mxu0 0
    %319 = vmatmul.mubr.bf16.gmra.mrb[0].mxu0 %v284
    %v320 = vpop.f32.mrb[0].mxu0
    %v321 = vadd.f32 %v269, %v320
    %v322 = vpop.f32.mrb[0].mxu0
    %v323 = vpop.f32.mrb[0].mxu0
    %v324 = vadd.f32 %v269, %v323
    %v325 = vpop.f32.mrb[0].mxu0
    %326 = vdwg.mxu0
    %v327 = vld [vmem:[#allocation8] sm:$0x1]
    %v328 = vld [vmem:[#allocation8 + $0x1] sm:$0x1]
    %v329 = vsub.f32 %v327, 1.0
    %v330 = vsub.f32 %v328, 1.0
    %v331 = vmul.f32 %v329, 1e+09
    %v332 = vmul.f32 %v330, 1e+09
    %v335 = vlaneseq
    %v336 = vshrl.u32 %v335, 7
    %v337 = vsub.s32 0, %v336
    %v338 = vrot.slane %v331, %v337
    %v339 = vlaneseq
    %v340 = vshrl.u32 %v339, 7
    %v341 = vsub.s32 0, %v340
    %v342 = vrot.slane %v332, %v341
    %v345 = vld [vmem:[#allocation5] sm:$0x3f]
    %v346 = vld [vmem:[#allocation5 + $0x8] sm:$0x3f]
    %v347 = vld [vmem:[#allocation13] sm:$0xf]
    %v348 = vld [vmem:[#allocation13 + $0x4] sm:$0xf]
    %v349 = vld [vmem:[#allocation13 + $0x8] sm:$0xf]
    %v350 = vld [vmem:[#allocation13 + $0xc] sm:$0xf]
    %v351 = vld [vmem:[#allocation14] sm:$0x1]
    %v352 = vld [vmem:[#allocation17] sm:$0x1]
    %v355 = vcombine.high %v345, %v345
    %v357 = vunpack.c.l.s4 1983009808
    %v358 = vunpack.c.0.s8 %v357
    %v359 = vlaneseq
    %v360 = vshrl.u32 %v359, 7
    %v361 = vsub.s32 %v358, %v360
    %v362 = vrot.slane %v345, %v361
    %v364 = vunpack.c.l.s4 1983009808
    %v365 = vunpack.c.0.s8 %v364
    %v366 = vlaneseq
    %v367 = vshrl.u32 %v366, 7
    %v368 = vsub.s32 %v365, %v367
    %v369 = vrot.slane %v355, %v368
    %v370 = vcombine.high %v362, %v362
    %v371 = vcombine.high %v346, %v346
    %v373 = vunpack.c.l.s4 1983009808
    %v374 = vunpack.c.0.s8 %v373
    %v375 = vlaneseq
    %v376 = vshrl.u32 %v375, 7
    %v377 = vsub.s32 %v374, %v376
    %v378 = vrot.slane %v346, %v377
    %v380 = vunpack.c.l.s4 1983009808
    %v381 = vunpack.c.0.s8 %v380
    %v382 = vlaneseq
    %v383 = vshrl.u32 %v382, 7
    %v384 = vsub.s32 %v381, %v383
    %v385 = vrot.slane %v371, %v384
    %v386 = vcombine.high %v378, %v378
    %v387 = vcombine.low %v362, %v370
    %v388 = vcombine.low %v369, %v378
    %v390 = vunpack.c.l.s4 1983009808
    %v391 = vunpack.c.0.s8 %v390
    %v392 = vlaneseq
    %v393 = vshrl.u32 %v392, 7
    %v394 = vsub.s32 %v391, %v393
    %v395 = vrot.slane %v387, %v394
    %v397 = vunpack.c.l.s4 1983009808
    %v398 = vunpack.c.0.s8 %v397
    %v399 = vlaneseq
    %v400 = vshrl.u32 %v399, 7
    %v401 = vsub.s32 %v398, %v400
    %v402 = vrot.slane %v388, %v401
    %v403 = vcombine.low %v395, %v402
    %v404 = vcombine.low %v386, %v385
    %v406 = vunpack.c.l.s4 1983009808
    %v407 = vunpack.c.0.s8 %v406
    %v408 = vlaneseq
    %v409 = vshrl.u32 %v408, 7
    %v410 = vsub.s32 %v407, %v409
    %v411 = vrot.slane %v404, %v410
    %v414 = vpack.c.bf16 %v411, %v403
    %v416 = vlaneseq
    %v417 = vshrl.u32 %v416, 7
    %v418 = vsub.s32 0, %v417
    %v419 = vrot.slane %v351, %v418
    %v425 = vunpack.c.l.b16 %v347
    %v426 = vunpack.c.l.b16 %v348
    %v427 = vunpack.c.l.b16 %v349
    %v428 = vunpack.c.l.b16 %v350
    %v429 = vpack.c.b16 %v426, %v425
    %v430 = vpack.c.b16 %v428, %v427
    %v434 = vsel %vm231, %v414, 0
    %436 = vmatprep.subr.bf16.mxu0 0
    %437 = vmatpush1.bf16.msra.mxu0 %v429
    %438 = vmatprep.subr.bf16.mxu0 0
    %439 = vmatpush1.bf16.msra.mxu0 %v430
    %440 = vmatprep.subr.bf16.mxu0 0
    %441 = vmatpush1.bf16.msra.mxu0 0
    %442 = vmatprep.subr.bf16.mxu0 0
    %443 = vmatpush1.bf16.msra.mxu0 0
    %444 = vmatprep.subr.bf16.mxu0 0
    %445 = vmatpush1.bf16.msra.mxu0 0
    %446 = vmatprep.subr.bf16.mxu0 0
    %447 = vmatpush1.bf16.msra.mxu0 0
    %448 = vmatprep.subr.bf16.mxu0 0
    %449 = vmatpush1.bf16.msra.mxu0 0
    %450 = vmatprep.subr.bf16.mxu0 0
    %451 = vmatpush1.bf16.msra.mxu0 0
    %452 = vmatprep.subr.bf16.mxu0 0
    %453 = vmatpush1.bf16.msra.mxu0 0
    %454 = vmatprep.subr.bf16.mxu0 0
    %455 = vmatpush1.bf16.msra.mxu0 0
    %456 = vmatprep.subr.bf16.mxu0 0
    %457 = vmatpush1.bf16.msra.mxu0 0
    %458 = vmatprep.subr.bf16.mxu0 0
    %459 = vmatpush1.bf16.msra.mxu0 0
    %460 = vmatprep.subr.bf16.mxu0 0
    %461 = vmatpush1.bf16.msra.mxu0 0
    %462 = vmatprep.subr.bf16.mxu0 0
    %463 = vmatpush1.bf16.msra.mxu0 0
    %464 = vmatprep.subr.bf16.mxu0 0
    %465 = vmatpush1.bf16.msra.mxu0 0
    %466 = vmatprep.subr.bf16.mxu0 0
    %467 = vmatpush1.bf16.msra.mxu0 0
    %468 = vmatprep.mubr.bf16.mxu0 0
    %469 = vmatmul.mubr.bf16.gmra.mrb[0].mxu0 %v434
    %v470 = vpop.f32.mrb[0].mxu0
    %v471 = vadd.f32 %v419, %v470
    %v472 = vpop.f32.mrb[0].mxu0
    %v473 = vpop.f32.mrb[0].mxu0
    %v474 = vadd.f32 %v419, %v473
    %v475 = vpop.f32.mrb[0].mxu0
    %476 = vdwg.mxu0
    %v479 = vcombine.high %v471, %v471
    %v481 = vunpack.c.l.s4 1983009808
    %v482 = vunpack.c.0.s8 %v481
    %v483 = vlaneseq
    %v484 = vshrl.u32 %v483, 7
    %v485 = vsub.s32 %v482, %v484
    %v486 = vrot.slane %v471, %v485
    %v488 = vunpack.c.l.s4 1983009808
    %v489 = vunpack.c.0.s8 %v488
    %v490 = vlaneseq
    %v491 = vshrl.u32 %v490, 7
    %v492 = vsub.s32 %v489, %v491
    %v493 = vrot.slane %v479, %v492
    %v494 = vcombine.high %v486, %v486
    %v495 = vcombine.high %v493, %v493
    %v497 = vunpack.c.l.s4 1983009808
    %v498 = vunpack.c.0.s8 %v497
    %v499 = vlaneseq
    %v500 = vshrl.u32 %v499, 7
    %v501 = vsub.s32 %v498, %v500
    %v502 = vrot.slane %v474, %v501
    %v503 = vcombine.high %v502, %v502
    %v504 = vpack.c.bf16 %v321, %v321
    %v505 = vpack.c.bf16 %v324, %v324
    %v506 = vcombine.low %v486, %v494
    %v508 = vunpack.c.l.s4 1983009808
    %v509 = vunpack.c.0.s8 %v508
    %v510 = vlaneseq
    %v511 = vshrl.u32 %v510, 7
    %v512 = vsub.s32 %v509, %v511
    %v513 = vrot.slane %v506, %v512
    %v515 = vunpack.c.l.s4 1983009808
    %v516 = vunpack.c.0.s8 %v515
    %v517 = vlaneseq
    %v518 = vshrl.u32 %v517, 7
    %v519 = vsub.s32 %v516, %v518
    %v520 = vrot.slane %v493, %v519
    %v521 = vcombine.low %v513, %v520
    %v522 = vcombine.low %v495, %v502
    %v524 = vunpack.c.l.s4 1983009808
    %v525 = vunpack.c.0.s8 %v524
    %v526 = vlaneseq
    %v527 = vshrl.u32 %v526, 7
    %v528 = vsub.s32 %v525, %v527
    %v529 = vrot.slane %v522, %v528
    %v531 = vunpack.c.l.s4 1983009808
    %v532 = vunpack.c.0.s8 %v531
    %v533 = vlaneseq
    %v534 = vshrl.u32 %v533, 7
    %v535 = vsub.s32 %v532, %v534
    %v536 = vrot.slane %v503, %v535
    %v537 = vcombine.low %v529, %v536
    %v540 = vpack.c.bf16 %v521, %v521
    %v541 = vpack.c.bf16 %v537, %v537
    %vm542 = vcmask 64512
    %v544 = vsel %vm542, %v504, 0
    %v547 = vsel %vm542, %v540, 0
    %549 = vmatprep.subr.bf16.mxu0 0
    %550 = vmatpush1.bf16.xpose.msra.mxu0 %v547
    %551 = vmatprep.subr.bf16.mxu0 0
    %552 = vmatpush1.bf16.xpose.msra.mxu0 0
    %553 = vmatprep.subr.bf16.mxu0 0
    %554 = vmatpush1.bf16.xpose.msra.mxu0 0
    %555 = vmatprep.subr.bf16.mxu0 0
    %556 = vmatpush1.bf16.xpose.msra.mxu0 0
    %557 = vmatprep.subr.bf16.mxu0 0
    %558 = vmatpush1.bf16.xpose.msra.mxu0 0
    %559 = vmatprep.subr.bf16.mxu0 0
    %560 = vmatpush1.bf16.xpose.msra.mxu0 0
    %561 = vmatprep.subr.bf16.mxu0 0
    %562 = vmatpush1.bf16.xpose.msra.mxu0 0
    %563 = vmatprep.subr.bf16.mxu0 0
    %564 = vmatpush1.bf16.xpose.msra.mxu0 0
    %565 = vmatprep.subr.bf16.mxu0 0
    %566 = vmatpush1.bf16.xpose.msra.mxu0 0
    %567 = vmatprep.subr.bf16.mxu0 0
    %568 = vmatpush1.bf16.xpose.msra.mxu0 0
    %569 = vmatprep.subr.bf16.mxu0 0
    %570 = vmatpush1.bf16.xpose.msra.mxu0 0
    %571 = vmatprep.subr.bf16.mxu0 0
    %572 = vmatpush1.bf16.xpose.msra.mxu0 0
    %573 = vmatprep.subr.bf16.mxu0 0
    %574 = vmatpush1.bf16.xpose.msra.mxu0 0
    %575 = vmatprep.subr.bf16.mxu0 0
    %576 = vmatpush1.bf16.xpose.msra.mxu0 0
    %577 = vmatprep.subr.bf16.mxu0 0
    %578 = vmatpush1.bf16.xpose.msra.mxu0 0
    %579 = vmatprep.subr.bf16.mxu0 0
    %580 = vmatpush1.bf16.xpose.msra.mxu0 0
    %581 = vmatprep.mubr.bf16.mxu0 0
    %582 = vmatmul.mubr.bf16.gmra.mrb[0].mxu0 %v544
    %v583 = vpop.f32.mrb[0].mxu0
    %v584 = vadd.f32 0.0, %v583
    %v585 = vpop.f32.mrb[0].mxu0
    %v586 = vpop.f32.mrb[0].mxu0
    %v587 = vpop.f32.mrb[0].mxu0
    %588 = vdwg.mxu0
    %v590 = vsel %vm542, %v505, 0
    %v593 = vsel %vm542, %v541, 0
    %595 = vmatprep.subr.bf16.mxu0 0
    %596 = vmatpush1.bf16.xpose.msra.mxu0 %v593
    %597 = vmatprep.subr.bf16.mxu0 0
    %598 = vmatpush1.bf16.xpose.msra.mxu0 0
    %599 = vmatprep.subr.bf16.mxu0 0
    %600 = vmatpush1.bf16.xpose.msra.mxu0 0
    %601 = vmatprep.subr.bf16.mxu0 0
    %602 = vmatpush1.bf16.xpose.msra.mxu0 0
    %603 = vmatprep.subr.bf16.mxu0 0
    %604 = vmatpush1.bf16.xpose.msra.mxu0 0
    %605 = vmatprep.subr.bf16.mxu0 0
    %606 = vmatpush1.bf16.xpose.msra.mxu0 0
    %607 = vmatprep.subr.bf16.mxu0 0
    %608 = vmatpush1.bf16.xpose.msra.mxu0 0
    %609 = vmatprep.subr.bf16.mxu0 0
    %610 = vmatpush1.bf16.xpose.msra.mxu0 0
    %611 = vmatprep.subr.bf16.mxu0 0
    %612 = vmatpush1.bf16.xpose.msra.mxu0 0
    %613 = vmatprep.subr.bf16.mxu0 0
    %614 = vmatpush1.bf16.xpose.msra.mxu0 0
    %615 = vmatprep.subr.bf16.mxu0 0
    %616 = vmatpush1.bf16.xpose.msra.mxu0 0
    %617 = vmatprep.subr.bf16.mxu0 0
    %618 = vmatpush1.bf16.xpose.msra.mxu0 0
    %619 = vmatprep.subr.bf16.mxu0 0
    %620 = vmatpush1.bf16.xpose.msra.mxu0 0
    %621 = vmatprep.subr.bf16.mxu0 0
    %622 = vmatpush1.bf16.xpose.msra.mxu0 0
    %623 = vmatprep.subr.bf16.mxu0 0
    %624 = vmatpush1.bf16.xpose.msra.mxu0 0
    %625 = vmatprep.subr.bf16.mxu0 0
    %626 = vmatpush1.bf16.xpose.msra.mxu0 0
    %627 = vmatprep.mubr.bf16.mxu0 0
    %628 = vmatmul.mubr.bf16.gmra.mrb[0].mxu0 %v590
    %v629 = vpop.f32.mrb[0].mxu0
    %v630 = vadd.f32 0.0, %v629
    %v631 = vpop.f32.mrb[0].mxu0
    %v632 = vpop.f32.mrb[0].mxu0
    %v633 = vpop.f32.mrb[0].mxu0
    %634 = vdwg.mxu0
    %v635 = vmul.f32 %v584, 0.35355338
    %v636 = vmul.f32 %v630, 0.35355338
    %v637 = vadd.f32 %v635, %v338
    %v638 = vadd.f32 %v636, %v342
    %vm639 = vcmask 48128
    %v640 = vsel %vm639, %v637, -inf
    %641 = vmax.xlane.f32.xlu0 %v640
    %v642 = vpop.xlane.xlu0 %641
    %v643 = vsel %vm639, %v638, -inf
    %644 = vmax.xlane.f32.xlu0 %v643
    %v645 = vpop.xlane.xlu0 %644
    %v646 = vsub.f32 %v637, %v642
    %v647 = vsub.f32 %v638, %v645
    %v648 = vmul.f32 %v646, 1.442695
    %v649 = vpow.pop %v648
    %v650 = vmul.f32 %v647, 1.442695
    %v651 = vpow.pop %v650
    %v652 = vsel %vm639, %v649, 0.0
    %653 = vadd.xlane.f32.xlu0 %v652
    %v654 = vpop.xlane.xlu0 %653
    %v655 = vsel %vm639, %v651, 0.0
    %656 = vadd.xlane.f32.xlu0 %v655
    %v657 = vpop.xlane.xlu0 %656
    %v658 = vrcp.pop %v654
    %v659 = vrcp.pop %v657
    %v660 = vmul.f32 %v649, %v658
    %v661 = vmul.f32 %v651, %v659
    %v662 = vpack.c.bf16 %v660, %v660
    %v663 = vpack.c.bf16 %v661, %v661
    %665 = vrot.lane.b32.xlu0 %v540, 96
    %v666 = vpop.permute.xlu0 %665
    %v668 = vsel %vm639, %v662, 0
    %vm670 = vcmask 1042432
    %v672 = vsel %vm670, %v666, 0
    %674 = vmatprep.subr.bf16.mxu0 0
    %675 = vmatpush1.bf16.msra.mxu0 %v672
    %676 = vmatprep.subr.bf16.mxu0 0
    %677 = vmatpush1.bf16.msra.mxu0 0
    %678 = vmatprep.subr.bf16.mxu0 0
    %679 = vmatpush1.bf16.msra.mxu0 0
    %680 = vmatprep.subr.bf16.mxu0 0
    %681 = vmatpush1.bf16.msra.mxu0 0
    %682 = vmatprep.subr.bf16.mxu0 0
    %683 = vmatpush1.bf16.msra.mxu0 0
    %684 = vmatprep.subr.bf16.mxu0 0
    %685 = vmatpush1.bf16.msra.mxu0 0
    %686 = vmatprep.subr.bf16.mxu0 0
    %687 = vmatpush1.bf16.msra.mxu0 0
    %688 = vmatprep.subr.bf16.mxu0 0
    %689 = vmatpush1.bf16.msra.mxu0 0
    %690 = vmatprep.subr.bf16.mxu0 0
    %691 = vmatpush1.bf16.msra.mxu0 0
    %692 = vmatprep.subr.bf16.mxu0 0
    %693 = vmatpush1.bf16.msra.mxu0 0
    %694 = vmatprep.subr.bf16.mxu0 0
    %695 = vmatpush1.bf16.msra.mxu0 0
    %696 = vmatprep.subr.bf16.mxu0 0
    %697 = vmatpush1.bf16.msra.mxu0 0
    %698 = vmatprep.subr.bf16.mxu0 0
    %699 = vmatpush1.bf16.msra.mxu0 0
    %700 = vmatprep.subr.bf16.mxu0 0
    %701 = vmatpush1.bf16.msra.mxu0 0
    %702 = vmatprep.subr.bf16.mxu0 0
    %703 = vmatpush1.bf16.msra.mxu0 0
    %704 = vmatprep.subr.bf16.mxu0 0
    %705 = vmatpush1.bf16.msra.mxu0 0
    %706 = vmatprep.mubr.bf16.mxu0 0
    %707 = vmatmul.mubr.bf16.gmra.mrb[0].mxu0 %v668
    %v708 = vpop.f32.mrb[0].mxu0
    %v709 = vadd.f32 0.0, %v708
    %v710 = vpop.f32.mrb[0].mxu0
    %v711 = vpop.f32.mrb[0].mxu0
    %v712 = vpop.f32.mrb[0].mxu0
    %713 = vdwg.mxu0
    %715 = vrot.lane.b32.xlu0 %v541, 96
    %v716 = vpop.permute.xlu0 %715
    %v718 = vsel %vm639, %v663, 0
    %v721 = vsel %vm670, %v716, 0
    %723 = vmatprep.subr.bf16.mxu0 0
    %724 = vmatpush1.bf16.msra.mxu0 %v721
    %725 = vmatprep.subr.bf16.mxu0 0
    %726 = vmatpush1.bf16.msra.mxu0 0
    %727 = vmatprep.subr.bf16.mxu0 0
    %728 = vmatpush1.bf16.msra.mxu0 0
    %729 = vmatprep.subr.bf16.mxu0 0
    %730 = vmatpush1.bf16.msra.mxu0 0
    %731 = vmatprep.subr.bf16.mxu0 0
    %732 = vmatpush1.bf16.msra.mxu0 0
    %733 = vmatprep.subr.bf16.mxu0 0
    %734 = vmatpush1.bf16.msra.mxu0 0
    %735 = vmatprep.subr.bf16.mxu0 0
    %736 = vmatpush1.bf16.msra.mxu0 0
    %737 = vmatprep.subr.bf16.mxu0 0
    %738 = vmatpush1.bf16.msra.mxu0 0
    %739 = vmatprep.subr.bf16.mxu0 0
    %740 = vmatpush1.bf16.msra.mxu0 0
    %741 = vmatprep.subr.bf16.mxu0 0
    %742 = vmatpush1.bf16.msra.mxu0 0
    %743 = vmatprep.subr.bf16.mxu0 0
    %744 = vmatpush1.bf16.msra.mxu0 0
    %745 = vmatprep.subr.bf16.mxu0 0
    %746 = vmatpush1.bf16.msra.mxu0 0
    %747 = vmatprep.subr.bf16.mxu0 0
    %748 = vmatpush1.bf16.msra.mxu0 0
    %749 = vmatprep.subr.bf16.mxu0 0
    %750 = vmatpush1.bf16.msra.mxu0 0
    %751 = vmatprep.subr.bf16.mxu0 0
    %752 = vmatpush1.bf16.msra.mxu0 0
    %753 = vmatprep.subr.bf16.mxu0 0
    %754 = vmatpush1.bf16.msra.mxu0 0
    %755 = vmatprep.mubr.bf16.mxu0 0
    %756 = vmatmul.mubr.bf16.gmra.mrb[0].mxu0 %v718
    %v757 = vpop.f32.mrb[0].mxu0
    %v758 = vadd.f32 0.0, %v757
    %v759 = vpop.f32.mrb[0].mxu0
    %v760 = vpop.f32.mrb[0].mxu0
    %v761 = vpop.f32.mrb[0].mxu0
    %762 = vdwg.mxu0
    %v763 = vpack.c.bf16 %v758, %v709
    %v764 = vld [vmem:[#allocation16] sm:$0xf]
    %766 = vrot.lane.b32.xlu0 %v504, 120
    %v767 = vpop.permute.xlu0 %766
    %768 = vrot.lane.b32.xlu0 %v540, 120
    %v769 = vpop.permute.xlu0 %768
    %v771 = vsel %vm542, %v767, 0
    %v774 = vsel %vm542, %v769, 0
    %776 = vmatprep.subr.bf16.mxu0 0
    %777 = vmatpush1.bf16.xpose.msra.mxu0 %v774
    %778 = vmatprep.subr.bf16.mxu0 0
    %779 = vmatpush1.bf16.xpose.msra.mxu0 0
    %780 = vmatprep.subr.bf16.mxu0 0
    %781 = vmatpush1.bf16.xpose.msra.mxu0 0
    %782 = vmatprep.subr.bf16.mxu0 0
    %783 = vmatpush1.bf16.xpose.msra.mxu0 0
    %784 = vmatprep.subr.bf16.mxu0 0
    %785 = vmatpush1.bf16.xpose.msra.mxu0 0
    %786 = vmatprep.subr.bf16.mxu0 0
    %787 = vmatpush1.bf16.xpose.msra.mxu0 0
    %788 = vmatprep.subr.bf16.mxu0 0
    %789 = vmatpush1.bf16.xpose.msra.mxu0 0
    %790 = vmatprep.subr.bf16.mxu0 0
    %791 = vmatpush1.bf16.xpose.msra.mxu0 0
    %792 = vmatprep.subr.bf16.mxu0 0
    %793 = vmatpush1.bf16.xpose.msra.mxu0 0
    %794 = vmatprep.subr.bf16.mxu0 0
    %795 = vmatpush1.bf16.xpose.msra.mxu0 0
    %796 = vmatprep.subr.bf16.mxu0 0
    %797 = vmatpush1.bf16.xpose.msra.mxu0 0
    %798 = vmatprep.subr.bf16.mxu0 0
    %799 = vmatpush1.bf16.xpose.msra.mxu0 0
    %800 = vmatprep.subr.bf16.mxu0 0
    %801 = vmatpush1.bf16.xpose.msra.mxu0 0
    %802 = vmatprep.subr.bf16.mxu0 0
    %803 = vmatpush1.bf16.xpose.msra.mxu0 0
    %804 = vmatprep.subr.bf16.mxu0 0
    %805 = vmatpush1.bf16.xpose.msra.mxu0 0
    %806 = vmatprep.subr.bf16.mxu0 0
    %807 = vmatpush1.bf16.xpose.msra.mxu0 0
    %808 = vmatprep.mubr.bf16.mxu0 0
    %809 = vmatmul.mubr.bf16.gmra.mrb[0].mxu0 %v771
    %v810 = vpop.f32.mrb[0].mxu0
    %v811 = vadd.f32 0.0, %v810
    %v812 = vpop.f32.mrb[0].mxu0
    %v813 = vpop.f32.mrb[0].mxu0
    %v814 = vpop.f32.mrb[0].mxu0
    %815 = vdwg.mxu0
    %817 = vrot.lane.b32.xlu0 %v505, 120
    %v818 = vpop.permute.xlu0 %817
    %819 = vrot.lane.b32.xlu0 %v541, 120
    %v820 = vpop.permute.xlu0 %819
    %v822 = vsel %vm542, %v818, 0
    %v825 = vsel %vm542, %v820, 0
    %827 = vmatprep.subr.bf16.mxu0 0
    %828 = vmatpush1.bf16.xpose.msra.mxu0 %v825
    %829 = vmatprep.subr.bf16.mxu0 0
    %830 = vmatpush1.bf16.xpose.msra.mxu0 0
    %831 = vmatprep.subr.bf16.mxu0 0
    %832 = vmatpush1.bf16.xpose.msra.mxu0 0
    %833 = vmatprep.subr.bf16.mxu0 0
    %834 = vmatpush1.bf16.xpose.msra.mxu0 0
    %835 = vmatprep.subr.bf16.mxu0 0
    %836 = vmatpush1.bf16.xpose.msra.mxu0 0
    %837 = vmatprep.subr.bf16.mxu0 0
    %838 = vmatpush1.bf16.xpose.msra.mxu0 0
    %839 = vmatprep.subr.bf16.mxu0 0
    %840 = vmatpush1.bf16.xpose.msra.mxu0 0
    %841 = vmatprep.subr.bf16.mxu0 0
    %842 = vmatpush1.bf16.xpose.msra.mxu0 0
    %843 = vmatprep.subr.bf16.mxu0 0
    %844 = vmatpush1.bf16.xpose.msra.mxu0 0
    %845 = vmatprep.subr.bf16.mxu0 0
    %846 = vmatpush1.bf16.xpose.msra.mxu0 0
    %847 = vmatprep.subr.bf16.mxu0 0
    %848 = vmatpush1.bf16.xpose.msra.mxu0 0
    %849 = vmatprep.subr.bf16.mxu0 0
    %850 = vmatpush1.bf16.xpose.msra.mxu0 0
    %851 = vmatprep.subr.bf16.mxu0 0
    %852 = vmatpush1.bf16.xpose.msra.mxu0 0
    %853 = vmatprep.subr.bf16.mxu0 0
    %854 = vmatpush1.bf16.xpose.msra.mxu0 0
    %855 = vmatprep.subr.bf16.mxu0 0
    %856 = vmatpush1.bf16.xpose.msra.mxu0 0
    %857 = vmatprep.subr.bf16.mxu0 0
    %858 = vmatpush1.bf16.xpose.msra.mxu0 0
    %859 = vmatprep.mubr.bf16.mxu0 0
    %860 = vmatmul.mubr.bf16.gmra.mrb[0].mxu0 %v822
    %v861 = vpop.f32.mrb[0].mxu0
    %v862 = vadd.f32 0.0, %v861
    %v863 = vpop.f32.mrb[0].mxu0
    %v864 = vpop.f32.mrb[0].mxu0
    %v865 = vpop.f32.mrb[0].mxu0
    %866 = vdwg.mxu0
    %v867 = vmul.f32 %v811, 0.35355338
    %v868 = vmul.f32 %v862, 0.35355338
    %v869 = vadd.f32 %v867, %v338
    %v870 = vadd.f32 %v868, %v342
    %v871 = vsel %vm639, %v869, -inf
    %872 = vmax.xlane.f32.xlu0 %v871
    %v873 = vpop.xlane.xlu0 %872
    %v874 = vsel %vm639, %v870, -inf
    %875 = vmax.xlane.f32.xlu0 %v874
    %v876 = vpop.xlane.xlu0 %875
    %v877 = vsub.f32 %v869, %v873
    %v878 = vsub.f32 %v870, %v876
    %v879 = vmul.f32 %v877, 1.442695
    %v880 = vpow.pop %v879
    %v881 = vmul.f32 %v878, 1.442695
    %v882 = vpow.pop %v881
    %v883 = vsel %vm639, %v880, 0.0
    %884 = vadd.xlane.f32.xlu0 %v883
    %v885 = vpop.xlane.xlu0 %884
    %v886 = vsel %vm639, %v882, 0.0
    %887 = vadd.xlane.f32.xlu0 %v886
    %v888 = vpop.xlane.xlu0 %887
    %v889 = vrcp.pop %v885
    %v890 = vrcp.pop %v888
    %v891 = vmul.f32 %v880, %v889
    %v892 = vmul.f32 %v882, %v890
    %v893 = vpack.c.bf16 %v891, %v891
    %v894 = vpack.c.bf16 %v892, %v892
    %895 = vrot.lane.b32.xlu0 %v540, 88
    %v896 = vpop.permute.xlu0 %895
    %v898 = vsel %vm639, %v893, 0
    %v901 = vsel %vm670, %v896, 0
    %903 = vmatprep.subr.bf16.mxu0 0
    %904 = vmatpush1.bf16.msra.mxu0 %v901
    %905 = vmatprep.subr.bf16.mxu0 0
    %906 = vmatpush1.bf16.msra.mxu0 0
    %907 = vmatprep.subr.bf16.mxu0 0
    %908 = vmatpush1.bf16.msra.mxu0 0
    %909 = vmatprep.subr.bf16.mxu0 0
    %910 = vmatpush1.bf16.msra.mxu0 0
    %911 = vmatprep.subr.bf16.mxu0 0
    %912 = vmatpush1.bf16.msra.mxu0 0
    %913 = vmatprep.subr.bf16.mxu0 0
    %914 = vmatpush1.bf16.msra.mxu0 0
    %915 = vmatprep.subr.bf16.mxu0 0
    %916 = vmatpush1.bf16.msra.mxu0 0
    %917 = vmatprep.subr.bf16.mxu0 0
    %918 = vmatpush1.bf16.msra.mxu0 0
    %919 = vmatprep.subr.bf16.mxu0 0
    %920 = vmatpush1.bf16.msra.mxu0 0
    %921 = vmatprep.subr.bf16.mxu0 0
    %922 = vmatpush1.bf16.msra.mxu0 0
    %923 = vmatprep.subr.bf16.mxu0 0
    %924 = vmatpush1.bf16.msra.mxu0 0
    %925 = vmatprep.subr.bf16.mxu0 0
    %926 = vmatpush1.bf16.msra.mxu0 0
    %927 = vmatprep.subr.bf16.mxu0 0
    %928 = vmatpush1.bf16.msra.mxu0 0
    %929 = vmatprep.subr.bf16.mxu0 0
    %930 = vmatpush1.bf16.msra.mxu0 0
    %931 = vmatprep.subr.bf16.mxu0 0
    %932 = vmatpush1.bf16.msra.mxu0 0
    %933 = vmatprep.subr.bf16.mxu0 0
    %934 = vmatpush1.bf16.msra.mxu0 0
    %935 = vmatprep.mubr.bf16.mxu0 0
    %936 = vmatmul.mubr.bf16.gmra.mrb[0].mxu0 %v898
    %v937 = vpop.f32.mrb[0].mxu0
    %v938 = vadd.f32 0.0, %v937
    %v939 = vpop.f32.mrb[0].mxu0
    %v940 = vpop.f32.mrb[0].mxu0
    %v941 = vpop.f32.mrb[0].mxu0
    %942 = vdwg.mxu0
    %943 = vrot.lane.b32.xlu0 %v541, 88
    %v944 = vpop.permute.xlu0 %943
    %v946 = vsel %vm639, %v894, 0
    %v949 = vsel %vm670, %v944, 0
    %951 = vmatprep.subr.bf16.mxu0 0
    %952 = vmatpush1.bf16.msra.mxu0 %v949
    %953 = vmatprep.subr.bf16.mxu0 0
    %954 = vmatpush1.bf16.msra.mxu0 0
    %955 = vmatprep.subr.bf16.mxu0 0
    %956 = vmatpush1.bf16.msra.mxu0 0
    %957 = vmatprep.subr.bf16.mxu0 0
    %958 = vmatpush1.bf16.msra.mxu0 0
    %959 = vmatprep.subr.bf16.mxu0 0
    %960 = vmatpush1.bf16.msra.mxu0 0
    %961 = vmatprep.subr.bf16.mxu0 0
    %962 = vmatpush1.bf16.msra.mxu0 0
    %963 = vmatprep.subr.bf16.mxu0 0
    %964 = vmatpush1.bf16.msra.mxu0 0
    %965 = vmatprep.subr.bf16.mxu0 0
    %966 = vmatpush1.bf16.msra.mxu0 0
    %967 = vmatprep.subr.bf16.mxu0 0
    %968 = vmatpush1.bf16.msra.mxu0 0
    %969 = vmatprep.subr.bf16.mxu0 0
    %970 = vmatpush1.bf16.msra.mxu0 0
    %971 = vmatprep.subr.bf16.mxu0 0
    %972 = vmatpush1.bf16.msra.mxu0 0
    %973 = vmatprep.subr.bf16.mxu0 0
    %974 = vmatpush1.bf16.msra.mxu0 0
    %975 = vmatprep.subr.bf16.mxu0 0
    %976 = vmatpush1.bf16.msra.mxu0 0
    %977 = vmatprep.subr.bf16.mxu0 0
    %978 = vmatpush1.bf16.msra.mxu0 0
    %979 = vmatprep.subr.bf16.mxu0 0
    %980 = vmatpush1.bf16.msra.mxu0 0
    %981 = vmatprep.subr.bf16.mxu0 0
    %982 = vmatpush1.bf16.msra.mxu0 0
    %983 = vmatprep.mubr.bf16.mxu0 0
    %984 = vmatmul.mubr.bf16.gmra.mrb[0].mxu0 %v946
    %v985 = vpop.f32.mrb[0].mxu0
    %v986 = vadd.f32 0.0, %v985
    %v987 = vpop.f32.mrb[0].mxu0
    %v988 = vpop.f32.mrb[0].mxu0
    %v989 = vpop.f32.mrb[0].mxu0
    %990 = vdwg.mxu0
    %v991 = vpack.c.bf16 %v986, %v938
    %s992 = scalar_lea.vmem [#allocation16], 4
    %v993 = vld [vmem:[%s992] sm:$0xf]
    %v995 = vsel %vm542, %v991, 0
    %vm997 = vcmask 1043456
    %v999 = vsel %vm997, %v993, 0
    %1001 = vmatprep.subr.bf16.mxu0 0
    %1002 = vmatpush1.bf16.msra.mxu0 %v999
    %1003 = vmatprep.subr.bf16.mxu0 0
    %1004 = vmatpush1.bf16.msra.mxu0 0
    %1005 = vmatprep.subr.bf16.mxu0 0
    %1006 = vmatpush1.bf16.msra.mxu0 0
    %1007 = vmatprep.subr.bf16.mxu0 0
    %1008 = vmatpush1.bf16.msra.mxu0 0
    %1009 = vmatprep.subr.bf16.mxu0 0
    %1010 = vmatpush1.bf16.msra.mxu0 0
    %1011 = vmatprep.subr.bf16.mxu0 0
    %1012 = vmatpush1.bf16.msra.mxu0 0
    %1013 = vmatprep.subr.bf16.mxu0 0
    %1014 = vmatpush1.bf16.msra.mxu0 0
    %1015 = vmatprep.subr.bf16.mxu0 0
    %1016 = vmatpush1.bf16.msra.mxu0 0
    %1017 = vmatprep.subr.bf16.mxu0 0
    %1018 = vmatpush1.bf16.msra.mxu0 0
    %1019 = vmatprep.subr.bf16.mxu0 0
    %1020 = vmatpush1.bf16.msra.mxu0 0
    %1021 = vmatprep.subr.bf16.mxu0 0
    %1022 = vmatpush1.bf16.msra.mxu0 0
    %1023 = vmatprep.subr.bf16.mxu0 0
    %1024 = vmatpush1.bf16.msra.mxu0 0
    %1025 = vmatprep.subr.bf16.mxu0 0
    %1026 = vmatpush1.bf16.msra.mxu0 0
    %1027 = vmatprep.subr.bf16.mxu0 0
    %1028 = vmatpush1.bf16.msra.mxu0 0
    %1029 = vmatprep.subr.bf16.mxu0 0
    %1030 = vmatpush1.bf16.msra.mxu0 0
    %1031 = vmatprep.subr.bf16.mxu0 0
    %1032 = vmatpush1.bf16.msra.mxu0 0
    %1033 = vmatprep.mubr.bf16.mxu0 0
    %1034 = vmatmul.mubr.bf16.gmra.mrb[0].mxu0 %v995
    %v1035 = vpop.f32.mrb[0].mxu0
    %v1036 = vadd.f32 0.0, %v1035
    %v1037 = vpop.f32.mrb[0].mxu0
    %v1038 = vpop.f32.mrb[0].mxu0
    %v1039 = vadd.f32 0.0, %v1038
    %v1040 = vpop.f32.mrb[0].mxu0
    %1041 = vdwg.mxu0
    %v1043 = vsel %vm542, %v763, 0
    %v1046 = vsel %vm997, %v764, 0
    %1048 = vmatprep.subr.bf16.mxu0 0
    %1049 = vmatpush1.bf16.msra.mxu0 %v1046
    %1050 = vmatprep.subr.bf16.mxu0 0
    %1051 = vmatpush1.bf16.msra.mxu0 0
    %1052 = vmatprep.subr.bf16.mxu0 0
    %1053 = vmatpush1.bf16.msra.mxu0 0
    %1054 = vmatprep.subr.bf16.mxu0 0
    %1055 = vmatpush1.bf16.msra.mxu0 0
    %1056 = vmatprep.subr.bf16.mxu0 0
    %1057 = vmatpush1.bf16.msra.mxu0 0
    %1058 = vmatprep.subr.bf16.mxu0 0
    %1059 = vmatpush1.bf16.msra.mxu0 0
    %1060 = vmatprep.subr.bf16.mxu0 0
    %1061 = vmatpush1.bf16.msra.mxu0 0
    %1062 = vmatprep.subr.bf16.mxu0 0
    %1063 = vmatpush1.bf16.msra.mxu0 0
    %1064 = vmatprep.subr.bf16.mxu0 0
    %1065 = vmatpush1.bf16.msra.mxu0 0
    %1066 = vmatprep.subr.bf16.mxu0 0
    %1067 = vmatpush1.bf16.msra.mxu0 0
    %1068 = vmatprep.subr.bf16.mxu0 0
    %1069 = vmatpush1.bf16.msra.mxu0 0
    %1070 = vmatprep.subr.bf16.mxu0 0
    %1071 = vmatpush1.bf16.msra.mxu0 0
    %1072 = vmatprep.subr.bf16.mxu0 0
    %1073 = vmatpush1.bf16.msra.mxu0 0
    %1074 = vmatprep.subr.bf16.mxu0 0
    %1075 = vmatpush1.bf16.msra.mxu0 0
    %1076 = vmatprep.subr.bf16.mxu0 0
    %1077 = vmatpush1.bf16.msra.mxu0 0
    %1078 = vmatprep.subr.bf16.mxu0 0
    %1079 = vmatpush1.bf16.msra.mxu0 0
    %1080 = vmatprep.mubr.bf16.mxu0 0
    %1081 = vmatmul.mubr.bf16.gmra.mrb[0].mxu0 %v1043
    %v1082 = vpop.f32.mrb[0].mxu0
    %v1083 = vadd.f32 %v1036, %v1082
    %v1084 = vpop.f32.mrb[0].mxu0
    %v1085 = vpop.f32.mrb[0].mxu0
    %v1086 = vadd.f32 %v1039, %v1085
    %v1087 = vpop.f32.mrb[0].mxu0
    %1088 = vdwg.mxu0
    %1089 = vrot.lane.b32.xlu0 %v504, 112
    %v1090 = vpop.permute.xlu0 %1089
    %1091 = vrot.lane.b32.xlu0 %v540, 112
    %v1092 = vpop.permute.xlu0 %1091
    %v1094 = vsel %vm542, %v1090, 0
    %v1097 = vsel %vm542, %v1092, 0
    %1099 = vmatprep.subr.bf16.mxu0 0
    %1100 = vmatpush1.bf16.xpose.msra.mxu0 %v1097
    %1101 = vmatprep.subr.bf16.mxu0 0
    %1102 = vmatpush1.bf16.xpose.msra.mxu0 0
    %1103 = vmatprep.subr.bf16.mxu0 0
    %1104 = vmatpush1.bf16.xpose.msra.mxu0 0
    %1105 = vmatprep.subr.bf16.mxu0 0
    %1106 = vmatpush1.bf16.xpose.msra.mxu0 0
    %1107 = vmatprep.subr.bf16.mxu0 0
    %1108 = vmatpush1.bf16.xpose.msra.mxu0 0
    %1109 = vmatprep.subr.bf16.mxu0 0
    %1110 = vmatpush1.bf16.xpose.msra.mxu0 0
    %1111 = vmatprep.subr.bf16.mxu0 0
    %1112 = vmatpush1.bf16.xpose.msra.mxu0 0
    %1113 = vmatprep.subr.bf16.mxu0 0
    %1114 = vmatpush1.bf16.xpose.msra.mxu0 0
    %1115 = vmatprep.subr.bf16.mxu0 0
    %1116 = vmatpush1.bf16.xpose.msra.mxu0 0
    %1117 = vmatprep.subr.bf16.mxu0 0
    %1118 = vmatpush1.bf16.xpose.msra.mxu0 0
    %1119 = vmatprep.subr.bf16.mxu0 0
    %1120 = vmatpush1.bf16.xpose.msra.mxu0 0
    %1121 = vmatprep.subr.bf16.mxu0 0
    %1122 = vmatpush1.bf16.xpose.msra.mxu0 0
    %1123 = vmatprep.subr.bf16.mxu0 0
    %1124 = vmatpush1.bf16.xpose.msra.mxu0 0
    %1125 = vmatprep.subr.bf16.mxu0 0
    %1126 = vmatpush1.bf16.xpose.msra.mxu0 0
    %1127 = vmatprep.subr.bf16.mxu0 0
    %1128 = vmatpush1.bf16.xpose.msra.mxu0 0
    %1129 = vmatprep.subr.bf16.mxu0 0
    %1130 = vmatpush1.bf16.xpose.msra.mxu0 0
    %1131 = vmatprep.mubr.bf16.mxu0 0
    %1132 = vmatmul.mubr.bf16.gmra.mrb[0].mxu0 %v1094
    %v1133 = vpop.f32.mrb[0].mxu0
    %v1134 = vadd.f32 0.0, %v1133
    %v1135 = vpop.f32.mrb[0].mxu0
    %v1136 = vpop.f32.mrb[0].mxu0
    %v1137 = vpop.f32.mrb[0].mxu0
    %1138 = vdwg.mxu0
    %1139 = vrot.lane.b32.xlu0 %v505, 112
    %v1140 = vpop.permute.xlu0 %1139
    %1141 = vrot.lane.b32.xlu0 %v541, 112
    %v1142 = vpop.permute.xlu0 %1141
    %v1144 = vsel %vm542, %v1140, 0
    %v1147 = vsel %vm542, %v1142, 0
    %1149 = vmatprep.subr.bf16.mxu0 0
    %1150 = vmatpush1.bf16.xpose.msra.mxu0 %v1147
    %1151 = vmatprep.subr.bf16.mxu0 0
    %1152 = vmatpush1.bf16.xpose.msra.mxu0 0
    %1153 = vmatprep.subr.bf16.mxu0 0
    %1154 = vmatpush1.bf16.xpose.msra.mxu0 0
    %1155 = vmatprep.subr.bf16.mxu0 0
    %1156 = vmatpush1.bf16.xpose.msra.mxu0 0
    %1157 = vmatprep.subr.bf16.mxu0 0
    %1158 = vmatpush1.bf16.xpose.msra.mxu0 0
    %1159 = vmatprep.subr.bf16.mxu0 0
    %1160 = vmatpush1.bf16.xpose.msra.mxu0 0
    %1161 = vmatprep.subr.bf16.mxu0 0
    %1162 = vmatpush1.bf16.xpose.msra.mxu0 0
    %1163 = vmatprep.subr.bf16.mxu0 0
    %1164 = vmatpush1.bf16.xpose.msra.mxu0 0
    %1165 = vmatprep.subr.bf16.mxu0 0
    %1166 = vmatpush1.bf16.xpose.msra.mxu0 0
    %1167 = vmatprep.subr.bf16.mxu0 0
    %1168 = vmatpush1.bf16.xpose.msra.mxu0 0
    %1169 = vmatprep.subr.bf16.mxu0 0
    %1170 = vmatpush1.bf16.xpose.msra.mxu0 0
    %1171 = vmatprep.subr.bf16.mxu0 0
    %1172 = vmatpush1.bf16.xpose.msra.mxu0 0
    %1173 = vmatprep.subr.bf16.mxu0 0
    %1174 = vmatpush1.bf16.xpose.msra.mxu0 0
    %1175 = vmatprep.subr.bf16.mxu0 0
    %1176 = vmatpush1.bf16.xpose.msra.mxu0 0
    %1177 = vmatprep.subr.bf16.mxu0 0
    %1178 = vmatpush1.bf16.xpose.msra.mxu0 0
    %1179 = vmatprep.subr.bf16.mxu0 0
    %1180 = vmatpush1.bf16.xpose.msra.mxu0 0
    %1181 = vmatprep.mubr.bf16.mxu0 0
    %1182 = vmatmul.mubr.bf16.gmra.mrb[0].mxu0 %v1144
    %v1183 = vpop.f32.mrb[0].mxu0
    %v1184 = vadd.f32 0.0, %v1183
    %v1185 = vpop.f32.mrb[0].mxu0
    %v1186 = vpop.f32.mrb[0].mxu0
    %v1187 = vpop.f32.mrb[0].mxu0
    %1188 = vdwg.mxu0
    %v1189 = vmul.f32 %v1134, 0.35355338
    %v1190 = vmul.f32 %v1184, 0.35355338
    %v1191 = vadd.f32 %v1189, %v338
    %v1192 = vadd.f32 %v1190, %v342
    %v1193 = vsel %vm639, %v1191, -inf
    %1194 = vmax.xlane.f32.xlu0 %v1193
    %v1195 = vpop.xlane.xlu0 %1194
    %v1196 = vsel %vm639, %v1192, -inf
    %1197 = vmax.xlane.f32.xlu0 %v1196
    %v1198 = vpop.xlane.xlu0 %1197
    %v1199 = vsub.f32 %v1191, %v1195
    %v1200 = vsub.f32 %v1192, %v1198
    %v1201 = vmul.f32 %v1199, 1.442695
    %v1202 = vpow.pop %v1201
    %v1203 = vmul.f32 %v1200, 1.442695
    %v1204 = vpow.pop %v1203
    %v1205 = vsel %vm639, %v1202, 0.0
    %1206 = vadd.xlane.f32.xlu0 %v1205
    %v1207 = vpop.xlane.xlu0 %1206
    %v1208 = vsel %vm639, %v1204, 0.0
    %1209 = vadd.xlane.f32.xlu0 %v1208
    %v1210 = vpop.xlane.xlu0 %1209
    %v1211 = vrcp.pop %v1207
    %v1212 = vrcp.pop %v1210
    %v1213 = vmul.f32 %v1202, %v1211
    %v1214 = vmul.f32 %v1204, %v1212
    %v1215 = vpack.c.bf16 %v1213, %v1213
    %v1216 = vpack.c.bf16 %v1214, %v1214
    %1217 = vrot.lane.b32.xlu0 %v540, 80
    %v1218 = vpop.permute.xlu0 %1217
    %v1220 = vsel %vm639, %v1215, 0
    %v1223 = vsel %vm670, %v1218, 0
    %1225 = vmatprep.subr.bf16.mxu0 0
    %1226 = vmatpush1.bf16.msra.mxu0 %v1223
    %1227 = vmatprep.subr.bf16.mxu0 0
    %1228 = vmatpush1.bf16.msra.mxu0 0
    %1229 = vmatprep.subr.bf16.mxu0 0
    %1230 = vmatpush1.bf16.msra.mxu0 0
    %1231 = vmatprep.subr.bf16.mxu0 0
    %1232 = vmatpush1.bf16.msra.mxu0 0
    %1233 = vmatprep.subr.bf16.mxu0 0
    %1234 = vmatpush1.bf16.msra.mxu0 0
    %1235 = vmatprep.subr.bf16.mxu0 0
    %1236 = vmatpush1.bf16.msra.mxu0 0
    %1237 = vmatprep.subr.bf16.mxu0 0
    %1238 = vmatpush1.bf16.msra.mxu0 0
    %1239 = vmatprep.subr.bf16.mxu0 0
    %1240 = vmatpush1.bf16.msra.mxu0 0
    %1241 = vmatprep.subr.bf16.mxu0 0
    %1242 = vmatpush1.bf16.msra.mxu0 0
    %1243 = vmatprep.subr.bf16.mxu0 0
    %1244 = vmatpush1.bf16.msra.mxu0 0
    %1245 = vmatprep.subr.bf16.mxu0 0
    %1246 = vmatpush1.bf16.msra.mxu0 0
    %1247 = vmatprep.subr.bf16.mxu0 0
    %1248 = vmatpush1.bf16.msra.mxu0 0
    %1249 = vmatprep.subr.bf16.mxu0 0
    %1250 = vmatpush1.bf16.msra.mxu0 0
    %1251 = vmatprep.subr.bf16.mxu0 0
    %1252 = vmatpush1.bf16.msra.mxu0 0
    %1253 = vmatprep.subr.bf16.mxu0 0
    %1254 = vmatpush1.bf16.msra.mxu0 0
    %1255 = vmatprep.subr.bf16.mxu0 0
    %1256 = vmatpush1.bf16.msra.mxu0 0
    %1257 = vmatprep.mubr.bf16.mxu0 0
    %1258 = vmatmul.mubr.bf16.gmra.mrb[0].mxu0 %v1220
    %v1259 = vpop.f32.mrb[0].mxu0
    %v1260 = vadd.f32 0.0, %v1259
    %v1261 = vpop.f32.mrb[0].mxu0
    %v1262 = vpop.f32.mrb[0].mxu0
    %v1263 = vpop.f32.mrb[0].mxu0
    %1264 = vdwg.mxu0
    %1265 = vrot.lane.b32.xlu0 %v541, 80
    %v1266 = vpop.permute.xlu0 %1265
    %v1268 = vsel %vm639, %v1216, 0
    %v1271 = vsel %vm670, %v1266, 0
    %1273 = vmatprep.subr.bf16.mxu0 0
    %1274 = vmatpush1.bf16.msra.mxu0 %v1271
    %1275 = vmatprep.subr.bf16.mxu0 0
    %1276 = vmatpush1.bf16.msra.mxu0 0
    %1277 = vmatprep.subr.bf16.mxu0 0
    %1278 = vmatpush1.bf16.msra.mxu0 0
    %1279 = vmatprep.subr.bf16.mxu0 0
    %1280 = vmatpush1.bf16.msra.mxu0 0
    %1281 = vmatprep.subr.bf16.mxu0 0
    %1282 = vmatpush1.bf16.msra.mxu0 0
    %1283 = vmatprep.subr.bf16.mxu0 0
    %1284 = vmatpush1.bf16.msra.mxu0 0
    %1285 = vmatprep.subr.bf16.mxu0 0
    %1286 = vmatpush1.bf16.msra.mxu0 0
    %1287 = vmatprep.subr.bf16.mxu0 0
    %1288 = vmatpush1.bf16.msra.mxu0 0
    %1289 = vmatprep.subr.bf16.mxu0 0
    %1290 = vmatpush1.bf16.msra.mxu0 0
    %1291 = vmatprep.subr.bf16.mxu0 0
    %1292 = vmatpush1.bf16.msra.mxu0 0
    %1293 = vmatprep.subr.bf16.mxu0 0
    %1294 = vmatpush1.bf16.msra.mxu0 0
    %1295 = vmatprep.subr.bf16.mxu0 0
    %1296 = vmatpush1.bf16.msra.mxu0 0
    %1297 = vmatprep.subr.bf16.mxu0 0
    %1298 = vmatpush1.bf16.msra.mxu0 0
    %1299 = vmatprep.subr.bf16.mxu0 0
    %1300 = vmatpush1.bf16.msra.mxu0 0
    %1301 = vmatprep.subr.bf16.mxu0 0
    %1302 = vmatpush1.bf16.msra.mxu0 0
    %1303 = vmatprep.subr.bf16.mxu0 0
    %1304 = vmatpush1.bf16.msra.mxu0 0
    %1305 = vmatprep.mubr.bf16.mxu0 0
    %1306 = vmatmul.mubr.bf16.gmra.mrb[0].mxu0 %v1268
    %v1307 = vpop.f32.mrb[0].mxu0
    %v1308 = vadd.f32 0.0, %v1307
    %v1309 = vpop.f32.mrb[0].mxu0
    %v1310 = vpop.f32.mrb[0].mxu0
    %v1311 = vpop.f32.mrb[0].mxu0
    %1312 = vdwg.mxu0
    %v1313 = vpack.c.bf16 %v1308, %v1260
    %s1314 = scalar_lea.vmem [#allocation16], 8
    %v1315 = vld [vmem:[%s1314] sm:$0xf]
    %v1317 = vsel %vm542, %v1313, 0
    %v1320 = vsel %vm997, %v1315, 0
    %1322 = vmatprep.subr.bf16.mxu0 0
    %1323 = vmatpush1.bf16.msra.mxu0 %v1320
    %1324 = vmatprep.subr.bf16.mxu0 0
    %1325 = vmatpush1.bf16.msra.mxu0 0
    %1326 = vmatprep.subr.bf16.mxu0 0
    %1327 = vmatpush1.bf16.msra.mxu0 0
    %1328 = vmatprep.subr.bf16.mxu0 0
    %1329 = vmatpush1.bf16.msra.mxu0 0
    %1330 = vmatprep.subr.bf16.mxu0 0
    %1331 = vmatpush1.bf16.msra.mxu0 0
    %1332 = vmatprep.subr.bf16.mxu0 0
    %1333 = vmatpush1.bf16.msra.mxu0 0
    %1334 = vmatprep.subr.bf16.mxu0 0
    %1335 = vmatpush1.bf16.msra.mxu0 0
    %1336 = vmatprep.subr.bf16.mxu0 0
    %1337 = vmatpush1.bf16.msra.mxu0 0
    %1338 = vmatprep.subr.bf16.mxu0 0
    %1339 = vmatpush1.bf16.msra.mxu0 0
    %1340 = vmatprep.subr.bf16.mxu0 0
    %1341 = vmatpush1.bf16.msra.mxu0 0
    %1342 = vmatprep.subr.bf16.mxu0 0
    %1343 = vmatpush1.bf16.msra.mxu0 0
    %1344 = vmatprep.subr.bf16.mxu0 0
    %1345 = vmatpush1.bf16.msra.mxu0 0
    %1346 = vmatprep.subr.bf16.mxu0 0
    %1347 = vmatpush1.bf16.msra.mxu0 0
    %1348 = vmatprep.subr.bf16.mxu0 0
    %1349 = vmatpush1.bf16.msra.mxu0 0
    %1350 = vmatprep.subr.bf16.mxu0 0
    %1351 = vmatpush1.bf16.msra.mxu0 0
    %1352 = vmatprep.subr.bf16.mxu0 0
    %1353 = vmatpush1.bf16.msra.mxu0 0
    %1354 = vmatprep.mubr.bf16.mxu0 0
    %1355 = vmatmul.mubr.bf16.gmra.mrb[0].mxu0 %v1317
    %v1356 = vpop.f32.mrb[0].mxu0
    %v1357 = vadd.f32 0.0, %v1356
    %v1358 = vpop.f32.mrb[0].mxu0
    %v1359 = vpop.f32.mrb[0].mxu0
    %v1360 = vadd.f32 0.0, %v1359
    %v1361 = vpop.f32.mrb[0].mxu0
    %1362 = vdwg.mxu0
    %v1363 = vadd.f32 %v1083, %v1357
    %v1364 = vadd.f32 %v1086, %v1360
    %1365 = vrot.lane.b32.xlu0 %v504, 104
    %v1366 = vpop.permute.xlu0 %1365
    %1367 = vrot.lane.b32.xlu0 %v540, 104
    %v1368 = vpop.permute.xlu0 %1367
    %v1370 = vsel %vm542, %v1366, 0
    %v1373 = vsel %vm542, %v1368, 0
    %1375 = vmatprep.subr.bf16.mxu0 0
    %1376 = vmatpush1.bf16.xpose.msra.mxu0 %v1373
    %1377 = vmatprep.subr.bf16.mxu0 0
    %1378 = vmatpush1.bf16.xpose.msra.mxu0 0
    %1379 = vmatprep.subr.bf16.mxu0 0
    %1380 = vmatpush1.bf16.xpose.msra.mxu0 0
    %1381 = vmatprep.subr.bf16.mxu0 0
    %1382 = vmatpush1.bf16.xpose.msra.mxu0 0
    %1383 = vmatprep.subr.bf16.mxu0 0
    %1384 = vmatpush1.bf16.xpose.msra.mxu0 0
    %1385 = vmatprep.subr.bf16.mxu0 0
    %1386 = vmatpush1.bf16.xpose.msra.mxu0 0
    %1387 = vmatprep.subr.bf16.mxu0 0
    %1388 = vmatpush1.bf16.xpose.msra.mxu0 0
    %1389 = vmatprep.subr.bf16.mxu0 0
    %1390 = vmatpush1.bf16.xpose.msra.mxu0 0
    %1391 = vmatprep.subr.bf16.mxu0 0
    %1392 = vmatpush1.bf16.xpose.msra.mxu0 0
    %1393 = vmatprep.subr.bf16.mxu0 0
    %1394 = vmatpush1.bf16.xpose.msra.mxu0 0
    %1395 = vmatprep.subr.bf16.mxu0 0
    %1396 = vmatpush1.bf16.xpose.msra.mxu0 0
    %1397 = vmatprep.subr.bf16.mxu0 0
    %1398 = vmatpush1.bf16.xpose.msra.mxu0 0
    %1399 = vmatprep.subr.bf16.mxu0 0
    %1400 = vmatpush1.bf16.xpose.msra.mxu0 0
    %1401 = vmatprep.subr.bf16.mxu0 0
    %1402 = vmatpush1.bf16.xpose.msra.mxu0 0
    %1403 = vmatprep.subr.bf16.mxu0 0
    %1404 = vmatpush1.bf16.xpose.msra.mxu0 0
    %1405 = vmatprep.subr.bf16.mxu0 0
    %1406 = vmatpush1.bf16.xpose.msra.mxu0 0
    %1407 = vmatprep.mubr.bf16.mxu0 0
    %1408 = vmatmul.mubr.bf16.gmra.mrb[0].mxu0 %v1370
    %v1409 = vpop.f32.mrb[0].mxu0
    %v1410 = vadd.f32 0.0, %v1409
    %v1411 = vpop.f32.mrb[0].mxu0
    %v1412 = vpop.f32.mrb[0].mxu0
    %v1413 = vpop.f32.mrb[0].mxu0
    %1414 = vdwg.mxu0
    %1415 = vrot.lane.b32.xlu0 %v505, 104
    %v1416 = vpop.permute.xlu0 %1415
    %1417 = vrot.lane.b32.xlu0 %v541, 104
    %v1418 = vpop.permute.xlu0 %1417
    %v1420 = vsel %vm542, %v1416, 0
    %v1423 = vsel %vm542, %v1418, 0
    %1425 = vmatprep.subr.bf16.mxu0 0
    %1426 = vmatpush1.bf16.xpose.msra.mxu0 %v1423
    %1427 = vmatprep.subr.bf16.mxu0 0
    %1428 = vmatpush1.bf16.xpose.msra.mxu0 0
    %1429 = vmatprep.subr.bf16.mxu0 0
    %1430 = vmatpush1.bf16.xpose.msra.mxu0 0
    %1431 = vmatprep.subr.bf16.mxu0 0
    %1432 = vmatpush1.bf16.xpose.msra.mxu0 0
    %1433 = vmatprep.subr.bf16.mxu0 0
    %1434 = vmatpush1.bf16.xpose.msra.mxu0 0
    %1435 = vmatprep.subr.bf16.mxu0 0
    %1436 = vmatpush1.bf16.xpose.msra.mxu0 0
    %1437 = vmatprep.subr.bf16.mxu0 0
    %1438 = vmatpush1.bf16.xpose.msra.mxu0 0
    %1439 = vmatprep.subr.bf16.mxu0 0
    %1440 = vmatpush1.bf16.xpose.msra.mxu0 0
    %1441 = vmatprep.subr.bf16.mxu0 0
    %1442 = vmatpush1.bf16.xpose.msra.mxu0 0
    %1443 = vmatprep.subr.bf16.mxu0 0
    %1444 = vmatpush1.bf16.xpose.msra.mxu0 0
    %1445 = vmatprep.subr.bf16.mxu0 0
    %1446 = vmatpush1.bf16.xpose.msra.mxu0 0
    %1447 = vmatprep.subr.bf16.mxu0 0
    %1448 = vmatpush1.bf16.xpose.msra.mxu0 0
    %1449 = vmatprep.subr.bf16.mxu0 0
    %1450 = vmatpush1.bf16.xpose.msra.mxu0 0
    %1451 = vmatprep.subr.bf16.mxu0 0
    %1452 = vmatpush1.bf16.xpose.msra.mxu0 0
    %1453 = vmatprep.subr.bf16.mxu0 0
    %1454 = vmatpush1.bf16.xpose.msra.mxu0 0
    %1455 = vmatprep.subr.bf16.mxu0 0
    %1456 = vmatpush1.bf16.xpose.msra.mxu0 0
    %1457 = vmatprep.mubr.bf16.mxu0 0
    %1458 = vmatmul.mubr.bf16.gmra.mrb[0].mxu0 %v1420
    %v1459 = vpop.f32.mrb[0].mxu0
    %v1460 = vadd.f32 0.0, %v1459
    %v1461 = vpop.f32.mrb[0].mxu0
    %v1462 = vpop.f32.mrb[0].mxu0
    %v1463 = vpop.f32.mrb[0].mxu0
    %1464 = vdwg.mxu0
    %v1465 = vmul.f32 %v1410, 0.35355338
    %v1466 = vmul.f32 %v1460, 0.35355338
    %v1467 = vadd.f32 %v1465, %v338
    %v1468 = vadd.f32 %v1466, %v342
    %v1469 = vsel %vm639, %v1467, -inf
    %1470 = vmax.xlane.f32.xlu0 %v1469
    %v1471 = vpop.xlane.xlu0 %1470
    %v1472 = vsel %vm639, %v1468, -inf
    %1473 = vmax.xlane.f32.xlu0 %v1472
    %v1474 = vpop.xlane.xlu0 %1473
    %v1475 = vsub.f32 %v1467, %v1471
    %v1476 = vsub.f32 %v1468, %v1474
    %v1477 = vmul.f32 %v1475, 1.442695
    %v1478 = vpow.pop %v1477
    %v1479 = vmul.f32 %v1476, 1.442695
    %v1480 = vpow.pop %v1479
    %v1481 = vsel %vm639, %v1478, 0.0
    %1482 = vadd.xlane.f32.xlu0 %v1481
    %v1483 = vpop.xlane.xlu0 %1482
    %v1484 = vsel %vm639, %v1480, 0.0
    %1485 = vadd.xlane.f32.xlu0 %v1484
    %v1486 = vpop.xlane.xlu0 %1485
    %v1487 = vrcp.pop %v1483
    %v1488 = vrcp.pop %v1486
    %v1489 = vmul.f32 %v1478, %v1487
    %v1490 = vmul.f32 %v1480, %v1488
    %v1491 = vpack.c.bf16 %v1489, %v1489
    %v1492 = vpack.c.bf16 %v1490, %v1490
    %1493 = vrot.lane.b32.xlu0 %v540, 72
    %v1494 = vpop.permute.xlu0 %1493
    %v1496 = vsel %vm639, %v1491, 0
    %v1499 = vsel %vm670, %v1494, 0
    %1501 = vmatprep.subr.bf16.mxu0 0
    %1502 = vmatpush1.bf16.msra.mxu0 %v1499
    %1503 = vmatprep.subr.bf16.mxu0 0
    %1504 = vmatpush1.bf16.msra.mxu0 0
    %1505 = vmatprep.subr.bf16.mxu0 0
    %1506 = vmatpush1.bf16.msra.mxu0 0
    %1507 = vmatprep.subr.bf16.mxu0 0
    %1508 = vmatpush1.bf16.msra.mxu0 0
    %1509 = vmatprep.subr.bf16.mxu0 0
    %1510 = vmatpush1.bf16.msra.mxu0 0
    %1511 = vmatprep.subr.bf16.mxu0 0
    %1512 = vmatpush1.bf16.msra.mxu0 0
    %1513 = vmatprep.subr.bf16.mxu0 0
    %1514 = vmatpush1.bf16.msra.mxu0 0
    %1515 = vmatprep.subr.bf16.mxu0 0
    %1516 = vmatpush1.bf16.msra.mxu0 0
    %1517 = vmatprep.subr.bf16.mxu0 0
    %1518 = vmatpush1.bf16.msra.mxu0 0
    %1519 = vmatprep.subr.bf16.mxu0 0
    %1520 = vmatpush1.bf16.msra.mxu0 0
    %1521 = vmatprep.subr.bf16.mxu0 0
    %1522 = vmatpush1.bf16.msra.mxu0 0
    %1523 = vmatprep.subr.bf16.mxu0 0
    %1524 = vmatpush1.bf16.msra.mxu0 0
    %1525 = vmatprep.subr.bf16.mxu0 0
    %1526 = vmatpush1.bf16.msra.mxu0 0
    %1527 = vmatprep.subr.bf16.mxu0 0
    %1528 = vmatpush1.bf16.msra.mxu0 0
    %1529 = vmatprep.subr.bf16.mxu0 0
    %1530 = vmatpush1.bf16.msra.mxu0 0
    %1531 = vmatprep.subr.bf16.mxu0 0
    %1532 = vmatpush1.bf16.msra.mxu0 0
    %1533 = vmatprep.mubr.bf16.mxu0 0
    %1534 = vmatmul.mubr.bf16.gmra.mrb[0].mxu0 %v1496
    %v1535 = vpop.f32.mrb[0].mxu0
    %v1536 = vadd.f32 0.0, %v1535
    %v1537 = vpop.f32.mrb[0].mxu0
    %v1538 = vpop.f32.mrb[0].mxu0
    %v1539 = vpop.f32.mrb[0].mxu0
    %1540 = vdwg.mxu0
    %1541 = vrot.lane.b32.xlu0 %v541, 72
    %v1542 = vpop.permute.xlu0 %1541
    %v1544 = vsel %vm639, %v1492, 0
    %v1547 = vsel %vm670, %v1542, 0
    %1549 = vmatprep.subr.bf16.mxu0 0
    %1550 = vmatpush1.bf16.msra.mxu0 %v1547
    %1551 = vmatprep.subr.bf16.mxu0 0
    %1552 = vmatpush1.bf16.msra.mxu0 0
    %1553 = vmatprep.subr.bf16.mxu0 0
    %1554 = vmatpush1.bf16.msra.mxu0 0
    %1555 = vmatprep.subr.bf16.mxu0 0
    %1556 = vmatpush1.bf16.msra.mxu0 0
    %1557 = vmatprep.subr.bf16.mxu0 0
    %1558 = vmatpush1.bf16.msra.mxu0 0
    %1559 = vmatprep.subr.bf16.mxu0 0
    %1560 = vmatpush1.bf16.msra.mxu0 0
    %1561 = vmatprep.subr.bf16.mxu0 0
    %1562 = vmatpush1.bf16.msra.mxu0 0
    %1563 = vmatprep.subr.bf16.mxu0 0
    %1564 = vmatpush1.bf16.msra.mxu0 0
    %1565 = vmatprep.subr.bf16.mxu0 0
    %1566 = vmatpush1.bf16.msra.mxu0 0
    %1567 = vmatprep.subr.bf16.mxu0 0
    %1568 = vmatpush1.bf16.msra.mxu0 0
    %1569 = vmatprep.subr.bf16.mxu0 0
    %1570 = vmatpush1.bf16.msra.mxu0 0
    %1571 = vmatprep.subr.bf16.mxu0 0
    %1572 = vmatpush1.bf16.msra.mxu0 0
    %1573 = vmatprep.subr.bf16.mxu0 0
    %1574 = vmatpush1.bf16.msra.mxu0 0
    %1575 = vmatprep.subr.bf16.mxu0 0
    %1576 = vmatpush1.bf16.msra.mxu0 0
    %1577 = vmatprep.subr.bf16.mxu0 0
    %1578 = vmatpush1.bf16.msra.mxu0 0
    %1579 = vmatprep.subr.bf16.mxu0 0
    %1580 = vmatpush1.bf16.msra.mxu0 0
    %1581 = vmatprep.mubr.bf16.mxu0 0
    %1582 = vmatmul.mubr.bf16.gmra.mrb[0].mxu0 %v1544
    %v1583 = vpop.f32.mrb[0].mxu0
    %v1584 = vadd.f32 0.0, %v1583
    %v1585 = vpop.f32.mrb[0].mxu0
    %v1586 = vpop.f32.mrb[0].mxu0
    %v1587 = vpop.f32.mrb[0].mxu0
    %1588 = vdwg.mxu0
    %v1589 = vpack.c.bf16 %v1584, %v1536
    %s1590 = scalar_lea.vmem [#allocation16], 12
    %v1591 = vld [vmem:[%s1590] sm:$0xf]
    %v1593 = vsel %vm542, %v1589, 0
    %v1596 = vsel %vm997, %v1591, 0
    %1598 = vmatprep.subr.bf16.mxu0 0
    %1599 = vmatpush1.bf16.msra.mxu0 %v1596
    %1600 = vmatprep.subr.bf16.mxu0 0
    %1601 = vmatpush1.bf16.msra.mxu0 0
    %1602 = vmatprep.subr.bf16.mxu0 0
    %1603 = vmatpush1.bf16.msra.mxu0 0
    %1604 = vmatprep.subr.bf16.mxu0 0
    %1605 = vmatpush1.bf16.msra.mxu0 0
    %1606 = vmatprep.subr.bf16.mxu0 0
    %1607 = vmatpush1.bf16.msra.mxu0 0
    %1608 = vmatprep.subr.bf16.mxu0 0
    %1609 = vmatpush1.bf16.msra.mxu0 0
    %1610 = vmatprep.subr.bf16.mxu0 0
    %1611 = vmatpush1.bf16.msra.mxu0 0
    %1612 = vmatprep.subr.bf16.mxu0 0
    %1613 = vmatpush1.bf16.msra.mxu0 0
    %1614 = vmatprep.subr.bf16.mxu0 0
    %1615 = vmatpush1.bf16.msra.mxu0 0
    %1616 = vmatprep.subr.bf16.mxu0 0
    %1617 = vmatpush1.bf16.msra.mxu0 0
    %1618 = vmatprep.subr.bf16.mxu0 0
    %1619 = vmatpush1.bf16.msra.mxu0 0
    %1620 = vmatprep.subr.bf16.mxu0 0
    %1621 = vmatpush1.bf16.msra.mxu0 0
    %1622 = vmatprep.subr.bf16.mxu0 0
    %1623 = vmatpush1.bf16.msra.mxu0 0
    %1624 = vmatprep.subr.bf16.mxu0 0
    %1625 = vmatpush1.bf16.msra.mxu0 0
    %1626 = vmatprep.subr.bf16.mxu0 0
    %1627 = vmatpush1.bf16.msra.mxu0 0
    %1628 = vmatprep.subr.bf16.mxu0 0
    %1629 = vmatpush1.bf16.msra.mxu0 0
    %1630 = vmatprep.mubr.bf16.mxu0 0
    %1631 = vmatmul.mubr.bf16.gmra.mrb[0].mxu0 %v1593
    %v1632 = vpop.f32.mrb[0].mxu0
    %v1633 = vadd.f32 0.0, %v1632
    %v1634 = vpop.f32.mrb[0].mxu0
    %v1635 = vpop.f32.mrb[0].mxu0
    %v1636 = vadd.f32 0.0, %v1635
    %v1637 = vpop.f32.mrb[0].mxu0
    %1638 = vdwg.mxu0
    %v1639 = vadd.f32 %v1363, %v1633
    %v1640 = vadd.f32 %v1364, %v1636
    %v1642 = vlaneseq
    %v1643 = vshrl.u32 %v1642, 7
    %v1644 = vsub.s32 0, %v1643
    %v1645 = vrot.slane %v352, %v1644
    %v1647 = vadd.f32 %v1639, %v1645
    %v1648 = vadd.f32 %v1640, %v1645
    %v1649 = vld [vmem:[#allocation7] sm:$0x3f]
    %v1650 = vld [vmem:[#allocation7 + $0x8] sm:$0x3f]
    %v1651 = vld [vmem:[#allocation19] sm:$0xf]
    %v1652 = vld [vmem:[#allocation19 + $0x4] sm:$0xf]
    %v1653 = vld [vmem:[#allocation19 + $0x8] sm:$0xf]
    %v1654 = vld [vmem:[#allocation19 + $0xc] sm:$0xf]
    %v1655 = vld [vmem:[#allocation20] sm:$0x1]
    %v1656 = vld [vmem:[#allocation23] sm:$0x1]
    %v1659 = vcombine.high %v1649, %v1649
    %v1661 = vunpack.c.l.s4 1983009808
    %v1662 = vunpack.c.0.s8 %v1661
    %v1663 = vlaneseq
    %v1664 = vshrl.u32 %v1663, 7
    %v1665 = vsub.s32 %v1662, %v1664
    %v1666 = vrot.slane %v1649, %v1665
    %v1668 = vunpack.c.l.s4 1983009808
    %v1669 = vunpack.c.0.s8 %v1668
    %v1670 = vlaneseq
    %v1671 = vshrl.u32 %v1670, 7
    %v1672 = vsub.s32 %v1669, %v1671
    %v1673 = vrot.slane %v1659, %v1672
    %v1674 = vcombine.high %v1666, %v1666
    %v1675 = vcombine.high %v1650, %v1650
    %v1677 = vunpack.c.l.s4 1983009808
    %v1678 = vunpack.c.0.s8 %v1677
    %v1679 = vlaneseq
    %v1680 = vshrl.u32 %v1679, 7
    %v1681 = vsub.s32 %v1678, %v1680
    %v1682 = vrot.slane %v1650, %v1681
    %v1684 = vunpack.c.l.s4 1983009808
    %v1685 = vunpack.c.0.s8 %v1684
    %v1686 = vlaneseq
    %v1687 = vshrl.u32 %v1686, 7
    %v1688 = vsub.s32 %v1685, %v1687
    %v1689 = vrot.slane %v1675, %v1688
    %v1690 = vcombine.high %v1682, %v1682
    %v1691 = vcombine.low %v1666, %v1674
    %v1692 = vcombine.low %v1673, %v1682
    %v1694 = vunpack.c.l.s4 1983009808
    %v1695 = vunpack.c.0.s8 %v1694
    %v1696 = vlaneseq
    %v1697 = vshrl.u32 %v1696, 7
    %v1698 = vsub.s32 %v1695, %v1697
    %v1699 = vrot.slane %v1691, %v1698
    %v1701 = vunpack.c.l.s4 1983009808
    %v1702 = vunpack.c.0.s8 %v1701
    %v1703 = vlaneseq
    %v1704 = vshrl.u32 %v1703, 7
    %v1705 = vsub.s32 %v1702, %v1704
    %v1706 = vrot.slane %v1692, %v1705
    %v1707 = vcombine.low %v1699, %v1706
    %v1708 = vcombine.low %v1690, %v1689
    %v1710 = vunpack.c.l.s4 1983009808
    %v1711 = vunpack.c.0.s8 %v1710
    %v1712 = vlaneseq
    %v1713 = vshrl.u32 %v1712, 7
    %v1714 = vsub.s32 %v1711, %v1713
    %v1715 = vrot.slane %v1708, %v1714
    %v1718 = vpack.c.bf16 %v1715, %v1707
    %v1720 = vlaneseq
    %v1721 = vshrl.u32 %v1720, 7
    %v1722 = vsub.s32 0, %v1721
    %v1723 = vrot.slane %v1655, %v1722
    %v1729 = vunpack.c.l.b16 %v1651
    %v1730 = vunpack.c.l.b16 %v1652
    %v1731 = vunpack.c.l.b16 %v1653
    %v1732 = vunpack.c.l.b16 %v1654
    %v1733 = vpack.c.b16 %v1730, %v1729
    %v1734 = vpack.c.b16 %v1732, %v1731
    %v1738 = vsel %vm231, %v1718, 0
    %1740 = vmatprep.subr.bf16.mxu0 0
    %1741 = vmatpush1.bf16.msra.mxu0 %v1733
    %1742 = vmatprep.subr.bf16.mxu0 0
    %1743 = vmatpush1.bf16.msra.mxu0 %v1734
    %1744 = vmatprep.subr.bf16.mxu0 0
    %1745 = vmatpush1.bf16.msra.mxu0 0
    %1746 = vmatprep.subr.bf16.mxu0 0
    %1747 = vmatpush1.bf16.msra.mxu0 0
    %1748 = vmatprep.subr.bf16.mxu0 0
    %1749 = vmatpush1.bf16.msra.mxu0 0
    %1750 = vmatprep.subr.bf16.mxu0 0
    %1751 = vmatpush1.bf16.msra.mxu0 0
    %1752 = vmatprep.subr.bf16.mxu0 0
    %1753 = vmatpush1.bf16.msra.mxu0 0
    %1754 = vmatprep.subr.bf16.mxu0 0
    %1755 = vmatpush1.bf16.msra.mxu0 0
    %1756 = vmatprep.subr.bf16.mxu0 0
    %1757 = vmatpush1.bf16.msra.mxu0 0
    %1758 = vmatprep.subr.bf16.mxu0 0
    %1759 = vmatpush1.bf16.msra.mxu0 0
    %1760 = vmatprep.subr.bf16.mxu0 0
    %1761 = vmatpush1.bf16.msra.mxu0 0
    %1762 = vmatprep.subr.bf16.mxu0 0
    %1763 = vmatpush1.bf16.msra.mxu0 0
    %1764 = vmatprep.subr.bf16.mxu0 0
    %1765 = vmatpush1.bf16.msra.mxu0 0
    %1766 = vmatprep.subr.bf16.mxu0 0
    %1767 = vmatpush1.bf16.msra.mxu0 0
    %1768 = vmatprep.subr.bf16.mxu0 0
    %1769 = vmatpush1.bf16.msra.mxu0 0
    %1770 = vmatprep.subr.bf16.mxu0 0
    %1771 = vmatpush1.bf16.msra.mxu0 0
    %1772 = vmatprep.mubr.bf16.mxu0 0
    %1773 = vmatmul.mubr.bf16.gmra.mrb[0].mxu0 %v1738
    %v1774 = vpop.f32.mrb[0].mxu0
    %v1775 = vadd.f32 %v1723, %v1774
    %v1776 = vpop.f32.mrb[0].mxu0
    %v1777 = vpop.f32.mrb[0].mxu0
    %v1778 = vadd.f32 %v1723, %v1777
    %v1779 = vpop.f32.mrb[0].mxu0
    %1780 = vdwg.mxu0
    %v1783 = vcombine.high %v1775, %v1775
    %v1785 = vunpack.c.l.s4 1983009808
    %v1786 = vunpack.c.0.s8 %v1785
    %v1787 = vlaneseq
    %v1788 = vshrl.u32 %v1787, 7
    %v1789 = vsub.s32 %v1786, %v1788
    %v1790 = vrot.slane %v1775, %v1789
    %v1792 = vunpack.c.l.s4 1983009808
    %v1793 = vunpack.c.0.s8 %v1792
    %v1794 = vlaneseq
    %v1795 = vshrl.u32 %v1794, 7
    %v1796 = vsub.s32 %v1793, %v1795
    %v1797 = vrot.slane %v1783, %v1796
    %v1798 = vcombine.high %v1790, %v1790
    %v1799 = vcombine.high %v1797, %v1797
    %v1801 = vunpack.c.l.s4 1983009808
    %v1802 = vunpack.c.0.s8 %v1801
    %v1803 = vlaneseq
    %v1804 = vshrl.u32 %v1803, 7
    %v1805 = vsub.s32 %v1802, %v1804
    %v1806 = vrot.slane %v1778, %v1805
    %v1807 = vcombine.high %v1806, %v1806
    %v1808 = vcombine.low %v1790, %v1798
    %v1810 = vunpack.c.l.s4 1983009808
    %v1811 = vunpack.c.0.s8 %v1810
    %v1812 = vlaneseq
    %v1813 = vshrl.u32 %v1812, 7
    %v1814 = vsub.s32 %v1811, %v1813
    %v1815 = vrot.slane %v1808, %v1814
    %v1817 = vunpack.c.l.s4 1983009808
    %v1818 = vunpack.c.0.s8 %v1817
    %v1819 = vlaneseq
    %v1820 = vshrl.u32 %v1819, 7
    %v1821 = vsub.s32 %v1818, %v1820
    %v1822 = vrot.slane %v1797, %v1821
    %v1823 = vcombine.low %v1815, %v1822
    %v1824 = vcombine.low %v1799, %v1806
    %v1826 = vunpack.c.l.s4 1983009808
    %v1827 = vunpack.c.0.s8 %v1826
    %v1828 = vlaneseq
    %v1829 = vshrl.u32 %v1828, 7
    %v1830 = vsub.s32 %v1827, %v1829
    %v1831 = vrot.slane %v1824, %v1830
    %v1833 = vunpack.c.l.s4 1983009808
    %v1834 = vunpack.c.0.s8 %v1833
    %v1835 = vlaneseq
    %v1836 = vshrl.u32 %v1835, 7
    %v1837 = vsub.s32 %v1834, %v1836
    %v1838 = vrot.slane %v1807, %v1837
    %v1839 = vcombine.low %v1831, %v1838
    %v1842 = vpack.c.bf16 %v1823, %v1823
    %v1843 = vpack.c.bf16 %v1839, %v1839
    %1844 = vrot.lane.b32.xlu0 %v504, 96
    %v1845 = vpop.permute.xlu0 %1844
    %v1847 = vsel %vm542, %v1845, 0
    %v1850 = vsel %vm542, %v1842, 0
    %1852 = vmatprep.subr.bf16.mxu0 0
    %1853 = vmatpush1.bf16.xpose.msra.mxu0 %v1850
    %1854 = vmatprep.subr.bf16.mxu0 0
    %1855 = vmatpush1.bf16.xpose.msra.mxu0 0
    %1856 = vmatprep.subr.bf16.mxu0 0
    %1857 = vmatpush1.bf16.xpose.msra.mxu0 0
    %1858 = vmatprep.subr.bf16.mxu0 0
    %1859 = vmatpush1.bf16.xpose.msra.mxu0 0
    %1860 = vmatprep.subr.bf16.mxu0 0
    %1861 = vmatpush1.bf16.xpose.msra.mxu0 0
    %1862 = vmatprep.subr.bf16.mxu0 0
    %1863 = vmatpush1.bf16.xpose.msra.mxu0 0
    %1864 = vmatprep.subr.bf16.mxu0 0
    %1865 = vmatpush1.bf16.xpose.msra.mxu0 0
    %1866 = vmatprep.subr.bf16.mxu0 0
    %1867 = vmatpush1.bf16.xpose.msra.mxu0 0
    %1868 = vmatprep.subr.bf16.mxu0 0
    %1869 = vmatpush1.bf16.xpose.msra.mxu0 0
    %1870 = vmatprep.subr.bf16.mxu0 0
    %1871 = vmatpush1.bf16.xpose.msra.mxu0 0
    %1872 = vmatprep.subr.bf16.mxu0 0
    %1873 = vmatpush1.bf16.xpose.msra.mxu0 0
    %1874 = vmatprep.subr.bf16.mxu0 0
    %1875 = vmatpush1.bf16.xpose.msra.mxu0 0
    %1876 = vmatprep.subr.bf16.mxu0 0
    %1877 = vmatpush1.bf16.xpose.msra.mxu0 0
    %1878 = vmatprep.subr.bf16.mxu0 0
    %1879 = vmatpush1.bf16.xpose.msra.mxu0 0
    %1880 = vmatprep.subr.bf16.mxu0 0
    %1881 = vmatpush1.bf16.xpose.msra.mxu0 0
    %1882 = vmatprep.subr.bf16.mxu0 0
    %1883 = vmatpush1.bf16.xpose.msra.mxu0 0
    %1884 = vmatprep.mubr.bf16.mxu0 0
    %1885 = vmatmul.mubr.bf16.gmra.mrb[0].mxu0 %v1847
    %v1886 = vpop.f32.mrb[0].mxu0
    %v1887 = vadd.f32 0.0, %v1886
    %v1888 = vpop.f32.mrb[0].mxu0
    %v1889 = vpop.f32.mrb[0].mxu0
    %v1890 = vpop.f32.mrb[0].mxu0
    %1891 = vdwg.mxu0
    %1892 = vrot.lane.b32.xlu0 %v505, 96
    %v1893 = vpop.permute.xlu0 %1892
    %v1895 = vsel %vm542, %v1893, 0
    %v1898 = vsel %vm542, %v1843, 0
    %1900 = vmatprep.subr.bf16.mxu0 0
    %1901 = vmatpush1.bf16.xpose.msra.mxu0 %v1898
    %1902 = vmatprep.subr.bf16.mxu0 0
    %1903 = vmatpush1.bf16.xpose.msra.mxu0 0
    %1904 = vmatprep.subr.bf16.mxu0 0
    %1905 = vmatpush1.bf16.xpose.msra.mxu0 0
    %1906 = vmatprep.subr.bf16.mxu0 0
    %1907 = vmatpush1.bf16.xpose.msra.mxu0 0
    %1908 = vmatprep.subr.bf16.mxu0 0
    %1909 = vmatpush1.bf16.xpose.msra.mxu0 0
    %1910 = vmatprep.subr.bf16.mxu0 0
    %1911 = vmatpush1.bf16.xpose.msra.mxu0 0
    %1912 = vmatprep.subr.bf16.mxu0 0
    %1913 = vmatpush1.bf16.xpose.msra.mxu0 0
    %1914 = vmatprep.subr.bf16.mxu0 0
    %1915 = vmatpush1.bf16.xpose.msra.mxu0 0
    %1916 = vmatprep.subr.bf16.mxu0 0
    %1917 = vmatpush1.bf16.xpose.msra.mxu0 0
    %1918 = vmatprep.subr.bf16.mxu0 0
    %1919 = vmatpush1.bf16.xpose.msra.mxu0 0
    %1920 = vmatprep.subr.bf16.mxu0 0
    %1921 = vmatpush1.bf16.xpose.msra.mxu0 0
    %1922 = vmatprep.subr.bf16.mxu0 0
    %1923 = vmatpush1.bf16.xpose.msra.mxu0 0
    %1924 = vmatprep.subr.bf16.mxu0 0
    %1925 = vmatpush1.bf16.xpose.msra.mxu0 0
    %1926 = vmatprep.subr.bf16.mxu0 0
    %1927 = vmatpush1.bf16.xpose.msra.mxu0 0
    %1928 = vmatprep.subr.bf16.mxu0 0
    %1929 = vmatpush1.bf16.xpose.msra.mxu0 0
    %1930 = vmatprep.subr.bf16.mxu0 0
    %1931 = vmatpush1.bf16.xpose.msra.mxu0 0
    %1932 = vmatprep.mubr.bf16.mxu0 0
    %1933 = vmatmul.mubr.bf16.gmra.mrb[0].mxu0 %v1895
    %v1934 = vpop.f32.mrb[0].mxu0
    %v1935 = vadd.f32 0.0, %v1934
    %v1936 = vpop.f32.mrb[0].mxu0
    %v1937 = vpop.f32.mrb[0].mxu0
    %v1938 = vpop.f32.mrb[0].mxu0
    %1939 = vdwg.mxu0
    %v1940 = vmul.f32 %v1887, 0.35355338
    %v1941 = vmul.f32 %v1935, 0.35355338
    %v1942 = vadd.f32 %v1940, %v338
    %v1943 = vadd.f32 %v1941, %v342
    %v1944 = vsel %vm639, %v1942, -inf
    %1945 = vmax.xlane.f32.xlu0 %v1944
    %v1946 = vpop.xlane.xlu0 %1945
    %v1947 = vsel %vm639, %v1943, -inf
    %1948 = vmax.xlane.f32.xlu0 %v1947
    %v1949 = vpop.xlane.xlu0 %1948
    %v1950 = vsub.f32 %v1942, %v1946
    %v1951 = vsub.f32 %v1943, %v1949
    %v1952 = vmul.f32 %v1950, 1.442695
    %v1953 = vpow.pop %v1952
    %v1954 = vmul.f32 %v1951, 1.442695
    %v1955 = vpow.pop %v1954
    %v1956 = vsel %vm639, %v1953, 0.0
    %1957 = vadd.xlane.f32.xlu0 %v1956
    %v1958 = vpop.xlane.xlu0 %1957
    %v1959 = vsel %vm639, %v1955, 0.0
    %1960 = vadd.xlane.f32.xlu0 %v1959
    %v1961 = vpop.xlane.xlu0 %1960
    %v1962 = vrcp.pop %v1958
    %v1963 = vrcp.pop %v1961
    %v1964 = vmul.f32 %v1953, %v1962
    %v1965 = vmul.f32 %v1955, %v1963
    %v1966 = vpack.c.bf16 %v1964, %v1964
    %v1967 = vpack.c.bf16 %v1965, %v1965
    %1969 = vrot.lane.b32.xlu0 %v1842, 96
    %v1970 = vpop.permute.xlu0 %1969
    %v1972 = vsel %vm639, %v1966, 0
    %v1975 = vsel %vm670, %v1970, 0
    %1977 = vmatprep.subr.bf16.mxu0 0
    %1978 = vmatpush1.bf16.msra.mxu0 %v1975
    %1979 = vmatprep.subr.bf16.mxu0 0
    %1980 = vmatpush1.bf16.msra.mxu0 0
    %1981 = vmatprep.subr.bf16.mxu0 0
    %1982 = vmatpush1.bf16.msra.mxu0 0
    %1983 = vmatprep.subr.bf16.mxu0 0
    %1984 = vmatpush1.bf16.msra.mxu0 0
    %1985 = vmatprep.subr.bf16.mxu0 0
    %1986 = vmatpush1.bf16.msra.mxu0 0
    %1987 = vmatprep.subr.bf16.mxu0 0
    %1988 = vmatpush1.bf16.msra.mxu0 0
    %1989 = vmatprep.subr.bf16.mxu0 0
    %1990 = vmatpush1.bf16.msra.mxu0 0
    %1991 = vmatprep.subr.bf16.mxu0 0
    %1992 = vmatpush1.bf16.msra.mxu0 0
    %1993 = vmatprep.subr.bf16.mxu0 0
    %1994 = vmatpush1.bf16.msra.mxu0 0
    %1995 = vmatprep.subr.bf16.mxu0 0
    %1996 = vmatpush1.bf16.msra.mxu0 0
    %1997 = vmatprep.subr.bf16.mxu0 0
    %1998 = vmatpush1.bf16.msra.mxu0 0
    %1999 = vmatprep.subr.bf16.mxu0 0
    %2000 = vmatpush1.bf16.msra.mxu0 0
    %2001 = vmatprep.subr.bf16.mxu0 0
    %2002 = vmatpush1.bf16.msra.mxu0 0
    %2003 = vmatprep.subr.bf16.mxu0 0
    %2004 = vmatpush1.bf16.msra.mxu0 0
    %2005 = vmatprep.subr.bf16.mxu0 0
    %2006 = vmatpush1.bf16.msra.mxu0 0
    %2007 = vmatprep.subr.bf16.mxu0 0
    %2008 = vmatpush1.bf16.msra.mxu0 0
    %2009 = vmatprep.mubr.bf16.mxu0 0
    %2010 = vmatmul.mubr.bf16.gmra.mrb[0].mxu0 %v1972
    %v2011 = vpop.f32.mrb[0].mxu0
    %v2012 = vadd.f32 0.0, %v2011
    %v2013 = vpop.f32.mrb[0].mxu0
    %v2014 = vpop.f32.mrb[0].mxu0
    %v2015 = vpop.f32.mrb[0].mxu0
    %2016 = vdwg.mxu0
    %2018 = vrot.lane.b32.xlu0 %v1843, 96
    %v2019 = vpop.permute.xlu0 %2018
    %v2021 = vsel %vm639, %v1967, 0
    %v2024 = vsel %vm670, %v2019, 0
    %2026 = vmatprep.subr.bf16.mxu0 0
    %2027 = vmatpush1.bf16.msra.mxu0 %v2024
    %2028 = vmatprep.subr.bf16.mxu0 0
    %2029 = vmatpush1.bf16.msra.mxu0 0
    %2030 = vmatprep.subr.bf16.mxu0 0
    %2031 = vmatpush1.bf16.msra.mxu0 0
    %2032 = vmatprep.subr.bf16.mxu0 0
    %2033 = vmatpush1.bf16.msra.mxu0 0
    %2034 = vmatprep.subr.bf16.mxu0 0
    %2035 = vmatpush1.bf16.msra.mxu0 0
    %2036 = vmatprep.subr.bf16.mxu0 0
    %2037 = vmatpush1.bf16.msra.mxu0 0
    %2038 = vmatprep.subr.bf16.mxu0 0
    %2039 = vmatpush1.bf16.msra.mxu0 0
    %2040 = vmatprep.subr.bf16.mxu0 0
    %2041 = vmatpush1.bf16.msra.mxu0 0
    %2042 = vmatprep.subr.bf16.mxu0 0
    %2043 = vmatpush1.bf16.msra.mxu0 0
    %2044 = vmatprep.subr.bf16.mxu0 0
    %2045 = vmatpush1.bf16.msra.mxu0 0
    %2046 = vmatprep.subr.bf16.mxu0 0
    %2047 = vmatpush1.bf16.msra.mxu0 0
    %2048 = vmatprep.subr.bf16.mxu0 0
    %2049 = vmatpush1.bf16.msra.mxu0 0
    %2050 = vmatprep.subr.bf16.mxu0 0
    %2051 = vmatpush1.bf16.msra.mxu0 0
    %2052 = vmatprep.subr.bf16.mxu0 0
    %2053 = vmatpush1.bf16.msra.mxu0 0
    %2054 = vmatprep.subr.bf16.mxu0 0
    %2055 = vmatpush1.bf16.msra.mxu0 0
    %2056 = vmatprep.subr.bf16.mxu0 0
    %2057 = vmatpush1.bf16.msra.mxu0 0
    %2058 = vmatprep.mubr.bf16.mxu0 0
    %2059 = vmatmul.mubr.bf16.gmra.mrb[0].mxu0 %v2021
    %v2060 = vpop.f32.mrb[0].mxu0
    %v2061 = vadd.f32 0.0, %v2060
    %v2062 = vpop.f32.mrb[0].mxu0
    %v2063 = vpop.f32.mrb[0].mxu0
    %v2064 = vpop.f32.mrb[0].mxu0
    %2065 = vdwg.mxu0
    %v2066 = vpack.c.bf16 %v2061, %v2012
    %v2067 = vld [vmem:[#allocation22] sm:$0xf]
    %2068 = vrot.lane.b32.xlu0 %v504, 88
    %v2069 = vpop.permute.xlu0 %2068
    %2070 = vrot.lane.b32.xlu0 %v1842, 120
    %v2071 = vpop.permute.xlu0 %2070
    %v2073 = vsel %vm542, %v2069, 0
    %v2076 = vsel %vm542, %v2071, 0
    %2078 = vmatprep.subr.bf16.mxu0 0
    %2079 = vmatpush1.bf16.xpose.msra.mxu0 %v2076
    %2080 = vmatprep.subr.bf16.mxu0 0
    %2081 = vmatpush1.bf16.xpose.msra.mxu0 0
    %2082 = vmatprep.subr.bf16.mxu0 0
    %2083 = vmatpush1.bf16.xpose.msra.mxu0 0
    %2084 = vmatprep.subr.bf16.mxu0 0
    %2085 = vmatpush1.bf16.xpose.msra.mxu0 0
    %2086 = vmatprep.subr.bf16.mxu0 0
    %2087 = vmatpush1.bf16.xpose.msra.mxu0 0
    %2088 = vmatprep.subr.bf16.mxu0 0
    %2089 = vmatpush1.bf16.xpose.msra.mxu0 0
    %2090 = vmatprep.subr.bf16.mxu0 0
    %2091 = vmatpush1.bf16.xpose.msra.mxu0 0
    %2092 = vmatprep.subr.bf16.mxu0 0
    %2093 = vmatpush1.bf16.xpose.msra.mxu0 0
    %2094 = vmatprep.subr.bf16.mxu0 0
    %2095 = vmatpush1.bf16.xpose.msra.mxu0 0
    %2096 = vmatprep.subr.bf16.mxu0 0
    %2097 = vmatpush1.bf16.xpose.msra.mxu0 0
    %2098 = vmatprep.subr.bf16.mxu0 0
    %2099 = vmatpush1.bf16.xpose.msra.mxu0 0
    %2100 = vmatprep.subr.bf16.mxu0 0
    %2101 = vmatpush1.bf16.xpose.msra.mxu0 0
    %2102 = vmatprep.subr.bf16.mxu0 0
    %2103 = vmatpush1.bf16.xpose.msra.mxu0 0
    %2104 = vmatprep.subr.bf16.mxu0 0
    %2105 = vmatpush1.bf16.xpose.msra.mxu0 0
    %2106 = vmatprep.subr.bf16.mxu0 0
    %2107 = vmatpush1.bf16.xpose.msra.mxu0 0
    %2108 = vmatprep.subr.bf16.mxu0 0
    %2109 = vmatpush1.bf16.xpose.msra.mxu0 0
    %2110 = vmatprep.mubr.bf16.mxu0 0
    %2111 = vmatmul.mubr.bf16.gmra.mrb[0].mxu0 %v2073
    %v2112 = vpop.f32.mrb[0].mxu0
    %v2113 = vadd.f32 0.0, %v2112
    %v2114 = vpop.f32.mrb[0].mxu0
    %v2115 = vpop.f32.mrb[0].mxu0
    %v2116 = vpop.f32.mrb[0].mxu0
    %2117 = vdwg.mxu0
    %2118 = vrot.lane.b32.xlu0 %v505, 88
    %v2119 = vpop.permute.xlu0 %2118
    %2120 = vrot.lane.b32.xlu0 %v1843, 120
    %v2121 = vpop.permute.xlu0 %2120
    %v2123 = vsel %vm542, %v2119, 0
    %v2126 = vsel %vm542, %v2121, 0
    %2128 = vmatprep.subr.bf16.mxu0 0
    %2129 = vmatpush1.bf16.xpose.msra.mxu0 %v2126
    %2130 = vmatprep.subr.bf16.mxu0 0
    %2131 = vmatpush1.bf16.xpose.msra.mxu0 0
    %2132 = vmatprep.subr.bf16.mxu0 0
    %2133 = vmatpush1.bf16.xpose.msra.mxu0 0
    %2134 = vmatprep.subr.bf16.mxu0 0
    %2135 = vmatpush1.bf16.xpose.msra.mxu0 0
    %2136 = vmatprep.subr.bf16.mxu0 0
    %2137 = vmatpush1.bf16.xpose.msra.mxu0 0
    %2138 = vmatprep.subr.bf16.mxu0 0
    %2139 = vmatpush1.bf16.xpose.msra.mxu0 0
    %2140 = vmatprep.subr.bf16.mxu0 0
    %2141 = vmatpush1.bf16.xpose.msra.mxu0 0
    %2142 = vmatprep.subr.bf16.mxu0 0
    %2143 = vmatpush1.bf16.xpose.msra.mxu0 0
    %2144 = vmatprep.subr.bf16.mxu0 0
    %2145 = vmatpush1.bf16.xpose.msra.mxu0 0
    %2146 = vmatprep.subr.bf16.mxu0 0
    %2147 = vmatpush1.bf16.xpose.msra.mxu0 0
    %2148 = vmatprep.subr.bf16.mxu0 0
    %2149 = vmatpush1.bf16.xpose.msra.mxu0 0
    %2150 = vmatprep.subr.bf16.mxu0 0
    %2151 = vmatpush1.bf16.xpose.msra.mxu0 0
    %2152 = vmatprep.subr.bf16.mxu0 0
    %2153 = vmatpush1.bf16.xpose.msra.mxu0 0
    %2154 = vmatprep.subr.bf16.mxu0 0
    %2155 = vmatpush1.bf16.xpose.msra.mxu0 0
    %2156 = vmatprep.subr.bf16.mxu0 0
    %2157 = vmatpush1.bf16.xpose.msra.mxu0 0
    %2158 = vmatprep.subr.bf16.mxu0 0
    %2159 = vmatpush1.bf16.xpose.msra.mxu0 0
    %2160 = vmatprep.mubr.bf16.mxu0 0
    %2161 = vmatmul.mubr.bf16.gmra.mrb[0].mxu0 %v2123
    %v2162 = vpop.f32.mrb[0].mxu0
    %v2163 = vadd.f32 0.0, %v2162
    %v2164 = vpop.f32.mrb[0].mxu0
    %v2165 = vpop.f32.mrb[0].mxu0
    %v2166 = vpop.f32.mrb[0].mxu0
    %2167 = vdwg.mxu0
    %v2168 = vmul.f32 %v2113, 0.35355338
    %v2169 = vmul.f32 %v2163, 0.35355338
    %v2170 = vadd.f32 %v2168, %v338
    %v2171 = vadd.f32 %v2169, %v342
    %v2172 = vsel %vm639, %v2170, -inf
    %2173 = vmax.xlane.f32.xlu0 %v2172
    %v2174 = vpop.xlane.xlu0 %2173
    %v2175 = vsel %vm639, %v2171, -inf
    %2176 = vmax.xlane.f32.xlu0 %v2175
    %v2177 = vpop.xlane.xlu0 %2176
    %v2178 = vsub.f32 %v2170, %v2174
    %v2179 = vsub.f32 %v2171, %v2177
    %v2180 = vmul.f32 %v2178, 1.442695
    %v2181 = vpow.pop %v2180
    %v2182 = vmul.f32 %v2179, 1.442695
    %v2183 = vpow.pop %v2182
    %v2184 = vsel %vm639, %v2181, 0.0
    %2185 = vadd.xlane.f32.xlu0 %v2184
    %v2186 = vpop.xlane.xlu0 %2185
    %v2187 = vsel %vm639, %v2183, 0.0
    %2188 = vadd.xlane.f32.xlu0 %v2187
    %v2189 = vpop.xlane.xlu0 %2188
    %v2190 = vrcp.pop %v2186
    %v2191 = vrcp.pop %v2189
    %v2192 = vmul.f32 %v2181, %v2190
    %v2193 = vmul.f32 %v2183, %v2191
    %v2194 = vpack.c.bf16 %v2192, %v2192
    %v2195 = vpack.c.bf16 %v2193, %v2193
    %2196 = vrot.lane.b32.xlu0 %v1842, 88
    %v2197 = vpop.permute.xlu0 %2196
    %v2199 = vsel %vm639, %v2194, 0
    %v2202 = vsel %vm670, %v2197, 0
    %2204 = vmatprep.subr.bf16.mxu0 0
    %2205 = vmatpush1.bf16.msra.mxu0 %v2202
    %2206 = vmatprep.subr.bf16.mxu0 0
    %2207 = vmatpush1.bf16.msra.mxu0 0
    %2208 = vmatprep.subr.bf16.mxu0 0
    %2209 = vmatpush1.bf16.msra.mxu0 0
    %2210 = vmatprep.subr.bf16.mxu0 0
    %2211 = vmatpush1.bf16.msra.mxu0 0
    %2212 = vmatprep.subr.bf16.mxu0 0
    %2213 = vmatpush1.bf16.msra.mxu0 0
    %2214 = vmatprep.subr.bf16.mxu0 0
    %2215 = vmatpush1.bf16.msra.mxu0 0
    %2216 = vmatprep.subr.bf16.mxu0 0
    %2217 = vmatpush1.bf16.msra.mxu0 0
    %2218 = vmatprep.subr.bf16.mxu0 0
    %2219 = vmatpush1.bf16.msra.mxu0 0
    %2220 = vmatprep.subr.bf16.mxu0 0
    %2221 = vmatpush1.bf16.msra.mxu0 0
    %2222 = vmatprep.subr.bf16.mxu0 0
    %2223 = vmatpush1.bf16.msra.mxu0 0
    %2224 = vmatprep.subr.bf16.mxu0 0
    %2225 = vmatpush1.bf16.msra.mxu0 0
    %2226 = vmatprep.subr.bf16.mxu0 0
    %2227 = vmatpush1.bf16.msra.mxu0 0
    %2228 = vmatprep.subr.bf16.mxu0 0
    %2229 = vmatpush1.bf16.msra.mxu0 0
    %2230 = vmatprep.subr.bf16.mxu0 0
    %2231 = vmatpush1.bf16.msra.mxu0 0
    %2232 = vmatprep.subr.bf16.mxu0 0
    %2233 = vmatpush1.bf16.msra.mxu0 0
    %2234 = vmatprep.subr.bf16.mxu0 0
    %2235 = vmatpush1.bf16.msra.mxu0 0
    %2236 = vmatprep.mubr.bf16.mxu0 0
    %2237 = vmatmul.mubr.bf16.gmra.mrb[0].mxu0 %v2199
    %v2238 = vpop.f32.mrb[0].mxu0
    %v2239 = vadd.f32 0.0, %v2238
    %v2240 = vpop.f32.mrb[0].mxu0
    %v2241 = vpop.f32.mrb[0].mxu0
    %v2242 = vpop.f32.mrb[0].mxu0
    %2243 = vdwg.mxu0
    %2244 = vrot.lane.b32.xlu0 %v1843, 88
    %v2245 = vpop.permute.xlu0 %2244
    %v2247 = vsel %vm639, %v2195, 0
    %v2250 = vsel %vm670, %v2245, 0
    %2252 = vmatprep.subr.bf16.mxu0 0
    %2253 = vmatpush1.bf16.msra.mxu0 %v2250
    %2254 = vmatprep.subr.bf16.mxu0 0
    %2255 = vmatpush1.bf16.msra.mxu0 0
    %2256 = vmatprep.subr.bf16.mxu0 0
    %2257 = vmatpush1.bf16.msra.mxu0 0
    %2258 = vmatprep.subr.bf16.mxu0 0
    %2259 = vmatpush1.bf16.msra.mxu0 0
    %2260 = vmatprep.subr.bf16.mxu0 0
    %2261 = vmatpush1.bf16.msra.mxu0 0
    %2262 = vmatprep.subr.bf16.mxu0 0
    %2263 = vmatpush1.bf16.msra.mxu0 0
    %2264 = vmatprep.subr.bf16.mxu0 0
    %2265 = vmatpush1.bf16.msra.mxu0 0
    %2266 = vmatprep.subr.bf16.mxu0 0
    %2267 = vmatpush1.bf16.msra.mxu0 0
    %2268 = vmatprep.subr.bf16.mxu0 0
    %2269 = vmatpush1.bf16.msra.mxu0 0
    %2270 = vmatprep.subr.bf16.mxu0 0
    %2271 = vmatpush1.bf16.msra.mxu0 0
    %2272 = vmatprep.subr.bf16.mxu0 0
    %2273 = vmatpush1.bf16.msra.mxu0 0
    %2274 = vmatprep.subr.bf16.mxu0 0
    %2275 = vmatpush1.bf16.msra.mxu0 0
    %2276 = vmatprep.subr.bf16.mxu0 0
    %2277 = vmatpush1.bf16.msra.mxu0 0
    %2278 = vmatprep.subr.bf16.mxu0 0
    %2279 = vmatpush1.bf16.msra.mxu0 0
    %2280 = vmatprep.subr.bf16.mxu0 0
    %2281 = vmatpush1.bf16.msra.mxu0 0
    %2282 = vmatprep.subr.bf16.mxu0 0
    %2283 = vmatpush1.bf16.msra.mxu0 0
    %2284 = vmatprep.mubr.bf16.mxu0 0
    %2285 = vmatmul.mubr.bf16.gmra.mrb[0].mxu0 %v2247
    %v2286 = vpop.f32.mrb[0].mxu0
    %v2287 = vadd.f32 0.0, %v2286
    %v2288 = vpop.f32.mrb[0].mxu0
    %v2289 = vpop.f32.mrb[0].mxu0
    %v2290 = vpop.f32.mrb[0].mxu0
    %2291 = vdwg.mxu0
    %v2292 = vpack.c.bf16 %v2287, %v2239
    %s2293 = scalar_lea.vmem [#allocation22], 4
    %v2294 = vld [vmem:[%s2293] sm:$0xf]
    %v2296 = vsel %vm542, %v2292, 0
    %v2299 = vsel %vm997, %v2294, 0
    %2301 = vmatprep.subr.bf16.mxu0 0
    %2302 = vmatpush1.bf16.msra.mxu0 %v2299
    %2303 = vmatprep.subr.bf16.mxu0 0
    %2304 = vmatpush1.bf16.msra.mxu0 0
    %2305 = vmatprep.subr.bf16.mxu0 0
    %2306 = vmatpush1.bf16.msra.mxu0 0
    %2307 = vmatprep.subr.bf16.mxu0 0
    %2308 = vmatpush1.bf16.msra.mxu0 0
    %2309 = vmatprep.subr.bf16.mxu0 0
    %2310 = vmatpush1.bf16.msra.mxu0 0
    %2311 = vmatprep.subr.bf16.mxu0 0
    %2312 = vmatpush1.bf16.msra.mxu0 0
    %2313 = vmatprep.subr.bf16.mxu0 0
    %2314 = vmatpush1.bf16.msra.mxu0 0
    %2315 = vmatprep.subr.bf16.mxu0 0
    %2316 = vmatpush1.bf16.msra.mxu0 0
    %2317 = vmatprep.subr.bf16.mxu0 0
    %2318 = vmatpush1.bf16.msra.mxu0 0
    %2319 = vmatprep.subr.bf16.mxu0 0
    %2320 = vmatpush1.bf16.msra.mxu0 0
    %2321 = vmatprep.subr.bf16.mxu0 0
    %2322 = vmatpush1.bf16.msra.mxu0 0
    %2323 = vmatprep.subr.bf16.mxu0 0
    %2324 = vmatpush1.bf16.msra.mxu0 0
    %2325 = vmatprep.subr.bf16.mxu0 0
    %2326 = vmatpush1.bf16.msra.mxu0 0
    %2327 = vmatprep.subr.bf16.mxu0 0
    %2328 = vmatpush1.bf16.msra.mxu0 0
    %2329 = vmatprep.subr.bf16.mxu0 0
    %2330 = vmatpush1.bf16.msra.mxu0 0
    %2331 = vmatprep.subr.bf16.mxu0 0
    %2332 = vmatpush1.bf16.msra.mxu0 0
    %2333 = vmatprep.mubr.bf16.mxu0 0
    %2334 = vmatmul.mubr.bf16.gmra.mrb[0].mxu0 %v2296
    %v2335 = vpop.f32.mrb[0].mxu0
    %v2336 = vadd.f32 0.0, %v2335
    %v2337 = vpop.f32.mrb[0].mxu0
    %v2338 = vpop.f32.mrb[0].mxu0
    %v2339 = vadd.f32 0.0, %v2338
    %v2340 = vpop.f32.mrb[0].mxu0
    %2341 = vdwg.mxu0
    %v2343 = vsel %vm542, %v2066, 0
    %v2346 = vsel %vm997, %v2067, 0
    %2348 = vmatprep.subr.bf16.mxu0 0
    %2349 = vmatpush1.bf16.msra.mxu0 %v2346
    %2350 = vmatprep.subr.bf16.mxu0 0
    %2351 = vmatpush1.bf16.msra.mxu0 0
    %2352 = vmatprep.subr.bf16.mxu0 0
    %2353 = vmatpush1.bf16.msra.mxu0 0
    %2354 = vmatprep.subr.bf16.mxu0 0
    %2355 = vmatpush1.bf16.msra.mxu0 0
    %2356 = vmatprep.subr.bf16.mxu0 0
    %2357 = vmatpush1.bf16.msra.mxu0 0
    %2358 = vmatprep.subr.bf16.mxu0 0
    %2359 = vmatpush1.bf16.msra.mxu0 0
    %2360 = vmatprep.subr.bf16.mxu0 0
    %2361 = vmatpush1.bf16.msra.mxu0 0
    %2362 = vmatprep.subr.bf16.mxu0 0
    %2363 = vmatpush1.bf16.msra.mxu0 0
    %2364 = vmatprep.subr.bf16.mxu0 0
    %2365 = vmatpush1.bf16.msra.mxu0 0
    %2366 = vmatprep.subr.bf16.mxu0 0
    %2367 = vmatpush1.bf16.msra.mxu0 0
    %2368 = vmatprep.subr.bf16.mxu0 0
    %2369 = vmatpush1.bf16.msra.mxu0 0
    %2370 = vmatprep.subr.bf16.mxu0 0
    %2371 = vmatpush1.bf16.msra.mxu0 0
    %2372 = vmatprep.subr.bf16.mxu0 0
    %2373 = vmatpush1.bf16.msra.mxu0 0
    %2374 = vmatprep.subr.bf16.mxu0 0
    %2375 = vmatpush1.bf16.msra.mxu0 0
    %2376 = vmatprep.subr.bf16.mxu0 0
    %2377 = vmatpush1.bf16.msra.mxu0 0
    %2378 = vmatprep.subr.bf16.mxu0 0
    %2379 = vmatpush1.bf16.msra.mxu0 0
    %2380 = vmatprep.mubr.bf16.mxu0 0
    %2381 = vmatmul.mubr.bf16.gmra.mrb[0].mxu0 %v2343
    %v2382 = vpop.f32.mrb[0].mxu0
    %v2383 = vadd.f32 %v2336, %v2382
    %v2384 = vpop.f32.mrb[0].mxu0
    %v2385 = vpop.f32.mrb[0].mxu0
    %v2386 = vadd.f32 %v2339, %v2385
    %v2387 = vpop.f32.mrb[0].mxu0
    %2388 = vdwg.mxu0
    %2389 = vrot.lane.b32.xlu0 %v504, 80
    %v2390 = vpop.permute.xlu0 %2389
    %2391 = vrot.lane.b32.xlu0 %v1842, 112
    %v2392 = vpop.permute.xlu0 %2391
    %v2394 = vsel %vm542, %v2390, 0
    %v2397 = vsel %vm542, %v2392, 0
    %2399 = vmatprep.subr.bf16.mxu0 0
    %2400 = vmatpush1.bf16.xpose.msra.mxu0 %v2397
    %2401 = vmatprep.subr.bf16.mxu0 0
    %2402 = vmatpush1.bf16.xpose.msra.mxu0 0
    %2403 = vmatprep.subr.bf16.mxu0 0
    %2404 = vmatpush1.bf16.xpose.msra.mxu0 0
    %2405 = vmatprep.subr.bf16.mxu0 0
    %2406 = vmatpush1.bf16.xpose.msra.mxu0 0
    %2407 = vmatprep.subr.bf16.mxu0 0
    %2408 = vmatpush1.bf16.xpose.msra.mxu0 0
    %2409 = vmatprep.subr.bf16.mxu0 0
    %2410 = vmatpush1.bf16.xpose.msra.mxu0 0
    %2411 = vmatprep.subr.bf16.mxu0 0
    %2412 = vmatpush1.bf16.xpose.msra.mxu0 0
    %2413 = vmatprep.subr.bf16.mxu0 0
    %2414 = vmatpush1.bf16.xpose.msra.mxu0 0
    %2415 = vmatprep.subr.bf16.mxu0 0
    %2416 = vmatpush1.bf16.xpose.msra.mxu0 0
    %2417 = vmatprep.subr.bf16.mxu0 0
    %2418 = vmatpush1.bf16.xpose.msra.mxu0 0
    %2419 = vmatprep.subr.bf16.mxu0 0
    %2420 = vmatpush1.bf16.xpose.msra.mxu0 0
    %2421 = vmatprep.subr.bf16.mxu0 0
    %2422 = vmatpush1.bf16.xpose.msra.mxu0 0
    %2423 = vmatprep.subr.bf16.mxu0 0
    %2424 = vmatpush1.bf16.xpose.msra.mxu0 0
    %2425 = vmatprep.subr.bf16.mxu0 0
    %2426 = vmatpush1.bf16.xpose.msra.mxu0 0
    %2427 = vmatprep.subr.bf16.mxu0 0
    %2428 = vmatpush1.bf16.xpose.msra.mxu0 0
    %2429 = vmatprep.subr.bf16.mxu0 0
    %2430 = vmatpush1.bf16.xpose.msra.mxu0 0
    %2431 = vmatprep.mubr.bf16.mxu0 0
    %2432 = vmatmul.mubr.bf16.gmra.mrb[0].mxu0 %v2394
    %v2433 = vpop.f32.mrb[0].mxu0
    %v2434 = vadd.f32 0.0, %v2433
    %v2435 = vpop.f32.mrb[0].mxu0
    %v2436 = vpop.f32.mrb[0].mxu0
    %v2437 = vpop.f32.mrb[0].mxu0
    %2438 = vdwg.mxu0
    %2439 = vrot.lane.b32.xlu0 %v505, 80
    %v2440 = vpop.permute.xlu0 %2439
    %2441 = vrot.lane.b32.xlu0 %v1843, 112
    %v2442 = vpop.permute.xlu0 %2441
    %v2444 = vsel %vm542, %v2440, 0
    %v2447 = vsel %vm542, %v2442, 0
    %2449 = vmatprep.subr.bf16.mxu0 0
    %2450 = vmatpush1.bf16.xpose.msra.mxu0 %v2447
    %2451 = vmatprep.subr.bf16.mxu0 0
    %2452 = vmatpush1.bf16.xpose.msra.mxu0 0
    %2453 = vmatprep.subr.bf16.mxu0 0
    %2454 = vmatpush1.bf16.xpose.msra.mxu0 0
    %2455 = vmatprep.subr.bf16.mxu0 0
    %2456 = vmatpush1.bf16.xpose.msra.mxu0 0
    %2457 = vmatprep.subr.bf16.mxu0 0
    %2458 = vmatpush1.bf16.xpose.msra.mxu0 0
    %2459 = vmatprep.subr.bf16.mxu0 0
    %2460 = vmatpush1.bf16.xpose.msra.mxu0 0
    %2461 = vmatprep.subr.bf16.mxu0 0
    %2462 = vmatpush1.bf16.xpose.msra.mxu0 0
    %2463 = vmatprep.subr.bf16.mxu0 0
    %2464 = vmatpush1.bf16.xpose.msra.mxu0 0
    %2465 = vmatprep.subr.bf16.mxu0 0
    %2466 = vmatpush1.bf16.xpose.msra.mxu0 0
    %2467 = vmatprep.subr.bf16.mxu0 0
    %2468 = vmatpush1.bf16.xpose.msra.mxu0 0
    %2469 = vmatprep.subr.bf16.mxu0 0
    %2470 = vmatpush1.bf16.xpose.msra.mxu0 0
    %2471 = vmatprep.subr.bf16.mxu0 0
    %2472 = vmatpush1.bf16.xpose.msra.mxu0 0
    %2473 = vmatprep.subr.bf16.mxu0 0
    %2474 = vmatpush1.bf16.xpose.msra.mxu0 0
    %2475 = vmatprep.subr.bf16.mxu0 0
    %2476 = vmatpush1.bf16.xpose.msra.mxu0 0
    %2477 = vmatprep.subr.bf16.mxu0 0
    %2478 = vmatpush1.bf16.xpose.msra.mxu0 0
    %2479 = vmatprep.subr.bf16.mxu0 0
    %2480 = vmatpush1.bf16.xpose.msra.mxu0 0
    %2481 = vmatprep.mubr.bf16.mxu0 0
    %2482 = vmatmul.mubr.bf16.gmra.mrb[0].mxu0 %v2444
    %v2483 = vpop.f32.mrb[0].mxu0
    %v2484 = vadd.f32 0.0, %v2483
    %v2485 = vpop.f32.mrb[0].mxu0
    %v2486 = vpop.f32.mrb[0].mxu0
    %v2487 = vpop.f32.mrb[0].mxu0
    %2488 = vdwg.mxu0
    %v2489 = vmul.f32 %v2434, 0.35355338
    %v2490 = vmul.f32 %v2484, 0.35355338
    %v2491 = vadd.f32 %v2489, %v338
    %v2492 = vadd.f32 %v2490, %v342
    %v2493 = vsel %vm639, %v2491, -inf
    %2494 = vmax.xlane.f32.xlu0 %v2493
    %v2495 = vpop.xlane.xlu0 %2494
    %v2496 = vsel %vm639, %v2492, -inf
    %2497 = vmax.xlane.f32.xlu0 %v2496
    %v2498 = vpop.xlane.xlu0 %2497
    %v2499 = vsub.f32 %v2491, %v2495
    %v2500 = vsub.f32 %v2492, %v2498
    %v2501 = vmul.f32 %v2499, 1.442695
    %v2502 = vpow.pop %v2501
    %v2503 = vmul.f32 %v2500, 1.442695
    %v2504 = vpow.pop %v2503
    %v2505 = vsel %vm639, %v2502, 0.0
    %2506 = vadd.xlane.f32.xlu0 %v2505
    %v2507 = vpop.xlane.xlu0 %2506
    %v2508 = vsel %vm639, %v2504, 0.0
    %2509 = vadd.xlane.f32.xlu0 %v2508
    %v2510 = vpop.xlane.xlu0 %2509
    %v2511 = vrcp.pop %v2507
    %v2512 = vrcp.pop %v2510
    %v2513 = vmul.f32 %v2502, %v2511
    %v2514 = vmul.f32 %v2504, %v2512
    %v2515 = vpack.c.bf16 %v2513, %v2513
    %v2516 = vpack.c.bf16 %v2514, %v2514
    %2517 = vrot.lane.b32.xlu0 %v1842, 80
    %v2518 = vpop.permute.xlu0 %2517
    %v2520 = vsel %vm639, %v2515, 0
    %v2523 = vsel %vm670, %v2518, 0
    %2525 = vmatprep.subr.bf16.mxu0 0
    %2526 = vmatpush1.bf16.msra.mxu0 %v2523
    %2527 = vmatprep.subr.bf16.mxu0 0
    %2528 = vmatpush1.bf16.msra.mxu0 0
    %2529 = vmatprep.subr.bf16.mxu0 0
    %2530 = vmatpush1.bf16.msra.mxu0 0
    %2531 = vmatprep.subr.bf16.mxu0 0
    %2532 = vmatpush1.bf16.msra.mxu0 0
    %2533 = vmatprep.subr.bf16.mxu0 0
    %2534 = vmatpush1.bf16.msra.mxu0 0
    %2535 = vmatprep.subr.bf16.mxu0 0
    %2536 = vmatpush1.bf16.msra.mxu0 0
    %2537 = vmatprep.subr.bf16.mxu0 0
    %2538 = vmatpush1.bf16.msra.mxu0 0
    %2539 = vmatprep.subr.bf16.mxu0 0
    %2540 = vmatpush1.bf16.msra.mxu0 0
    %2541 = vmatprep.subr.bf16.mxu0 0
    %2542 = vmatpush1.bf16.msra.mxu0 0
    %2543 = vmatprep.subr.bf16.mxu0 0
    %2544 = vmatpush1.bf16.msra.mxu0 0
    %2545 = vmatprep.subr.bf16.mxu0 0
    %2546 = vmatpush1.bf16.msra.mxu0 0
    %2547 = vmatprep.subr.bf16.mxu0 0
    %2548 = vmatpush1.bf16.msra.mxu0 0
    %2549 = vmatprep.subr.bf16.mxu0 0
    %2550 = vmatpush1.bf16.msra.mxu0 0
    %2551 = vmatprep.subr.bf16.mxu0 0
    %2552 = vmatpush1.bf16.msra.mxu0 0
    %2553 = vmatprep.subr.bf16.mxu0 0
    %2554 = vmatpush1.bf16.msra.mxu0 0
    %2555 = vmatprep.subr.bf16.mxu0 0
    %2556 = vmatpush1.bf16.msra.mxu0 0
    %2557 = vmatprep.mubr.bf16.mxu0 0
    %2558 = vmatmul.mubr.bf16.gmra.mrb[0].mxu0 %v2520
    %v2559 = vpop.f32.mrb[0].mxu0
    %v2560 = vadd.f32 0.0, %v2559
    %v2561 = vpop.f32.mrb[0].mxu0
    %v2562 = vpop.f32.mrb[0].mxu0
    %v2563 = vpop.f32.mrb[0].mxu0
    %2564 = vdwg.mxu0
    %2565 = vrot.lane.b32.xlu0 %v1843, 80
    %v2566 = vpop.permute.xlu0 %2565
    %v2568 = vsel %vm639, %v2516, 0
    %v2571 = vsel %vm670, %v2566, 0
    %2573 = vmatprep.subr.bf16.mxu0 0
    %2574 = vmatpush1.bf16.msra.mxu0 %v2571
    %2575 = vmatprep.subr.bf16.mxu0 0
    %2576 = vmatpush1.bf16.msra.mxu0 0
    %2577 = vmatprep.subr.bf16.mxu0 0
    %2578 = vmatpush1.bf16.msra.mxu0 0
    %2579 = vmatprep.subr.bf16.mxu0 0
    %2580 = vmatpush1.bf16.msra.mxu0 0
    %2581 = vmatprep.subr.bf16.mxu0 0
    %2582 = vmatpush1.bf16.msra.mxu0 0
    %2583 = vmatprep.subr.bf16.mxu0 0
    %2584 = vmatpush1.bf16.msra.mxu0 0
    %2585 = vmatprep.subr.bf16.mxu0 0
    %2586 = vmatpush1.bf16.msra.mxu0 0
    %2587 = vmatprep.subr.bf16.mxu0 0
    %2588 = vmatpush1.bf16.msra.mxu0 0
    %2589 = vmatprep.subr.bf16.mxu0 0
    %2590 = vmatpush1.bf16.msra.mxu0 0
    %2591 = vmatprep.subr.bf16.mxu0 0
    %2592 = vmatpush1.bf16.msra.mxu0 0
    %2593 = vmatprep.subr.bf16.mxu0 0
    %2594 = vmatpush1.bf16.msra.mxu0 0
    %2595 = vmatprep.subr.bf16.mxu0 0
    %2596 = vmatpush1.bf16.msra.mxu0 0
    %2597 = vmatprep.subr.bf16.mxu0 0
    %2598 = vmatpush1.bf16.msra.mxu0 0
    %2599 = vmatprep.subr.bf16.mxu0 0
    %2600 = vmatpush1.bf16.msra.mxu0 0
    %2601 = vmatprep.subr.bf16.mxu0 0
    %2602 = vmatpush1.bf16.msra.mxu0 0
    %2603 = vmatprep.subr.bf16.mxu0 0
    %2604 = vmatpush1.bf16.msra.mxu0 0
    %2605 = vmatprep.mubr.bf16.mxu0 0
    %2606 = vmatmul.mubr.bf16.gmra.mrb[0].mxu0 %v2568
    %v2607 = vpop.f32.mrb[0].mxu0
    %v2608 = vadd.f32 0.0, %v2607
    %v2609 = vpop.f32.mrb[0].mxu0
    %v2610 = vpop.f32.mrb[0].mxu0
    %v2611 = vpop.f32.mrb[0].mxu0
    %2612 = vdwg.mxu0
    %v2613 = vpack.c.bf16 %v2608, %v2560
    %s2614 = scalar_lea.vmem [#allocation22], 8
    %v2615 = vld [vmem:[%s2614] sm:$0xf]
    %v2617 = vsel %vm542, %v2613, 0
    %v2620 = vsel %vm997, %v2615, 0
    %2622 = vmatprep.subr.bf16.mxu0 0
    %2623 = vmatpush1.bf16.msra.mxu0 %v2620
    %2624 = vmatprep.subr.bf16.mxu0 0
    %2625 = vmatpush1.bf16.msra.mxu0 0
    %2626 = vmatprep.subr.bf16.mxu0 0
    %2627 = vmatpush1.bf16.msra.mxu0 0
    %2628 = vmatprep.subr.bf16.mxu0 0
    %2629 = vmatpush1.bf16.msra.mxu0 0
    %2630 = vmatprep.subr.bf16.mxu0 0
    %2631 = vmatpush1.bf16.msra.mxu0 0
    %2632 = vmatprep.subr.bf16.mxu0 0
    %2633 = vmatpush1.bf16.msra.mxu0 0
    %2634 = vmatprep.subr.bf16.mxu0 0
    %2635 = vmatpush1.bf16.msra.mxu0 0
    %2636 = vmatprep.subr.bf16.mxu0 0
    %2637 = vmatpush1.bf16.msra.mxu0 0
    %2638 = vmatprep.subr.bf16.mxu0 0
    %2639 = vmatpush1.bf16.msra.mxu0 0
    %2640 = vmatprep.subr.bf16.mxu0 0
    %2641 = vmatpush1.bf16.msra.mxu0 0
    %2642 = vmatprep.subr.bf16.mxu0 0
    %2643 = vmatpush1.bf16.msra.mxu0 0
    %2644 = vmatprep.subr.bf16.mxu0 0
    %2645 = vmatpush1.bf16.msra.mxu0 0
    %2646 = vmatprep.subr.bf16.mxu0 0
    %2647 = vmatpush1.bf16.msra.mxu0 0
    %2648 = vmatprep.subr.bf16.mxu0 0
    %2649 = vmatpush1.bf16.msra.mxu0 0
    %2650 = vmatprep.subr.bf16.mxu0 0
    %2651 = vmatpush1.bf16.msra.mxu0 0
    %2652 = vmatprep.subr.bf16.mxu0 0
    %2653 = vmatpush1.bf16.msra.mxu0 0
    %2654 = vmatprep.mubr.bf16.mxu0 0
    %2655 = vmatmul.mubr.bf16.gmra.mrb[0].mxu0 %v2617
    %v2656 = vpop.f32.mrb[0].mxu0
    %v2657 = vadd.f32 0.0, %v2656
    %v2658 = vpop.f32.mrb[0].mxu0
    %v2659 = vpop.f32.mrb[0].mxu0
    %v2660 = vadd.f32 0.0, %v2659
    %v2661 = vpop.f32.mrb[0].mxu0
    %2662 = vdwg.mxu0
    %v2663 = vadd.f32 %v2383, %v2657
    %v2664 = vadd.f32 %v2386, %v2660
    %2665 = vrot.lane.b32.xlu0 %v504, 72
    %v2666 = vpop.permute.xlu0 %2665
    %2667 = vrot.lane.b32.xlu0 %v1842, 104
    %v2668 = vpop.permute.xlu0 %2667
    %v2670 = vsel %vm542, %v2666, 0
    %v2673 = vsel %vm542, %v2668, 0
    %2675 = vmatprep.subr.bf16.mxu0 0
    %2676 = vmatpush1.bf16.xpose.msra.mxu0 %v2673
    %2677 = vmatprep.subr.bf16.mxu0 0
    %2678 = vmatpush1.bf16.xpose.msra.mxu0 0
    %2679 = vmatprep.subr.bf16.mxu0 0
    %2680 = vmatpush1.bf16.xpose.msra.mxu0 0
    %2681 = vmatprep.subr.bf16.mxu0 0
    %2682 = vmatpush1.bf16.xpose.msra.mxu0 0
    %2683 = vmatprep.subr.bf16.mxu0 0
    %2684 = vmatpush1.bf16.xpose.msra.mxu0 0
    %2685 = vmatprep.subr.bf16.mxu0 0
    %2686 = vmatpush1.bf16.xpose.msra.mxu0 0
    %2687 = vmatprep.subr.bf16.mxu0 0
    %2688 = vmatpush1.bf16.xpose.msra.mxu0 0
    %2689 = vmatprep.subr.bf16.mxu0 0
    %2690 = vmatpush1.bf16.xpose.msra.mxu0 0
    %2691 = vmatprep.subr.bf16.mxu0 0
    %2692 = vmatpush1.bf16.xpose.msra.mxu0 0
    %2693 = vmatprep.subr.bf16.mxu0 0
    %2694 = vmatpush1.bf16.xpose.msra.mxu0 0
    %2695 = vmatprep.subr.bf16.mxu0 0
    %2696 = vmatpush1.bf16.xpose.msra.mxu0 0
    %2697 = vmatprep.subr.bf16.mxu0 0
    %2698 = vmatpush1.bf16.xpose.msra.mxu0 0
    %2699 = vmatprep.subr.bf16.mxu0 0
    %2700 = vmatpush1.bf16.xpose.msra.mxu0 0
    %2701 = vmatprep.subr.bf16.mxu0 0
    %2702 = vmatpush1.bf16.xpose.msra.mxu0 0
    %2703 = vmatprep.subr.bf16.mxu0 0
    %2704 = vmatpush1.bf16.xpose.msra.mxu0 0
    %2705 = vmatprep.subr.bf16.mxu0 0
    %2706 = vmatpush1.bf16.xpose.msra.mxu0 0
    %2707 = vmatprep.mubr.bf16.mxu0 0
    %2708 = vmatmul.mubr.bf16.gmra.mrb[0].mxu0 %v2670
    %v2709 = vpop.f32.mrb[0].mxu0
    %v2710 = vadd.f32 0.0, %v2709
    %v2711 = vpop.f32.mrb[0].mxu0
    %v2712 = vpop.f32.mrb[0].mxu0
    %v2713 = vpop.f32.mrb[0].mxu0
    %2714 = vdwg.mxu0
    %2715 = vrot.lane.b32.xlu0 %v505, 72
    %v2716 = vpop.permute.xlu0 %2715
    %2717 = vrot.lane.b32.xlu0 %v1843, 104
    %v2718 = vpop.permute.xlu0 %2717
    %v2720 = vsel %vm542, %v2716, 0
    %v2723 = vsel %vm542, %v2718, 0
    %2725 = vmatprep.subr.bf16.mxu0 0
    %2726 = vmatpush1.bf16.xpose.msra.mxu0 %v2723
    %2727 = vmatprep.subr.bf16.mxu0 0
    %2728 = vmatpush1.bf16.xpose.msra.mxu0 0
    %2729 = vmatprep.subr.bf16.mxu0 0
    %2730 = vmatpush1.bf16.xpose.msra.mxu0 0
    %2731 = vmatprep.subr.bf16.mxu0 0
    %2732 = vmatpush1.bf16.xpose.msra.mxu0 0
    %2733 = vmatprep.subr.bf16.mxu0 0
    %2734 = vmatpush1.bf16.xpose.msra.mxu0 0
    %2735 = vmatprep.subr.bf16.mxu0 0
    %2736 = vmatpush1.bf16.xpose.msra.mxu0 0
    %2737 = vmatprep.subr.bf16.mxu0 0
    %2738 = vmatpush1.bf16.xpose.msra.mxu0 0
    %2739 = vmatprep.subr.bf16.mxu0 0
    %2740 = vmatpush1.bf16.xpose.msra.mxu0 0
    %2741 = vmatprep.subr.bf16.mxu0 0
    %2742 = vmatpush1.bf16.xpose.msra.mxu0 0
    %2743 = vmatprep.subr.bf16.mxu0 0
    %2744 = vmatpush1.bf16.xpose.msra.mxu0 0
    %2745 = vmatprep.subr.bf16.mxu0 0
    %2746 = vmatpush1.bf16.xpose.msra.mxu0 0
    %2747 = vmatprep.subr.bf16.mxu0 0
    %2748 = vmatpush1.bf16.xpose.msra.mxu0 0
    %2749 = vmatprep.subr.bf16.mxu0 0
    %2750 = vmatpush1.bf16.xpose.msra.mxu0 0
    %2751 = vmatprep.subr.bf16.mxu0 0
    %2752 = vmatpush1.bf16.xpose.msra.mxu0 0
    %2753 = vmatprep.subr.bf16.mxu0 0
    %2754 = vmatpush1.bf16.xpose.msra.mxu0 0
    %2755 = vmatprep.subr.bf16.mxu0 0
    %2756 = vmatpush1.bf16.xpose.msra.mxu0 0
    %2757 = vmatprep.mubr.bf16.mxu0 0
    %2758 = vmatmul.mubr.bf16.gmra.mrb[0].mxu0 %v2720
    %v2759 = vpop.f32.mrb[0].mxu0
    %v2760 = vadd.f32 0.0, %v2759
    %v2761 = vpop.f32.mrb[0].mxu0
    %v2762 = vpop.f32.mrb[0].mxu0
    %v2763 = vpop.f32.mrb[0].mxu0
    %2764 = vdwg.mxu0
    %v2765 = vmul.f32 %v2710, 0.35355338
    %v2766 = vmul.f32 %v2760, 0.35355338
    %v2767 = vadd.f32 %v2765, %v338
    %v2768 = vadd.f32 %v2766, %v342
    %v2769 = vsel %vm639, %v2767, -inf
    %2770 = vmax.xlane.f32.xlu0 %v2769
    %v2771 = vpop.xlane.xlu0 %2770
    %v2772 = vsel %vm639, %v2768, -inf
    %2773 = vmax.xlane.f32.xlu0 %v2772
    %v2774 = vpop.xlane.xlu0 %2773
    %v2775 = vsub.f32 %v2767, %v2771
    %v2776 = vsub.f32 %v2768, %v2774
    %v2777 = vmul.f32 %v2775, 1.442695
    %v2778 = vpow.pop %v2777
    %v2779 = vmul.f32 %v2776, 1.442695
    %v2780 = vpow.pop %v2779
    %v2781 = vsel %vm639, %v2778, 0.0
    %2782 = vadd.xlane.f32.xlu0 %v2781
    %v2783 = vpop.xlane.xlu0 %2782
    %v2784 = vsel %vm639, %v2780, 0.0
    %2785 = vadd.xlane.f32.xlu0 %v2784
    %v2786 = vpop.xlane.xlu0 %2785
    %v2787 = vrcp.pop %v2783
    %v2788 = vrcp.pop %v2786
    %v2789 = vmul.f32 %v2778, %v2787
    %v2790 = vmul.f32 %v2780, %v2788
    %v2791 = vpack.c.bf16 %v2789, %v2789
    %v2792 = vpack.c.bf16 %v2790, %v2790
    %2793 = vrot.lane.b32.xlu0 %v1842, 72
    %v2794 = vpop.permute.xlu0 %2793
    %v2796 = vsel %vm639, %v2791, 0
    %v2799 = vsel %vm670, %v2794, 0
    %2801 = vmatprep.subr.bf16.mxu0 0
    %2802 = vmatpush1.bf16.msra.mxu0 %v2799
    %2803 = vmatprep.subr.bf16.mxu0 0
    %2804 = vmatpush1.bf16.msra.mxu0 0
    %2805 = vmatprep.subr.bf16.mxu0 0
    %2806 = vmatpush1.bf16.msra.mxu0 0
    %2807 = vmatprep.subr.bf16.mxu0 0
    %2808 = vmatpush1.bf16.msra.mxu0 0
    %2809 = vmatprep.subr.bf16.mxu0 0
    %2810 = vmatpush1.bf16.msra.mxu0 0
    %2811 = vmatprep.subr.bf16.mxu0 0
    %2812 = vmatpush1.bf16.msra.mxu0 0
    %2813 = vmatprep.subr.bf16.mxu0 0
    %2814 = vmatpush1.bf16.msra.mxu0 0
    %2815 = vmatprep.subr.bf16.mxu0 0
    %2816 = vmatpush1.bf16.msra.mxu0 0
    %2817 = vmatprep.subr.bf16.mxu0 0
    %2818 = vmatpush1.bf16.msra.mxu0 0
    %2819 = vmatprep.subr.bf16.mxu0 0
    %2820 = vmatpush1.bf16.msra.mxu0 0
    %2821 = vmatprep.subr.bf16.mxu0 0
    %2822 = vmatpush1.bf16.msra.mxu0 0
    %2823 = vmatprep.subr.bf16.mxu0 0
    %2824 = vmatpush1.bf16.msra.mxu0 0
    %2825 = vmatprep.subr.bf16.mxu0 0
    %2826 = vmatpush1.bf16.msra.mxu0 0
    %2827 = vmatprep.subr.bf16.mxu0 0
    %2828 = vmatpush1.bf16.msra.mxu0 0
    %2829 = vmatprep.subr.bf16.mxu0 0
    %2830 = vmatpush1.bf16.msra.mxu0 0
    %2831 = vmatprep.subr.bf16.mxu0 0
    %2832 = vmatpush1.bf16.msra.mxu0 0
    %2833 = vmatprep.mubr.bf16.mxu0 0
    %2834 = vmatmul.mubr.bf16.gmra.mrb[0].mxu0 %v2796
    %v2835 = vpop.f32.mrb[0].mxu0
    %v2836 = vadd.f32 0.0, %v2835
    %v2837 = vpop.f32.mrb[0].mxu0
    %v2838 = vpop.f32.mrb[0].mxu0
    %v2839 = vpop.f32.mrb[0].mxu0
    %2840 = vdwg.mxu0
    %2841 = vrot.lane.b32.xlu0 %v1843, 72
    %v2842 = vpop.permute.xlu0 %2841
    %v2844 = vsel %vm639, %v2792, 0
    %v2847 = vsel %vm670, %v2842, 0
    %2849 = vmatprep.subr.bf16.mxu0 0
    %2850 = vmatpush1.bf16.msra.mxu0 %v2847
    %2851 = vmatprep.subr.bf16.mxu0 0
    %2852 = vmatpush1.bf16.msra.mxu0 0
    %2853 = vmatprep.subr.bf16.mxu0 0
    %2854 = vmatpush1.bf16.msra.mxu0 0
    %2855 = vmatprep.subr.bf16.mxu0 0
    %2856 = vmatpush1.bf16.msra.mxu0 0
    %2857 = vmatprep.subr.bf16.mxu0 0
    %2858 = vmatpush1.bf16.msra.mxu0 0
    %2859 = vmatprep.subr.bf16.mxu0 0
    %2860 = vmatpush1.bf16.msra.mxu0 0
    %2861 = vmatprep.subr.bf16.mxu0 0
    %2862 = vmatpush1.bf16.msra.mxu0 0
    %2863 = vmatprep.subr.bf16.mxu0 0
    %2864 = vmatpush1.bf16.msra.mxu0 0
    %2865 = vmatprep.subr.bf16.mxu0 0
    %2866 = vmatpush1.bf16.msra.mxu0 0
    %2867 = vmatprep.subr.bf16.mxu0 0
    %2868 = vmatpush1.bf16.msra.mxu0 0
    %2869 = vmatprep.subr.bf16.mxu0 0
    %2870 = vmatpush1.bf16.msra.mxu0 0
    %2871 = vmatprep.subr.bf16.mxu0 0
    %2872 = vmatpush1.bf16.msra.mxu0 0
    %2873 = vmatprep.subr.bf16.mxu0 0
    %2874 = vmatpush1.bf16.msra.mxu0 0
    %2875 = vmatprep.subr.bf16.mxu0 0
    %2876 = vmatpush1.bf16.msra.mxu0 0
    %2877 = vmatprep.subr.bf16.mxu0 0
    %2878 = vmatpush1.bf16.msra.mxu0 0
    %2879 = vmatprep.subr.bf16.mxu0 0
    %2880 = vmatpush1.bf16.msra.mxu0 0
    %2881 = vmatprep.mubr.bf16.mxu0 0
    %2882 = vmatmul.mubr.bf16.gmra.mrb[0].mxu0 %v2844
    %v2883 = vpop.f32.mrb[0].mxu0
    %v2884 = vadd.f32 0.0, %v2883
    %v2885 = vpop.f32.mrb[0].mxu0
    %v2886 = vpop.f32.mrb[0].mxu0
    %v2887 = vpop.f32.mrb[0].mxu0
    %2888 = vdwg.mxu0
    %v2889 = vpack.c.bf16 %v2884, %v2836
    %s2890 = scalar_lea.vmem [#allocation22], 12
    %v2891 = vld [vmem:[%s2890] sm:$0xf]
    %v2893 = vsel %vm542, %v2889, 0
    %v2896 = vsel %vm997, %v2891, 0
    %2898 = vmatprep.subr.bf16.mxu0 0
    %2899 = vmatpush1.bf16.msra.mxu0 %v2896
    %2900 = vmatprep.subr.bf16.mxu0 0
    %2901 = vmatpush1.bf16.msra.mxu0 0
    %2902 = vmatprep.subr.bf16.mxu0 0
    %2903 = vmatpush1.bf16.msra.mxu0 0
    %2904 = vmatprep.subr.bf16.mxu0 0
    %2905 = vmatpush1.bf16.msra.mxu0 0
    %2906 = vmatprep.subr.bf16.mxu0 0
    %2907 = vmatpush1.bf16.msra.mxu0 0
    %2908 = vmatprep.subr.bf16.mxu0 0
    %2909 = vmatpush1.bf16.msra.mxu0 0
    %2910 = vmatprep.subr.bf16.mxu0 0
    %2911 = vmatpush1.bf16.msra.mxu0 0
    %2912 = vmatprep.subr.bf16.mxu0 0
    %2913 = vmatpush1.bf16.msra.mxu0 0
    %2914 = vmatprep.subr.bf16.mxu0 0
    %2915 = vmatpush1.bf16.msra.mxu0 0
    %2916 = vmatprep.subr.bf16.mxu0 0
    %2917 = vmatpush1.bf16.msra.mxu0 0
    %2918 = vmatprep.subr.bf16.mxu0 0
    %2919 = vmatpush1.bf16.msra.mxu0 0
    %2920 = vmatprep.subr.bf16.mxu0 0
    %2921 = vmatpush1.bf16.msra.mxu0 0
    %2922 = vmatprep.subr.bf16.mxu0 0
    %2923 = vmatpush1.bf16.msra.mxu0 0
    %2924 = vmatprep.subr.bf16.mxu0 0
    %2925 = vmatpush1.bf16.msra.mxu0 0
    %2926 = vmatprep.subr.bf16.mxu0 0
    %2927 = vmatpush1.bf16.msra.mxu0 0
    %2928 = vmatprep.subr.bf16.mxu0 0
    %2929 = vmatpush1.bf16.msra.mxu0 0
    %2930 = vmatprep.mubr.bf16.mxu0 0
    %2931 = vmatmul.mubr.bf16.gmra.mrb[0].mxu0 %v2893
    %v2932 = vpop.f32.mrb[0].mxu0
    %v2933 = vadd.f32 0.0, %v2932
    %v2934 = vpop.f32.mrb[0].mxu0
    %v2935 = vpop.f32.mrb[0].mxu0
    %v2936 = vadd.f32 0.0, %v2935
    %v2937 = vpop.f32.mrb[0].mxu0
    %2938 = vdwg.mxu0
    %v2939 = vadd.f32 %v2663, %v2933
    %v2940 = vadd.f32 %v2664, %v2936
    %v2942 = vlaneseq
    %v2943 = vshrl.u32 %v2942, 7
    %v2944 = vsub.s32 0, %v2943
    %v2945 = vrot.slane %v1656, %v2944
    %v2947 = vadd.f32 %v2939, %v2945
    %v2948 = vadd.f32 %v2940, %v2945
    %v2949 = vmul.f32 %v1647, %v229
    %v2950 = vmul.f32 %v1648, %v230
    %v2951 = vsel %vm231, %v2949, 0.0
    %2952 = vadd.xlane.f32.xlu0 %v2951
    %v2953 = vpop.xlane.xlu0 %2952
    %v2954 = vsel %vm231, %v2950, 0.0
    %2955 = vadd.xlane.f32.xlu0 %v2954
    %v2956 = vpop.xlane.xlu0 %2955
    %v2957 = vmul.f32 %v2953, 0.17677669
    %v2958 = vmul.f32 %v2956, 0.17677669
    %v2959 = vmul.f32 %v2947, %v229
    %v2960 = vmul.f32 %v2948, %v230
    %v2961 = vsel %vm231, %v2959, 0.0
    %2962 = vadd.xlane.f32.xlu0 %v2961
    %v2963 = vpop.xlane.xlu0 %2962
    %v2964 = vsel %vm231, %v2960, 0.0
    %2965 = vadd.xlane.f32.xlu0 %v2964
    %v2966 = vpop.xlane.xlu0 %2965
    %v2967 = vmul.f32 %v2963, 0.17677669
    %v2968 = vmul.f32 %v2966, 0.17677669
    %v2969 = vmax.f32 %v2957, %v2967
    %v2970 = vmax.f32 %v2958, %v2968
    %v2971 = vsub.f32 %v2957, %v2969
    %v2972 = vsub.f32 %v2958, %v2970
    %v2973 = vmul.f32 %v2971, 1.442695
    %v2974 = vpow.pop %v2973
    %v2975 = vmul.f32 %v2972, 1.442695
    %v2976 = vpow.pop %v2975
    %v2977 = vsub.f32 %v2967, %v2969
    %v2978 = vsub.f32 %v2968, %v2970
    %v2979 = vmul.f32 %v2977, 1.442695
    %v2980 = vpow.pop %v2979
    %v2981 = vmul.f32 %v2978, 1.442695
    %v2982 = vpow.pop %v2981
    %v2983 = vadd.f32 %v2974, %v2980
    %v2984 = vadd.f32 %v2976, %v2982
    %v2985 = vrcp.pop %v2983
    %v2986 = vmul.f32 1.0, %v2985
    %v2987 = vrcp.pop %v2984
    %v2988 = vmul.f32 1.0, %v2987
    %v2989 = vmul.f32 %v2974, %v1647
    %v2990 = vmul.f32 %v2976, %v1648
    %v2991 = vmul.f32 %v2980, %v2947
    %v2992 = vmul.f32 %v2982, %v2948
    %v2993 = vadd.f32 %v2989, %v2991
    %v2994 = vadd.f32 %v2990, %v2992
    %v2995 = vmul.f32 %v2993, %v2986
    %v2996 = vmul.f32 %v2994, %v2988
    %2997 = vst.msk [vmem:[#allocation25] sm:$0xff] %vm231, %v2995
    %2998 = vst.msk [vmem:[#allocation25 + $0x8] sm:$0xff] %vm231, %v2996
    // Predicated region
    $region114: #{decoder_forward.10} parent=1 // pred_check
      _
    $region115: #{decoder_forward.10} parent=1 // pred_check_branch
      %3000 = sbr.rel (0) target = $region117
    $region116: #{decoder_forward.10} parent=1 // pred_region
      %s3002 = ssub.s32 256, 256
      %3003 = vsyncadd [#allocation4], %s3002
      %s3004 = sshll.u32 [#allocation25], 4
      %s3005 = int_to_ptr.vmem [resolvable:$true] %s3004
      %3010 = dma.vmem_to_hbm [thread:$0]  %s3005, 256, %s14, [#allocation4], 128, 128, 8
    $region117: #{decoder_forward.10} parent=1 // pred_fallthru
      _
    // Predicated region
    $region118: #{decoder_forward.10} parent=1 // pred_check
      _
    $region119: #{decoder_forward.10} parent=1 // pred_check_branch
      %3012 = sbr.rel (0) target = $region121
    $region120: #{decoder_forward.10} parent=1 // pred_region
      %3013 = dma.done [#allocation4], 256
    $region121: #{decoder_forward.10} parent=1 // pred_fallthru
      _
    %3014 = vsyncpa [#allocation3], 1
    %3015 = vsyncpa [#allocation6], 1
    %3016 = vsyncpa [#allocation9], 1
    %3017 = vsyncpa [#allocation12], 1
    %3018 = vsyncpa [#allocation15], 1
    %3019 = vsyncpa [#allocation18], 1
    %3020 = vsyncpa [#allocation21], 1
    %3021 = vsyncpa [#allocation24], 1
    %3022 = vsyncpa [#allocation4], 1

// kernel: decoder_forward.11
$region0: #{decoder_forward.11}
  #allocation0 [shape = 'u32[]', space=smem, size = 0x4, offset = 0x4, fixed_abs, tag = 'smem constant byte address 0x4 - core index']
  #allocation1 [shape = 'u32[144,128]{1,0:T(1,128)}', space=vmem, size = 0x12000, scoped, tag = 'internal scratch']
  %s0 = inlined_call_operand.hbm [shape: f32[2,8,32], index: 0, kind: input, shape index: {}]
  %s1 = inlined_call_operand.hbm [shape: f32[2,5,32], index: 1, kind: input, shape index: {}]
  %s2 = inlined_call_operand.hbm [shape: f32[2,5,32], index: 2, kind: input, shape index: {}]
  %s3 = inlined_call_operand.hbm [shape: f32[2,1,1,5], index: 3, kind: input, shape index: {}]
  %s4 = inlined_call_operand.hbm [shape: bf16[32,64], index: 4, kind: input, shape index: {}]
  %s5 = inlined_call_operand.hbm [shape: f32[1,64], index: 5, kind: input, shape index: {}]
  %s6 = inlined_call_operand.hbm [shape: bf16[32,64], index: 6, kind: input, shape index: {}]
  %s7 = inlined_call_operand.hbm [shape: f32[1,64], index: 7, kind: input, shape index: {}]
  %s8 = inlined_call_operand.hbm [shape: bf16[4,8,32], index: 8, kind: input, shape index: {}]
  %s9 = inlined_call_operand.hbm [shape: f32[1,32], index: 9, kind: input, shape index: {}]
  %s10 = inlined_call_operand.hbm [shape: bf16[32,64], index: 10, kind: input, shape index: {}]
  %s11 = inlined_call_operand.hbm [shape: f32[1,64], index: 11, kind: input, shape index: {}]
  %s12 = inlined_call_operand.hbm [shape: bf16[4,8,32], index: 12, kind: input, shape index: {}]
  %s13 = inlined_call_operand.hbm [shape: f32[1,32], index: 13, kind: input, shape index: {}]
  %s14 = inlined_call_operand.hbm [shape: f32[2,8,32], index: 14, kind: output, shape index: {}]
  %s15 = sld [smem:[#allocation0]]
  $region122: #{decoder_forward.11} parent=0
    _
  %s17 = ssub.s32 1, %s15
  %s18 = scalar_select 0, %s17, %s15
  $region1: #{decoder_forward.11} parent=0
    #allocation2 [shape = 'u8[8192]{0}', space=vmem, size = 0x2000, scoped, tag = 'input window, operand 0, single buffered']
    #allocation3 [shape = 's32[1]{0}', space=sflag, size = 0x4, scoped, tag = 'scoped memory for decoder_forward.11']
    #allocation4 [shape = 's32[1]{0}', space=sflag, size = 0x4, scoped, tag = 'scoped memory for decoder_forward.11']
    #allocation5 [shape = 'u8[8192]{0}', space=vmem, size = 0x2000, scoped, tag = 'input window, operand 1, single buffered']
    #allocation6 [shape = 's32[1]{0}', space=sflag, size = 0x4, scoped, tag = 'scoped memory for decoder_forward.11']
    #allocation7 [shape = 'u8[8192]{0}', space=vmem, size = 0x2000, scoped, tag = 'input window, operand 2, single buffered']
    #allocation8 [shape = 'u8[1024]{0}', space=vmem, size = 0x400, scoped, tag = 'input window, operand 3, single buffered']
    #allocation9 [shape = 's32[1]{0}', space=sflag, size = 0x4, scoped, tag = 'scoped memory for decoder_forward.11']
    #allocation10 [shape = 'u8[8192]{0}', space=vmem, size = 0x2000, scoped, tag = 'input window, operand 4, single buffered']
    #allocation11 [shape = 'u8[512]{0}', space=vmem, size = 0x400, scoped, tag = 'input window, operand 5, single buffered']
    #allocation12 [shape = 's32[1]{0}', space=sflag, size = 0x4, scoped, tag = 'scoped memory for decoder_forward.11']
    #allocation13 [shape = 'u8[8192]{0}', space=vmem, size = 0x2000, scoped, tag = 'input window, operand 6, single buffered']
    #allocation14 [shape = 'u8[512]{0}', space=vmem, size = 0x400, scoped, tag = 'input window, operand 7, single buffered']
    #allocation15 [shape = 's32[1]{0}', space=sflag, size = 0x4, scoped, tag = 'scoped memory for decoder_forward.11']
    #allocation16 [shape = 'u8[8192]{0}', space=vmem, size = 0x2000, scoped, tag = 'input window, operand 8, single buffered']
    #allocation17 [shape = 'u8[512]{0}', space=vmem, size = 0x400, scoped, tag = 'input window, operand 9, single buffered']
    #allocation18 [shape = 's32[1]{0}', space=sflag, size = 0x4, scoped, tag = 'scoped memory for decoder_forward.11']
    #allocation19 [shape = 'u8[8192]{0}', space=vmem, size = 0x2000, scoped, tag = 'input window, operand 10, single buffered']
    #allocation20 [shape = 'u8[512]{0}', space=vmem, size = 0x400, scoped, tag = 'input window, operand 11, single buffered']
    #allocation21 [shape = 's32[1]{0}', space=sflag, size = 0x4, scoped, tag = 'scoped memory for decoder_forward.11']
    #allocation22 [shape = 'u8[8192]{0}', space=vmem, size = 0x2000, scoped, tag = 'input window, operand 12, single buffered']
    #allocation23 [shape = 'u8[512]{0}', space=vmem, size = 0x400, scoped, tag = 'input window, operand 13, single buffered']
    #allocation24 [shape = 's32[1]{0}', space=sflag, size = 0x4, scoped, tag = 'scoped memory for decoder_forward.11']
    #allocation25 [shape = 'u8[8192]{0}', space=vmem, size = 0x2000, scoped, tag = 'output window, operand 0, single buffered']
    %19 = vsyncpa [#allocation3], 0
    %20 = vsyncpa [#allocation6], 0
    %21 = vsyncpa [#allocation9], 0
    %22 = vsyncpa [#allocation12], 0
    %23 = vsyncpa [#allocation15], 0
    %24 = vsyncpa [#allocation18], 0
    %25 = vsyncpa [#allocation21], 0
    %26 = vsyncpa [#allocation24], 0
    %27 = vsyncpa [#allocation4], 0
    // Predicated region
    $region2: #{decoder_forward.11} parent=1 // pred_check
      _
    $region3: #{decoder_forward.11} parent=1 // pred_check_branch
      %29 = sbr.rel (0) target = $region5
    $region4: #{decoder_forward.11} parent=1 // pred_region
      %s31 = ssub.s32 256, 256
      %32 = vsyncadd [#allocation3], %s31
      %s33 = sshll.u32 [#allocation2], 4
      %s34 = int_to_ptr.vmem [resolvable:$true] %s33
      %39 = dma.hbm_to_vmem [thread:$0]  %s0, 256, %s34, [#allocation3], 128, 128, 8
    $region5: #{decoder_forward.11} parent=1 // pred_fallthru
      _
    // Predicated region
    $region6: #{decoder_forward.11} parent=1 // pred_check
      _
    $region7: #{decoder_forward.11} parent=1 // pred_check_branch
      %41 = sbr.rel (0) target = $region9
    $region8: #{decoder_forward.11} parent=1 // pred_region
      %s43 = ssub.s32 256, 256
      %44 = vsyncadd [#allocation6], %s43
      %s45 = sshll.u32 [#allocation5], 4
      %s46 = int_to_ptr.vmem [resolvable:$true] %s45
      %51 = dma.hbm_to_vmem [thread:$0]  %s1, 256, %s46, [#allocation6], 128, 128, 8
    $region9: #{decoder_forward.11} parent=1 // pred_fallthru
      _
    // Predicated region
    $region10: #{decoder_forward.11} parent=1 // pred_check
      _
    $region11: #{decoder_forward.11} parent=1 // pred_check_branch
      %53 = sbr.rel (0) target = $region13
    $region12: #{decoder_forward.11} parent=1 // pred_region
      %s55 = ssub.s32 256, 256
      %56 = vsyncadd [#allocation6], %s55
      %s57 = sshll.u32 [#allocation7], 4
      %s58 = int_to_ptr.vmem [resolvable:$true] %s57
      %63 = dma.hbm_to_vmem [thread:$0]  %s2, 256, %s58, [#allocation6], 128, 128, 8
    $region13: #{decoder_forward.11} parent=1 // pred_fallthru
      _
    // Predicated region
    $region14: #{decoder_forward.11} parent=1 // pred_check
      _
    $region15: #{decoder_forward.11} parent=1 // pred_check_branch
      %65 = sbr.rel (0) target = $region17
    $region16: #{decoder_forward.11} parent=1 // pred_region
      %s67 = ssub.s32 32, 32
      %68 = vsyncadd [#allocation9], %s67
      %s69 = sshll.u32 [#allocation8], 4
      %s70 = int_to_ptr.vmem [resolvable:$true] %s69
      %75 = dma.hbm_to_vmem [thread:$0]  %s3, 32, %s70, [#allocation9], 16, 16, 1
    $region17: #{decoder_forward.11} parent=1 // pred_fallthru
      _
    // Predicated region
    $region18: #{decoder_forward.11} parent=1 // pred_check
      _
    $region19: #{decoder_forward.11} parent=1 // pred_check_branch
      %77 = sbr.rel (0) target = $region21
    $region20: #{decoder_forward.11} parent=1 // pred_region
      %s79 = ssub.s32 256, 256
      %80 = vsyncadd [#allocation9], %s79
      %s81 = sshll.u32 [#allocation10], 4
      %s82 = int_to_ptr.vmem [resolvable:$true] %s81
      %87 = dma.hbm_to_vmem [thread:$0]  %s4, 256, %s82, [#allocation9], 64, 64, 4
    $region21: #{decoder_forward.11} parent=1 // pred_fallthru
      _
    // Predicated region
    $region22: #{decoder_forward.11} parent=1 // pred_check
      _
    $region23: #{decoder_forward.11} parent=1 // pred_check_branch
      %89 = sbr.rel (0) target = $region25
    $region24: #{decoder_forward.11} parent=1 // pred_region
      %s91 = ssub.s32 16, 16
      %92 = vsyncadd [#allocation12], %s91
      %s94 = sshll.u32 [#allocation11], 4
      %s95 = int_to_ptr.vmem [resolvable:$true] %s94
      %97 = dma.hbm_to_vmem [thread:$0]  %s5, 16, %s95, [#allocation12]
    $region25: #{decoder_forward.11} parent=1 // pred_fallthru
      _
    // Predicated region
    $region26: #{decoder_forward.11} parent=1 // pred_check
      _
    $region27: #{decoder_forward.11} parent=1 // pred_check_branch
      %99 = sbr.rel (0) target = $region29
    $region28: #{decoder_forward.11} parent=1 // pred_region
      %s101 = ssub.s32 256, 256
      %102 = vsyncadd [#allocation12], %s101
      %s103 = sshll.u32 [#allocation13], 4
      %s104 = int_to_ptr.vmem [resolvable:$true] %s103
      %109 = dma.hbm_to_vmem [thread:$0]  %s6, 256, %s104, [#allocation12], 64, 64, 4
    $region29: #{decoder_forward.11} parent=1 // pred_fallthru
      _
    // Predicated region
    $region30: #{decoder_forward.11} parent=1 // pred_check
      _
    $region31: #{decoder_forward.11} parent=1 // pred_check_branch
      %111 = sbr.rel (0) target = $region33
    $region32: #{decoder_forward.11} parent=1 // pred_region
      %s113 = ssub.s32 16, 16
      %114 = vsyncadd [#allocation15], %s113
      %s116 = sshll.u32 [#allocation14], 4
      %s117 = int_to_ptr.vmem [resolvable:$true] %s116
      %119 = dma.hbm_to_vmem [thread:$0]  %s7, 16, %s117, [#allocation15]
    $region33: #{decoder_forward.11} parent=1 // pred_fallthru
      _
    // Predicated region
    $region34: #{decoder_forward.11} parent=1 // pred_check
      _
    $region35: #{decoder_forward.11} parent=1 // pred_check_branch
      %121 = sbr.rel (0) target = $region37
    $region36: #{decoder_forward.11} parent=1 // pred_region
      %s123 = ssub.s32 256, 256
      %124 = vsyncadd [#allocation15], %s123
      %s125 = sshll.u32 [#allocation16], 4
      %s126 = int_to_ptr.vmem [resolvable:$true] %s125
      %131 = dma.hbm_to_vmem [thread:$0]  %s8, 256, %s126, [#allocation15], 64, 64, 4
    $region37: #{decoder_forward.11} parent=1 // pred_fallthru
      _
    // Predicated region
    $region38: #{decoder_forward.11} parent=1 // pred_check
      _
    $region39: #{decoder_forward.11} parent=1 // pred_check_branch
      %133 = sbr.rel (0) target = $region41
    $region40: #{decoder_forward.11} parent=1 // pred_region
      %s135 = ssub.s32 16, 16
      %136 = vsyncadd [#allocation18], %s135
      %s138 = sshll.u32 [#allocation17], 4
      %s139 = int_to_ptr.vmem [resolvable:$true] %s138
      %141 = dma.hbm_to_vmem [thread:$0]  %s9, 16, %s139, [#allocation18]
    $region41: #{decoder_forward.11} parent=1 // pred_fallthru
      _
    // Predicated region
    $region42: #{decoder_forward.11} parent=1 // pred_check
      _
    $region43: #{decoder_forward.11} parent=1 // pred_check_branch
      %143 = sbr.rel (0) target = $region45
    $region44: #{decoder_forward.11} parent=1 // pred_region
      %s145 = ssub.s32 256, 256
      %146 = vsyncadd [#allocation18], %s145
      %s147 = sshll.u32 [#allocation19], 4
      %s148 = int_to_ptr.vmem [resolvable:$true] %s147
      %153 = dma.hbm_to_vmem [thread:$0]  %s10, 256, %s148, [#allocation18], 64, 64, 4
    $region45: #{decoder_forward.11} parent=1 // pred_fallthru
      _
    // Predicated region
    $region46: #{decoder_forward.11} parent=1 // pred_check
      _
    $region47: #{decoder_forward.11} parent=1 // pred_check_branch
      %155 = sbr.rel (0) target = $region49
    $region48: #{decoder_forward.11} parent=1 // pred_region
      %s157 = ssub.s32 16, 16
      %158 = vsyncadd [#allocation21], %s157
      %s160 = sshll.u32 [#allocation20], 4
      %s161 = int_to_ptr.vmem [resolvable:$true] %s160
      %163 = dma.hbm_to_vmem [thread:$0]  %s11, 16, %s161, [#allocation21]
    $region49: #{decoder_forward.11} parent=1 // pred_fallthru
      _
    // Predicated region
    $region50: #{decoder_forward.11} parent=1 // pred_check
      _
    $region51: #{decoder_forward.11} parent=1 // pred_check_branch
      %165 = sbr.rel (0) target = $region53
    $region52: #{decoder_forward.11} parent=1 // pred_region
      %s167 = ssub.s32 256, 256
      %168 = vsyncadd [#allocation21], %s167
      %s169 = sshll.u32 [#allocation22], 4
      %s170 = int_to_ptr.vmem [resolvable:$true] %s169
      %175 = dma.hbm_to_vmem [thread:$0]  %s12, 256, %s170, [#allocation21], 64, 64, 4
    $region53: #{decoder_forward.11} parent=1 // pred_fallthru
      _
    // Predicated region
    $region54: #{decoder_forward.11} parent=1 // pred_check
      _
    $region55: #{decoder_forward.11} parent=1 // pred_check_branch
      %177 = sbr.rel (0) target = $region57
    $region56: #{decoder_forward.11} parent=1 // pred_region
      %s179 = ssub.s32 16, 16
      %180 = vsyncadd [#allocation24], %s179
      %s182 = sshll.u32 [#allocation23], 4
      %s183 = int_to_ptr.vmem [resolvable:$true] %s182
      %185 = dma.hbm_to_vmem [thread:$0]  %s13, 16, %s183, [#allocation24]
    $region57: #{decoder_forward.11} parent=1 // pred_fallthru
      _
    // Predicated region
    $region58: #{decoder_forward.11} parent=1 // pred_check
      _
    $region59: #{decoder_forward.11} parent=1 // pred_check_branch
      %187 = sbr.rel (0) target = $region61
    $region60: #{decoder_forward.11} parent=1 // pred_region
      %188 = dma.done [#allocation3], 256
    $region61: #{decoder_forward.11} parent=1 // pred_fallthru
      _
    // Predicated region
    $region62: #{decoder_forward.11} parent=1 // pred_check
      _
    $region63: #{decoder_forward.11} parent=1 // pred_check_branch
      %190 = sbr.rel (0) target = $region65
    $region64: #{decoder_forward.11} parent=1 // pred_region
      %191 = dma.done [#allocation6], 256
    $region65: #{decoder_forward.11} parent=1 // pred_fallthru
      _
    // Predicated region
    $region66: #{decoder_forward.11} parent=1 // pred_check
      _
    $region67: #{decoder_forward.11} parent=1 // pred_check_branch
      %193 = sbr.rel (0) target = $region69
    $region68: #{decoder_forward.11} parent=1 // pred_region
      %194 = dma.done [#allocation6], 256
    $region69: #{decoder_forward.11} parent=1 // pred_fallthru
      _
    // Predicated region
    $region70: #{decoder_forward.11} parent=1 // pred_check
      _
    $region71: #{decoder_forward.11} parent=1 // pred_check_branch
      %196 = sbr.rel (0) target = $region73
    $region72: #{decoder_forward.11} parent=1 // pred_region
      %197 = dma.done [#allocation9], 32
    $region73: #{decoder_forward.11} parent=1 // pred_fallthru
      _
    // Predicated region
    $region74: #{decoder_forward.11} parent=1 // pred_check
      _
    $region75: #{decoder_forward.11} parent=1 // pred_check_branch
      %199 = sbr.rel (0) target = $region77
    $region76: #{decoder_forward.11} parent=1 // pred_region
      %200 = dma.done [#allocation9], 256
    $region77: #{decoder_forward.11} parent=1 // pred_fallthru
      _
    // Predicated region
    $region78: #{decoder_forward.11} parent=1 // pred_check
      _
    $region79: #{decoder_forward.11} parent=1 // pred_check_branch
      %202 = sbr.rel (0) target = $region81
    $region80: #{decoder_forward.11} parent=1 // pred_region
      %203 = dma.done [#allocation12], 16
    $region81: #{decoder_forward.11} parent=1 // pred_fallthru
      _
    // Predicated region
    $region82: #{decoder_forward.11} parent=1 // pred_check
      _
    $region83: #{decoder_forward.11} parent=1 // pred_check_branch
      %205 = sbr.rel (0) target = $region85
    $region84: #{decoder_forward.11} parent=1 // pred_region
      %206 = dma.done [#allocation12], 256
    $region85: #{decoder_forward.11} parent=1 // pred_fallthru
      _
    // Predicated region
    $region86: #{decoder_forward.11} parent=1 // pred_check
      _
    $region87: #{decoder_forward.11} parent=1 // pred_check_branch
      %208 = sbr.rel (0) target = $region89
    $region88: #{decoder_forward.11} parent=1 // pred_region
      %209 = dma.done [#allocation15], 16
    $region89: #{decoder_forward.11} parent=1 // pred_fallthru
      _
    // Predicated region
    $region90: #{decoder_forward.11} parent=1 // pred_check
      _
    $region91: #{decoder_forward.11} parent=1 // pred_check_branch
      %211 = sbr.rel (0) target = $region93
    $region92: #{decoder_forward.11} parent=1 // pred_region
      %212 = dma.done [#allocation15], 256
    $region93: #{decoder_forward.11} parent=1 // pred_fallthru
      _
    // Predicated region
    $region94: #{decoder_forward.11} parent=1 // pred_check
      _
    $region95: #{decoder_forward.11} parent=1 // pred_check_branch
      %214 = sbr.rel (0) target = $region97
    $region96: #{decoder_forward.11} parent=1 // pred_region
      %215 = dma.done [#allocation18], 16
    $region97: #{decoder_forward.11} parent=1 // pred_fallthru
      _
    // Predicated region
    $region98: #{decoder_forward.11} parent=1 // pred_check
      _
    $region99: #{decoder_forward.11} parent=1 // pred_check_branch
      %217 = sbr.rel (0) target = $region101
    $region100: #{decoder_forward.11} parent=1 // pred_region
      %218 = dma.done [#allocation18], 256
    $region101: #{decoder_forward.11} parent=1 // pred_fallthru
      _
    // Predicated region
    $region102: #{decoder_forward.11} parent=1 // pred_check
      _
    $region103: #{decoder_forward.11} parent=1 // pred_check_branch
      %220 = sbr.rel (0) target = $region105
    $region104: #{decoder_forward.11} parent=1 // pred_region
      %221 = dma.done [#allocation21], 16
    $region105: #{decoder_forward.11} parent=1 // pred_fallthru
      _
    // Predicated region
    $region106: #{decoder_forward.11} parent=1 // pred_check
      _
    $region107: #{decoder_forward.11} parent=1 // pred_check_branch
      %223 = sbr.rel (0) target = $region109
    $region108: #{decoder_forward.11} parent=1 // pred_region
      %224 = dma.done [#allocation21], 256
    $region109: #{decoder_forward.11} parent=1 // pred_fallthru
      _
    // Predicated region
    $region110: #{decoder_forward.11} parent=1 // pred_check
      _
    $region111: #{decoder_forward.11} parent=1 // pred_check_branch
      %226 = sbr.rel (0) target = $region113
    $region112: #{decoder_forward.11} parent=1 // pred_region
      %227 = dma.done [#allocation24], 16
    $region113: #{decoder_forward.11} parent=1 // pred_fallthru
      _
    %v229 = vld [vmem:[#allocation2] sm:$0xff]
    %v230 = vld [vmem:[#allocation2 + $0x8] sm:$0xff]
    %vm231 = vcmask 261120
    %v232 = vsel %vm231, %v229, 0.0
    %233 = vadd.xlane.f32.xlu0 %v232
    %v234 = vpop.xlane.xlu0 %233
    %v235 = vsel %vm231, %v230, 0.0
    %236 = vadd.xlane.f32.xlu0 %v235
    %v237 = vpop.xlane.xlu0 %236
    %v238 = vrcp.pop 32.0
    %v239 = vmul.f32 %v234, %v238
    %v240 = vmul.f32 %v237, %v238
    %v241 = vsub.f32 %v229, %v239
    %v242 = vsub.f32 %v230, %v240
    %v243 = vmul.f32 %v241, %v241
    %v244 = vmul.f32 %v242, %v242
    %v245 = vsel %vm231, %v243, 0.0
    %246 = vadd.xlane.f32.xlu0 %v245
    %v247 = vpop.xlane.xlu0 %246
    %v248 = vsel %vm231, %v244, 0.0
    %249 = vadd.xlane.f32.xlu0 %v248
    %v250 = vpop.xlane.xlu0 %249
    %v251 = vmul.f32 %v247, %v238
    %v252 = vmul.f32 %v250, %v238
    %v253 = vadd.f32 %v251, 1e-05
    %v254 = vadd.f32 %v252, 1e-05
    %v255 = vrsqrt.pop %v253
    %v256 = vrsqrt.pop %v254
    %v257 = vmul.f32 %v241, %v255
    %v258 = vmul.f32 %v242, %v256
    %v259 = vpack.c.bf16 %v258, %v257
    %v260 = vld [vmem:[#allocation10] sm:$0xf]
    %v261 = vld [vmem:[#allocation10 + $0x4] sm:$0xf]
    %v262 = vld [vmem:[#allocation10 + $0x8] sm:$0xf]
    %v263 = vld [vmem:[#allocation10 + $0xc] sm:$0xf]
    %v264 = vld [vmem:[#allocation11] sm:$0x1]
    %v266 = vlaneseq
    %v267 = vshrl.u32 %v266, 7
    %v268 = vsub.s32 0, %v267
    %v269 = vrot.slane %v264, %v268
    %v275 = vunpack.c.l.b16 %v260
    %v276 = vunpack.c.l.b16 %v261
    %v277 = vunpack.c.l.b16 %v262
    %v278 = vunpack.c.l.b16 %v263
    %v279 = vpack.c.b16 %v276, %v275
    %v280 = vpack.c.b16 %v278, %v277
    %v284 = vsel %vm231, %v259, 0
    %286 = vmatprep.subr.bf16.mxu0 0
    %287 = vmatpush1.bf16.msra.mxu0 %v279
    %288 = vmatprep.subr.bf16.mxu0 0
    %289 = vmatpush1.bf16.msra.mxu0 %v280
    %290 = vmatprep.subr.bf16.mxu0 0
    %291 = vmatpush1.bf16.msra.mxu0 0
    %292 = vmatprep.subr.bf16.mxu0 0
    %293 = vmatpush1.bf16.msra.mxu0 0
    %294 = vmatprep.subr.bf16.mxu0 0
    %295 = vmatpush1.bf16.msra.mxu0 0
    %296 = vmatprep.subr.bf16.mxu0 0
    %297 = vmatpush1.bf16.msra.mxu0 0
    %298 = vmatprep.subr.bf16.mxu0 0
    %299 = vmatpush1.bf16.msra.mxu0 0
    %300 = vmatprep.subr.bf16.mxu0 0
    %301 = vmatpush1.bf16.msra.mxu0 0
    %302 = vmatprep.subr.bf16.mxu0 0
    %303 = vmatpush1.bf16.msra.mxu0 0
    %304 = vmatprep.subr.bf16.mxu0 0
    %305 = vmatpush1.bf16.msra.mxu0 0
    %306 = vmatprep.subr.bf16.mxu0 0
    %307 = vmatpush1.bf16.msra.mxu0 0
    %308 = vmatprep.subr.bf16.mxu0 0
    %309 = vmatpush1.bf16.msra.mxu0 0
    %310 = vmatprep.subr.bf16.mxu0 0
    %311 = vmatpush1.bf16.msra.mxu0 0
    %312 = vmatprep.subr.bf16.mxu0 0
    %313 = vmatpush1.bf16.msra.mxu0 0
    %314 = vmatprep.subr.bf16.mxu0 0
    %315 = vmatpush1.bf16.msra.mxu0 0
    %316 = vmatprep.subr.bf16.mxu0 0
    %317 = vmatpush1.bf16.msra.mxu0 0
    %318 = vmatprep.mubr.bf16.mxu0 0
    %319 = vmatmul.mubr.bf16.gmra.mrb[0].mxu0 %v284
    %v320 = vpop.f32.mrb[0].mxu0
    %v321 = vadd.f32 %v269, %v320
    %v322 = vpop.f32.mrb[0].mxu0
    %v323 = vpop.f32.mrb[0].mxu0
    %v324 = vadd.f32 %v269, %v323
    %v325 = vpop.f32.mrb[0].mxu0
    %326 = vdwg.mxu0
    %v327 = vld [vmem:[#allocation8] sm:$0x1]
    %v328 = vld [vmem:[#allocation8 + $0x1] sm:$0x1]
    %v329 = vsub.f32 %v327, 1.0
    %v330 = vsub.f32 %v328, 1.0
    %v331 = vmul.f32 %v329, 1e+09
    %v332 = vmul.f32 %v330, 1e+09
    %v335 = vlaneseq
    %v336 = vshrl.u32 %v335, 7
    %v337 = vsub.s32 0, %v336
    %v338 = vrot.slane %v331, %v337
    %v339 = vlaneseq
    %v340 = vshrl.u32 %v339, 7
    %v341 = vsub.s32 0, %v340
    %v342 = vrot.slane %v332, %v341
    %v345 = vld [vmem:[#allocation5] sm:$0x1f]
    %v346 = vld [vmem:[#allocation5 + $0x8] sm:$0x1f]
    %v347 = vld [vmem:[#allocation13] sm:$0xf]
    %v348 = vld [vmem:[#allocation13 + $0x4] sm:$0xf]
    %v349 = vld [vmem:[#allocation13 + $0x8] sm:$0xf]
    %v350 = vld [vmem:[#allocation13 + $0xc] sm:$0xf]
    %v351 = vld [vmem:[#allocation14] sm:$0x1]
    %v352 = vld [vmem:[#allocation17] sm:$0x1]
    %v355 = vcombine.high %v345, %v345
    %v357 = vunpack.c.l.s4 1966171168
    %v358 = vunpack.c.0.s8 %v357
    %v359 = vlaneseq
    %v360 = vshrl.u32 %v359, 7
    %v361 = vsub.s32 %v358, %v360
    %v362 = vrot.slane %v345, %v361
    %v364 = vunpack.c.l.s4 1966171168
    %v365 = vunpack.c.0.s8 %v364
    %v366 = vlaneseq
    %v367 = vshrl.u32 %v366, 7
    %v368 = vsub.s32 %v365, %v367
    %v369 = vrot.slane %v355, %v368
    %v370 = vcombine.high %v362, %v362
    %v372 = vunpack.c.l.s4 1966171168
    %v373 = vunpack.c.0.s8 %v372
    %v374 = vlaneseq
    %v375 = vshrl.u32 %v374, 7
    %v376 = vsub.s32 %v373, %v375
    %v377 = vrot.slane %v362, %v376
    %v379 = vunpack.c.l.s4 1966171168
    %v380 = vunpack.c.0.s8 %v379
    %v381 = vlaneseq
    %v382 = vshrl.u32 %v381, 7
    %v383 = vsub.s32 %v380, %v382
    %v384 = vrot.slane %v369, %v383
    %v386 = vunpack.c.l.s4 1966171168
    %v387 = vunpack.c.0.s8 %v386
    %v388 = vlaneseq
    %v389 = vshrl.u32 %v388, 7
    %v390 = vsub.s32 %v387, %v389
    %v391 = vrot.slane %v370, %v390
    %v392 = vcombine.high %v377, %v377
    %v393 = vcombine.high %v391, %v391
    %v394 = vcombine.high %v346, %v346
    %v396 = vunpack.c.l.s4 1966171168
    %v397 = vunpack.c.0.s8 %v396
    %v398 = vlaneseq
    %v399 = vshrl.u32 %v398, 7
    %v400 = vsub.s32 %v397, %v399
    %v401 = vrot.slane %v346, %v400
    %v403 = vunpack.c.l.s4 1966171168
    %v404 = vunpack.c.0.s8 %v403
    %v405 = vlaneseq
    %v406 = vshrl.u32 %v405, 7
    %v407 = vsub.s32 %v404, %v406
    %v408 = vrot.slane %v394, %v407
    %v409 = vcombine.high %v401, %v401
    %v411 = vunpack.c.l.s4 1966171168
    %v412 = vunpack.c.0.s8 %v411
    %v413 = vlaneseq
    %v414 = vshrl.u32 %v413, 7
    %v415 = vsub.s32 %v412, %v414
    %v416 = vrot.slane %v401, %v415
    %v418 = vunpack.c.l.s4 1966171168
    %v419 = vunpack.c.0.s8 %v418
    %v420 = vlaneseq
    %v421 = vshrl.u32 %v420, 7
    %v422 = vsub.s32 %v419, %v421
    %v423 = vrot.slane %v408, %v422
    %v425 = vunpack.c.l.s4 1966171168
    %v426 = vunpack.c.0.s8 %v425
    %v427 = vlaneseq
    %v428 = vshrl.u32 %v427, 7
    %v429 = vsub.s32 %v426, %v428
    %v430 = vrot.slane %v409, %v429
    %v431 = vcombine.high %v416, %v416
    %v432 = vcombine.high %v430, %v430
    %v433 = vcombine.low %v377, %v391
    %v434 = vcombine.low %v392, %v393
    %v435 = vcombine.low %v384, %v416
    %v436 = vcombine.low %v430, %v431
    %v438 = vunpack.c.l.s4 1966171168
    %v439 = vunpack.c.0.s8 %v438
    %v440 = vlaneseq
    %v441 = vshrl.u32 %v440, 7
    %v442 = vsub.s32 %v439, %v441
    %v443 = vrot.slane %v433, %v442
    %v445 = vunpack.c.l.s4 1966171168
    %v446 = vunpack.c.0.s8 %v445
    %v447 = vlaneseq
    %v448 = vshrl.u32 %v447, 7
    %v449 = vsub.s32 %v446, %v448
    %v450 = vrot.slane %v434, %v449
    %v452 = vunpack.c.l.s4 1966171168
    %v453 = vunpack.c.0.s8 %v452
    %v454 = vlaneseq
    %v455 = vshrl.u32 %v454, 7
    %v456 = vsub.s32 %v453, %v455
    %v457 = vrot.slane %v435, %v456
    %v459 = vunpack.c.l.s4 1966171168
    %v460 = vunpack.c.0.s8 %v459
    %v461 = vlaneseq
    %v462 = vshrl.u32 %v461, 7
    %v463 = vsub.s32 %v460, %v462
    %v464 = vrot.slane %v436, %v463
    %v465 = vcombine.low %v443, %v450
    %v466 = vcombine.low %v457, %v464
    %v468 = vunpack.c.l.s4 1966171168
    %v469 = vunpack.c.0.s8 %v468
    %v470 = vlaneseq
    %v471 = vshrl.u32 %v470, 7
    %v472 = vsub.s32 %v469, %v471
    %v473 = vrot.slane %v465, %v472
    %v475 = vunpack.c.l.s4 1966171168
    %v476 = vunpack.c.0.s8 %v475
    %v477 = vlaneseq
    %v478 = vshrl.u32 %v477, 7
    %v479 = vsub.s32 %v476, %v478
    %v480 = vrot.slane %v466, %v479
    %v481 = vcombine.low %v473, %v480
    %v482 = vcombine.low %v432, %v423
    %v484 = vunpack.c.l.s4 1966171168
    %v485 = vunpack.c.0.s8 %v484
    %v486 = vlaneseq
    %v487 = vshrl.u32 %v486, 7
    %v488 = vsub.s32 %v485, %v487
    %v489 = vrot.slane %v482, %v488
    %v491 = vunpack.c.l.s4 1966171168
    %v492 = vunpack.c.0.s8 %v491
    %v493 = vlaneseq
    %v494 = vshrl.u32 %v493, 7
    %v495 = vsub.s32 %v492, %v494
    %v496 = vrot.slane %v489, %v495
    %v499 = vpack.c.bf16 %v496, %v481
    %v501 = vlaneseq
    %v502 = vshrl.u32 %v501, 7
    %v503 = vsub.s32 0, %v502
    %v504 = vrot.slane %v351, %v503
    %v510 = vunpack.c.l.b16 %v347
    %v511 = vunpack.c.l.b16 %v348
    %v512 = vunpack.c.l.b16 %v349
    %v513 = vunpack.c.l.b16 %v350
    %v514 = vpack.c.b16 %v511, %v510
    %v515 = vpack.c.b16 %v513, %v512
    %v519 = vsel %vm231, %v499, 0
    %521 = vmatprep.subr.bf16.mxu0 0
    %522 = vmatpush1.bf16.msra.mxu0 %v514
    %523 = vmatprep.subr.bf16.mxu0 0
    %524 = vmatpush1.bf16.msra.mxu0 %v515
    %525 = vmatprep.subr.bf16.mxu0 0
    %526 = vmatpush1.bf16.msra.mxu0 0
    %527 = vmatprep.subr.bf16.mxu0 0
    %528 = vmatpush1.bf16.msra.mxu0 0
    %529 = vmatprep.subr.bf16.mxu0 0
    %530 = vmatpush1.bf16.msra.mxu0 0
    %531 = vmatprep.subr.bf16.mxu0 0
    %532 = vmatpush1.bf16.msra.mxu0 0
    %533 = vmatprep.subr.bf16.mxu0 0
    %534 = vmatpush1.bf16.msra.mxu0 0
    %535 = vmatprep.subr.bf16.mxu0 0
    %536 = vmatpush1.bf16.msra.mxu0 0
    %537 = vmatprep.subr.bf16.mxu0 0
    %538 = vmatpush1.bf16.msra.mxu0 0
    %539 = vmatprep.subr.bf16.mxu0 0
    %540 = vmatpush1.bf16.msra.mxu0 0
    %541 = vmatprep.subr.bf16.mxu0 0
    %542 = vmatpush1.bf16.msra.mxu0 0
    %543 = vmatprep.subr.bf16.mxu0 0
    %544 = vmatpush1.bf16.msra.mxu0 0
    %545 = vmatprep.subr.bf16.mxu0 0
    %546 = vmatpush1.bf16.msra.mxu0 0
    %547 = vmatprep.subr.bf16.mxu0 0
    %548 = vmatpush1.bf16.msra.mxu0 0
    %549 = vmatprep.subr.bf16.mxu0 0
    %550 = vmatpush1.bf16.msra.mxu0 0
    %551 = vmatprep.subr.bf16.mxu0 0
    %552 = vmatpush1.bf16.msra.mxu0 0
    %553 = vmatprep.mubr.bf16.mxu0 0
    %554 = vmatmul.mubr.bf16.gmra.mrb[0].mxu0 %v519
    %v555 = vpop.f32.mrb[0].mxu0
    %v556 = vadd.f32 %v504, %v555
    %v557 = vpop.f32.mrb[0].mxu0
    %v558 = vpop.f32.mrb[0].mxu0
    %v559 = vadd.f32 %v504, %v558
    %v560 = vpop.f32.mrb[0].mxu0
    %561 = vdwg.mxu0
    %v564 = vcombine.high %v556, %v556
    %v566 = vunpack.c.l.s4 1966171168
    %v567 = vunpack.c.0.s8 %v566
    %v568 = vlaneseq
    %v569 = vshrl.u32 %v568, 7
    %v570 = vsub.s32 %v567, %v569
    %v571 = vrot.slane %v556, %v570
    %v573 = vunpack.c.l.s4 1966171168
    %v574 = vunpack.c.0.s8 %v573
    %v575 = vlaneseq
    %v576 = vshrl.u32 %v575, 7
    %v577 = vsub.s32 %v574, %v576
    %v578 = vrot.slane %v564, %v577
    %v579 = vcombine.high %v571, %v571
    %v580 = vcombine.high %v578, %v578
    %v582 = vunpack.c.l.s4 1966171168
    %v583 = vunpack.c.0.s8 %v582
    %v584 = vlaneseq
    %v585 = vshrl.u32 %v584, 7
    %v586 = vsub.s32 %v583, %v585
    %v587 = vrot.slane %v571, %v586
    %v589 = vunpack.c.l.s4 1966171168
    %v590 = vunpack.c.0.s8 %v589
    %v591 = vlaneseq
    %v592 = vshrl.u32 %v591, 7
    %v593 = vsub.s32 %v590, %v592
    %v594 = vrot.slane %v578, %v593
    %v596 = vunpack.c.l.s4 1966171168
    %v597 = vunpack.c.0.s8 %v596
    %v598 = vlaneseq
    %v599 = vshrl.u32 %v598, 7
    %v600 = vsub.s32 %v597, %v599
    %v601 = vrot.slane %v579, %v600
    %v603 = vunpack.c.l.s4 1966171168
    %v604 = vunpack.c.0.s8 %v603
    %v605 = vlaneseq
    %v606 = vshrl.u32 %v605, 7
    %v607 = vsub.s32 %v604, %v606
    %v608 = vrot.slane %v580, %v607
    %v609 = vcombine.high %v587, %v587
    %v610 = vcombine.high %v594, %v594
    %v611 = vcombine.high %v601, %v601
    %v612 = vcombine.high %v608, %v608
    %v614 = vunpack.c.l.s4 1966171168
    %v615 = vunpack.c.0.s8 %v614
    %v616 = vlaneseq
    %v617 = vshrl.u32 %v616, 7
    %v618 = vsub.s32 %v615, %v617
    %v619 = vrot.slane %v559, %v618
    %v620 = vcombine.high %v619, %v619
    %v622 = vunpack.c.l.s4 1966171168
    %v623 = vunpack.c.0.s8 %v622
    %v624 = vlaneseq
    %v625 = vshrl.u32 %v624, 7
    %v626 = vsub.s32 %v623, %v625
    %v627 = vrot.slane %v619, %v626
    %v629 = vunpack.c.l.s4 1966171168
    %v630 = vunpack.c.0.s8 %v629
    %v631 = vlaneseq
    %v632 = vshrl.u32 %v631, 7
    %v633 = vsub.s32 %v630, %v632
    %v634 = vrot.slane %v620, %v633
    %v635 = vpack.c.bf16 %v321, %v321
    %v636 = vpack.c.bf16 %v324, %v324
    %v637 = vcombine.low %v587, %v601
    %v638 = vcombine.low %v609, %v611
    %v640 = vunpack.c.l.s4 1966171168
    %v641 = vunpack.c.0.s8 %v640
    %v642 = vlaneseq
    %v643 = vshrl.u32 %v642, 7
    %v644 = vsub.s32 %v641, %v643
    %v645 = vrot.slane %v637, %v644
    %v647 = vunpack.c.l.s4 1966171168
    %v648 = vunpack.c.0.s8 %v647
    %v649 = vlaneseq
    %v650 = vshrl.u32 %v649, 7
    %v651 = vsub.s32 %v648, %v650
    %v652 = vrot.slane %v638, %v651
    %v654 = vunpack.c.l.s4 1966171168
    %v655 = vunpack.c.0.s8 %v654
    %v656 = vlaneseq
    %v657 = vshrl.u32 %v656, 7
    %v658 = vsub.s32 %v655, %v657
    %v659 = vrot.slane %v594, %v658
    %v660 = vcombine.low %v645, %v652
    %v662 = vunpack.c.l.s4 1966171168
    %v663 = vunpack.c.0.s8 %v662
    %v664 = vlaneseq
    %v665 = vshrl.u32 %v664, 7
    %v666 = vsub.s32 %v663, %v665
    %v667 = vrot.slane %v660, %v666
    %v669 = vunpack.c.l.s4 1966171168
    %v670 = vunpack.c.0.s8 %v669
    %v671 = vlaneseq
    %v672 = vshrl.u32 %v671, 7
    %v673 = vsub.s32 %v670, %v672
    %v674 = vrot.slane %v659, %v673
    %v675 = vcombine.low %v667, %v674
    %v676 = vcombine.low %v608, %v610
    %v677 = vcombine.low %v612, %v627
    %v679 = vunpack.c.l.s4 1966171168
    %v680 = vunpack.c.0.s8 %v679
    %v681 = vlaneseq
    %v682 = vshrl.u32 %v681, 7
    %v683 = vsub.s32 %v680, %v682
    %v684 = vrot.slane %v676, %v683
    %v686 = vunpack.c.l.s4 1966171168
    %v687 = vunpack.c.0.s8 %v686
    %v688 = vlaneseq
    %v689 = vshrl.u32 %v688, 7
    %v690 = vsub.s32 %v687, %v689
    %v691 = vrot.slane %v677, %v690
    %v693 = vunpack.c.l.s4 1966171168
    %v694 = vunpack.c.0.s8 %v693
    %v695 = vlaneseq
    %v696 = vshrl.u32 %v695, 7
    %v697 = vsub.s32 %v694, %v696
    %v698 = vrot.slane %v634, %v697
    %v699 = vcombine.low %v684, %v691
    %v701 = vunpack.c.l.s4 1966171168
    %v702 = vunpack.c.0.s8 %v701
    %v703 = vlaneseq
    %v704 = vshrl.u32 %v703, 7
    %v705 = vsub.s32 %v702, %v704
    %v706 = vrot.slane %v699, %v705
    %v708 = vunpack.c.l.s4 1966171168
    %v709 = vunpack.c.0.s8 %v708
    %v710 = vlaneseq
    %v711 = vshrl.u32 %v710, 7
    %v712 = vsub.s32 %v709, %v711
    %v713 = vrot.slane %v698, %v712
    %v714 = vcombine.low %v706, %v713
    %v717 = vpack.c.bf16 %v675, %v675
    %v718 = vpack.c.bf16 %v714, %v714
    %vm719 = vcmask 64512
    %v721 = vsel %vm719, %v635, 0
    %v724 = vsel %vm719, %v717, 0
    %726 = vmatprep.subr.bf16.mxu0 0
    %727 = vmatpush1.bf16.xpose.msra.mxu0 %v724
    %728 = vmatprep.subr.bf16.mxu0 0
    %729 = vmatpush1.bf16.xpose.msra.mxu0 0
    %730 = vmatprep.subr.bf16.mxu0 0
    %731 = vmatpush1.bf16.xpose.msra.mxu0 0
    %732 = vmatprep.subr.bf16.mxu0 0
    %733 = vmatpush1.bf16.xpose.msra.mxu0 0
    %734 = vmatprep.subr.bf16.mxu0 0
    %735 = vmatpush1.bf16.xpose.msra.mxu0 0
    %736 = vmatprep.subr.bf16.mxu0 0
    %737 = vmatpush1.bf16.xpose.msra.mxu0 0
    %738 = vmatprep.subr.bf16.mxu0 0
    %739 = vmatpush1.bf16.xpose.msra.mxu0 0
    %740 = vmatprep.subr.bf16.mxu0 0
    %741 = vmatpush1.bf16.xpose.msra.mxu0 0
    %742 = vmatprep.subr.bf16.mxu0 0
    %743 = vmatpush1.bf16.xpose.msra.mxu0 0
    %744 = vmatprep.subr.bf16.mxu0 0
    %745 = vmatpush1.bf16.xpose.msra.mxu0 0
    %746 = vmatprep.subr.bf16.mxu0 0
    %747 = vmatpush1.bf16.xpose.msra.mxu0 0
    %748 = vmatprep.subr.bf16.mxu0 0
    %749 = vmatpush1.bf16.xpose.msra.mxu0 0
    %750 = vmatprep.subr.bf16.mxu0 0
    %751 = vmatpush1.bf16.xpose.msra.mxu0 0
    %752 = vmatprep.subr.bf16.mxu0 0
    %753 = vmatpush1.bf16.xpose.msra.mxu0 0
    %754 = vmatprep.subr.bf16.mxu0 0
    %755 = vmatpush1.bf16.xpose.msra.mxu0 0
    %756 = vmatprep.subr.bf16.mxu0 0
    %757 = vmatpush1.bf16.xpose.msra.mxu0 0
    %758 = vmatprep.mubr.bf16.mxu0 0
    %759 = vmatmul.mubr.bf16.gmra.mrb[0].mxu0 %v721
    %v760 = vpop.f32.mrb[0].mxu0
    %v761 = vadd.f32 0.0, %v760
    %v762 = vpop.f32.mrb[0].mxu0
    %v763 = vpop.f32.mrb[0].mxu0
    %v764 = vpop.f32.mrb[0].mxu0
    %765 = vdwg.mxu0
    %v767 = vsel %vm719, %v636, 0
    %v770 = vsel %vm719, %v718, 0
    %772 = vmatprep.subr.bf16.mxu0 0
    %773 = vmatpush1.bf16.xpose.msra.mxu0 %v770
    %774 = vmatprep.subr.bf16.mxu0 0
    %775 = vmatpush1.bf16.xpose.msra.mxu0 0
    %776 = vmatprep.subr.bf16.mxu0 0
    %777 = vmatpush1.bf16.xpose.msra.mxu0 0
    %778 = vmatprep.subr.bf16.mxu0 0
    %779 = vmatpush1.bf16.xpose.msra.mxu0 0
    %780 = vmatprep.subr.bf16.mxu0 0
    %781 = vmatpush1.bf16.xpose.msra.mxu0 0
    %782 = vmatprep.subr.bf16.mxu0 0
    %783 = vmatpush1.bf16.xpose.msra.mxu0 0
    %784 = vmatprep.subr.bf16.mxu0 0
    %785 = vmatpush1.bf16.xpose.msra.mxu0 0
    %786 = vmatprep.subr.bf16.mxu0 0
    %787 = vmatpush1.bf16.xpose.msra.mxu0 0
    %788 = vmatprep.subr.bf16.mxu0 0
    %789 = vmatpush1.bf16.xpose.msra.mxu0 0
    %790 = vmatprep.subr.bf16.mxu0 0
    %791 = vmatpush1.bf16.xpose.msra.mxu0 0
    %792 = vmatprep.subr.bf16.mxu0 0
    %793 = vmatpush1.bf16.xpose.msra.mxu0 0
    %794 = vmatprep.subr.bf16.mxu0 0
    %795 = vmatpush1.bf16.xpose.msra.mxu0 0
    %796 = vmatprep.subr.bf16.mxu0 0
    %797 = vmatpush1.bf16.xpose.msra.mxu0 0
    %798 = vmatprep.subr.bf16.mxu0 0
    %799 = vmatpush1.bf16.xpose.msra.mxu0 0
    %800 = vmatprep.subr.bf16.mxu0 0
    %801 = vmatpush1.bf16.xpose.msra.mxu0 0
    %802 = vmatprep.subr.bf16.mxu0 0
    %803 = vmatpush1.bf16.xpose.msra.mxu0 0
    %804 = vmatprep.mubr.bf16.mxu0 0
    %805 = vmatmul.mubr.bf16.gmra.mrb[0].mxu0 %v767
    %v806 = vpop.f32.mrb[0].mxu0
    %v807 = vadd.f32 0.0, %v806
    %v808 = vpop.f32.mrb[0].mxu0
    %v809 = vpop.f32.mrb[0].mxu0
    %v810 = vpop.f32.mrb[0].mxu0
    %811 = vdwg.mxu0
    %v812 = vmul.f32 %v761, 0.35355338
    %v813 = vmul.f32 %v807, 0.35355338
    %v814 = vadd.f32 %v812, %v338
    %v815 = vadd.f32 %v813, %v342
    %vm816 = vcmask 39936
    %v817 = vsel %vm816, %v814, -inf
    %818 = vmax.xlane.f32.xlu0 %v817
    %v819 = vpop.xlane.xlu0 %818
    %v820 = vsel %vm816, %v815, -inf
    %821 = vmax.xlane.f32.xlu0 %v820
    %v822 = vpop.xlane.xlu0 %821
    %v823 = vsub.f32 %v814, %v819
    %v824 = vsub.f32 %v815, %v822
    %v825 = vmul.f32 %v823, 1.442695
    %v826 = vpow.pop %v825
    %v827 = vmul.f32 %v824, 1.442695
    %v828 = vpow.pop %v827
    %v829 = vsel %vm816, %v826, 0.0
    %830 = vadd.xlane.f32.xlu0 %v829
    %v831 = vpop.xlane.xlu0 %830
    %v832 = vsel %vm816, %v828, 0.0
    %833 = vadd.xlane.f32.xlu0 %v832
    %v834 = vpop.xlane.xlu0 %833
    %v835 = vrcp.pop %v831
    %v836 = vrcp.pop %v834
    %v837 = vmul.f32 %v826, %v835
    %v838 = vmul.f32 %v828, %v836
    %v839 = vpack.c.bf16 %v837, %v837
    %v840 = vpack.c.bf16 %v838, %v838
    %842 = vrot.lane.b32.xlu0 %v717, 96
    %v843 = vpop.permute.xlu0 %842
    %v845 = vsel %vm816, %v839, 0
    %vm847 = vcmask 1041408
    %vm848 = vcmask 1042432
    %v849 = vsel %vm847, 4294967295, 65535
    %v850 = vsel %vm848, %v849, 0
    %v852 = vand.u32 %v843, %v850
    %854 = vmatprep.subr.bf16.mxu0 0
    %855 = vmatpush1.bf16.msra.mxu0 %v852
    %856 = vmatprep.subr.bf16.mxu0 0
    %857 = vmatpush1.bf16.msra.mxu0 0
    %858 = vmatprep.subr.bf16.mxu0 0
    %859 = vmatpush1.bf16.msra.mxu0 0
    %860 = vmatprep.subr.bf16.mxu0 0
    %861 = vmatpush1.bf16.msra.mxu0 0
    %862 = vmatprep.subr.bf16.mxu0 0
    %863 = vmatpush1.bf16.msra.mxu0 0
    %864 = vmatprep.subr.bf16.mxu0 0
    %865 = vmatpush1.bf16.msra.mxu0 0
    %866 = vmatprep.subr.bf16.mxu0 0
    %867 = vmatpush1.bf16.msra.mxu0 0
    %868 = vmatprep.subr.bf16.mxu0 0
    %869 = vmatpush1.bf16.msra.mxu0 0
    %870 = vmatprep.subr.bf16.mxu0 0
    %871 = vmatpush1.bf16.msra.mxu0 0
    %872 = vmatprep.subr.bf16.mxu0 0
    %873 = vmatpush1.bf16.msra.mxu0 0
    %874 = vmatprep.subr.bf16.mxu0 0
    %875 = vmatpush1.bf16.msra.mxu0 0
    %876 = vmatprep.subr.bf16.mxu0 0
    %877 = vmatpush1.bf16.msra.mxu0 0
    %878 = vmatprep.subr.bf16.mxu0 0
    %879 = vmatpush1.bf16.msra.mxu0 0
    %880 = vmatprep.subr.bf16.mxu0 0
    %881 = vmatpush1.bf16.msra.mxu0 0
    %882 = vmatprep.subr.bf16.mxu0 0
    %883 = vmatpush1.bf16.msra.mxu0 0
    %884 = vmatprep.subr.bf16.mxu0 0
    %885 = vmatpush1.bf16.msra.mxu0 0
    %886 = vmatprep.mubr.bf16.mxu0 0
    %887 = vmatmul.mubr.bf16.gmra.mrb[0].mxu0 %v845
    %v888 = vpop.f32.mrb[0].mxu0
    %v889 = vadd.f32 0.0, %v888
    %v890 = vpop.f32.mrb[0].mxu0
    %v891 = vpop.f32.mrb[0].mxu0
    %v892 = vpop.f32.mrb[0].mxu0
    %893 = vdwg.mxu0
    %895 = vrot.lane.b32.xlu0 %v718, 96
    %v896 = vpop.permute.xlu0 %895
    %v898 = vsel %vm816, %v840, 0
    %v901 = vand.u32 %v896, %v850
    %903 = vmatprep.subr.bf16.mxu0 0
    %904 = vmatpush1.bf16.msra.mxu0 %v901
    %905 = vmatprep.subr.bf16.mxu0 0
    %906 = vmatpush1.bf16.msra.mxu0 0
    %907 = vmatprep.subr.bf16.mxu0 0
    %908 = vmatpush1.bf16.msra.mxu0 0
    %909 = vmatprep.subr.bf16.mxu0 0
    %910 = vmatpush1.bf16.msra.mxu0 0
    %911 = vmatprep.subr.bf16.mxu0 0
    %912 = vmatpush1.bf16.msra.mxu0 0
    %913 = vmatprep.subr.bf16.mxu0 0
    %914 = vmatpush1.bf16.msra.mxu0 0
    %915 = vmatprep.subr.bf16.mxu0 0
    %916 = vmatpush1.bf16.msra.mxu0 0
    %917 = vmatprep.subr.bf16.mxu0 0
    %918 = vmatpush1.bf16.msra.mxu0 0
    %919 = vmatprep.subr.bf16.mxu0 0
    %920 = vmatpush1.bf16.msra.mxu0 0
    %921 = vmatprep.subr.bf16.mxu0 0
    %922 = vmatpush1.bf16.msra.mxu0 0
    %923 = vmatprep.subr.bf16.mxu0 0
    %924 = vmatpush1.bf16.msra.mxu0 0
    %925 = vmatprep.subr.bf16.mxu0 0
    %926 = vmatpush1.bf16.msra.mxu0 0
    %927 = vmatprep.subr.bf16.mxu0 0
    %928 = vmatpush1.bf16.msra.mxu0 0
    %929 = vmatprep.subr.bf16.mxu0 0
    %930 = vmatpush1.bf16.msra.mxu0 0
    %931 = vmatprep.subr.bf16.mxu0 0
    %932 = vmatpush1.bf16.msra.mxu0 0
    %933 = vmatprep.subr.bf16.mxu0 0
    %934 = vmatpush1.bf16.msra.mxu0 0
    %935 = vmatprep.mubr.bf16.mxu0 0
    %936 = vmatmul.mubr.bf16.gmra.mrb[0].mxu0 %v898
    %v937 = vpop.f32.mrb[0].mxu0
    %v938 = vadd.f32 0.0, %v937
    %v939 = vpop.f32.mrb[0].mxu0
    %v940 = vpop.f32.mrb[0].mxu0
    %v941 = vpop.f32.mrb[0].mxu0
    %942 = vdwg.mxu0
    %v943 = vpack.c.bf16 %v938, %v889
    %v944 = vld [vmem:[#allocation16] sm:$0xf]
    %946 = vrot.lane.b32.xlu0 %v635, 120
    %v947 = vpop.permute.xlu0 %946
    %948 = vrot.lane.b32.xlu0 %v717, 120
    %v949 = vpop.permute.xlu0 %948
    %v951 = vsel %vm719, %v947, 0
    %v954 = vsel %vm719, %v949, 0
    %956 = vmatprep.subr.bf16.mxu0 0
    %957 = vmatpush1.bf16.xpose.msra.mxu0 %v954
    %958 = vmatprep.subr.bf16.mxu0 0
    %959 = vmatpush1.bf16.xpose.msra.mxu0 0
    %960 = vmatprep.subr.bf16.mxu0 0
    %961 = vmatpush1.bf16.xpose.msra.mxu0 0
    %962 = vmatprep.subr.bf16.mxu0 0
    %963 = vmatpush1.bf16.xpose.msra.mxu0 0
    %964 = vmatprep.subr.bf16.mxu0 0
    %965 = vmatpush1.bf16.xpose.msra.mxu0 0
    %966 = vmatprep.subr.bf16.mxu0 0
    %967 = vmatpush1.bf16.xpose.msra.mxu0 0
    %968 = vmatprep.subr.bf16.mxu0 0
    %969 = vmatpush1.bf16.xpose.msra.mxu0 0
    %970 = vmatprep.subr.bf16.mxu0 0
    %971 = vmatpush1.bf16.xpose.msra.mxu0 0
    %972 = vmatprep.subr.bf16.mxu0 0
    %973 = vmatpush1.bf16.xpose.msra.mxu0 0
    %974 = vmatprep.subr.bf16.mxu0 0
    %975 = vmatpush1.bf16.xpose.msra.mxu0 0
    %976 = vmatprep.subr.bf16.mxu0 0
    %977 = vmatpush1.bf16.xpose.msra.mxu0 0
    %978 = vmatprep.subr.bf16.mxu0 0
    %979 = vmatpush1.bf16.xpose.msra.mxu0 0
    %980 = vmatprep.subr.bf16.mxu0 0
    %981 = vmatpush1.bf16.xpose.msra.mxu0 0
    %982 = vmatprep.subr.bf16.mxu0 0
    %983 = vmatpush1.bf16.xpose.msra.mxu0 0
    %984 = vmatprep.subr.bf16.mxu0 0
    %985 = vmatpush1.bf16.xpose.msra.mxu0 0
    %986 = vmatprep.subr.bf16.mxu0 0
    %987 = vmatpush1.bf16.xpose.msra.mxu0 0
    %988 = vmatprep.mubr.bf16.mxu0 0
    %989 = vmatmul.mubr.bf16.gmra.mrb[0].mxu0 %v951
    %v990 = vpop.f32.mrb[0].mxu0
    %v991 = vadd.f32 0.0, %v990
    %v992 = vpop.f32.mrb[0].mxu0
    %v993 = vpop.f32.mrb[0].mxu0
    %v994 = vpop.f32.mrb[0].mxu0
    %995 = vdwg.mxu0
    %997 = vrot.lane.b32.xlu0 %v636, 120
    %v998 = vpop.permute.xlu0 %997
    %999 = vrot.lane.b32.xlu0 %v718, 120
    %v1000 = vpop.permute.xlu0 %999
    %v1002 = vsel %vm719, %v998, 0
    %v1005 = vsel %vm719, %v1000, 0
    %1007 = vmatprep.subr.bf16.mxu0 0
    %1008 = vmatpush1.bf16.xpose.msra.mxu0 %v1005
    %1009 = vmatprep.subr.bf16.mxu0 0
    %1010 = vmatpush1.bf16.xpose.msra.mxu0 0
    %1011 = vmatprep.subr.bf16.mxu0 0
    %1012 = vmatpush1.bf16.xpose.msra.mxu0 0
    %1013 = vmatprep.subr.bf16.mxu0 0
    %1014 = vmatpush1.bf16.xpose.msra.mxu0 0
    %1015 = vmatprep.subr.bf16.mxu0 0
    %1016 = vmatpush1.bf16.xpose.msra.mxu0 0
    %1017 = vmatprep.subr.bf16.mxu0 0
    %1018 = vmatpush1.bf16.xpose.msra.mxu0 0
    %1019 = vmatprep.subr.bf16.mxu0 0
    %1020 = vmatpush1.bf16.xpose.msra.mxu0 0
    %1021 = vmatprep.subr.bf16.mxu0 0
    %1022 = vmatpush1.bf16.xpose.msra.mxu0 0
    %1023 = vmatprep.subr.bf16.mxu0 0
    %1024 = vmatpush1.bf16.xpose.msra.mxu0 0
    %1025 = vmatprep.subr.bf16.mxu0 0
    %1026 = vmatpush1.bf16.xpose.msra.mxu0 0
    %1027 = vmatprep.subr.bf16.mxu0 0
    %1028 = vmatpush1.bf16.xpose.msra.mxu0 0
    %1029 = vmatprep.subr.bf16.mxu0 0
    %1030 = vmatpush1.bf16.xpose.msra.mxu0 0
    %1031 = vmatprep.subr.bf16.mxu0 0
    %1032 = vmatpush1.bf16.xpose.msra.mxu0 0
    %1033 = vmatprep.subr.bf16.mxu0 0
    %1034 = vmatpush1.bf16.xpose.msra.mxu0 0
    %1035 = vmatprep.subr.bf16.mxu0 0
    %1036 = vmatpush1.bf16.xpose.msra.mxu0 0
    %1037 = vmatprep.subr.bf16.mxu0 0
    %1038 = vmatpush1.bf16.xpose.msra.mxu0 0
    %1039 = vmatprep.mubr.bf16.mxu0 0
    %1040 = vmatmul.mubr.bf16.gmra.mrb[0].mxu0 %v1002
    %v1041 = vpop.f32.mrb[0].mxu0
    %v1042 = vadd.f32 0.0, %v1041
    %v1043 = vpop.f32.mrb[0].mxu0
    %v1044 = vpop.f32.mrb[0].mxu0
    %v1045 = vpop.f32.mrb[0].mxu0
    %1046 = vdwg.mxu0
    %v1047 = vmul.f32 %v991, 0.35355338
    %v1048 = vmul.f32 %v1042, 0.35355338
    %v1049 = vadd.f32 %v1047, %v338
    %v1050 = vadd.f32 %v1048, %v342
    %v1051 = vsel %vm816, %v1049, -inf
    %1052 = vmax.xlane.f32.xlu0 %v1051
    %v1053 = vpop.xlane.xlu0 %1052
    %v1054 = vsel %vm816, %v1050, -inf
    %1055 = vmax.xlane.f32.xlu0 %v1054
    %v1056 = vpop.xlane.xlu0 %1055
    %v1057 = vsub.f32 %v1049, %v1053
    %v1058 = vsub.f32 %v1050, %v1056
    %v1059 = vmul.f32 %v1057, 1.442695
    %v1060 = vpow.pop %v1059
    %v1061 = vmul.f32 %v1058, 1.442695
    %v1062 = vpow.pop %v1061
    %v1063 = vsel %vm816, %v1060, 0.0
    %1064 = vadd.xlane.f32.xlu0 %v1063
    %v1065 = vpop.xlane.xlu0 %1064
    %v1066 = vsel %vm816, %v1062, 0.0
    %1067 = vadd.xlane.f32.xlu0 %v1066
    %v1068 = vpop.xlane.xlu0 %1067
    %v1069 = vrcp.pop %v1065
    %v1070 = vrcp.pop %v1068
    %v1071 = vmul.f32 %v1060, %v1069
    %v1072 = vmul.f32 %v1062, %v1070
    %v1073 = vpack.c.bf16 %v1071, %v1071
    %v1074 = vpack.c.bf16 %v1072, %v1072
    %1075 = vrot.lane.b32.xlu0 %v717, 88
    %v1076 = vpop.permute.xlu0 %1075
    %v1078 = vsel %vm816, %v1073, 0
    %v1081 = vand.u32 %v1076, %v850
    %1083 = vmatprep.subr.bf16.mxu0 0
    %1084 = vmatpush1.bf16.msra.mxu0 %v1081
    %1085 = vmatprep.subr.bf16.mxu0 0
    %1086 = vmatpush1.bf16.msra.mxu0 0
    %1087 = vmatprep.subr.bf16.mxu0 0
    %1088 = vmatpush1.bf16.msra.mxu0 0
    %1089 = vmatprep.subr.bf16.mxu0 0
    %1090 = vmatpush1.bf16.msra.mxu0 0
    %1091 = vmatprep.subr.bf16.mxu0 0
    %1092 = vmatpush1.bf16.msra.mxu0 0
    %1093 = vmatprep.subr.bf16.mxu0 0
    %1094 = vmatpush1.bf16.msra.mxu0 0
    %1095 = vmatprep.subr.bf16.mxu0 0
    %1096 = vmatpush1.bf16.msra.mxu0 0
    %1097 = vmatprep.subr.bf16.mxu0 0
    %1098 = vmatpush1.bf16.msra.mxu0 0
    %1099 = vmatprep.subr.bf16.mxu0 0
    %1100 = vmatpush1.bf16.msra.mxu0 0
    %1101 = vmatprep.subr.bf16.mxu0 0
    %1102 = vmatpush1.bf16.msra.mxu0 0
    %1103 = vmatprep.subr.bf16.mxu0 0
    %1104 = vmatpush1.bf16.msra.mxu0 0
    %1105 = vmatprep.subr.bf16.mxu0 0
    %1106 = vmatpush1.bf16.msra.mxu0 0
    %1107 = vmatprep.subr.bf16.mxu0 0
    %1108 = vmatpush1.bf16.msra.mxu0 0
    %1109 = vmatprep.subr.bf16.mxu0 0
    %1110 = vmatpush1.bf16.msra.mxu0 0
    %1111 = vmatprep.subr.bf16.mxu0 0
    %1112 = vmatpush1.bf16.msra.mxu0 0
    %1113 = vmatprep.subr.bf16.mxu0 0
    %1114 = vmatpush1.bf16.msra.mxu0 0
    %1115 = vmatprep.mubr.bf16.mxu0 0
    %1116 = vmatmul.mubr.bf16.gmra.mrb[0].mxu0 %v1078
    %v1117 = vpop.f32.mrb[0].mxu0
    %v1118 = vadd.f32 0.0, %v1117
    %v1119 = vpop.f32.mrb[0].mxu0
    %v1120 = vpop.f32.mrb[0].mxu0
    %v1121 = vpop.f32.mrb[0].mxu0
    %1122 = vdwg.mxu0
    %1123 = vrot.lane.b32.xlu0 %v718, 88
    %v1124 = vpop.permute.xlu0 %1123
    %v1126 = vsel %vm816, %v1074, 0
    %v1129 = vand.u32 %v1124, %v850
    %1131 = vmatprep.subr.bf16.mxu0 0
    %1132 = vmatpush1.bf16.msra.mxu0 %v1129
    %1133 = vmatprep.subr.bf16.mxu0 0
    %1134 = vmatpush1.bf16.msra.mxu0 0
    %1135 = vmatprep.subr.bf16.mxu0 0
    %1136 = vmatpush1.bf16.msra.mxu0 0
    %1137 = vmatprep.subr.bf16.mxu0 0
    %1138 = vmatpush1.bf16.msra.mxu0 0
    %1139 = vmatprep.subr.bf16.mxu0 0
    %1140 = vmatpush1.bf16.msra.mxu0 0
    %1141 = vmatprep.subr.bf16.mxu0 0
    %1142 = vmatpush1.bf16.msra.mxu0 0
    %1143 = vmatprep.subr.bf16.mxu0 0
    %1144 = vmatpush1.bf16.msra.mxu0 0
    %1145 = vmatprep.subr.bf16.mxu0 0
    %1146 = vmatpush1.bf16.msra.mxu0 0
    %1147 = vmatprep.subr.bf16.mxu0 0
    %1148 = vmatpush1.bf16.msra.mxu0 0
    %1149 = vmatprep.subr.bf16.mxu0 0
    %1150 = vmatpush1.bf16.msra.mxu0 0
    %1151 = vmatprep.subr.bf16.mxu0 0
    %1152 = vmatpush1.bf16.msra.mxu0 0
    %1153 = vmatprep.subr.bf16.mxu0 0
    %1154 = vmatpush1.bf16.msra.mxu0 0
    %1155 = vmatprep.subr.bf16.mxu0 0
    %1156 = vmatpush1.bf16.msra.mxu0 0
    %1157 = vmatprep.subr.bf16.mxu0 0
    %1158 = vmatpush1.bf16.msra.mxu0 0
    %1159 = vmatprep.subr.bf16.mxu0 0
    %1160 = vmatpush1.bf16.msra.mxu0 0
    %1161 = vmatprep.subr.bf16.mxu0 0
    %1162 = vmatpush1.bf16.msra.mxu0 0
    %1163 = vmatprep.mubr.bf16.mxu0 0
    %1164 = vmatmul.mubr.bf16.gmra.mrb[0].mxu0 %v1126
    %v1165 = vpop.f32.mrb[0].mxu0
    %v1166 = vadd.f32 0.0, %v1165
    %v1167 = vpop.f32.mrb[0].mxu0
    %v1168 = vpop.f32.mrb[0].mxu0
    %v1169 = vpop.f32.mrb[0].mxu0
    %1170 = vdwg.mxu0
    %v1171 = vpack.c.bf16 %v1166, %v1118
    %s1172 = scalar_lea.vmem [#allocation16], 4
    %v1173 = vld [vmem:[%s1172] sm:$0xf]
    %v1175 = vsel %vm719, %v1171, 0
    %vm1177 = vcmask 1043456
    %v1179 = vsel %vm1177, %v1173, 0
    %1181 = vmatprep.subr.bf16.mxu0 0
    %1182 = vmatpush1.bf16.msra.mxu0 %v1179
    %1183 = vmatprep.subr.bf16.mxu0 0
    %1184 = vmatpush1.bf16.msra.mxu0 0
    %1185 = vmatprep.subr.bf16.mxu0 0
    %1186 = vmatpush1.bf16.msra.mxu0 0
    %1187 = vmatprep.subr.bf16.mxu0 0
    %1188 = vmatpush1.bf16.msra.mxu0 0
    %1189 = vmatprep.subr.bf16.mxu0 0
    %1190 = vmatpush1.bf16.msra.mxu0 0
    %1191 = vmatprep.subr.bf16.mxu0 0
    %1192 = vmatpush1.bf16.msra.mxu0 0
    %1193 = vmatprep.subr.bf16.mxu0 0
    %1194 = vmatpush1.bf16.msra.mxu0 0
    %1195 = vmatprep.subr.bf16.mxu0 0
    %1196 = vmatpush1.bf16.msra.mxu0 0
    %1197 = vmatprep.subr.bf16.mxu0 0
    %1198 = vmatpush1.bf16.msra.mxu0 0
    %1199 = vmatprep.subr.bf16.mxu0 0
    %1200 = vmatpush1.bf16.msra.mxu0 0
    %1201 = vmatprep.subr.bf16.mxu0 0
    %1202 = vmatpush1.bf16.msra.mxu0 0
    %1203 = vmatprep.subr.bf16.mxu0 0
    %1204 = vmatpush1.bf16.msra.mxu0 0
    %1205 = vmatprep.subr.bf16.mxu0 0
    %1206 = vmatpush1.bf16.msra.mxu0 0
    %1207 = vmatprep.subr.bf16.mxu0 0
    %1208 = vmatpush1.bf16.msra.mxu0 0
    %1209 = vmatprep.subr.bf16.mxu0 0
    %1210 = vmatpush1.bf16.msra.mxu0 0
    %1211 = vmatprep.subr.bf16.mxu0 0
    %1212 = vmatpush1.bf16.msra.mxu0 0
    %1213 = vmatprep.mubr.bf16.mxu0 0
    %1214 = vmatmul.mubr.bf16.gmra.mrb[0].mxu0 %v1175
    %v1215 = vpop.f32.mrb[0].mxu0
    %v1216 = vadd.f32 0.0, %v1215
    %v1217 = vpop.f32.mrb[0].mxu0
    %v1218 = vpop.f32.mrb[0].mxu0
    %v1219 = vadd.f32 0.0, %v1218
    %v1220 = vpop.f32.mrb[0].mxu0
    %1221 = vdwg.mxu0
    %v1223 = vsel %vm719, %v943, 0
    %v1226 = vsel %vm1177, %v944, 0
    %1228 = vmatprep.subr.bf16.mxu0 0
    %1229 = vmatpush1.bf16.msra.mxu0 %v1226
    %1230 = vmatprep.subr.bf16.mxu0 0
    %1231 = vmatpush1.bf16.msra.mxu0 0
    %1232 = vmatprep.subr.bf16.mxu0 0
    %1233 = vmatpush1.bf16.msra.mxu0 0
    %1234 = vmatprep.subr.bf16.mxu0 0
    %1235 = vmatpush1.bf16.msra.mxu0 0
    %1236 = vmatprep.subr.bf16.mxu0 0
    %1237 = vmatpush1.bf16.msra.mxu0 0
    %1238 = vmatprep.subr.bf16.mxu0 0
    %1239 = vmatpush1.bf16.msra.mxu0 0
    %1240 = vmatprep.subr.bf16.mxu0 0
    %1241 = vmatpush1.bf16.msra.mxu0 0
    %1242 = vmatprep.subr.bf16.mxu0 0
    %1243 = vmatpush1.bf16.msra.mxu0 0
    %1244 = vmatprep.subr.bf16.mxu0 0
    %1245 = vmatpush1.bf16.msra.mxu0 0
    %1246 = vmatprep.subr.bf16.mxu0 0
    %1247 = vmatpush1.bf16.msra.mxu0 0
    %1248 = vmatprep.subr.bf16.mxu0 0
    %1249 = vmatpush1.bf16.msra.mxu0 0
    %1250 = vmatprep.subr.bf16.mxu0 0
    %1251 = vmatpush1.bf16.msra.mxu0 0
    %1252 = vmatprep.subr.bf16.mxu0 0
    %1253 = vmatpush1.bf16.msra.mxu0 0
    %1254 = vmatprep.subr.bf16.mxu0 0
    %1255 = vmatpush1.bf16.msra.mxu0 0
    %1256 = vmatprep.subr.bf16.mxu0 0
    %1257 = vmatpush1.bf16.msra.mxu0 0
    %1258 = vmatprep.subr.bf16.mxu0 0
    %1259 = vmatpush1.bf16.msra.mxu0 0
    %1260 = vmatprep.mubr.bf16.mxu0 0
    %1261 = vmatmul.mubr.bf16.gmra.mrb[0].mxu0 %v1223
    %v1262 = vpop.f32.mrb[0].mxu0
    %v1263 = vadd.f32 %v1216, %v1262
    %v1264 = vpop.f32.mrb[0].mxu0
    %v1265 = vpop.f32.mrb[0].mxu0
    %v1266 = vadd.f32 %v1219, %v1265
    %v1267 = vpop.f32.mrb[0].mxu0
    %1268 = vdwg.mxu0
    %1269 = vrot.lane.b32.xlu0 %v635, 112
    %v1270 = vpop.permute.xlu0 %1269
    %1271 = vrot.lane.b32.xlu0 %v717, 112
    %v1272 = vpop.permute.xlu0 %1271
    %v1274 = vsel %vm719, %v1270, 0
    %v1277 = vsel %vm719, %v1272, 0
    %1279 = vmatprep.subr.bf16.mxu0 0
    %1280 = vmatpush1.bf16.xpose.msra.mxu0 %v1277
    %1281 = vmatprep.subr.bf16.mxu0 0
    %1282 = vmatpush1.bf16.xpose.msra.mxu0 0
    %1283 = vmatprep.subr.bf16.mxu0 0
    %1284 = vmatpush1.bf16.xpose.msra.mxu0 0
    %1285 = vmatprep.subr.bf16.mxu0 0
    %1286 = vmatpush1.bf16.xpose.msra.mxu0 0
    %1287 = vmatprep.subr.bf16.mxu0 0
    %1288 = vmatpush1.bf16.xpose.msra.mxu0 0
    %1289 = vmatprep.subr.bf16.mxu0 0
    %1290 = vmatpush1.bf16.xpose.msra.mxu0 0
    %1291 = vmatprep.subr.bf16.mxu0 0
    %1292 = vmatpush1.bf16.xpose.msra.mxu0 0
    %1293 = vmatprep.subr.bf16.mxu0 0
    %1294 = vmatpush1.bf16.xpose.msra.mxu0 0
    %1295 = vmatprep.subr.bf16.mxu0 0
    %1296 = vmatpush1.bf16.xpose.msra.mxu0 0
    %1297 = vmatprep.subr.bf16.mxu0 0
    %1298 = vmatpush1.bf16.xpose.msra.mxu0 0
    %1299 = vmatprep.subr.bf16.mxu0 0
    %1300 = vmatpush1.bf16.xpose.msra.mxu0 0
    %1301 = vmatprep.subr.bf16.mxu0 0
    %1302 = vmatpush1.bf16.xpose.msra.mxu0 0
    %1303 = vmatprep.subr.bf16.mxu0 0
    %1304 = vmatpush1.bf16.xpose.msra.mxu0 0
    %1305 = vmatprep.subr.bf16.mxu0 0
    %1306 = vmatpush1.bf16.xpose.msra.mxu0 0
    %1307 = vmatprep.subr.bf16.mxu0 0
    %1308 = vmatpush1.bf16.xpose.msra.mxu0 0
    %1309 = vmatprep.subr.bf16.mxu0 0
    %1310 = vmatpush1.bf16.xpose.msra.mxu0 0
    %1311 = vmatprep.mubr.bf16.mxu0 0
    %1312 = vmatmul.mubr.bf16.gmra.mrb[0].mxu0 %v1274
    %v1313 = vpop.f32.mrb[0].mxu0
    %v1314 = vadd.f32 0.0, %v1313
    %v1315 = vpop.f32.mrb[0].mxu0
    %v1316 = vpop.f32.mrb[0].mxu0
    %v1317 = vpop.f32.mrb[0].mxu0
    %1318 = vdwg.mxu0
    %1319 = vrot.lane.b32.xlu0 %v636, 112
    %v1320 = vpop.permute.xlu0 %1319
    %1321 = vrot.lane.b32.xlu0 %v718, 112
    %v1322 = vpop.permute.xlu0 %1321
    %v1324 = vsel %vm719, %v1320, 0
    %v1327 = vsel %vm719, %v1322, 0
    %1329 = vmatprep.subr.bf16.mxu0 0
    %1330 = vmatpush1.bf16.xpose.msra.mxu0 %v1327
    %1331 = vmatprep.subr.bf16.mxu0 0
    %1332 = vmatpush1.bf16.xpose.msra.mxu0 0
    %1333 = vmatprep.subr.bf16.mxu0 0
    %1334 = vmatpush1.bf16.xpose.msra.mxu0 0
    %1335 = vmatprep.subr.bf16.mxu0 0
    %1336 = vmatpush1.bf16.xpose.msra.mxu0 0
    %1337 = vmatprep.subr.bf16.mxu0 0
    %1338 = vmatpush1.bf16.xpose.msra.mxu0 0
    %1339 = vmatprep.subr.bf16.mxu0 0
    %1340 = vmatpush1.bf16.xpose.msra.mxu0 0
    %1341 = vmatprep.subr.bf16.mxu0 0
    %1342 = vmatpush1.bf16.xpose.msra.mxu0 0
    %1343 = vmatprep.subr.bf16.mxu0 0
    %1344 = vmatpush1.bf16.xpose.msra.mxu0 0
    %1345 = vmatprep.subr.bf16.mxu0 0
    %1346 = vmatpush1.bf16.xpose.msra.mxu0 0
    %1347 = vmatprep.subr.bf16.mxu0 0
    %1348 = vmatpush1.bf16.xpose.msra.mxu0 0
    %1349 = vmatprep.subr.bf16.mxu0 0
    %1350 = vmatpush1.bf16.xpose.msra.mxu0 0
    %1351 = vmatprep.subr.bf16.mxu0 0
    %1352 = vmatpush1.bf16.xpose.msra.mxu0 0
    %1353 = vmatprep.subr.bf16.mxu0 0
    %1354 = vmatpush1.bf16.xpose.msra.mxu0 0
    %1355 = vmatprep.subr.bf16.mxu0 0
    %1356 = vmatpush1.bf16.xpose.msra.mxu0 0
    %1357 = vmatprep.subr.bf16.mxu0 0
    %1358 = vmatpush1.bf16.xpose.msra.mxu0 0
    %1359 = vmatprep.subr.bf16.mxu0 0
    %1360 = vmatpush1.bf16.xpose.msra.mxu0 0
    %1361 = vmatprep.mubr.bf16.mxu0 0
    %1362 = vmatmul.mubr.bf16.gmra.mrb[0].mxu0 %v1324
    %v1363 = vpop.f32.mrb[0].mxu0
    %v1364 = vadd.f32 0.0, %v1363
    %v1365 = vpop.f32.mrb[0].mxu0
    %v1366 = vpop.f32.mrb[0].mxu0
    %v1367 = vpop.f32.mrb[0].mxu0
    %1368 = vdwg.mxu0
    %v1369 = vmul.f32 %v1314, 0.35355338
    %v1370 = vmul.f32 %v1364, 0.35355338
    %v1371 = vadd.f32 %v1369, %v338
    %v1372 = vadd.f32 %v1370, %v342
    %v1373 = vsel %vm816, %v1371, -inf
    %1374 = vmax.xlane.f32.xlu0 %v1373
    %v1375 = vpop.xlane.xlu0 %1374
    %v1376 = vsel %vm816, %v1372, -inf
    %1377 = vmax.xlane.f32.xlu0 %v1376
    %v1378 = vpop.xlane.xlu0 %1377
    %v1379 = vsub.f32 %v1371, %v1375
    %v1380 = vsub.f32 %v1372, %v1378
    %v1381 = vmul.f32 %v1379, 1.442695
    %v1382 = vpow.pop %v1381
    %v1383 = vmul.f32 %v1380, 1.442695
    %v1384 = vpow.pop %v1383
    %v1385 = vsel %vm816, %v1382, 0.0
    %1386 = vadd.xlane.f32.xlu0 %v1385
    %v1387 = vpop.xlane.xlu0 %1386
    %v1388 = vsel %vm816, %v1384, 0.0
    %1389 = vadd.xlane.f32.xlu0 %v1388
    %v1390 = vpop.xlane.xlu0 %1389
    %v1391 = vrcp.pop %v1387
    %v1392 = vrcp.pop %v1390
    %v1393 = vmul.f32 %v1382, %v1391
    %v1394 = vmul.f32 %v1384, %v1392
    %v1395 = vpack.c.bf16 %v1393, %v1393
    %v1396 = vpack.c.bf16 %v1394, %v1394
    %1397 = vrot.lane.b32.xlu0 %v717, 80
    %v1398 = vpop.permute.xlu0 %1397
    %v1400 = vsel %vm816, %v1395, 0
    %v1403 = vand.u32 %v1398, %v850
    %1405 = vmatprep.subr.bf16.mxu0 0
    %1406 = vmatpush1.bf16.msra.mxu0 %v1403
    %1407 = vmatprep.subr.bf16.mxu0 0
    %1408 = vmatpush1.bf16.msra.mxu0 0
    %1409 = vmatprep.subr.bf16.mxu0 0
    %1410 = vmatpush1.bf16.msra.mxu0 0
    %1411 = vmatprep.subr.bf16.mxu0 0
    %1412 = vmatpush1.bf16.msra.mxu0 0
    %1413 = vmatprep.subr.bf16.mxu0 0
    %1414 = vmatpush1.bf16.msra.mxu0 0
    %1415 = vmatprep.subr.bf16.mxu0 0
    %1416 = vmatpush1.bf16.msra.mxu0 0
    %1417 = vmatprep.subr.bf16.mxu0 0
    %1418 = vmatpush1.bf16.msra.mxu0 0
    %1419 = vmatprep.subr.bf16.mxu0 0
    %1420 = vmatpush1.bf16.msra.mxu0 0
    %1421 = vmatprep.subr.bf16.mxu0 0
    %1422 = vmatpush1.bf16.msra.mxu0 0
    %1423 = vmatprep.subr.bf16.mxu0 0
    %1424 = vmatpush1.bf16.msra.mxu0 0
    %1425 = vmatprep.subr.bf16.mxu0 0
    %1426 = vmatpush1.bf16.msra.mxu0 0
    %1427 = vmatprep.subr.bf16.mxu0 0
    %1428 = vmatpush1.bf16.msra.mxu0 0
    %1429 = vmatprep.subr.bf16.mxu0 0
    %1430 = vmatpush1.bf16.msra.mxu0 0
    %1431 = vmatprep.subr.bf16.mxu0 0
    %1432 = vmatpush1.bf16.msra.mxu0 0
    %1433 = vmatprep.subr.bf16.mxu0 0
    %1434 = vmatpush1.bf16.msra.mxu0 0
    %1435 = vmatprep.subr.bf16.mxu0 0
    %1436 = vmatpush1.bf16.msra.mxu0 0
    %1437 = vmatprep.mubr.bf16.mxu0 0
    %1438 = vmatmul.mubr.bf16.gmra.mrb[0].mxu0 %v1400
    %v1439 = vpop.f32.mrb[0].mxu0
    %v1440 = vadd.f32 0.0, %v1439
    %v1441 = vpop.f32.mrb[0].mxu0
    %v1442 = vpop.f32.mrb[0].mxu0
    %v1443 = vpop.f32.mrb[0].mxu0
    %1444 = vdwg.mxu0
    %1445 = vrot.lane.b32.xlu0 %v718, 80
    %v1446 = vpop.permute.xlu0 %1445
    %v1448 = vsel %vm816, %v1396, 0
    %v1451 = vand.u32 %v1446, %v850
    %1453 = vmatprep.subr.bf16.mxu0 0
    %1454 = vmatpush1.bf16.msra.mxu0 %v1451
    %1455 = vmatprep.subr.bf16.mxu0 0
    %1456 = vmatpush1.bf16.msra.mxu0 0
    %1457 = vmatprep.subr.bf16.mxu0 0
    %1458 = vmatpush1.bf16.msra.mxu0 0
    %1459 = vmatprep.subr.bf16.mxu0 0
    %1460 = vmatpush1.bf16.msra.mxu0 0
    %1461 = vmatprep.subr.bf16.mxu0 0
    %1462 = vmatpush1.bf16.msra.mxu0 0
    %1463 = vmatprep.subr.bf16.mxu0 0
    %1464 = vmatpush1.bf16.msra.mxu0 0
    %1465 = vmatprep.subr.bf16.mxu0 0
    %1466 = vmatpush1.bf16.msra.mxu0 0
    %1467 = vmatprep.subr.bf16.mxu0 0
    %1468 = vmatpush1.bf16.msra.mxu0 0
    %1469 = vmatprep.subr.bf16.mxu0 0
    %1470 = vmatpush1.bf16.msra.mxu0 0
    %1471 = vmatprep.subr.bf16.mxu0 0
    %1472 = vmatpush1.bf16.msra.mxu0 0
    %1473 = vmatprep.subr.bf16.mxu0 0
    %1474 = vmatpush1.bf16.msra.mxu0 0
    %1475 = vmatprep.subr.bf16.mxu0 0
    %1476 = vmatpush1.bf16.msra.mxu0 0
    %1477 = vmatprep.subr.bf16.mxu0 0
    %1478 = vmatpush1.bf16.msra.mxu0 0
    %1479 = vmatprep.subr.bf16.mxu0 0
    %1480 = vmatpush1.bf16.msra.mxu0 0
    %1481 = vmatprep.subr.bf16.mxu0 0
    %1482 = vmatpush1.bf16.msra.mxu0 0
    %1483 = vmatprep.subr.bf16.mxu0 0
    %1484 = vmatpush1.bf16.msra.mxu0 0
    %1485 = vmatprep.mubr.bf16.mxu0 0
    %1486 = vmatmul.mubr.bf16.gmra.mrb[0].mxu0 %v1448
    %v1487 = vpop.f32.mrb[0].mxu0
    %v1488 = vadd.f32 0.0, %v1487
    %v1489 = vpop.f32.mrb[0].mxu0
    %v1490 = vpop.f32.mrb[0].mxu0
    %v1491 = vpop.f32.mrb[0].mxu0
    %1492 = vdwg.mxu0
    %v1493 = vpack.c.bf16 %v1488, %v1440
    %s1494 = scalar_lea.vmem [#allocation16], 8
    %v1495 = vld [vmem:[%s1494] sm:$0xf]
    %v1497 = vsel %vm719, %v1493, 0
    %v1500 = vsel %vm1177, %v1495, 0
    %1502 = vmatprep.subr.bf16.mxu0 0
    %1503 = vmatpush1.bf16.msra.mxu0 %v1500
    %1504 = vmatprep.subr.bf16.mxu0 0
    %1505 = vmatpush1.bf16.msra.mxu0 0
    %1506 = vmatprep.subr.bf16.mxu0 0
    %1507 = vmatpush1.bf16.msra.mxu0 0
    %1508 = vmatprep.subr.bf16.mxu0 0
    %1509 = vmatpush1.bf16.msra.mxu0 0
    %1510 = vmatprep.subr.bf16.mxu0 0
    %1511 = vmatpush1.bf16.msra.mxu0 0
    %1512 = vmatprep.subr.bf16.mxu0 0
    %1513 = vmatpush1.bf16.msra.mxu0 0
    %1514 = vmatprep.subr.bf16.mxu0 0
    %1515 = vmatpush1.bf16.msra.mxu0 0
    %1516 = vmatprep.subr.bf16.mxu0 0
    %1517 = vmatpush1.bf16.msra.mxu0 0
    %1518 = vmatprep.subr.bf16.mxu0 0
    %1519 = vmatpush1.bf16.msra.mxu0 0
    %1520 = vmatprep.subr.bf16.mxu0 0
    %1521 = vmatpush1.bf16.msra.mxu0 0
    %1522 = vmatprep.subr.bf16.mxu0 0
    %1523 = vmatpush1.bf16.msra.mxu0 0
    %1524 = vmatprep.subr.bf16.mxu0 0
    %1525 = vmatpush1.bf16.msra.mxu0 0
    %1526 = vmatprep.subr.bf16.mxu0 0
    %1527 = vmatpush1.bf16.msra.mxu0 0
    %1528 = vmatprep.subr.bf16.mxu0 0
    %1529 = vmatpush1.bf16.msra.mxu0 0
    %1530 = vmatprep.subr.bf16.mxu0 0
    %1531 = vmatpush1.bf16.msra.mxu0 0
    %1532 = vmatprep.subr.bf16.mxu0 0
    %1533 = vmatpush1.bf16.msra.mxu0 0
    %1534 = vmatprep.mubr.bf16.mxu0 0
    %1535 = vmatmul.mubr.bf16.gmra.mrb[0].mxu0 %v1497
    %v1536 = vpop.f32.mrb[0].mxu0
    %v1537 = vadd.f32 0.0, %v1536
    %v1538 = vpop.f32.mrb[0].mxu0
    %v1539 = vpop.f32.mrb[0].mxu0
    %v1540 = vadd.f32 0.0, %v1539
    %v1541 = vpop.f32.mrb[0].mxu0
    %1542 = vdwg.mxu0
    %v1543 = vadd.f32 %v1263, %v1537
    %v1544 = vadd.f32 %v1266, %v1540
    %1545 = vrot.lane.b32.xlu0 %v635, 104
    %v1546 = vpop.permute.xlu0 %1545
    %1547 = vrot.lane.b32.xlu0 %v717, 104
    %v1548 = vpop.permute.xlu0 %1547
    %v1550 = vsel %vm719, %v1546, 0
    %v1553 = vsel %vm719, %v1548, 0
    %1555 = vmatprep.subr.bf16.mxu0 0
    %1556 = vmatpush1.bf16.xpose.msra.mxu0 %v1553
    %1557 = vmatprep.subr.bf16.mxu0 0
    %1558 = vmatpush1.bf16.xpose.msra.mxu0 0
    %1559 = vmatprep.subr.bf16.mxu0 0
    %1560 = vmatpush1.bf16.xpose.msra.mxu0 0
    %1561 = vmatprep.subr.bf16.mxu0 0
    %1562 = vmatpush1.bf16.xpose.msra.mxu0 0
    %1563 = vmatprep.subr.bf16.mxu0 0
    %1564 = vmatpush1.bf16.xpose.msra.mxu0 0
    %1565 = vmatprep.subr.bf16.mxu0 0
    %1566 = vmatpush1.bf16.xpose.msra.mxu0 0
    %1567 = vmatprep.subr.bf16.mxu0 0
    %1568 = vmatpush1.bf16.xpose.msra.mxu0 0
    %1569 = vmatprep.subr.bf16.mxu0 0
    %1570 = vmatpush1.bf16.xpose.msra.mxu0 0
    %1571 = vmatprep.subr.bf16.mxu0 0
    %1572 = vmatpush1.bf16.xpose.msra.mxu0 0
    %1573 = vmatprep.subr.bf16.mxu0 0
    %1574 = vmatpush1.bf16.xpose.msra.mxu0 0
    %1575 = vmatprep.subr.bf16.mxu0 0
    %1576 = vmatpush1.bf16.xpose.msra.mxu0 0
    %1577 = vmatprep.subr.bf16.mxu0 0
    %1578 = vmatpush1.bf16.xpose.msra.mxu0 0
    %1579 = vmatprep.subr.bf16.mxu0 0
    %1580 = vmatpush1.bf16.xpose.msra.mxu0 0
    %1581 = vmatprep.subr.bf16.mxu0 0
    %1582 = vmatpush1.bf16.xpose.msra.mxu0 0
    %1583 = vmatprep.subr.bf16.mxu0 0
    %1584 = vmatpush1.bf16.xpose.msra.mxu0 0
    %1585 = vmatprep.subr.bf16.mxu0 0
    %1586 = vmatpush1.bf16.xpose.msra.mxu0 0
    %1587 = vmatprep.mubr.bf16.mxu0 0
    %1588 = vmatmul.mubr.bf16.gmra.mrb[0].mxu0 %v1550
    %v1589 = vpop.f32.mrb[0].mxu0
    %v1590 = vadd.f32 0.0, %v1589
    %v1591 = vpop.f32.mrb[0].mxu0
    %v1592 = vpop.f32.mrb[0].mxu0
    %v1593 = vpop.f32.mrb[0].mxu0
    %1594 = vdwg.mxu0
    %1595 = vrot.lane.b32.xlu0 %v636, 104
    %v1596 = vpop.permute.xlu0 %1595
    %1597 = vrot.lane.b32.xlu0 %v718, 104
    %v1598 = vpop.permute.xlu0 %1597
    %v1600 = vsel %vm719, %v1596, 0
    %v1603 = vsel %vm719, %v1598, 0
    %1605 = vmatprep.subr.bf16.mxu0 0
    %1606 = vmatpush1.bf16.xpose.msra.mxu0 %v1603
    %1607 = vmatprep.subr.bf16.mxu0 0
    %1608 = vmatpush1.bf16.xpose.msra.mxu0 0
    %1609 = vmatprep.subr.bf16.mxu0 0
    %1610 = vmatpush1.bf16.xpose.msra.mxu0 0
    %1611 = vmatprep.subr.bf16.mxu0 0
    %1612 = vmatpush1.bf16.xpose.msra.mxu0 0
    %1613 = vmatprep.subr.bf16.mxu0 0
    %1614 = vmatpush1.bf16.xpose.msra.mxu0 0
    %1615 = vmatprep.subr.bf16.mxu0 0
    %1616 = vmatpush1.bf16.xpose.msra.mxu0 0
    %1617 = vmatprep.subr.bf16.mxu0 0
    %1618 = vmatpush1.bf16.xpose.msra.mxu0 0
    %1619 = vmatprep.subr.bf16.mxu0 0
    %1620 = vmatpush1.bf16.xpose.msra.mxu0 0
    %1621 = vmatprep.subr.bf16.mxu0 0
    %1622 = vmatpush1.bf16.xpose.msra.mxu0 0
    %1623 = vmatprep.subr.bf16.mxu0 0
    %1624 = vmatpush1.bf16.xpose.msra.mxu0 0
    %1625 = vmatprep.subr.bf16.mxu0 0
    %1626 = vmatpush1.bf16.xpose.msra.mxu0 0
    %1627 = vmatprep.subr.bf16.mxu0 0
    %1628 = vmatpush1.bf16.xpose.msra.mxu0 0
    %1629 = vmatprep.subr.bf16.mxu0 0
    %1630 = vmatpush1.bf16.xpose.msra.mxu0 0
    %1631 = vmatprep.subr.bf16.mxu0 0
    %1632 = vmatpush1.bf16.xpose.msra.mxu0 0
    %1633 = vmatprep.subr.bf16.mxu0 0
    %1634 = vmatpush1.bf16.xpose.msra.mxu0 0
    %1635 = vmatprep.subr.bf16.mxu0 0
    %1636 = vmatpush1.bf16.xpose.msra.mxu0 0
    %1637 = vmatprep.mubr.bf16.mxu0 0
    %1638 = vmatmul.mubr.bf16.gmra.mrb[0].mxu0 %v1600
    %v1639 = vpop.f32.mrb[0].mxu0
    %v1640 = vadd.f32 0.0, %v1639
    %v1641 = vpop.f32.mrb[0].mxu0
    %v1642 = vpop.f32.mrb[0].mxu0
    %v1643 = vpop.f32.mrb[0].mxu0
    %1644 = vdwg.mxu0
    %v1645 = vmul.f32 %v1590, 0.35355338
    %v1646 = vmul.f32 %v1640, 0.35355338
    %v1647 = vadd.f32 %v1645, %v338
    %v1648 = vadd.f32 %v1646, %v342
    %v1649 = vsel %vm816, %v1647, -inf
    %1650 = vmax.xlane.f32.xlu0 %v1649
    %v1651 = vpop.xlane.xlu0 %1650
    %v1652 = vsel %vm816, %v1648, -inf
    %1653 = vmax.xlane.f32.xlu0 %v1652
    %v1654 = vpop.xlane.xlu0 %1653
    %v1655 = vsub.f32 %v1647, %v1651
    %v1656 = vsub.f32 %v1648, %v1654
    %v1657 = vmul.f32 %v1655, 1.442695
    %v1658 = vpow.pop %v1657
    %v1659 = vmul.f32 %v1656, 1.442695
    %v1660 = vpow.pop %v1659
    %v1661 = vsel %vm816, %v1658, 0.0
    %1662 = vadd.xlane.f32.xlu0 %v1661
    %v1663 = vpop.xlane.xlu0 %1662
    %v1664 = vsel %vm816, %v1660, 0.0
    %1665 = vadd.xlane.f32.xlu0 %v1664
    %v1666 = vpop.xlane.xlu0 %1665
    %v1667 = vrcp.pop %v1663
    %v1668 = vrcp.pop %v1666
    %v1669 = vmul.f32 %v1658, %v1667
    %v1670 = vmul.f32 %v1660, %v1668
    %v1671 = vpack.c.bf16 %v1669, %v1669
    %v1672 = vpack.c.bf16 %v1670, %v1670
    %1673 = vrot.lane.b32.xlu0 %v717, 72
    %v1674 = vpop.permute.xlu0 %1673
    %v1676 = vsel %vm816, %v1671, 0
    %v1679 = vand.u32 %v1674, %v850
    %1681 = vmatprep.subr.bf16.mxu0 0
    %1682 = vmatpush1.bf16.msra.mxu0 %v1679
    %1683 = vmatprep.subr.bf16.mxu0 0
    %1684 = vmatpush1.bf16.msra.mxu0 0
    %1685 = vmatprep.subr.bf16.mxu0 0
    %1686 = vmatpush1.bf16.msra.mxu0 0
    %1687 = vmatprep.subr.bf16.mxu0 0
    %1688 = vmatpush1.bf16.msra.mxu0 0
    %1689 = vmatprep.subr.bf16.mxu0 0
    %1690 = vmatpush1.bf16.msra.mxu0 0
    %1691 = vmatprep.subr.bf16.mxu0 0
    %1692 = vmatpush1.bf16.msra.mxu0 0
    %1693 = vmatprep.subr.bf16.mxu0 0
    %1694 = vmatpush1.bf16.msra.mxu0 0
    %1695 = vmatprep.subr.bf16.mxu0 0
    %1696 = vmatpush1.bf16.msra.mxu0 0
    %1697 = vmatprep.subr.bf16.mxu0 0
    %1698 = vmatpush1.bf16.msra.mxu0 0
    %1699 = vmatprep.subr.bf16.mxu0 0
    %1700 = vmatpush1.bf16.msra.mxu0 0
    %1701 = vmatprep.subr.bf16.mxu0 0
    %1702 = vmatpush1.bf16.msra.mxu0 0
    %1703 = vmatprep.subr.bf16.mxu0 0
    %1704 = vmatpush1.bf16.msra.mxu0 0
    %1705 = vmatprep.subr.bf16.mxu0 0
    %1706 = vmatpush1.bf16.msra.mxu0 0
    %1707 = vmatprep.subr.bf16.mxu0 0
    %1708 = vmatpush1.bf16.msra.mxu0 0
    %1709 = vmatprep.subr.bf16.mxu0 0
    %1710 = vmatpush1.bf16.msra.mxu0 0
    %1711 = vmatprep.subr.bf16.mxu0 0
    %1712 = vmatpush1.bf16.msra.mxu0 0
    %1713 = vmatprep.mubr.bf16.mxu0 0
    %1714 = vmatmul.mubr.bf16.gmra.mrb[0].mxu0 %v1676
    %v1715 = vpop.f32.mrb[0].mxu0
    %v1716 = vadd.f32 0.0, %v1715
    %v1717 = vpop.f32.mrb[0].mxu0
    %v1718 = vpop.f32.mrb[0].mxu0
    %v1719 = vpop.f32.mrb[0].mxu0
    %1720 = vdwg.mxu0
    %1721 = vrot.lane.b32.xlu0 %v718, 72
    %v1722 = vpop.permute.xlu0 %1721
    %v1724 = vsel %vm816, %v1672, 0
    %v1727 = vand.u32 %v1722, %v850
    %1729 = vmatprep.subr.bf16.mxu0 0
    %1730 = vmatpush1.bf16.msra.mxu0 %v1727
    %1731 = vmatprep.subr.bf16.mxu0 0
    %1732 = vmatpush1.bf16.msra.mxu0 0
    %1733 = vmatprep.subr.bf16.mxu0 0
    %1734 = vmatpush1.bf16.msra.mxu0 0
    %1735 = vmatprep.subr.bf16.mxu0 0
    %1736 = vmatpush1.bf16.msra.mxu0 0
    %1737 = vmatprep.subr.bf16.mxu0 0
    %1738 = vmatpush1.bf16.msra.mxu0 0
    %1739 = vmatprep.subr.bf16.mxu0 0
    %1740 = vmatpush1.bf16.msra.mxu0 0
    %1741 = vmatprep.subr.bf16.mxu0 0
    %1742 = vmatpush1.bf16.msra.mxu0 0
    %1743 = vmatprep.subr.bf16.mxu0 0
    %1744 = vmatpush1.bf16.msra.mxu0 0
    %1745 = vmatprep.subr.bf16.mxu0 0
    %1746 = vmatpush1.bf16.msra.mxu0 0
    %1747 = vmatprep.subr.bf16.mxu0 0
    %1748 = vmatpush1.bf16.msra.mxu0 0
    %1749 = vmatprep.subr.bf16.mxu0 0
    %1750 = vmatpush1.bf16.msra.mxu0 0
    %1751 = vmatprep.subr.bf16.mxu0 0
    %1752 = vmatpush1.bf16.msra.mxu0 0
    %1753 = vmatprep.subr.bf16.mxu0 0
    %1754 = vmatpush1.bf16.msra.mxu0 0
    %1755 = vmatprep.subr.bf16.mxu0 0
    %1756 = vmatpush1.bf16.msra.mxu0 0
    %1757 = vmatprep.subr.bf16.mxu0 0
    %1758 = vmatpush1.bf16.msra.mxu0 0
    %1759 = vmatprep.subr.bf16.mxu0 0
    %1760 = vmatpush1.bf16.msra.mxu0 0
    %1761 = vmatprep.mubr.bf16.mxu0 0
    %1762 = vmatmul.mubr.bf16.gmra.mrb[0].mxu0 %v1724
    %v1763 = vpop.f32.mrb[0].mxu0
    %v1764 = vadd.f32 0.0, %v1763
    %v1765 = vpop.f32.mrb[0].mxu0
    %v1766 = vpop.f32.mrb[0].mxu0
    %v1767 = vpop.f32.mrb[0].mxu0
    %1768 = vdwg.mxu0
    %v1769 = vpack.c.bf16 %v1764, %v1716
    %s1770 = scalar_lea.vmem [#allocation16], 12
    %v1771 = vld [vmem:[%s1770] sm:$0xf]
    %v1773 = vsel %vm719, %v1769, 0
    %v1776 = vsel %vm1177, %v1771, 0
    %1778 = vmatprep.subr.bf16.mxu0 0
    %1779 = vmatpush1.bf16.msra.mxu0 %v1776
    %1780 = vmatprep.subr.bf16.mxu0 0
    %1781 = vmatpush1.bf16.msra.mxu0 0
    %1782 = vmatprep.subr.bf16.mxu0 0
    %1783 = vmatpush1.bf16.msra.mxu0 0
    %1784 = vmatprep.subr.bf16.mxu0 0
    %1785 = vmatpush1.bf16.msra.mxu0 0
    %1786 = vmatprep.subr.bf16.mxu0 0
    %1787 = vmatpush1.bf16.msra.mxu0 0
    %1788 = vmatprep.subr.bf16.mxu0 0
    %1789 = vmatpush1.bf16.msra.mxu0 0
    %1790 = vmatprep.subr.bf16.mxu0 0
    %1791 = vmatpush1.bf16.msra.mxu0 0
    %1792 = vmatprep.subr.bf16.mxu0 0
    %1793 = vmatpush1.bf16.msra.mxu0 0
    %1794 = vmatprep.subr.bf16.mxu0 0
    %1795 = vmatpush1.bf16.msra.mxu0 0
    %1796 = vmatprep.subr.bf16.mxu0 0
    %1797 = vmatpush1.bf16.msra.mxu0 0
    %1798 = vmatprep.subr.bf16.mxu0 0
    %1799 = vmatpush1.bf16.msra.mxu0 0
    %1800 = vmatprep.subr.bf16.mxu0 0
    %1801 = vmatpush1.bf16.msra.mxu0 0
    %1802 = vmatprep.subr.bf16.mxu0 0
    %1803 = vmatpush1.bf16.msra.mxu0 0
    %1804 = vmatprep.subr.bf16.mxu0 0
    %1805 = vmatpush1.bf16.msra.mxu0 0
    %1806 = vmatprep.subr.bf16.mxu0 0
    %1807 = vmatpush1.bf16.msra.mxu0 0
    %1808 = vmatprep.subr.bf16.mxu0 0
    %1809 = vmatpush1.bf16.msra.mxu0 0
    %1810 = vmatprep.mubr.bf16.mxu0 0
    %1811 = vmatmul.mubr.bf16.gmra.mrb[0].mxu0 %v1773
    %v1812 = vpop.f32.mrb[0].mxu0
    %v1813 = vadd.f32 0.0, %v1812
    %v1814 = vpop.f32.mrb[0].mxu0
    %v1815 = vpop.f32.mrb[0].mxu0
    %v1816 = vadd.f32 0.0, %v1815
    %v1817 = vpop.f32.mrb[0].mxu0
    %1818 = vdwg.mxu0
    %v1819 = vadd.f32 %v1543, %v1813
    %v1820 = vadd.f32 %v1544, %v1816
    %v1822 = vlaneseq
    %v1823 = vshrl.u32 %v1822, 7
    %v1824 = vsub.s32 0, %v1823
    %v1825 = vrot.slane %v352, %v1824
    %v1827 = vadd.f32 %v1819, %v1825
    %v1828 = vadd.f32 %v1820, %v1825
    %v1829 = vld [vmem:[#allocation7] sm:$0x1f]
    %v1830 = vld [vmem:[#allocation7 + $0x8] sm:$0x1f]
    %v1831 = vld [vmem:[#allocation19] sm:$0xf]
    %v1832 = vld [vmem:[#allocation19 + $0x4] sm:$0xf]
    %v1833 = vld [vmem:[#allocation19 + $0x8] sm:$0xf]
    %v1834 = vld [vmem:[#allocation19 + $0xc] sm:$0xf]
    %v1835 = vld [vmem:[#allocation20] sm:$0x1]
    %v1836 = vld [vmem:[#allocation23] sm:$0x1]
    %v1839 = vcombine.high %v1829, %v1829
    %v1841 = vunpack.c.l.s4 1966171168
    %v1842 = vunpack.c.0.s8 %v1841
    %v1843 = vlaneseq
    %v1844 = vshrl.u32 %v1843, 7
    %v1845 = vsub.s32 %v1842, %v1844
    %v1846 = vrot.slane %v1829, %v1845
    %v1848 = vunpack.c.l.s4 1966171168
    %v1849 = vunpack.c.0.s8 %v1848
    %v1850 = vlaneseq
    %v1851 = vshrl.u32 %v1850, 7
    %v1852 = vsub.s32 %v1849, %v1851
    %v1853 = vrot.slane %v1839, %v1852
    %v1854 = vcombine.high %v1846, %v1846
    %v1856 = vunpack.c.l.s4 1966171168
    %v1857 = vunpack.c.0.s8 %v1856
    %v1858 = vlaneseq
    %v1859 = vshrl.u32 %v1858, 7
    %v1860 = vsub.s32 %v1857, %v1859
    %v1861 = vrot.slane %v1846, %v1860
    %v1863 = vunpack.c.l.s4 1966171168
    %v1864 = vunpack.c.0.s8 %v1863
    %v1865 = vlaneseq
    %v1866 = vshrl.u32 %v1865, 7
    %v1867 = vsub.s32 %v1864, %v1866
    %v1868 = vrot.slane %v1853, %v1867
    %v1870 = vunpack.c.l.s4 1966171168
    %v1871 = vunpack.c.0.s8 %v1870
    %v1872 = vlaneseq
    %v1873 = vshrl.u32 %v1872, 7
    %v1874 = vsub.s32 %v1871, %v1873
    %v1875 = vrot.slane %v1854, %v1874
    %v1876 = vcombine.high %v1861, %v1861
    %v1877 = vcombine.high %v1875, %v1875
    %v1878 = vcombine.high %v1830, %v1830
    %v1880 = vunpack.c.l.s4 1966171168
    %v1881 = vunpack.c.0.s8 %v1880
    %v1882 = vlaneseq
    %v1883 = vshrl.u32 %v1882, 7
    %v1884 = vsub.s32 %v1881, %v1883
    %v1885 = vrot.slane %v1830, %v1884
    %v1887 = vunpack.c.l.s4 1966171168
    %v1888 = vunpack.c.0.s8 %v1887
    %v1889 = vlaneseq
    %v1890 = vshrl.u32 %v1889, 7
    %v1891 = vsub.s32 %v1888, %v1890
    %v1892 = vrot.slane %v1878, %v1891
    %v1893 = vcombine.high %v1885, %v1885
    %v1895 = vunpack.c.l.s4 1966171168
    %v1896 = vunpack.c.0.s8 %v1895
    %v1897 = vlaneseq
    %v1898 = vshrl.u32 %v1897, 7
    %v1899 = vsub.s32 %v1896, %v1898
    %v1900 = vrot.slane %v1885, %v1899
    %v1902 = vunpack.c.l.s4 1966171168
    %v1903 = vunpack.c.0.s8 %v1902
    %v1904 = vlaneseq
    %v1905 = vshrl.u32 %v1904, 7
    %v1906 = vsub.s32 %v1903, %v1905
    %v1907 = vrot.slane %v1892, %v1906
    %v1909 = vunpack.c.l.s4 1966171168
    %v1910 = vunpack.c.0.s8 %v1909
    %v1911 = vlaneseq
    %v1912 = vshrl.u32 %v1911, 7
    %v1913 = vsub.s32 %v1910, %v1912
    %v1914 = vrot.slane %v1893, %v1913
    %v1915 = vcombine.high %v1900, %v1900
    %v1916 = vcombine.high %v1914, %v1914
    %v1917 = vcombine.low %v1861, %v1875
    %v1918 = vcombine.low %v1876, %v1877
    %v1919 = vcombine.low %v1868, %v1900
    %v1920 = vcombine.low %v1914, %v1915
    %v1922 = vunpack.c.l.s4 1966171168
    %v1923 = vunpack.c.0.s8 %v1922
    %v1924 = vlaneseq
    %v1925 = vshrl.u32 %v1924, 7
    %v1926 = vsub.s32 %v1923, %v1925
    %v1927 = vrot.slane %v1917, %v1926
    %v1929 = vunpack.c.l.s4 1966171168
    %v1930 = vunpack.c.0.s8 %v1929
    %v1931 = vlaneseq
    %v1932 = vshrl.u32 %v1931, 7
    %v1933 = vsub.s32 %v1930, %v1932
    %v1934 = vrot.slane %v1918, %v1933
    %v1936 = vunpack.c.l.s4 1966171168
    %v1937 = vunpack.c.0.s8 %v1936
    %v1938 = vlaneseq
    %v1939 = vshrl.u32 %v1938, 7
    %v1940 = vsub.s32 %v1937, %v1939
    %v1941 = vrot.slane %v1919, %v1940
    %v1943 = vunpack.c.l.s4 1966171168
    %v1944 = vunpack.c.0.s8 %v1943
    %v1945 = vlaneseq
    %v1946 = vshrl.u32 %v1945, 7
    %v1947 = vsub.s32 %v1944, %v1946
    %v1948 = vrot.slane %v1920, %v1947
    %v1949 = vcombine.low %v1927, %v1934
    %v1950 = vcombine.low %v1941, %v1948
    %v1952 = vunpack.c.l.s4 1966171168
    %v1953 = vunpack.c.0.s8 %v1952
    %v1954 = vlaneseq
    %v1955 = vshrl.u32 %v1954, 7
    %v1956 = vsub.s32 %v1953, %v1955
    %v1957 = vrot.slane %v1949, %v1956
    %v1959 = vunpack.c.l.s4 1966171168
    %v1960 = vunpack.c.0.s8 %v1959
    %v1961 = vlaneseq
    %v1962 = vshrl.u32 %v1961, 7
    %v1963 = vsub.s32 %v1960, %v1962
    %v1964 = vrot.slane %v1950, %v1963
    %v1965 = vcombine.low %v1957, %v1964
    %v1966 = vcombine.low %v1916, %v1907
    %v1968 = vunpack.c.l.s4 1966171168
    %v1969 = vunpack.c.0.s8 %v1968
    %v1970 = vlaneseq
    %v1971 = vshrl.u32 %v1970, 7
    %v1972 = vsub.s32 %v1969, %v1971
    %v1973 = vrot.slane %v1966, %v1972
    %v1975 = vunpack.c.l.s4 1966171168
    %v1976 = vunpack.c.0.s8 %v1975
    %v1977 = vlaneseq
    %v1978 = vshrl.u32 %v1977, 7
    %v1979 = vsub.s32 %v1976, %v1978
    %v1980 = vrot.slane %v1973, %v1979
    %v1983 = vpack.c.bf16 %v1980, %v1965
    %v1985 = vlaneseq
    %v1986 = vshrl.u32 %v1985, 7
    %v1987 = vsub.s32 0, %v1986
    %v1988 = vrot.slane %v1835, %v1987
    %v1994 = vunpack.c.l.b16 %v1831
    %v1995 = vunpack.c.l.b16 %v1832
    %v1996 = vunpack.c.l.b16 %v1833
    %v1997 = vunpack.c.l.b16 %v1834
    %v1998 = vpack.c.b16 %v1995, %v1994
    %v1999 = vpack.c.b16 %v1997, %v1996
    %v2003 = vsel %vm231, %v1983, 0
    %2005 = vmatprep.subr.bf16.mxu0 0
    %2006 = vmatpush1.bf16.msra.mxu0 %v1998
    %2007 = vmatprep.subr.bf16.mxu0 0
    %2008 = vmatpush1.bf16.msra.mxu0 %v1999
    %2009 = vmatprep.subr.bf16.mxu0 0
    %2010 = vmatpush1.bf16.msra.mxu0 0
    %2011 = vmatprep.subr.bf16.mxu0 0
    %2012 = vmatpush1.bf16.msra.mxu0 0
    %2013 = vmatprep.subr.bf16.mxu0 0
    %2014 = vmatpush1.bf16.msra.mxu0 0
    %2015 = vmatprep.subr.bf16.mxu0 0
    %2016 = vmatpush1.bf16.msra.mxu0 0
    %2017 = vmatprep.subr.bf16.mxu0 0
    %2018 = vmatpush1.bf16.msra.mxu0 0
    %2019 = vmatprep.subr.bf16.mxu0 0
    %2020 = vmatpush1.bf16.msra.mxu0 0
    %2021 = vmatprep.subr.bf16.mxu0 0
    %2022 = vmatpush1.bf16.msra.mxu0 0
    %2023 = vmatprep.subr.bf16.mxu0 0
    %2024 = vmatpush1.bf16.msra.mxu0 0
    %2025 = vmatprep.subr.bf16.mxu0 0
    %2026 = vmatpush1.bf16.msra.mxu0 0
    %2027 = vmatprep.subr.bf16.mxu0 0
    %2028 = vmatpush1.bf16.msra.mxu0 0
    %2029 = vmatprep.subr.bf16.mxu0 0
    %2030 = vmatpush1.bf16.msra.mxu0 0
    %2031 = vmatprep.subr.bf16.mxu0 0
    %2032 = vmatpush1.bf16.msra.mxu0 0
    %2033 = vmatprep.subr.bf16.mxu0 0
    %2034 = vmatpush1.bf16.msra.mxu0 0
    %2035 = vmatprep.subr.bf16.mxu0 0
    %2036 = vmatpush1.bf16.msra.mxu0 0
    %2037 = vmatprep.mubr.bf16.mxu0 0
    %2038 = vmatmul.mubr.bf16.gmra.mrb[0].mxu0 %v2003
    %v2039 = vpop.f32.mrb[0].mxu0
    %v2040 = vadd.f32 %v1988, %v2039
    %v2041 = vpop.f32.mrb[0].mxu0
    %v2042 = vpop.f32.mrb[0].mxu0
    %v2043 = vadd.f32 %v1988, %v2042
    %v2044 = vpop.f32.mrb[0].mxu0
    %2045 = vdwg.mxu0
    %v2048 = vcombine.high %v2040, %v2040
    %v2050 = vunpack.c.l.s4 1966171168
    %v2051 = vunpack.c.0.s8 %v2050
    %v2052 = vlaneseq
    %v2053 = vshrl.u32 %v2052, 7
    %v2054 = vsub.s32 %v2051, %v2053
    %v2055 = vrot.slane %v2040, %v2054
    %v2057 = vunpack.c.l.s4 1966171168
    %v2058 = vunpack.c.0.s8 %v2057
    %v2059 = vlaneseq
    %v2060 = vshrl.u32 %v2059, 7
    %v2061 = vsub.s32 %v2058, %v2060
    %v2062 = vrot.slane %v2048, %v2061
    %v2063 = vcombine.high %v2055, %v2055
    %v2064 = vcombine.high %v2062, %v2062
    %v2066 = vunpack.c.l.s4 1966171168
    %v2067 = vunpack.c.0.s8 %v2066
    %v2068 = vlaneseq
    %v2069 = vshrl.u32 %v2068, 7
    %v2070 = vsub.s32 %v2067, %v2069
    %v2071 = vrot.slane %v2055, %v2070
    %v2073 = vunpack.c.l.s4 1966171168
    %v2074 = vunpack.c.0.s8 %v2073
    %v2075 = vlaneseq
    %v2076 = vshrl.u32 %v2075, 7
    %v2077 = vsub.s32 %v2074, %v2076
    %v2078 = vrot.slane %v2062, %v2077
    %v2080 = vunpack.c.l.s4 1966171168
    %v2081 = vunpack.c.0.s8 %v2080
    %v2082 = vlaneseq
    %v2083 = vshrl.u32 %v2082, 7
    %v2084 = vsub.s32 %v2081, %v2083
    %v2085 = vrot.slane %v2063, %v2084
    %v2087 = vunpack.c.l.s4 1966171168
    %v2088 = vunpack.c.0.s8 %v2087
    %v2089 = vlaneseq
    %v2090 = vshrl.u32 %v2089, 7
    %v2091 = vsub.s32 %v2088, %v2090
    %v2092 = vrot.slane %v2064, %v2091
    %v2093 = vcombine.high %v2071, %v2071
    %v2094 = vcombine.high %v2078, %v2078
    %v2095 = vcombine.high %v2085, %v2085
    %v2096 = vcombine.high %v2092, %v2092
    %v2098 = vunpack.c.l.s4 1966171168
    %v2099 = vunpack.c.0.s8 %v2098
    %v2100 = vlaneseq
    %v2101 = vshrl.u32 %v2100, 7
    %v2102 = vsub.s32 %v2099, %v2101
    %v2103 = vrot.slane %v2043, %v2102
    %v2104 = vcombine.high %v2103, %v2103
    %v2106 = vunpack.c.l.s4 1966171168
    %v2107 = vunpack.c.0.s8 %v2106
    %v2108 = vlaneseq
    %v2109 = vshrl.u32 %v2108, 7
    %v2110 = vsub.s32 %v2107, %v2109
    %v2111 = vrot.slane %v2103, %v2110
    %v2113 = vunpack.c.l.s4 1966171168
    %v2114 = vunpack.c.0.s8 %v2113
    %v2115 = vlaneseq
    %v2116 = vshrl.u32 %v2115, 7
    %v2117 = vsub.s32 %v2114, %v2116
    %v2118 = vrot.slane %v2104, %v2117
    %v2119 = vcombine.low %v2071, %v2085
    %v2120 = vcombine.low %v2093, %v2095
    %v2122 = vunpack.c.l.s4 1966171168
    %v2123 = vunpack.c.0.s8 %v2122
    %v2124 = vlaneseq
    %v2125 = vshrl.u32 %v2124, 7
    %v2126 = vsub.s32 %v2123, %v2125
    %v2127 = vrot.slane %v2119, %v2126
    %v2129 = vunpack.c.l.s4 1966171168
    %v2130 = vunpack.c.0.s8 %v2129
    %v2131 = vlaneseq
    %v2132 = vshrl.u32 %v2131, 7
    %v2133 = vsub.s32 %v2130, %v2132
    %v2134 = vrot.slane %v2120, %v2133
    %v2136 = vunpack.c.l.s4 1966171168
    %v2137 = vunpack.c.0.s8 %v2136
    %v2138 = vlaneseq
    %v2139 = vshrl.u32 %v2138, 7
    %v2140 = vsub.s32 %v2137, %v2139
    %v2141 = vrot.slane %v2078, %v2140
    %v2142 = vcombine.low %v2127, %v2134
    %v2144 = vunpack.c.l.s4 1966171168
    %v2145 = vunpack.c.0.s8 %v2144
    %v2146 = vlaneseq
    %v2147 = vshrl.u32 %v2146, 7
    %v2148 = vsub.s32 %v2145, %v2147
    %v2149 = vrot.slane %v2142, %v2148
    %v2151 = vunpack.c.l.s4 1966171168
    %v2152 = vunpack.c.0.s8 %v2151
    %v2153 = vlaneseq
    %v2154 = vshrl.u32 %v2153, 7
    %v2155 = vsub.s32 %v2152, %v2154
    %v2156 = vrot.slane %v2141, %v2155
    %v2157 = vcombine.low %v2149, %v2156
    %v2158 = vcombine.low %v2092, %v2094
    %v2159 = vcombine.low %v2096, %v2111
    %v2161 = vunpack.c.l.s4 1966171168
    %v2162 = vunpack.c.0.s8 %v2161
    %v2163 = vlaneseq
    %v2164 = vshrl.u32 %v2163, 7
    %v2165 = vsub.s32 %v2162, %v2164
    %v2166 = vrot.slane %v2158, %v2165
    %v2168 = vunpack.c.l.s4 1966171168
    %v2169 = vunpack.c.0.s8 %v2168
    %v2170 = vlaneseq
    %v2171 = vshrl.u32 %v2170, 7
    %v2172 = vsub.s32 %v2169, %v2171
    %v2173 = vrot.slane %v2159, %v2172
    %v2175 = vunpack.c.l.s4 1966171168
    %v2176 = vunpack.c.0.s8 %v2175
    %v2177 = vlaneseq
    %v2178 = vshrl.u32 %v2177, 7
    %v2179 = vsub.s32 %v2176, %v2178
    %v2180 = vrot.slane %v2118, %v2179
    %v2181 = vcombine.low %v2166, %v2173
    %v2183 = vunpack.c.l.s4 1966171168
    %v2184 = vunpack.c.0.s8 %v2183
    %v2185 = vlaneseq
    %v2186 = vshrl.u32 %v2185, 7
    %v2187 = vsub.s32 %v2184, %v2186
    %v2188 = vrot.slane %v2181, %v2187
    %v2190 = vunpack.c.l.s4 1966171168
    %v2191 = vunpack.c.0.s8 %v2190
    %v2192 = vlaneseq
    %v2193 = vshrl.u32 %v2192, 7
    %v2194 = vsub.s32 %v2191, %v2193
    %v2195 = vrot.slane %v2180, %v2194
    %v2196 = vcombine.low %v2188, %v2195
    %v2199 = vpack.c.bf16 %v2157, %v2157
    %v2200 = vpack.c.bf16 %v2196, %v2196
    %2201 = vrot.lane.b32.xlu0 %v635, 96
    %v2202 = vpop.permute.xlu0 %2201
    %v2204 = vsel %vm719, %v2202, 0
    %v2207 = vsel %vm719, %v2199, 0
    %2209 = vmatprep.subr.bf16.mxu0 0
    %2210 = vmatpush1.bf16.xpose.msra.mxu0 %v2207
    %2211 = vmatprep.subr.bf16.mxu0 0
    %2212 = vmatpush1.bf16.xpose.msra.mxu0 0
    %2213 = vmatprep.subr.bf16.mxu0 0
    %2214 = vmatpush1.bf16.xpose.msra.mxu0 0
    %2215 = vmatprep.subr.bf16.mxu0 0
    %2216 = vmatpush1.bf16.xpose.msra.mxu0 0
    %2217 = vmatprep.subr.bf16.mxu0 0
    %2218 = vmatpush1.bf16.xpose.msra.mxu0 0
    %2219 = vmatprep.subr.bf16.mxu0 0
    %2220 = vmatpush1.bf16.xpose.msra.mxu0 0
    %2221 = vmatprep.subr.bf16.mxu0 0
    %2222 = vmatpush1.bf16.xpose.msra.mxu0 0
    %2223 = vmatprep.subr.bf16.mxu0 0
    %2224 = vmatpush1.bf16.xpose.msra.mxu0 0
    %2225 = vmatprep.subr.bf16.mxu0 0
    %2226 = vmatpush1.bf16.xpose.msra.mxu0 0
    %2227 = vmatprep.subr.bf16.mxu0 0
    %2228 = vmatpush1.bf16.xpose.msra.mxu0 0
    %2229 = vmatprep.subr.bf16.mxu0 0
    %2230 = vmatpush1.bf16.xpose.msra.mxu0 0
    %2231 = vmatprep.subr.bf16.mxu0 0
    %2232 = vmatpush1.bf16.xpose.msra.mxu0 0
    %2233 = vmatprep.subr.bf16.mxu0 0
    %2234 = vmatpush1.bf16.xpose.msra.mxu0 0
    %2235 = vmatprep.subr.bf16.mxu0 0
    %2236 = vmatpush1.bf16.xpose.msra.mxu0 0
    %2237 = vmatprep.subr.bf16.mxu0 0
    %2238 = vmatpush1.bf16.xpose.msra.mxu0 0
    %2239 = vmatprep.subr.bf16.mxu0 0
    %2240 = vmatpush1.bf16.xpose.msra.mxu0 0
    %2241 = vmatprep.mubr.bf16.mxu0 0
    %2242 = vmatmul.mubr.bf16.gmra.mrb[0].mxu0 %v2204
    %v2243 = vpop.f32.mrb[0].mxu0
    %v2244 = vadd.f32 0.0, %v2243
    %v2245 = vpop.f32.mrb[0].mxu0
    %v2246 = vpop.f32.mrb[0].mxu0
    %v2247 = vpop.f32.mrb[0].mxu0
    %2248 = vdwg.mxu0
    %2249 = vrot.lane.b32.xlu0 %v636, 96
    %v2250 = vpop.permute.xlu0 %2249
    %v2252 = vsel %vm719, %v2250, 0
    %v2255 = vsel %vm719, %v2200, 0
    %2257 = vmatprep.subr.bf16.mxu0 0
    %2258 = vmatpush1.bf16.xpose.msra.mxu0 %v2255
    %2259 = vmatprep.subr.bf16.mxu0 0
    %2260 = vmatpush1.bf16.xpose.msra.mxu0 0
    %2261 = vmatprep.subr.bf16.mxu0 0
    %2262 = vmatpush1.bf16.xpose.msra.mxu0 0
    %2263 = vmatprep.subr.bf16.mxu0 0
    %2264 = vmatpush1.bf16.xpose.msra.mxu0 0
    %2265 = vmatprep.subr.bf16.mxu0 0
    %2266 = vmatpush1.bf16.xpose.msra.mxu0 0
    %2267 = vmatprep.subr.bf16.mxu0 0
    %2268 = vmatpush1.bf16.xpose.msra.mxu0 0
    %2269 = vmatprep.subr.bf16.mxu0 0
    %2270 = vmatpush1.bf16.xpose.msra.mxu0 0
    %2271 = vmatprep.subr.bf16.mxu0 0
    %2272 = vmatpush1.bf16.xpose.msra.mxu0 0
    %2273 = vmatprep.subr.bf16.mxu0 0
    %2274 = vmatpush1.bf16.xpose.msra.mxu0 0
    %2275 = vmatprep.subr.bf16.mxu0 0
    %2276 = vmatpush1.bf16.xpose.msra.mxu0 0
    %2277 = vmatprep.subr.bf16.mxu0 0
    %2278 = vmatpush1.bf16.xpose.msra.mxu0 0
    %2279 = vmatprep.subr.bf16.mxu0 0
    %2280 = vmatpush1.bf16.xpose.msra.mxu0 0
    %2281 = vmatprep.subr.bf16.mxu0 0
    %2282 = vmatpush1.bf16.xpose.msra.mxu0 0
    %2283 = vmatprep.subr.bf16.mxu0 0
    %2284 = vmatpush1.bf16.xpose.msra.mxu0 0
    %2285 = vmatprep.subr.bf16.mxu0 0
    %2286 = vmatpush1.bf16.xpose.msra.mxu0 0
    %2287 = vmatprep.subr.bf16.mxu0 0
    %2288 = vmatpush1.bf16.xpose.msra.mxu0 0
    %2289 = vmatprep.mubr.bf16.mxu0 0
    %2290 = vmatmul.mubr.bf16.gmra.mrb[0].mxu0 %v2252
    %v2291 = vpop.f32.mrb[0].mxu0
    %v2292 = vadd.f32 0.0, %v2291
    %v2293 = vpop.f32.mrb[0].mxu0
    %v2294 = vpop.f32.mrb[0].mxu0
    %v2295 = vpop.f32.mrb[0].mxu0
    %2296 = vdwg.mxu0
    %v2297 = vmul.f32 %v2244, 0.35355338
    %v2298 = vmul.f32 %v2292, 0.35355338
    %v2299 = vadd.f32 %v2297, %v338
    %v2300 = vadd.f32 %v2298, %v342
    %v2301 = vsel %vm816, %v2299, -inf
    %2302 = vmax.xlane.f32.xlu0 %v2301
    %v2303 = vpop.xlane.xlu0 %2302
    %v2304 = vsel %vm816, %v2300, -inf
    %2305 = vmax.xlane.f32.xlu0 %v2304
    %v2306 = vpop.xlane.xlu0 %2305
    %v2307 = vsub.f32 %v2299, %v2303
    %v2308 = vsub.f32 %v2300, %v2306
    %v2309 = vmul.f32 %v2307, 1.442695
    %v2310 = vpow.pop %v2309
    %v2311 = vmul.f32 %v2308, 1.442695
    %v2312 = vpow.pop %v2311
    %v2313 = vsel %vm816, %v2310, 0.0
    %2314 = vadd.xlane.f32.xlu0 %v2313
    %v2315 = vpop.xlane.xlu0 %2314
    %v2316 = vsel %vm816, %v2312, 0.0
    %2317 = vadd.xlane.f32.xlu0 %v2316
    %v2318 = vpop.xlane.xlu0 %2317
    %v2319 = vrcp.pop %v2315
    %v2320 = vrcp.pop %v2318
    %v2321 = vmul.f32 %v2310, %v2319
    %v2322 = vmul.f32 %v2312, %v2320
    %v2323 = vpack.c.bf16 %v2321, %v2321
    %v2324 = vpack.c.bf16 %v2322, %v2322
    %2326 = vrot.lane.b32.xlu0 %v2199, 96
    %v2327 = vpop.permute.xlu0 %2326
    %v2329 = vsel %vm816, %v2323, 0
    %v2332 = vand.u32 %v2327, %v850
    %2334 = vmatprep.subr.bf16.mxu0 0
    %2335 = vmatpush1.bf16.msra.mxu0 %v2332
    %2336 = vmatprep.subr.bf16.mxu0 0
    %2337 = vmatpush1.bf16.msra.mxu0 0
    %2338 = vmatprep.subr.bf16.mxu0 0
    %2339 = vmatpush1.bf16.msra.mxu0 0
    %2340 = vmatprep.subr.bf16.mxu0 0
    %2341 = vmatpush1.bf16.msra.mxu0 0
    %2342 = vmatprep.subr.bf16.mxu0 0
    %2343 = vmatpush1.bf16.msra.mxu0 0
    %2344 = vmatprep.subr.bf16.mxu0 0
    %2345 = vmatpush1.bf16.msra.mxu0 0
    %2346 = vmatprep.subr.bf16.mxu0 0
    %2347 = vmatpush1.bf16.msra.mxu0 0
    %2348 = vmatprep.subr.bf16.mxu0 0
    %2349 = vmatpush1.bf16.msra.mxu0 0
    %2350 = vmatprep.subr.bf16.mxu0 0
    %2351 = vmatpush1.bf16.msra.mxu0 0
    %2352 = vmatprep.subr.bf16.mxu0 0
    %2353 = vmatpush1.bf16.msra.mxu0 0
    %2354 = vmatprep.subr.bf16.mxu0 0
    %2355 = vmatpush1.bf16.msra.mxu0 0
    %2356 = vmatprep.subr.bf16.mxu0 0
    %2357 = vmatpush1.bf16.msra.mxu0 0
    %2358 = vmatprep.subr.bf16.mxu0 0
    %2359 = vmatpush1.bf16.msra.mxu0 0
    %2360 = vmatprep.subr.bf16.mxu0 0
    %2361 = vmatpush1.bf16.msra.mxu0 0
    %2362 = vmatprep.subr.bf16.mxu0 0
    %2363 = vmatpush1.bf16.msra.mxu0 0
    %2364 = vmatprep.subr.bf16.mxu0 0
    %2365 = vmatpush1.bf16.msra.mxu0 0
    %2366 = vmatprep.mubr.bf16.mxu0 0
    %2367 = vmatmul.mubr.bf16.gmra.mrb[0].mxu0 %v2329
    %v2368 = vpop.f32.mrb[0].mxu0
    %v2369 = vadd.f32 0.0, %v2368
    %v2370 = vpop.f32.mrb[0].mxu0
    %v2371 = vpop.f32.mrb[0].mxu0
    %v2372 = vpop.f32.mrb[0].mxu0
    %2373 = vdwg.mxu0
    %2375 = vrot.lane.b32.xlu0 %v2200, 96
    %v2376 = vpop.permute.xlu0 %2375
    %v2378 = vsel %vm816, %v2324, 0
    %v2381 = vand.u32 %v2376, %v850
    %2383 = vmatprep.subr.bf16.mxu0 0
    %2384 = vmatpush1.bf16.msra.mxu0 %v2381
    %2385 = vmatprep.subr.bf16.mxu0 0
    %2386 = vmatpush1.bf16.msra.mxu0 0
    %2387 = vmatprep.subr.bf16.mxu0 0
    %2388 = vmatpush1.bf16.msra.mxu0 0
    %2389 = vmatprep.subr.bf16.mxu0 0
    %2390 = vmatpush1.bf16.msra.mxu0 0
    %2391 = vmatprep.subr.bf16.mxu0 0
    %2392 = vmatpush1.bf16.msra.mxu0 0
    %2393 = vmatprep.subr.bf16.mxu0 0
    %2394 = vmatpush1.bf16.msra.mxu0 0
    %2395 = vmatprep.subr.bf16.mxu0 0
    %2396 = vmatpush1.bf16.msra.mxu0 0
    %2397 = vmatprep.subr.bf16.mxu0 0
    %2398 = vmatpush1.bf16.msra.mxu0 0
    %2399 = vmatprep.subr.bf16.mxu0 0
    %2400 = vmatpush1.bf16.msra.mxu0 0
    %2401 = vmatprep.subr.bf16.mxu0 0
    %2402 = vmatpush1.bf16.msra.mxu0 0
    %2403 = vmatprep.subr.bf16.mxu0 0
    %2404 = vmatpush1.bf16.msra.mxu0 0
    %2405 = vmatprep.subr.bf16.mxu0 0
    %2406 = vmatpush1.bf16.msra.mxu0 0
    %2407 = vmatprep.subr.bf16.mxu0 0
    %2408 = vmatpush1.bf16.msra.mxu0 0
    %2409 = vmatprep.subr.bf16.mxu0 0
    %2410 = vmatpush1.bf16.msra.mxu0 0
    %2411 = vmatprep.subr.bf16.mxu0 0
    %2412 = vmatpush1.bf16.msra.mxu0 0
    %2413 = vmatprep.subr.bf16.mxu0 0
    %2414 = vmatpush1.bf16.msra.mxu0 0
    %2415 = vmatprep.mubr.bf16.mxu0 0
    %2416 = vmatmul.mubr.bf16.gmra.mrb[0].mxu0 %v2378
    %v2417 = vpop.f32.mrb[0].mxu0
    %v2418 = vadd.f32 0.0, %v2417
    %v2419 = vpop.f32.mrb[0].mxu0
    %v2420 = vpop.f32.mrb[0].mxu0
    %v2421 = vpop.f32.mrb[0].mxu0
    %2422 = vdwg.mxu0
    %v2423 = vpack.c.bf16 %v2418, %v2369
    %v2424 = vld [vmem:[#allocation22] sm:$0xf]
    %2425 = vrot.lane.b32.xlu0 %v635, 88
    %v2426 = vpop.permute.xlu0 %2425
    %2427 = vrot.lane.b32.xlu0 %v2199, 120
    %v2428 = vpop.permute.xlu0 %2427
    %v2430 = vsel %vm719, %v2426, 0
    %v2433 = vsel %vm719, %v2428, 0
    %2435 = vmatprep.subr.bf16.mxu0 0
    %2436 = vmatpush1.bf16.xpose.msra.mxu0 %v2433
    %2437 = vmatprep.subr.bf16.mxu0 0
    %2438 = vmatpush1.bf16.xpose.msra.mxu0 0
    %2439 = vmatprep.subr.bf16.mxu0 0
    %2440 = vmatpush1.bf16.xpose.msra.mxu0 0
    %2441 = vmatprep.subr.bf16.mxu0 0
    %2442 = vmatpush1.bf16.xpose.msra.mxu0 0
    %2443 = vmatprep.subr.bf16.mxu0 0
    %2444 = vmatpush1.bf16.xpose.msra.mxu0 0
    %2445 = vmatprep.subr.bf16.mxu0 0
    %2446 = vmatpush1.bf16.xpose.msra.mxu0 0
    %2447 = vmatprep.subr.bf16.mxu0 0
    %2448 = vmatpush1.bf16.xpose.msra.mxu0 0
    %2449 = vmatprep.subr.bf16.mxu0 0
    %2450 = vmatpush1.bf16.xpose.msra.mxu0 0
    %2451 = vmatprep.subr.bf16.mxu0 0
    %2452 = vmatpush1.bf16.xpose.msra.mxu0 0
    %2453 = vmatprep.subr.bf16.mxu0 0
    %2454 = vmatpush1.bf16.xpose.msra.mxu0 0
    %2455 = vmatprep.subr.bf16.mxu0 0
    %2456 = vmatpush1.bf16.xpose.msra.mxu0 0
    %2457 = vmatprep.subr.bf16.mxu0 0
    %2458 = vmatpush1.bf16.xpose.msra.mxu0 0
    %2459 = vmatprep.subr.bf16.mxu0 0
    %2460 = vmatpush1.bf16.xpose.msra.mxu0 0
    %2461 = vmatprep.subr.bf16.mxu0 0
    %2462 = vmatpush1.bf16.xpose.msra.mxu0 0
    %2463 = vmatprep.subr.bf16.mxu0 0
    %2464 = vmatpush1.bf16.xpose.msra.mxu0 0
    %2465 = vmatprep.subr.bf16.mxu0 0
    %2466 = vmatpush1.bf16.xpose.msra.mxu0 0
    %2467 = vmatprep.mubr.bf16.mxu0 0
    %2468 = vmatmul.mubr.bf16.gmra.mrb[0].mxu0 %v2430
    %v2469 = vpop.f32.mrb[0].mxu0
    %v2470 = vadd.f32 0.0, %v2469
    %v2471 = vpop.f32.mrb[0].mxu0
    %v2472 = vpop.f32.mrb[0].mxu0
    %v2473 = vpop.f32.mrb[0].mxu0
    %2474 = vdwg.mxu0
    %2475 = vrot.lane.b32.xlu0 %v636, 88
    %v2476 = vpop.permute.xlu0 %2475
    %2477 = vrot.lane.b32.xlu0 %v2200, 120
    %v2478 = vpop.permute.xlu0 %2477
    %v2480 = vsel %vm719, %v2476, 0
    %v2483 = vsel %vm719, %v2478, 0
    %2485 = vmatprep.subr.bf16.mxu0 0
    %2486 = vmatpush1.bf16.xpose.msra.mxu0 %v2483
    %2487 = vmatprep.subr.bf16.mxu0 0
    %2488 = vmatpush1.bf16.xpose.msra.mxu0 0
    %2489 = vmatprep.subr.bf16.mxu0 0
    %2490 = vmatpush1.bf16.xpose.msra.mxu0 0
    %2491 = vmatprep.subr.bf16.mxu0 0
    %2492 = vmatpush1.bf16.xpose.msra.mxu0 0
    %2493 = vmatprep.subr.bf16.mxu0 0
    %2494 = vmatpush1.bf16.xpose.msra.mxu0 0
    %2495 = vmatprep.subr.bf16.mxu0 0
    %2496 = vmatpush1.bf16.xpose.msra.mxu0 0
    %2497 = vmatprep.subr.bf16.mxu0 0
    %2498 = vmatpush1.bf16.xpose.msra.mxu0 0
    %2499 = vmatprep.subr.bf16.mxu0 0
    %2500 = vmatpush1.bf16.xpose.msra.mxu0 0
    %2501 = vmatprep.subr.bf16.mxu0 0
    %2502 = vmatpush1.bf16.xpose.msra.mxu0 0
    %2503 = vmatprep.subr.bf16.mxu0 0
    %2504 = vmatpush1.bf16.xpose.msra.mxu0 0
    %2505 = vmatprep.subr.bf16.mxu0 0
    %2506 = vmatpush1.bf16.xpose.msra.mxu0 0
    %2507 = vmatprep.subr.bf16.mxu0 0
    %2508 = vmatpush1.bf16.xpose.msra.mxu0 0
    %2509 = vmatprep.subr.bf16.mxu0 0
    %2510 = vmatpush1.bf16.xpose.msra.mxu0 0
    %2511 = vmatprep.subr.bf16.mxu0 0
    %2512 = vmatpush1.bf16.xpose.msra.mxu0 0
    %2513 = vmatprep.subr.bf16.mxu0 0
    %2514 = vmatpush1.bf16.xpose.msra.mxu0 0
    %2515 = vmatprep.subr.bf16.mxu0 0
    %2516 = vmatpush1.bf16.xpose.msra.mxu0 0
    %2517 = vmatprep.mubr.bf16.mxu0 0
    %2518 = vmatmul.mubr.bf16.gmra.mrb[0].mxu0 %v2480
    %v2519 = vpop.f32.mrb[0].mxu0
    %v2520 = vadd.f32 0.0, %v2519
    %v2521 = vpop.f32.mrb[0].mxu0
    %v2522 = vpop.f32.mrb[0].mxu0
    %v2523 = vpop.f32.mrb[0].mxu0
    %2524 = vdwg.mxu0
    %v2525 = vmul.f32 %v2470, 0.35355338
    %v2526 = vmul.f32 %v2520, 0.35355338
    %v2527 = vadd.f32 %v2525, %v338
    %v2528 = vadd.f32 %v2526, %v342
    %v2529 = vsel %vm816, %v2527, -inf
    %2530 = vmax.xlane.f32.xlu0 %v2529
    %v2531 = vpop.xlane.xlu0 %2530
    %v2532 = vsel %vm816, %v2528, -inf
    %2533 = vmax.xlane.f32.xlu0 %v2532
    %v2534 = vpop.xlane.xlu0 %2533
    %v2535 = vsub.f32 %v2527, %v2531
    %v2536 = vsub.f32 %v2528, %v2534
    %v2537 = vmul.f32 %v2535, 1.442695
    %v2538 = vpow.pop %v2537
    %v2539 = vmul.f32 %v2536, 1.442695
    %v2540 = vpow.pop %v2539
    %v2541 = vsel %vm816, %v2538, 0.0
    %2542 = vadd.xlane.f32.xlu0 %v2541
    %v2543 = vpop.xlane.xlu0 %2542
    %v2544 = vsel %vm816, %v2540, 0.0
    %2545 = vadd.xlane.f32.xlu0 %v2544
    %v2546 = vpop.xlane.xlu0 %2545
    %v2547 = vrcp.pop %v2543
    %v2548 = vrcp.pop %v2546
    %v2549 = vmul.f32 %v2538, %v2547
    %v2550 = vmul.f32 %v2540, %v2548
    %v2551 = vpack.c.bf16 %v2549, %v2549
    %v2552 = vpack.c.bf16 %v2550, %v2550
    %2553 = vrot.lane.b32.xlu0 %v2199, 88
    %v2554 = vpop.permute.xlu0 %2553
    %v2556 = vsel %vm816, %v2551, 0
    %v2559 = vand.u32 %v2554, %v850
    %2561 = vmatprep.subr.bf16.mxu0 0
    %2562 = vmatpush1.bf16.msra.mxu0 %v2559
    %2563 = vmatprep.subr.bf16.mxu0 0
    %2564 = vmatpush1.bf16.msra.mxu0 0
    %2565 = vmatprep.subr.bf16.mxu0 0
    %2566 = vmatpush1.bf16.msra.mxu0 0
    %2567 = vmatprep.subr.bf16.mxu0 0
    %2568 = vmatpush1.bf16.msra.mxu0 0
    %2569 = vmatprep.subr.bf16.mxu0 0
    %2570 = vmatpush1.bf16.msra.mxu0 0
    %2571 = vmatprep.subr.bf16.mxu0 0
    %2572 = vmatpush1.bf16.msra.mxu0 0
    %2573 = vmatprep.subr.bf16.mxu0 0
    %2574 = vmatpush1.bf16.msra.mxu0 0
    %2575 = vmatprep.subr.bf16.mxu0 0
    %2576 = vmatpush1.bf16.msra.mxu0 0
    %2577 = vmatprep.subr.bf16.mxu0 0
    %2578 = vmatpush1.bf16.msra.mxu0 0
    %2579 = vmatprep.subr.bf16.mxu0 0
    %2580 = vmatpush1.bf16.msra.mxu0 0
    %2581 = vmatprep.subr.bf16.mxu0 0
    %2582 = vmatpush1.bf16.msra.mxu0 0
    %2583 = vmatprep.subr.bf16.mxu0 0
    %2584 = vmatpush1.bf16.msra.mxu0 0
    %2585 = vmatprep.subr.bf16.mxu0 0
    %2586 = vmatpush1.bf16.msra.mxu0 0
    %2587 = vmatprep.subr.bf16.mxu0 0
    %2588 = vmatpush1.bf16.msra.mxu0 0
    %2589 = vmatprep.subr.bf16.mxu0 0
    %2590 = vmatpush1.bf16.msra.mxu0 0
    %2591 = vmatprep.subr.bf16.mxu0 0
    %2592 = vmatpush1.bf16.msra.mxu0 0
    %2593 = vmatprep.mubr.bf16.mxu0 0
    %2594 = vmatmul.mubr.bf16.gmra.mrb[0].mxu0 %v2556
    %v2595 = vpop.f32.mrb[0].mxu0
    %v2596 = vadd.f32 0.0, %v2595
    %v2597 = vpop.f32.mrb[0].mxu0
    %v2598 = vpop.f32.mrb[0].mxu0
    %v2599 = vpop.f32.mrb[0].mxu0
    %2600 = vdwg.mxu0
    %2601 = vrot.lane.b32.xlu0 %v2200, 88
    %v2602 = vpop.permute.xlu0 %2601
    %v2604 = vsel %vm816, %v2552, 0
    %v2607 = vand.u32 %v2602, %v850
    %2609 = vmatprep.subr.bf16.mxu0 0
    %2610 = vmatpush1.bf16.msra.mxu0 %v2607
    %2611 = vmatprep.subr.bf16.mxu0 0
    %2612 = vmatpush1.bf16.msra.mxu0 0
    %2613 = vmatprep.subr.bf16.mxu0 0
    %2614 = vmatpush1.bf16.msra.mxu0 0
    %2615 = vmatprep.subr.bf16.mxu0 0
    %2616 = vmatpush1.bf16.msra.mxu0 0
    %2617 = vmatprep.subr.bf16.mxu0 0
    %2618 = vmatpush1.bf16.msra.mxu0 0
    %2619 = vmatprep.subr.bf16.mxu0 0
    %2620 = vmatpush1.bf16.msra.mxu0 0
    %2621 = vmatprep.subr.bf16.mxu0 0
    %2622 = vmatpush1.bf16.msra.mxu0 0
    %2623 = vmatprep.subr.bf16.mxu0 0
    %2624 = vmatpush1.bf16.msra.mxu0 0
    %2625 = vmatprep.subr.bf16.mxu0 0
    %2626 = vmatpush1.bf16.msra.mxu0 0
    %2627 = vmatprep.subr.bf16.mxu0 0
    %2628 = vmatpush1.bf16.msra.mxu0 0
    %2629 = vmatprep.subr.bf16.mxu0 0
    %2630 = vmatpush1.bf16.msra.mxu0 0
    %2631 = vmatprep.subr.bf16.mxu0 0
    %2632 = vmatpush1.bf16.msra.mxu0 0
    %2633 = vmatprep.subr.bf16.mxu0 0
    %2634 = vmatpush1.bf16.msra.mxu0 0
    %2635 = vmatprep.subr.bf16.mxu0 0
    %2636 = vmatpush1.bf16.msra.mxu0 0
    %2637 = vmatprep.subr.bf16.mxu0 0
    %2638 = vmatpush1.bf16.msra.mxu0 0
    %2639 = vmatprep.subr.bf16.mxu0 0
    %2640 = vmatpush1.bf16.msra.mxu0 0
    %2641 = vmatprep.mubr.bf16.mxu0 0
    %2642 = vmatmul.mubr.bf16.gmra.mrb[0].mxu0 %v2604
    %v2643 = vpop.f32.mrb[0].mxu0
    %v2644 = vadd.f32 0.0, %v2643
    %v2645 = vpop.f32.mrb[0].mxu0
    %v2646 = vpop.f32.mrb[0].mxu0
    %v2647 = vpop.f32.mrb[0].mxu0
    %2648 = vdwg.mxu0
    %v2649 = vpack.c.bf16 %v2644, %v2596
    %s2650 = scalar_lea.vmem [#allocation22], 4
    %v2651 = vld [vmem:[%s2650] sm:$0xf]
    %v2653 = vsel %vm719, %v2649, 0
    %v2656 = vsel %vm1177, %v2651, 0
    %2658 = vmatprep.subr.bf16.mxu0 0
    %2659 = vmatpush1.bf16.msra.mxu0 %v2656
    %2660 = vmatprep.subr.bf16.mxu0 0
    %2661 = vmatpush1.bf16.msra.mxu0 0
    %2662 = vmatprep.subr.bf16.mxu0 0
    %2663 = vmatpush1.bf16.msra.mxu0 0
    %2664 = vmatprep.subr.bf16.mxu0 0
    %2665 = vmatpush1.bf16.msra.mxu0 0
    %2666 = vmatprep.subr.bf16.mxu0 0
    %2667 = vmatpush1.bf16.msra.mxu0 0
    %2668 = vmatprep.subr.bf16.mxu0 0
    %2669 = vmatpush1.bf16.msra.mxu0 0
    %2670 = vmatprep.subr.bf16.mxu0 0
    %2671 = vmatpush1.bf16.msra.mxu0 0
    %2672 = vmatprep.subr.bf16.mxu0 0
    %2673 = vmatpush1.bf16.msra.mxu0 0
    %2674 = vmatprep.subr.bf16.mxu0 0
    %2675 = vmatpush1.bf16.msra.mxu0 0
    %2676 = vmatprep.subr.bf16.mxu0 0
    %2677 = vmatpush1.bf16.msra.mxu0 0
    %2678 = vmatprep.subr.bf16.mxu0 0
    %2679 = vmatpush1.bf16.msra.mxu0 0
    %2680 = vmatprep.subr.bf16.mxu0 0
    %2681 = vmatpush1.bf16.msra.mxu0 0
    %2682 = vmatprep.subr.bf16.mxu0 0
    %2683 = vmatpush1.bf16.msra.mxu0 0
    %2684 = vmatprep.subr.bf16.mxu0 0
    %2685 = vmatpush1.bf16.msra.mxu0 0
    %2686 = vmatprep.subr.bf16.mxu0 0
    %2687 = vmatpush1.bf16.msra.mxu0 0
    %2688 = vmatprep.subr.bf16.mxu0 0
    %2689 = vmatpush1.bf16.msra.mxu0 0
    %2690 = vmatprep.mubr.bf16.mxu0 0
    %2691 = vmatmul.mubr.bf16.gmra.mrb[0].mxu0 %v2653
    %v2692 = vpop.f32.mrb[0].mxu0
    %v2693 = vadd.f32 0.0, %v2692
    %v2694 = vpop.f32.mrb[0].mxu0
    %v2695 = vpop.f32.mrb[0].mxu0
    %v2696 = vadd.f32 0.0, %v2695
    %v2697 = vpop.f32.mrb[0].mxu0
    %2698 = vdwg.mxu0
    %v2700 = vsel %vm719, %v2423, 0
    %v2703 = vsel %vm1177, %v2424, 0
    %2705 = vmatprep.subr.bf16.mxu0 0
    %2706 = vmatpush1.bf16.msra.mxu0 %v2703
    %2707 = vmatprep.subr.bf16.mxu0 0
    %2708 = vmatpush1.bf16.msra.mxu0 0
    %2709 = vmatprep.subr.bf16.mxu0 0
    %2710 = vmatpush1.bf16.msra.mxu0 0
    %2711 = vmatprep.subr.bf16.mxu0 0
    %2712 = vmatpush1.bf16.msra.mxu0 0
    %2713 = vmatprep.subr.bf16.mxu0 0
    %2714 = vmatpush1.bf16.msra.mxu0 0
    %2715 = vmatprep.subr.bf16.mxu0 0
    %2716 = vmatpush1.bf16.msra.mxu0 0
    %2717 = vmatprep.subr.bf16.mxu0 0
    %2718 = vmatpush1.bf16.msra.mxu0 0
    %2719 = vmatprep.subr.bf16.mxu0 0
    %2720 = vmatpush1.bf16.msra.mxu0 0
    %2721 = vmatprep.subr.bf16.mxu0 0
    %2722 = vmatpush1.bf16.msra.mxu0 0
    %2723 = vmatprep.subr.bf16.mxu0 0
    %2724 = vmatpush1.bf16.msra.mxu0 0
    %2725 = vmatprep.subr.bf16.mxu0 0
    %2726 = vmatpush1.bf16.msra.mxu0 0
    %2727 = vmatprep.subr.bf16.mxu0 0
    %2728 = vmatpush1.bf16.msra.mxu0 0
    %2729 = vmatprep.subr.bf16.mxu0 0
    %2730 = vmatpush1.bf16.msra.mxu0 0
    %2731 = vmatprep.subr.bf16.mxu0 0
    %2732 = vmatpush1.bf16.msra.mxu0 0
    %2733 = vmatprep.subr.bf16.mxu0 0
    %2734 = vmatpush1.bf16.msra.mxu0 0
    %2735 = vmatprep.subr.bf16.mxu0 0
    %2736 = vmatpush1.bf16.msra.mxu0 0
    %2737 = vmatprep.mubr.bf16.mxu0 0
    %2738 = vmatmul.mubr.bf16.gmra.mrb[0].mxu0 %v2700
    %v2739 = vpop.f32.mrb[0].mxu0
    %v2740 = vadd.f32 %v2693, %v2739
    %v2741 = vpop.f32.mrb[0].mxu0
    %v2742 = vpop.f32.mrb[0].mxu0
    %v2743 = vadd.f32 %v2696, %v2742
    %v2744 = vpop.f32.mrb[0].mxu0
    %2745 = vdwg.mxu0
    %2746 = vrot.lane.b32.xlu0 %v635, 80
    %v2747 = vpop.permute.xlu0 %2746
    %2748 = vrot.lane.b32.xlu0 %v2199, 112
    %v2749 = vpop.permute.xlu0 %2748
    %v2751 = vsel %vm719, %v2747, 0
    %v2754 = vsel %vm719, %v2749, 0
    %2756 = vmatprep.subr.bf16.mxu0 0
    %2757 = vmatpush1.bf16.xpose.msra.mxu0 %v2754
    %2758 = vmatprep.subr.bf16.mxu0 0
    %2759 = vmatpush1.bf16.xpose.msra.mxu0 0
    %2760 = vmatprep.subr.bf16.mxu0 0
    %2761 = vmatpush1.bf16.xpose.msra.mxu0 0
    %2762 = vmatprep.subr.bf16.mxu0 0
    %2763 = vmatpush1.bf16.xpose.msra.mxu0 0
    %2764 = vmatprep.subr.bf16.mxu0 0
    %2765 = vmatpush1.bf16.xpose.msra.mxu0 0
    %2766 = vmatprep.subr.bf16.mxu0 0
    %2767 = vmatpush1.bf16.xpose.msra.mxu0 0
    %2768 = vmatprep.subr.bf16.mxu0 0
    %2769 = vmatpush1.bf16.xpose.msra.mxu0 0
    %2770 = vmatprep.subr.bf16.mxu0 0
    %2771 = vmatpush1.bf16.xpose.msra.mxu0 0
    %2772 = vmatprep.subr.bf16.mxu0 0
    %2773 = vmatpush1.bf16.xpose.msra.mxu0 0
    %2774 = vmatprep.subr.bf16.mxu0 0
    %2775 = vmatpush1.bf16.xpose.msra.mxu0 0
    %2776 = vmatprep.subr.bf16.mxu0 0
    %2777 = vmatpush1.bf16.xpose.msra.mxu0 0
    %2778 = vmatprep.subr.bf16.mxu0 0
    %2779 = vmatpush1.bf16.xpose.msra.mxu0 0
    %2780 = vmatprep.subr.bf16.mxu0 0
    %2781 = vmatpush1.bf16.xpose.msra.mxu0 0
    %2782 = vmatprep.subr.bf16.mxu0 0
    %2783 = vmatpush1.bf16.xpose.msra.mxu0 0
    %2784 = vmatprep.subr.bf16.mxu0 0
    %2785 = vmatpush1.bf16.xpose.msra.mxu0 0
    %2786 = vmatprep.subr.bf16.mxu0 0
    %2787 = vmatpush1.bf16.xpose.msra.mxu0 0
    %2788 = vmatprep.mubr.bf16.mxu0 0
    %2789 = vmatmul.mubr.bf16.gmra.mrb[0].mxu0 %v2751
    %v2790 = vpop.f32.mrb[0].mxu0
    %v2791 = vadd.f32 0.0, %v2790
    %v2792 = vpop.f32.mrb[0].mxu0
    %v2793 = vpop.f32.mrb[0].mxu0
    %v2794 = vpop.f32.mrb[0].mxu0
    %2795 = vdwg.mxu0
    %2796 = vrot.lane.b32.xlu0 %v636, 80
    %v2797 = vpop.permute.xlu0 %2796
    %2798 = vrot.lane.b32.xlu0 %v2200, 112
    %v2799 = vpop.permute.xlu0 %2798
    %v2801 = vsel %vm719, %v2797, 0
    %v2804 = vsel %vm719, %v2799, 0
    %2806 = vmatprep.subr.bf16.mxu0 0
    %2807 = vmatpush1.bf16.xpose.msra.mxu0 %v2804
    %2808 = vmatprep.subr.bf16.mxu0 0
    %2809 = vmatpush1.bf16.xpose.msra.mxu0 0
    %2810 = vmatprep.subr.bf16.mxu0 0
    %2811 = vmatpush1.bf16.xpose.msra.mxu0 0
    %2812 = vmatprep.subr.bf16.mxu0 0
    %2813 = vmatpush1.bf16.xpose.msra.mxu0 0
    %2814 = vmatprep.subr.bf16.mxu0 0
    %2815 = vmatpush1.bf16.xpose.msra.mxu0 0
    %2816 = vmatprep.subr.bf16.mxu0 0
    %2817 = vmatpush1.bf16.xpose.msra.mxu0 0
    %2818 = vmatprep.subr.bf16.mxu0 0
    %2819 = vmatpush1.bf16.xpose.msra.mxu0 0
    %2820 = vmatprep.subr.bf16.mxu0 0
    %2821 = vmatpush1.bf16.xpose.msra.mxu0 0
    %2822 = vmatprep.subr.bf16.mxu0 0
    %2823 = vmatpush1.bf16.xpose.msra.mxu0 0
    %2824 = vmatprep.subr.bf16.mxu0 0
    %2825 = vmatpush1.bf16.xpose.msra.mxu0 0
    %2826 = vmatprep.subr.bf16.mxu0 0
    %2827 = vmatpush1.bf16.xpose.msra.mxu0 0
    %2828 = vmatprep.subr.bf16.mxu0 0
    %2829 = vmatpush1.bf16.xpose.msra.mxu0 0
    %2830 = vmatprep.subr.bf16.mxu0 0
    %2831 = vmatpush1.bf16.xpose.msra.mxu0 0
    %2832 = vmatprep.subr.bf16.mxu0 0
    %2833 = vmatpush1.bf16.xpose.msra.mxu0 0
    %2834 = vmatprep.subr.bf16.mxu0 0
    %2835 = vmatpush1.bf16.xpose.msra.mxu0 0
    %2836 = vmatprep.subr.bf16.mxu0 0
    %2837 = vmatpush1.bf16.xpose.msra.mxu0 0
    %2838 = vmatprep.mubr.bf16.mxu0 0
    %2839 = vmatmul.mubr.bf16.gmra.mrb[0].mxu0 %v2801
    %v2840 = vpop.f32.mrb[0].mxu0
    %v2841 = vadd.f32 0.0, %v2840
    %v2842 = vpop.f32.mrb[0].mxu0
    %v2843 = vpop.f32.mrb[0].mxu0
    %v2844 = vpop.f32.mrb[0].mxu0
    %2845 = vdwg.mxu0
    %v2846 = vmul.f32 %v2791, 0.35355338
    %v2847 = vmul.f32 %v2841, 0.35355338
    %v2848 = vadd.f32 %v2846, %v338
    %v2849 = vadd.f32 %v2847, %v342
    %v2850 = vsel %vm816, %v2848, -inf
    %2851 = vmax.xlane.f32.xlu0 %v2850
    %v2852 = vpop.xlane.xlu0 %2851
    %v2853 = vsel %vm816, %v2849, -inf
    %2854 = vmax.xlane.f32.xlu0 %v2853
    %v2855 = vpop.xlane.xlu0 %2854
    %v2856 = vsub.f32 %v2848, %v2852
    %v2857 = vsub.f32 %v2849, %v2855
    %v2858 = vmul.f32 %v2856, 1.442695
    %v2859 = vpow.pop %v2858
    %v2860 = vmul.f32 %v2857, 1.442695
    %v2861 = vpow.pop %v2860
    %v2862 = vsel %vm816, %v2859, 0.0
    %2863 = vadd.xlane.f32.xlu0 %v2862
    %v2864 = vpop.xlane.xlu0 %2863
    %v2865 = vsel %vm816, %v2861, 0.0
    %2866 = vadd.xlane.f32.xlu0 %v2865
    %v2867 = vpop.xlane.xlu0 %2866
    %v2868 = vrcp.pop %v2864
    %v2869 = vrcp.pop %v2867
    %v2870 = vmul.f32 %v2859, %v2868
    %v2871 = vmul.f32 %v2861, %v2869
    %v2872 = vpack.c.bf16 %v2870, %v2870
    %v2873 = vpack.c.bf16 %v2871, %v2871
    %2874 = vrot.lane.b32.xlu0 %v2199, 80
    %v2875 = vpop.permute.xlu0 %2874
    %v2877 = vsel %vm816, %v2872, 0
    %v2880 = vand.u32 %v2875, %v850
    %2882 = vmatprep.subr.bf16.mxu0 0
    %2883 = vmatpush1.bf16.msra.mxu0 %v2880
    %2884 = vmatprep.subr.bf16.mxu0 0
    %2885 = vmatpush1.bf16.msra.mxu0 0
    %2886 = vmatprep.subr.bf16.mxu0 0
    %2887 = vmatpush1.bf16.msra.mxu0 0
    %2888 = vmatprep.subr.bf16.mxu0 0
    %2889 = vmatpush1.bf16.msra.mxu0 0
    %2890 = vmatprep.subr.bf16.mxu0 0
    %2891 = vmatpush1.bf16.msra.mxu0 0
    %2892 = vmatprep.subr.bf16.mxu0 0
    %2893 = vmatpush1.bf16.msra.mxu0 0
    %2894 = vmatprep.subr.bf16.mxu0 0
    %2895 = vmatpush1.bf16.msra.mxu0 0
    %2896 = vmatprep.subr.bf16.mxu0 0
    %2897 = vmatpush1.bf16.msra.mxu0 0
    %2898 = vmatprep.subr.bf16.mxu0 0
    %2899 = vmatpush1.bf16.msra.mxu0 0
    %2900 = vmatprep.subr.bf16.mxu0 0
    %2901 = vmatpush1.bf16.msra.mxu0 0
    %2902 = vmatprep.subr.bf16.mxu0 0
    %2903 = vmatpush1.bf16.msra.mxu0 0
    %2904 = vmatprep.subr.bf16.mxu0 0
    %2905 = vmatpush1.bf16.msra.mxu0 0
    %2906 = vmatprep.subr.bf16.mxu0 0
    %2907 = vmatpush1.bf16.msra.mxu0 0
    %2908 = vmatprep.subr.bf16.mxu0 0
    %2909 = vmatpush1.bf16.msra.mxu0 0
    %2910 = vmatprep.subr.bf16.mxu0 0
    %2911 = vmatpush1.bf16.msra.mxu0 0
    %2912 = vmatprep.subr.bf16.mxu0 0
    %2913 = vmatpush1.bf16.msra.mxu0 0
    %2914 = vmatprep.mubr.bf16.mxu0 0
    %2915 = vmatmul.mubr.bf16.gmra.mrb[0].mxu0 %v2877
    %v2916 = vpop.f32.mrb[0].mxu0
    %v2917 = vadd.f32 0.0, %v2916
    %v2918 = vpop.f32.mrb[0].mxu0
    %v2919 = vpop.f32.mrb[0].mxu0
    %v2920 = vpop.f32.mrb[0].mxu0
    %2921 = vdwg.mxu0
    %2922 = vrot.lane.b32.xlu0 %v2200, 80
    %v2923 = vpop.permute.xlu0 %2922
    %v2925 = vsel %vm816, %v2873, 0
    %v2928 = vand.u32 %v2923, %v850
    %2930 = vmatprep.subr.bf16.mxu0 0
    %2931 = vmatpush1.bf16.msra.mxu0 %v2928
    %2932 = vmatprep.subr.bf16.mxu0 0
    %2933 = vmatpush1.bf16.msra.mxu0 0
    %2934 = vmatprep.subr.bf16.mxu0 0
    %2935 = vmatpush1.bf16.msra.mxu0 0
    %2936 = vmatprep.subr.bf16.mxu0 0
    %2937 = vmatpush1.bf16.msra.mxu0 0
    %2938 = vmatprep.subr.bf16.mxu0 0
    %2939 = vmatpush1.bf16.msra.mxu0 0
    %2940 = vmatprep.subr.bf16.mxu0 0
    %2941 = vmatpush1.bf16.msra.mxu0 0
    %2942 = vmatprep.subr.bf16.mxu0 0
    %2943 = vmatpush1.bf16.msra.mxu0 0
    %2944 = vmatprep.subr.bf16.mxu0 0
    %2945 = vmatpush1.bf16.msra.mxu0 0
    %2946 = vmatprep.subr.bf16.mxu0 0
    %2947 = vmatpush1.bf16.msra.mxu0 0
    %2948 = vmatprep.subr.bf16.mxu0 0
    %2949 = vmatpush1.bf16.msra.mxu0 0
    %2950 = vmatprep.subr.bf16.mxu0 0
    %2951 = vmatpush1.bf16.msra.mxu0 0
    %2952 = vmatprep.subr.bf16.mxu0 0
    %2953 = vmatpush1.bf16.msra.mxu0 0
    %2954 = vmatprep.subr.bf16.mxu0 0
    %2955 = vmatpush1.bf16.msra.mxu0 0
    %2956 = vmatprep.subr.bf16.mxu0 0
    %2957 = vmatpush1.bf16.msra.mxu0 0
    %2958 = vmatprep.subr.bf16.mxu0 0
    %2959 = vmatpush1.bf16.msra.mxu0 0
    %2960 = vmatprep.subr.bf16.mxu0 0
    %2961 = vmatpush1.bf16.msra.mxu0 0
    %2962 = vmatprep.mubr.bf16.mxu0 0
    %2963 = vmatmul.mubr.bf16.gmra.mrb[0].mxu0 %v2925
    %v2964 = vpop.f32.mrb[0].mxu0
    %v2965 = vadd.f32 0.0, %v2964
    %v2966 = vpop.f32.mrb[0].mxu0
    %v2967 = vpop.f32.mrb[0].mxu0
    %v2968 = vpop.f32.mrb[0].mxu0
    %2969 = vdwg.mxu0
    %v2970 = vpack.c.bf16 %v2965, %v2917
    %s2971 = scalar_lea.vmem [#allocation22], 8
    %v2972 = vld [vmem:[%s2971] sm:$0xf]
    %v2974 = vsel %vm719, %v2970, 0
    %v2977 = vsel %vm1177, %v2972, 0
    %2979 = vmatprep.subr.bf16.mxu0 0
    %2980 = vmatpush1.bf16.msra.mxu0 %v2977
    %2981 = vmatprep.subr.bf16.mxu0 0
    %2982 = vmatpush1.bf16.msra.mxu0 0
    %2983 = vmatprep.subr.bf16.mxu0 0
    %2984 = vmatpush1.bf16.msra.mxu0 0
    %2985 = vmatprep.subr.bf16.mxu0 0
    %2986 = vmatpush1.bf16.msra.mxu0 0
    %2987 = vmatprep.subr.bf16.mxu0 0
    %2988 = vmatpush1.bf16.msra.mxu0 0
    %2989 = vmatprep.subr.bf16.mxu0 0
    %2990 = vmatpush1.bf16.msra.mxu0 0
    %2991 = vmatprep.subr.bf16.mxu0 0
    %2992 = vmatpush1.bf16.msra.mxu0 0
    %2993 = vmatprep.subr.bf16.mxu0 0
    %2994 = vmatpush1.bf16.msra.mxu0 0
    %2995 = vmatprep.subr.bf16.mxu0 0
    %2996 = vmatpush1.bf16.msra.mxu0 0
    %2997 = vmatprep.subr.bf16.mxu0 0
    %2998 = vmatpush1.bf16.msra.mxu0 0
    %2999 = vmatprep.subr.bf16.mxu0 0
    %3000 = vmatpush1.bf16.msra.mxu0 0
    %3001 = vmatprep.subr.bf16.mxu0 0
    %3002 = vmatpush1.bf16.msra.mxu0 0
    %3003 = vmatprep.subr.bf16.mxu0 0
    %3004 = vmatpush1.bf16.msra.mxu0 0
    %3005 = vmatprep.subr.bf16.mxu0 0
    %3006 = vmatpush1.bf16.msra.mxu0 0
    %3007 = vmatprep.subr.bf16.mxu0 0
    %3008 = vmatpush1.bf16.msra.mxu0 0
    %3009 = vmatprep.subr.bf16.mxu0 0
    %3010 = vmatpush1.bf16.msra.mxu0 0
    %3011 = vmatprep.mubr.bf16.mxu0 0
    %3012 = vmatmul.mubr.bf16.gmra.mrb[0].mxu0 %v2974
    %v3013 = vpop.f32.mrb[0].mxu0
    %v3014 = vadd.f32 0.0, %v3013
    %v3015 = vpop.f32.mrb[0].mxu0
    %v3016 = vpop.f32.mrb[0].mxu0
    %v3017 = vadd.f32 0.0, %v3016
    %v3018 = vpop.f32.mrb[0].mxu0
    %3019 = vdwg.mxu0
    %v3020 = vadd.f32 %v2740, %v3014
    %v3021 = vadd.f32 %v2743, %v3017
    %3022 = vrot.lane.b32.xlu0 %v635, 72
    %v3023 = vpop.permute.xlu0 %3022
    %3024 = vrot.lane.b32.xlu0 %v2199, 104
    %v3025 = vpop.permute.xlu0 %3024
    %v3027 = vsel %vm719, %v3023, 0
    %v3030 = vsel %vm719, %v3025, 0
    %3032 = vmatprep.subr.bf16.mxu0 0
    %3033 = vmatpush1.bf16.xpose.msra.mxu0 %v3030
    %3034 = vmatprep.subr.bf16.mxu0 0
    %3035 = vmatpush1.bf16.xpose.msra.mxu0 0
    %3036 = vmatprep.subr.bf16.mxu0 0
    %3037 = vmatpush1.bf16.xpose.msra.mxu0 0
    %3038 = vmatprep.subr.bf16.mxu0 0
    %3039 = vmatpush1.bf16.xpose.msra.mxu0 0
    %3040 = vmatprep.subr.bf16.mxu0 0
    %3041 = vmatpush1.bf16.xpose.msra.mxu0 0
    %3042 = vmatprep.subr.bf16.mxu0 0
    %3043 = vmatpush1.bf16.xpose.msra.mxu0 0
    %3044 = vmatprep.subr.bf16.mxu0 0
    %3045 = vmatpush1.bf16.xpose.msra.mxu0 0
    %3046 = vmatprep.subr.bf16.mxu0 0
    %3047 = vmatpush1.bf16.xpose.msra.mxu0 0
    %3048 = vmatprep.subr.bf16.mxu0 0
    %3049 = vmatpush1.bf16.xpose.msra.mxu0 0
    %3050 = vmatprep.subr.bf16.mxu0 0
    %3051 = vmatpush1.bf16.xpose.msra.mxu0 0
    %3052 = vmatprep.subr.bf16.mxu0 0
    %3053 = vmatpush1.bf16.xpose.msra.mxu0 0
    %3054 = vmatprep.subr.bf16.mxu0 0
    %3055 = vmatpush1.bf16.xpose.msra.mxu0 0
    %3056 = vmatprep.subr.bf16.mxu0 0
    %3057 = vmatpush1.bf16.xpose.msra.mxu0 0
    %3058 = vmatprep.subr.bf16.mxu0 0
    %3059 = vmatpush1.bf16.xpose.msra.mxu0 0
    %3060 = vmatprep.subr.bf16.mxu0 0
    %3061 = vmatpush1.bf16.xpose.msra.mxu0 0
    %3062 = vmatprep.subr.bf16.mxu0 0
    %3063 = vmatpush1.bf16.xpose.msra.mxu0 0
    %3064 = vmatprep.mubr.bf16.mxu0 0
    %3065 = vmatmul.mubr.bf16.gmra.mrb[0].mxu0 %v3027
    %v3066 = vpop.f32.mrb[0].mxu0
    %v3067 = vadd.f32 0.0, %v3066
    %v3068 = vpop.f32.mrb[0].mxu0
    %v3069 = vpop.f32.mrb[0].mxu0
    %v3070 = vpop.f32.mrb[0].mxu0
    %3071 = vdwg.mxu0
    %3072 = vrot.lane.b32.xlu0 %v636, 72
    %v3073 = vpop.permute.xlu0 %3072
    %3074 = vrot.lane.b32.xlu0 %v2200, 104
    %v3075 = vpop.permute.xlu0 %3074
    %v3077 = vsel %vm719, %v3073, 0
    %v3080 = vsel %vm719, %v3075, 0
    %3082 = vmatprep.subr.bf16.mxu0 0
    %3083 = vmatpush1.bf16.xpose.msra.mxu0 %v3080
    %3084 = vmatprep.subr.bf16.mxu0 0
    %3085 = vmatpush1.bf16.xpose.msra.mxu0 0
    %3086 = vmatprep.subr.bf16.mxu0 0
    %3087 = vmatpush1.bf16.xpose.msra.mxu0 0
    %3088 = vmatprep.subr.bf16.mxu0 0
    %3089 = vmatpush1.bf16.xpose.msra.mxu0 0
    %3090 = vmatprep.subr.bf16.mxu0 0
    %3091 = vmatpush1.bf16.xpose.msra.mxu0 0
    %3092 = vmatprep.subr.bf16.mxu0 0
    %3093 = vmatpush1.bf16.xpose.msra.mxu0 0
    %3094 = vmatprep.subr.bf16.mxu0 0
    %3095 = vmatpush1.bf16.xpose.msra.mxu0 0
    %3096 = vmatprep.subr.bf16.mxu0 0
    %3097 = vmatpush1.bf16.xpose.msra.mxu0 0
    %3098 = vmatprep.subr.bf16.mxu0 0
    %3099 = vmatpush1.bf16.xpose.msra.mxu0 0
    %3100 = vmatprep.subr.bf16.mxu0 0
    %3101 = vmatpush1.bf16.xpose.msra.mxu0 0
    %3102 = vmatprep.subr.bf16.mxu0 0
    %3103 = vmatpush1.bf16.xpose.msra.mxu0 0
    %3104 = vmatprep.subr.bf16.mxu0 0
    %3105 = vmatpush1.bf16.xpose.msra.mxu0 0
    %3106 = vmatprep.subr.bf16.mxu0 0
    %3107 = vmatpush1.bf16.xpose.msra.mxu0 0
    %3108 = vmatprep.subr.bf16.mxu0 0
    %3109 = vmatpush1.bf16.xpose.msra.mxu0 0
    %3110 = vmatprep.subr.bf16.mxu0 0
    %3111 = vmatpush1.bf16.xpose.msra.mxu0 0
    %3112 = vmatprep.subr.bf16.mxu0 0
    %3113 = vmatpush1.bf16.xpose.msra.mxu0 0
    %3114 = vmatprep.mubr.bf16.mxu0 0
    %3115 = vmatmul.mubr.bf16.gmra.mrb[0].mxu0 %v3077
    %v3116 = vpop.f32.mrb[0].mxu0
    %v3117 = vadd.f32 0.0, %v3116
    %v3118 = vpop.f32.mrb[0].mxu0
    %v3119 = vpop.f32.mrb[0].mxu0
    %v3120 = vpop.f32.mrb[0].mxu0
    %3121 = vdwg.mxu0
    %v3122 = vmul.f32 %v3067, 0.35355338
    %v3123 = vmul.f32 %v3117, 0.35355338
    %v3124 = vadd.f32 %v3122, %v338
    %v3125 = vadd.f32 %v3123, %v342
    %v3126 = vsel %vm816, %v3124, -inf
    %3127 = vmax.xlane.f32.xlu0 %v3126
    %v3128 = vpop.xlane.xlu0 %3127
    %v3129 = vsel %vm816, %v3125, -inf
    %3130 = vmax.xlane.f32.xlu0 %v3129
    %v3131 = vpop.xlane.xlu0 %3130
    %v3132 = vsub.f32 %v3124, %v3128
    %v3133 = vsub.f32 %v3125, %v3131
    %v3134 = vmul.f32 %v3132, 1.442695
    %v3135 = vpow.pop %v3134
    %v3136 = vmul.f32 %v3133, 1.442695
    %v3137 = vpow.pop %v3136
    %v3138 = vsel %vm816, %v3135, 0.0
    %3139 = vadd.xlane.f32.xlu0 %v3138
    %v3140 = vpop.xlane.xlu0 %3139
    %v3141 = vsel %vm816, %v3137, 0.0
    %3142 = vadd.xlane.f32.xlu0 %v3141
    %v3143 = vpop.xlane.xlu0 %3142
    %v3144 = vrcp.pop %v3140
    %v3145 = vrcp.pop %v3143
    %v3146 = vmul.f32 %v3135, %v3144
    %v3147 = vmul.f32 %v3137, %v3145
    %v3148 = vpack.c.bf16 %v3146, %v3146
    %v3149 = vpack.c.bf16 %v3147, %v3147
    %3150 = vrot.lane.b32.xlu0 %v2199, 72
    %v3151 = vpop.permute.xlu0 %3150
    %v3153 = vsel %vm816, %v3148, 0
    %v3156 = vand.u32 %v3151, %v850
    %3158 = vmatprep.subr.bf16.mxu0 0
    %3159 = vmatpush1.bf16.msra.mxu0 %v3156
    %3160 = vmatprep.subr.bf16.mxu0 0
    %3161 = vmatpush1.bf16.msra.mxu0 0
    %3162 = vmatprep.subr.bf16.mxu0 0
    %3163 = vmatpush1.bf16.msra.mxu0 0
    %3164 = vmatprep.subr.bf16.mxu0 0
    %3165 = vmatpush1.bf16.msra.mxu0 0
    %3166 = vmatprep.subr.bf16.mxu0 0
    %3167 = vmatpush1.bf16.msra.mxu0 0
    %3168 = vmatprep.subr.bf16.mxu0 0
    %3169 = vmatpush1.bf16.msra.mxu0 0
    %3170 = vmatprep.subr.bf16.mxu0 0
    %3171 = vmatpush1.bf16.msra.mxu0 0
    %3172 = vmatprep.subr.bf16.mxu0 0
    %3173 = vmatpush1.bf16.msra.mxu0 0
    %3174 = vmatprep.subr.bf16.mxu0 0
    %3175 = vmatpush1.bf16.msra.mxu0 0
    %3176 = vmatprep.subr.bf16.mxu0 0
    %3177 = vmatpush1.bf16.msra.mxu0 0
    %3178 = vmatprep.subr.bf16.mxu0 0
    %3179 = vmatpush1.bf16.msra.mxu0 0
    %3180 = vmatprep.subr.bf16.mxu0 0
    %3181 = vmatpush1.bf16.msra.mxu0 0
    %3182 = vmatprep.subr.bf16.mxu0 0
    %3183 = vmatpush1.bf16.msra.mxu0 0
    %3184 = vmatprep.subr.bf16.mxu0 0
    %3185 = vmatpush1.bf16.msra.mxu0 0
    %3186 = vmatprep.subr.bf16.mxu0 0
    %3187 = vmatpush1.bf16.msra.mxu0 0
    %3188 = vmatprep.subr.bf16.mxu0 0
    %3189 = vmatpush1.bf16.msra.mxu0 0
    %3190 = vmatprep.mubr.bf16.mxu0 0
    %3191 = vmatmul.mubr.bf16.gmra.mrb[0].mxu0 %v3153
    %v3192 = vpop.f32.mrb[0].mxu0
    %v3193 = vadd.f32 0.0, %v3192
    %v3194 = vpop.f32.mrb[0].mxu0
    %v3195 = vpop.f32.mrb[0].mxu0
    %v3196 = vpop.f32.mrb[0].mxu0
    %3197 = vdwg.mxu0
    %3198 = vrot.lane.b32.xlu0 %v2200, 72
    %v3199 = vpop.permute.xlu0 %3198
    %v3201 = vsel %vm816, %v3149, 0
    %v3204 = vand.u32 %v3199, %v850
    %3206 = vmatprep.subr.bf16.mxu0 0
    %3207 = vmatpush1.bf16.msra.mxu0 %v3204
    %3208 = vmatprep.subr.bf16.mxu0 0
    %3209 = vmatpush1.bf16.msra.mxu0 0
    %3210 = vmatprep.subr.bf16.mxu0 0
    %3211 = vmatpush1.bf16.msra.mxu0 0
    %3212 = vmatprep.subr.bf16.mxu0 0
    %3213 = vmatpush1.bf16.msra.mxu0 0
    %3214 = vmatprep.subr.bf16.mxu0 0
    %3215 = vmatpush1.bf16.msra.mxu0 0
    %3216 = vmatprep.subr.bf16.mxu0 0
    %3217 = vmatpush1.bf16.msra.mxu0 0
    %3218 = vmatprep.subr.bf16.mxu0 0
    %3219 = vmatpush1.bf16.msra.mxu0 0
    %3220 = vmatprep.subr.bf16.mxu0 0
    %3221 = vmatpush1.bf16.msra.mxu0 0
    %3222 = vmatprep.subr.bf16.mxu0 0
    %3223 = vmatpush1.bf16.msra.mxu0 0
    %3224 = vmatprep.subr.bf16.mxu0 0
    %3225 = vmatpush1.bf16.msra.mxu0 0
    %3226 = vmatprep.subr.bf16.mxu0 0
    %3227 = vmatpush1.bf16.msra.mxu0 0
    %3228 = vmatprep.subr.bf16.mxu0 0
    %3229 = vmatpush1.bf16.msra.mxu0 0
    %3230 = vmatprep.subr.bf16.mxu0 0
    %3231 = vmatpush1.bf16.msra.mxu0 0
    %3232 = vmatprep.subr.bf16.mxu0 0
    %3233 = vmatpush1.bf16.msra.mxu0 0
    %3234 = vmatprep.subr.bf16.mxu0 0
    %3235 = vmatpush1.bf16.msra.mxu0 0
    %3236 = vmatprep.subr.bf16.mxu0 0
    %3237 = vmatpush1.bf16.msra.mxu0 0
    %3238 = vmatprep.mubr.bf16.mxu0 0
    %3239 = vmatmul.mubr.bf16.gmra.mrb[0].mxu0 %v3201
    %v3240 = vpop.f32.mrb[0].mxu0
    %v3241 = vadd.f32 0.0, %v3240
    %v3242 = vpop.f32.mrb[0].mxu0
    %v3243 = vpop.f32.mrb[0].mxu0
    %v3244 = vpop.f32.mrb[0].mxu0
    %3245 = vdwg.mxu0
    %v3246 = vpack.c.bf16 %v3241, %v3193
    %s3247 = scalar_lea.vmem [#allocation22], 12
    %v3248 = vld [vmem:[%s3247] sm:$0xf]
    %v3250 = vsel %vm719, %v3246, 0
    %v3253 = vsel %vm1177, %v3248, 0
    %3255 = vmatprep.subr.bf16.mxu0 0
    %3256 = vmatpush1.bf16.msra.mxu0 %v3253
    %3257 = vmatprep.subr.bf16.mxu0 0
    %3258 = vmatpush1.bf16.msra.mxu0 0
    %3259 = vmatprep.subr.bf16.mxu0 0
    %3260 = vmatpush1.bf16.msra.mxu0 0
    %3261 = vmatprep.subr.bf16.mxu0 0
    %3262 = vmatpush1.bf16.msra.mxu0 0
    %3263 = vmatprep.subr.bf16.mxu0 0
    %3264 = vmatpush1.bf16.msra.mxu0 0
    %3265 = vmatprep.subr.bf16.mxu0 0
    %3266 = vmatpush1.bf16.msra.mxu0 0
    %3267 = vmatprep.subr.bf16.mxu0 0
    %3268 = vmatpush1.bf16.msra.mxu0 0
    %3269 = vmatprep.subr.bf16.mxu0 0
    %3270 = vmatpush1.bf16.msra.mxu0 0
    %3271 = vmatprep.subr.bf16.mxu0 0
    %3272 = vmatpush1.bf16.msra.mxu0 0
    %3273 = vmatprep.subr.bf16.mxu0 0
    %3274 = vmatpush1.bf16.msra.mxu0 0
    %3275 = vmatprep.subr.bf16.mxu0 0
    %3276 = vmatpush1.bf16.msra.mxu0 0
    %3277 = vmatprep.subr.bf16.mxu0 0
    %3278 = vmatpush1.bf16.msra.mxu0 0
    %3279 = vmatprep.subr.bf16.mxu0 0
    %3280 = vmatpush1.bf16.msra.mxu0 0
    %3281 = vmatprep.subr.bf16.mxu0 0
    %3282 = vmatpush1.bf16.msra.mxu0 0
    %3283 = vmatprep.subr.bf16.mxu0 0
    %3284 = vmatpush1.bf16.msra.mxu0 0
    %3285 = vmatprep.subr.bf16.mxu0 0
    %3286 = vmatpush1.bf16.msra.mxu0 0
    %3287 = vmatprep.mubr.bf16.mxu0 0
    %3288 = vmatmul.mubr.bf16.gmra.mrb[0].mxu0 %v3250
    %v3289 = vpop.f32.mrb[0].mxu0
    %v3290 = vadd.f32 0.0, %v3289
    %v3291 = vpop.f32.mrb[0].mxu0
    %v3292 = vpop.f32.mrb[0].mxu0
    %v3293 = vadd.f32 0.0, %v3292
    %v3294 = vpop.f32.mrb[0].mxu0
    %3295 = vdwg.mxu0
    %v3296 = vadd.f32 %v3020, %v3290
    %v3297 = vadd.f32 %v3021, %v3293
    %v3299 = vlaneseq
    %v3300 = vshrl.u32 %v3299, 7
    %v3301 = vsub.s32 0, %v3300
    %v3302 = vrot.slane %v1836, %v3301
    %v3304 = vadd.f32 %v3296, %v3302
    %v3305 = vadd.f32 %v3297, %v3302
    %v3306 = vmul.f32 %v1827, %v229
    %v3307 = vmul.f32 %v1828, %v230
    %v3308 = vsel %vm231, %v3306, 0.0
    %3309 = vadd.xlane.f32.xlu0 %v3308
    %v3310 = vpop.xlane.xlu0 %3309
    %v3311 = vsel %vm231, %v3307, 0.0
    %3312 = vadd.xlane.f32.xlu0 %v3311
    %v3313 = vpop.xlane.xlu0 %3312
    %v3314 = vmul.f32 %v3310, 0.17677669
    %v3315 = vmul.f32 %v3313, 0.17677669
    %v3316 = vmul.f32 %v3304, %v229
    %v3317 = vmul.f32 %v3305, %v230
    %v3318 = vsel %vm231, %v3316, 0.0
    %3319 = vadd.xlane.f32.xlu0 %v3318
    %v3320 = vpop.xlane.xlu0 %3319
    %v3321 = vsel %vm231, %v3317, 0.0
    %3322 = vadd.xlane.f32.xlu0 %v3321
    %v3323 = vpop.xlane.xlu0 %3322
    %v3324 = vmul.f32 %v3320, 0.17677669
    %v3325 = vmul.f32 %v3323, 0.17677669
    %v3326 = vmax.f32 %v3314, %v3324
    %v3327 = vmax.f32 %v3315, %v3325
    %v3328 = vsub.f32 %v3314, %v3326
    %v3329 = vsub.f32 %v3315, %v3327
    %v3330 = vmul.f32 %v3328, 1.442695
    %v3331 = vpow.pop %v3330
    %v3332 = vmul.f32 %v3329, 1.442695
    %v3333 = vpow.pop %v3332
    %v3334 = vsub.f32 %v3324, %v3326
    %v3335 = vsub.f32 %v3325, %v3327
    %v3336 = vmul.f32 %v3334, 1.442695
    %v3337 = vpow.pop %v3336
    %v3338 = vmul.f32 %v3335, 1.442695
    %v3339 = vpow.pop %v3338
    %v3340 = vadd.f32 %v3331, %v3337
    %v3341 = vadd.f32 %v3333, %v3339
    %v3342 = vrcp.pop %v3340
    %v3343 = vmul.f32 1.0, %v3342
    %v3344 = vrcp.pop %v3341
    %v3345 = vmul.f32 1.0, %v3344
    %v3346 = vmul.f32 %v3331, %v1827
    %v3347 = vmul.f32 %v3333, %v1828
    %v3348 = vmul.f32 %v3337, %v3304
    %v3349 = vmul.f32 %v3339, %v3305
    %v3350 = vadd.f32 %v3346, %v3348
    %v3351 = vadd.f32 %v3347, %v3349
    %v3352 = vmul.f32 %v3350, %v3343
    %v3353 = vmul.f32 %v3351, %v3345
    %3354 = vst.msk [vmem:[#allocation25] sm:$0xff] %vm231, %v3352
    %3355 = vst.msk [vmem:[#allocation25 + $0x8] sm:$0xff] %vm231, %v3353
    // Predicated region
    $region114: #{decoder_forward.11} parent=1 // pred_check
      _
    $region115: #{decoder_forward.11} parent=1 // pred_check_branch
      %3357 = sbr.rel (0) target = $region117
    $region116: #{decoder_forward.11} parent=1 // pred_region
      %s3359 = ssub.s32 256, 256
      %3360 = vsyncadd [#allocation4], %s3359
      %s3361 = sshll.u32 [#allocation25], 4
      %s3362 = int_to_ptr.vmem [resolvable:$true] %s3361
      %3367 = dma.vmem_to_hbm [thread:$0]  %s3362, 256, %s14, [#allocation4], 128, 128, 8
    $region117: #{decoder_forward.11} parent=1 // pred_fallthru
      _
    // Predicated region
    $region118: #{decoder_forward.11} parent=1 // pred_check
      _
    $region119: #{decoder_forward.11} parent=1 // pred_check_branch
      %3369 = sbr.rel (0) target = $region121
    $region120: #{decoder_forward.11} parent=1 // pred_region
      %3370 = dma.done [#allocation4], 256
    $region121: #{decoder_forward.11} parent=1 // pred_fallthru
      _
    %3371 = vsyncpa [#allocation3], 1
    %3372 = vsyncpa [#allocation6], 1
    %3373 = vsyncpa [#allocation9], 1
    %3374 = vsyncpa [#allocation12], 1
    %3375 = vsyncpa [#allocation15], 1
    %3376 = vsyncpa [#allocation18], 1
    %3377 = vsyncpa [#allocation21], 1
    %3378 = vsyncpa [#allocation24], 1
    %3379 = vsyncpa [#allocation4], 1

</llo_original>
